<compile_context>
chip_gen: v7x
topology: tpu7x:2x2x1
jax: 0.10.0
libtpu: 0.0.40
codegen_flags: <defaults>
</compile_context>

<pallas_src>
import jax
import jax.numpy as jnp
from jax.experimental import pallas as pl
from jax.experimental.pallas import tpu as pltpu

EPS = 1e-5
LANE = 128                      # keep every channel dim a multiple of the lane width
TM = 512                        # voxel rows per tile for the row-gridded stages
VMEM_LIMIT = 32 * 1024 * 1024   # explicit scoped-VMEM budget (headroom on v7x's 64 MiB)


def _ceil_to(x, m):
    return (x + m - 1) // m * m


def bottleneck_forward(x_ncdhw, params):
    """Forward of Bottleneck (training-mode BN, stride=1, downsample=None).

    x_ncdhw: (N, C_in, D, H, W) float32, same layout as the PyTorch module.
    """
    w1, g1, b1, w2, g2, b2, w3, g3, b3 = params
    N, Cin, D, H, W = x_ncdhw.shape
    P = w1.shape[1]                   # planes
    Cout = w3.shape[1]                # planes * expansion
    assert Cin == Cout, "identity residual (downsample=None) needs in_planes == planes*4"

    M = N * D * H * W                 # voxels; BN reduces over these
    Cp = _ceil_to(Cin, LANE)          # lane-padded in/out channels
    Pp = _ceil_to(P, LANE)            # lane-padded bottleneck channels
    tm = TM if M >= TM else _ceil_to(M, 8)
    Mp = _ceil_to(M, tm)
    n_row_tiles = Mp // tm
    rem = M % tm                      # valid rows in the last tile (0 == full tile)

    f32, bf16 = jnp.float32, jnp.bfloat16

    # ---- layout plumbing (host): NCDHW -> voxel rows x lane-dense channels ----
    x = jnp.transpose(x_ncdhw, (0, 2, 3, 4, 1)).astype(f32)            # NDHWC
    x_flat = jnp.pad(x.reshape(M, Cin), ((0, Mp - M), (0, Cp - Cin)))

    # Lane-padded weights / BN params. Zero padding keeps padded channels inert
    # (padded gamma/beta are 0, so padded channels stay exactly 0 end to end).
    w1p = jnp.pad(w1, ((0, Cp - Cin), (0, Pp - P))).astype(bf16)
    w2p = jnp.pad(w2, ((0, 0), (0, 0), (0, 0), (0, Pp - P), (0, Pp - P)))
    w2p = w2p.reshape(27, Pp, Pp).astype(bf16)                          # per-tap matrices
    w3p = jnp.pad(w3, ((0, Pp - P), (0, Cp - Cout))).astype(bf16)
    g1p, b1p = jnp.pad(g1, (0, Pp - P)), jnp.pad(b1, (0, Pp - P))
    g2p, b2p = jnp.pad(g2, (0, Pp - P)), jnp.pad(b2, (0, Pp - P))
    g3p, b3p = jnp.pad(g3, (0, Cp - Cout)), jnp.pad(b3, (0, Cp - Cout))

    inv_count = 1.0 / float(M)

    def fold_bn(stats, gamma, beta):
        # stats[0] = per-channel sum, stats[1] = per-channel sum of squares.
        mean = stats[0] * inv_count
        var = jnp.maximum(stats[1] * inv_count - mean * mean, 0.0)      # biased var
        scale = gamma * jax.lax.rsqrt(var + EPS)
        shift = beta - mean * scale
        return scale.reshape(1, -1).astype(f32), shift.reshape(1, -1).astype(f32)

    row_tile_params = pltpu.CompilerParams(
        dimension_semantics=("arbitrary",), vmem_limit_bytes=VMEM_LIMIT)

    # ---------------- stage 1: conv1x1x1 (MXU) + BN1 statistics ----------------
    def stage1_kernel(x_ref, w_ref, y_ref, st_ref):
        @pl.when(pl.program_id(0) == 0)
        def _():
            st_ref[...] = jnp.zeros_like(st_ref)
        y = jnp.dot(x_ref[...].astype(bf16), w_ref[...],
                    preferred_element_type=jnp.float32)
        y_ref[...] = y.astype(y_ref.dtype)
        st_ref[...] += jnp.concatenate(
            [jnp.sum(y, axis=0, keepdims=True),
             jnp.sum(y * y, axis=0, keepdims=True)], axis=0)

    y1_flat, stats1 = pl.pallas_call(
        stage1_kernel,
        grid=(n_row_tiles,),
        in_specs=(pl.BlockSpec((tm, Cp), lambda i: (i, 0)),
                  pl.BlockSpec((Cp, Pp), lambda i: (0, 0))),     # resident weight
        out_specs=(pl.BlockSpec((tm, Pp), lambda i: (i, 0)),
                   pl.BlockSpec((2, Pp), lambda i: (0, 0))),     # resident sum/sumsq
        out_shape=(jax.ShapeDtypeStruct((Mp, Pp), bf16),
                   jax.ShapeDtypeStruct((2, Pp), f32)),
        compiler_params=row_tile_params,
    )(x_flat, w1p)

    # BN1 apply + ReLU + zero-pad halo: the unavoidable second traversal after
    # the global-stats sync point, fused into one XLA elementwise pass.
    sc1, sh1 = fold_bn(stats1, g1p, b1p)
    a1 = jnp.maximum(y1_flat[:M].astype(f32) * sc1 + sh1, 0.0).reshape(N, D, H, W, Pp)
    a1p = jnp.pad(a1, ((0, 0), (1, 1), (1, 1), (1, 1), (0, 0))).astype(bf16)

    # ---- stage 2: conv3x3x3 as 27 per-tap matmuls (no HBM im2col) + BN2 stats ----
    Hp, Wp = H + 2, W + 2

    def stage2_kernel(p0_ref, p1_ref, p2_ref, w_ref, y_ref, st_ref):
        @pl.when(jnp.logical_and(pl.program_id(0) == 0, pl.program_id(1) == 0))
        def _():
            st_ref[...] = jnp.zeros_like(st_ref)
        planes = (p0_ref, p1_ref, p2_ref)
        acc = jnp.zeros((H * W, Pp), jnp.float32)
        for kd in range(3):
            plane = planes[kd][0, 0].astype(jnp.float32)          # (Hp, Wp, Pp)
            for kh in range(3):
                for kw in range(3):
                    win = plane[kh:kh + H, kw:kw + W, :].reshape(H * W, Pp)
                    acc = acc + jnp.dot(win.astype(bf16),
                                        w_ref[kd * 9 + kh * 3 + kw],
                                        preferred_element_type=jnp.float32)
        y_ref[...] = acc.reshape(1, 1, H, W, Pp).astype(y_ref.dtype)
        st_ref[...] += jnp.concatenate(
            [jnp.sum(acc, axis=0, keepdims=True),
             jnp.sum(acc * acc, axis=0, keepdims=True)], axis=0)

    def plane_spec(kd):
        # Block depth 1 => block index == element index: the depth halo is
        # expressed purely through the index_map (padded array, depths d+kd).
        return pl.BlockSpec((1, 1, Hp, Wp, Pp), lambda n, d: (n, d + kd, 0, 0, 0))

    y2, stats2 = pl.pallas_call(
        stage2_kernel,
        grid=(N, D),
        in_specs=(plane_spec(0), plane_spec(1), plane_spec(2),
                  pl.BlockSpec((27, Pp, Pp), lambda n, d: (0, 0, 0))),  # resident weight
        out_specs=(pl.BlockSpec((1, 1, H, W, Pp), lambda n, d: (n, d, 0, 0, 0)),
                   pl.BlockSpec((2, Pp), lambda n, d: (0, 0))),
        out_shape=(jax.ShapeDtypeStruct((N, D, H, W, Pp), bf16),
                   jax.ShapeDtypeStruct((2, Pp), f32)),
        compiler_params=pltpu.CompilerParams(
            dimension_semantics=("arbitrary", "arbitrary"),
            vmem_limit_bytes=VMEM_LIMIT),
    )(a1p, a1p, a1p, w2p)

    sc2, sh2 = fold_bn(stats2, g2p, b2p)
    y2_flat = jnp.pad(y2.reshape(M, Pp), ((0, Mp - M), (0, 0)))

    # -------- stage 3: BN2 apply + ReLU + conv1x1x1 + BN3 statistics --------
    def stage3_kernel(y2_ref, sc_ref, sh_ref, w_ref, y_ref, st_ref):
        i = pl.program_id(0)

        @pl.when(i == 0)
        def _():
            st_ref[...] = jnp.zeros_like(st_ref)
        a2 = jnp.maximum(y2_ref[...].astype(jnp.float32) * sc_ref[...] + sh_ref[...], 0.0)
        y3 = jnp.dot(a2.astype(bf16), w_ref[...], preferred_element_type=jnp.float32)
        y_ref[...] = y3.astype(y_ref.dtype)
        if rem:   # static: keep zero-padded rows out of the BN3 statistics
            nvalid = jnp.where(i == pl.num_programs(0) - 1, rem, tm)
            rmask = (jax.lax.broadcasted_iota(jnp.int32, (tm, 1), 0) < nvalid
                     ).astype(jnp.float32)
            y3 = y3 * rmask
        st_ref[...] += jnp.concatenate(
            [jnp.sum(y3, axis=0, keepdims=True),
             jnp.sum(y3 * y3, axis=0, keepdims=True)], axis=0)

    y3_flat, stats3 = pl.pallas_call(
        stage3_kernel,
        grid=(n_row_tiles,),
        in_specs=(pl.BlockSpec((tm, Pp), lambda i: (i, 0)),
                  pl.BlockSpec((1, Pp), lambda i: (0, 0)),       # resident scale
                  pl.BlockSpec((1, Pp), lambda i: (0, 0)),       # resident shift
                  pl.BlockSpec((Pp, Cp), lambda i: (0, 0))),     # resident weight
        out_specs=(pl.BlockSpec((tm, Cp), lambda i: (i, 0)),
                   pl.BlockSpec((2, Cp), lambda i: (0, 0))),
        out_shape=(jax.ShapeDtypeStruct((Mp, Cp), bf16),
                   jax.ShapeDtypeStruct((2, Cp), f32)),
        compiler_params=row_tile_params,
    )(y2_flat, sc2, sh2, w3p)

    sc3, sh3 = fold_bn(stats3, g3p, b3p)

    # -------- stage 4: BN3 apply + residual add + ReLU (elementwise, 'parallel') --------
    def stage4_kernel(y3_ref, x_ref, sc_ref, sh_ref, o_ref):
        z = y3_ref[...].astype(jnp.float32) * sc_ref[...] + sh_ref[...]
        o_ref[...] = jnp.maximum(z + x_ref[...], 0.0)

    out_flat = pl.pallas_call(
        stage4_kernel,
        grid=(n_row_tiles,),
        in_specs=(pl.BlockSpec((tm, Cp), lambda i: (i, 0)),
                  pl.BlockSpec((tm, Cp), lambda i: (i, 0)),
                  pl.BlockSpec((1, Cp), lambda i: (0, 0)),
                  pl.BlockSpec((1, Cp), lambda i: (0, 0))),
        out_specs=pl.BlockSpec((tm, Cp), lambda i: (i, 0)),
        out_shape=jax.ShapeDtypeStruct((Mp, Cp), f32),
        compiler_params=pltpu.CompilerParams(
            dimension_semantics=("parallel",), vmem_limit_bytes=VMEM_LIMIT),
    )(y3_flat, x_flat, sc3, sh3)

    out = out_flat[:M, :Cout].reshape(N, D, H, W, Cout)
    return jnp.transpose(out, (0, 4, 1, 2, 3))


def bottleneck_reference(x_ncdhw, params):
    """Pure-JAX f32 reference (same math, XLA conv) for the correctness check."""
    w1, g1, b1, w2, g2, b2, w3, g3, b3 = params
    x = jnp.transpose(x_ncdhw, (0, 2, 3, 4, 1)).astype(jnp.float32)

    def bn(y, g, b):
        mean = jnp.mean(y, axis=(0, 1, 2, 3), keepdims=True)
        var = jnp.mean((y - mean) ** 2, axis=(0, 1, 2, 3), keepdims=True)
        return (y - mean) * jax.lax.rsqrt(var + EPS) * g + b

    hp = jax.lax.Precision.HIGHEST
    y = jnp.einsum('ndhwc,cp->ndhwp', x, w1, precision=hp)
    y = jax.nn.relu(bn(y, g1, b1))
    y = jax.lax.conv_general_dilated(
        y, w2, window_strides=(1, 1, 1), padding=((1, 1), (1, 1), (1, 1)),
        dimension_numbers=('NDHWC', 'DHWIO', 'NDHWC'), precision=hp)
    y = jax.nn.relu(bn(y, g2, b2))
    z = jnp.einsum('ndhwp,pq->ndhwq', y, w3, precision=hp)
    z = bn(z, g3, b3)
    out = jax.nn.relu(z + x)
    return jnp.transpose(out, (0, 4, 1, 2, 3))


if __name__ == "__main__":
    key = jax.random.PRNGKey(0)
    N, D, H, W = 2, 8, 8, 8
    planes = 4
    expansion = 4
    in_planes = planes * expansion   # identity residual requires this

    ks = jax.random.split(key, 10)
    x = jax.random.normal(ks[0], (N, in_planes, D, H, W), jnp.float32)
    # conv weights stored channels-last, ready for matmul / DHWIO
    w1 = 0.2 * jax.random.normal(ks[1], (in_planes, planes), jnp.float32)
    g1 = 1.0 + 0.1 * jax.random.normal(ks[2], (planes,), jnp.float32)
    b1 = 0.1 * jax.random.normal(ks[3], (planes,), jnp.float32)
    w2 = 0.1 * jax.random.normal(ks[4], (3, 3, 3, planes, planes), jnp.float32)
    g2 = 1.0 + 0.1 * jax.random.normal(ks[5], (planes,), jnp.float32)
    b2 = 0.1 * jax.random.normal(ks[6], (planes,), jnp.float32)
    w3 = 0.2 * jax.random.normal(ks[7], (planes, planes * expansion), jnp.float32)
    g3 = 1.0 + 0.1 * jax.random.normal(ks[8], (planes * expansion,), jnp.float32)
    b3 = 0.1 * jax.random.normal(ks[9], (planes * expansion,), jnp.float32)
    params = (w1, g1, b1, w2, g2, b2, w3, g3, b3)

    out = jax.block_until_ready(jax.jit(bottleneck_forward)(x, params))
    ref = bottleneck_reference(x, params)

    assert out.shape == (N, in_planes, D, H, W)
    max_err = float(jnp.max(jnp.abs(out - ref)))
    mean_err = float(jnp.mean(jnp.abs(out - ref)))
    # Tolerances account for bf16 MXU inputs + bf16 intermediate storage vs the
    # f32 HIGHEST-precision reference (BN keeps activations ~unit scale).
    assert max_err < 2e-1, f"max abs err {max_err}"
    assert mean_err < 3e-2, f"mean abs err {mean_err}"

    print("KERNEL_OK")
</pallas_src>

<mosaic_0001>
module attributes {stable_mosaic.version = 11 : i64} {
  func.func @stage1_kernel(%arg0: i32, %arg1: memref<512x128xf32, #tpu.memory_space<vmem>>, %arg2: memref<128x128xbf16, #tpu.memory_space<vmem>>, %arg3: memref<512x128xbf16, #tpu.memory_space<vmem>>, %arg4: memref<2x128xf32, #tpu.memory_space<vmem>>) attributes {dimension_semantics = [#tpu.dimension_semantics<arbitrary>], iteration_bounds = array<i64: 2>, scalar_prefetch = 0 : i64, scratch_operands = 0 : i64, tpu.core_type = #tpu.core_type<tc>, window_params = [{transform_indices = @transform_0, window_bounds = array<i64: 512, 128>}, {pipeline_mode = #tpu.pipeline_mode<synchronous>, transform_indices = @transform_1, window_bounds = array<i64: 128, 128>}, {transform_indices = @transform_2, window_bounds = array<i64: 512, 128>}, {pipeline_mode = #tpu.pipeline_mode<synchronous>, transform_indices = @transform_3, window_bounds = array<i64: 2, 128>}]} {
    %c0_i32 = arith.constant 0 : i32
    %0 = arith.cmpi eq, %arg0, %c0_i32 : i32
    %1 = arith.extui %0 : i1 to i32
    %c0_i32_0 = arith.constant 0 : i32
    %2 = arith.cmpi ne, %1, %c0_i32_0 : i32
    scf.if %2 {
      %cst_12 = arith.constant 0.000000e+00 : f32
      %18 = vector.broadcast %cst_12 : f32 to vector<2x128xf32>
      %c0_13 = arith.constant 0 : index
      %c0_14 = arith.constant 0 : index
      %19 = vector.load %arg4[%c0_13, %c0_14] : memref<2x128xf32, #tpu.memory_space<vmem>>, vector<2x128xf32>
      tpu.vector_store %arg4[%c0_13, %c0_14], %18 {strides = array<i32>} : memref<2x128xf32, #tpu.memory_space<vmem>>, vector<2x128xf32>,
    } else {
    }
    %c0 = arith.constant 0 : index
    %c0_1 = arith.constant 0 : index
    %3 = vector.load %arg1[%c0, %c0_1] : memref<512x128xf32, #tpu.memory_space<vmem>>, vector<512x128xf32>
    %4 = arith.truncf %3 : vector<512x128xf32> to vector<512x128xbf16>
    %c0_2 = arith.constant 0 : index
    %c0_3 = arith.constant 0 : index
    %5 = vector.load %arg2[%c0_2, %c0_3] : memref<128x128xbf16, #tpu.memory_space<vmem>>, vector<128x128xbf16>
    %cst = arith.constant dense<0.000000e+00> : vector<512x128xf32>
    %6 = tpu.matmul %4, %5, %cst {dimension_numbers = #tpu.dot_dimension_numbers<[1], [0], [0], [1], [0, 0, 1, 1], [], []>} : vector<512x128xbf16>, vector<128x128xbf16>, vector<512x128xf32> -> vector<512x128xf32>
    %7 = arith.truncf %6 : vector<512x128xf32> to vector<512x128xbf16>
    %c0_4 = arith.constant 0 : index
    %c0_5 = arith.constant 0 : index
    %8 = vector.load %arg3[%c0_4, %c0_5] : memref<512x128xbf16, #tpu.memory_space<vmem>>, vector<512x128xbf16>
    tpu.vector_store %arg3[%c0_4, %c0_5], %7 {strides = array<i32>} : memref<512x128xbf16, #tpu.memory_space<vmem>>, vector<512x128xbf16>,
    %c0_6 = arith.constant 0 : index
    %c0_7 = arith.constant 0 : index
    %9 = vector.load %arg4[%c0_6, %c0_7] : memref<2x128xf32, #tpu.memory_space<vmem>>, vector<2x128xf32>
    %cst_8 = arith.constant dense<0.000000e+00> : vector<128xf32>
    %10 = vector.multi_reduction <add>, %6, %cst_8 [0] : vector<512x128xf32> to vector<128xf32>
    %11 = vector.shape_cast %10 : vector<128xf32> to vector<1x128xf32>
    %12 = arith.mulf %6, %6 : vector<512x128xf32>
    %cst_9 = arith.constant dense<0.000000e+00> : vector<128xf32>
    %13 = vector.multi_reduction <add>, %12, %cst_9 [0] : vector<512x128xf32> to vector<128xf32>
    %14 = vector.shape_cast %13 : vector<128xf32> to vector<1x128xf32>
    %15 = tpu.concatenate %11, %14 in 0 : vector<1x128xf32>, vector<1x128xf32> -> vector<2x128xf32>
    %16 = arith.addf %9, %15 : vector<2x128xf32>
    %c0_10 = arith.constant 0 : index
    %c0_11 = arith.constant 0 : index
    %17 = vector.load %arg4[%c0_10, %c0_11] : memref<2x128xf32, #tpu.memory_space<vmem>>, vector<2x128xf32>
    tpu.vector_store %arg4[%c0_10, %c0_11], %16 {strides = array<i32>} : memref<2x128xf32, #tpu.memory_space<vmem>>, vector<2x128xf32>,
    return
  }
  func.func @transform_0(%arg0: i32) -> (i32, i32) {
    %c0_i32 = arith.constant 0 : i32
    %c0_i32_0 = arith.constant 0 : i32
    return %arg0, %c0_i32 : i32, i32
  }
  func.func @transform_1(%arg0: i32) -> (i32, i32) {
    %c0_i32 = arith.constant 0 : i32
    %c0_i32_0 = arith.constant 0 : i32
    %c0_i32_1 = arith.constant 0 : i32
    return %c0_i32, %c0_i32_0 : i32, i32
  }
  func.func @transform_2(%arg0: i32) -> (i32, i32) {
    %c0_i32 = arith.constant 0 : i32
    %c0_i32_0 = arith.constant 0 : i32
    return %arg0, %c0_i32 : i32, i32
  }
  func.func @transform_3(%arg0: i32) -> (i32, i32) {
    %c0_i32 = arith.constant 0 : i32
    %c0_i32_0 = arith.constant 0 : i32
    %c0_i32_1 = arith.constant 0 : i32
    return %c0_i32, %c0_i32_0 : i32, i32
  }
}

module attributes {stable_mosaic.version = 11 : i64} {
  func.func @stage2_kernel(%arg0: i32, %arg1: i32, %arg2: memref<1x1x10x10x128xbf16, #tpu.memory_space<vmem>>, %arg3: memref<1x1x10x10x128xbf16, #tpu.memory_space<vmem>>, %arg4: memref<1x1x10x10x128xbf16, #tpu.memory_space<vmem>>, %arg5: memref<27x128x128xbf16, #tpu.memory_space<vmem>>, %arg6: memref<1x1x8x8x128xbf16, #tpu.memory_space<vmem>>, %arg7: memref<2x128xf32, #tpu.memory_space<vmem>>) attributes {dimension_semantics = [#tpu.dimension_semantics<arbitrary>, #tpu.dimension_semantics<arbitrary>], iteration_bounds = array<i64: 2, 8>, scalar_prefetch = 0 : i64, scratch_operands = 0 : i64, tpu.core_type = #tpu.core_type<tc>, window_params = [{transform_indices = @transform_0, window_bounds = array<i64: 1, 1, 10, 10, 128>}, {transform_indices = @transform_1, window_bounds = array<i64: 1, 1, 10, 10, 128>}, {transform_indices = @transform_2, window_bounds = array<i64: 1, 1, 10, 10, 128>}, {pipeline_mode = #tpu.pipeline_mode<synchronous>, transform_indices = @transform_3, window_bounds = array<i64: 27, 128, 128>}, {transform_indices = @transform_4, window_bounds = array<i64: 1, 1, 8, 8, 128>}, {pipeline_mode = #tpu.pipeline_mode<synchronous>, transform_indices = @transform_5, window_bounds = array<i64: 2, 128>}]} {
    %c0_i32 = arith.constant 0 : i32
    %0 = arith.cmpi eq, %arg0, %c0_i32 : i32
    %c0_i32_0 = arith.constant 0 : i32
    %1 = arith.cmpi eq, %arg1, %c0_i32_0 : i32
    %2 = arith.andi %0, %1 : i1
    %3 = arith.extui %2 : i1 to i32
    %c0_i32_1 = arith.constant 0 : i32
    %4 = arith.cmpi ne, %3, %c0_i32_1 : i32
    scf.if %4 {
      %cst_109 = arith.constant 0.000000e+00 : f32
      %216 = vector.broadcast %cst_109 : f32 to vector<2x128xf32>
      %c0_110 = arith.constant 0 : index
      %c0_111 = arith.constant 0 : index
      %217 = vector.load %arg7[%c0_110, %c0_111] : memref<2x128xf32, #tpu.memory_space<vmem>>, vector<2x128xf32>
      tpu.vector_store %arg7[%c0_110, %c0_111], %216 {strides = array<i32>} : memref<2x128xf32, #tpu.memory_space<vmem>>, vector<2x128xf32>,
    } else {
    }
    %cst = arith.constant 0.000000e+00 : f32
    %5 = vector.broadcast %cst : f32 to vector<64x128xf32>
    %c0 = arith.constant 0 : index
    %c0_2 = arith.constant 0 : index
    %c0_3 = arith.constant 0 : index
    %c0_4 = arith.constant 0 : index
    %c0_5 = arith.constant 0 : index
    %6 = vector.load %arg2[%c0, %c0_2, %c0_3, %c0_4, %c0_5] : memref<1x1x10x10x128xbf16, #tpu.memory_space<vmem>>, vector<1x1x10x10x128xbf16>
    %7 = vector.shape_cast %6 : vector<1x1x10x10x128xbf16> to vector<10x10x128xbf16>
    %8 = arith.extf %7 : vector<10x10x128xbf16> to vector<10x10x128xf32>
    %9 = vector.extract_strided_slice %8 {offsets = [0, 0, 0], sizes = [8, 8, 128], strides = [1, 1, 1]} : vector<10x10x128xf32> to vector<8x8x128xf32>
    %10 = vector.shape_cast %9 : vector<8x8x128xf32> to vector<64x128xf32>
    %11 = arith.truncf %10 : vector<64x128xf32> to vector<64x128xbf16>
    %c0_6 = arith.constant 0 : index
    %c0_7 = arith.constant 0 : index
    %c0_8 = arith.constant 0 : index
    %12 = vector.load %arg5[%c0_6, %c0_7, %c0_8] : memref<27x128x128xbf16, #tpu.memory_space<vmem>>, vector<1x128x128xbf16>
    %13 = vector.shape_cast %12 : vector<1x128x128xbf16> to vector<128x128xbf16>
    %cst_9 = arith.constant dense<0.000000e+00> : vector<64x128xf32>
    %14 = tpu.matmul %11, %13, %cst_9 {dimension_numbers = #tpu.dot_dimension_numbers<[1], [0], [0], [1], [0, 0, 1, 1], [], []>} : vector<64x128xbf16>, vector<128x128xbf16>, vector<64x128xf32> -> vector<64x128xf32>
    %15 = arith.addf %5, %14 : vector<64x128xf32>
    %16 = vector.extract_strided_slice %8 {offsets = [0, 1, 0], sizes = [8, 8, 128], strides = [1, 1, 1]} : vector<10x10x128xf32> to vector<8x8x128xf32>
    %17 = vector.shape_cast %16 : vector<8x8x128xf32> to vector<64x128xf32>
    %18 = arith.truncf %17 : vector<64x128xf32> to vector<64x128xbf16>
    %c1 = arith.constant 1 : index
    %c0_10 = arith.constant 0 : index
    %c0_11 = arith.constant 0 : index
    %19 = vector.load %arg5[%c1, %c0_10, %c0_11] : memref<27x128x128xbf16, #tpu.memory_space<vmem>>, vector<1x128x128xbf16>
    %20 = vector.shape_cast %19 : vector<1x128x128xbf16> to vector<128x128xbf16>
    %cst_12 = arith.constant dense<0.000000e+00> : vector<64x128xf32>
    %21 = tpu.matmul %18, %20, %cst_12 {dimension_numbers = #tpu.dot_dimension_numbers<[1], [0], [0], [1], [0, 0, 1, 1], [], []>} : vector<64x128xbf16>, vector<128x128xbf16>, vector<64x128xf32> -> vector<64x128xf32>
    %22 = arith.addf %15, %21 : vector<64x128xf32>
    %23 = vector.extract_strided_slice %8 {offsets = [0, 2, 0], sizes = [8, 8, 128], strides = [1, 1, 1]} : vector<10x10x128xf32> to vector<8x8x128xf32>
    %24 = vector.shape_cast %23 : vector<8x8x128xf32> to vector<64x128xf32>
    %25 = arith.truncf %24 : vector<64x128xf32> to vector<64x128xbf16>
    %c2 = arith.constant 2 : index
    %c0_13 = arith.constant 0 : index
    %c0_14 = arith.constant 0 : index
    %26 = vector.load %arg5[%c2, %c0_13, %c0_14] : memref<27x128x128xbf16, #tpu.memory_space<vmem>>, vector<1x128x128xbf16>
    %27 = vector.shape_cast %26 : vector<1x128x128xbf16> to vector<128x128xbf16>
    %cst_15 = arith.constant dense<0.000000e+00> : vector<64x128xf32>
    %28 = tpu.matmul %25, %27, %cst_15 {dimension_numbers = #tpu.dot_dimension_numbers<[1], [0], [0], [1], [0, 0, 1, 1], [], []>} : vector<64x128xbf16>, vector<128x128xbf16>, vector<64x128xf32> -> vector<64x128xf32>
    %29 = arith.addf %22, %28 : vector<64x128xf32>
    %30 = vector.extract_strided_slice %8 {offsets = [1, 0, 0], sizes = [8, 8, 128], strides = [1, 1, 1]} : vector<10x10x128xf32> to vector<8x8x128xf32>
    %31 = vector.shape_cast %30 : vector<8x8x128xf32> to vector<64x128xf32>
    %32 = arith.truncf %31 : vector<64x128xf32> to vector<64x128xbf16>
    %c3 = arith.constant 3 : index
    %c0_16 = arith.constant 0 : index
    %c0_17 = arith.constant 0 : index
    %33 = vector.load %arg5[%c3, %c0_16, %c0_17] : memref<27x128x128xbf16, #tpu.memory_space<vmem>>, vector<1x128x128xbf16>
    %34 = vector.shape_cast %33 : vector<1x128x128xbf16> to vector<128x128xbf16>
    %cst_18 = arith.constant dense<0.000000e+00> : vector<64x128xf32>
    %35 = tpu.matmul %32, %34, %cst_18 {dimension_numbers = #tpu.dot_dimension_numbers<[1], [0], [0], [1], [0, 0, 1, 1], [], []>} : vector<64x128xbf16>, vector<128x128xbf16>, vector<64x128xf32> -> vector<64x128xf32>
    %36 = arith.addf %29, %35 : vector<64x128xf32>
    %37 = vector.extract_strided_slice %8 {offsets = [1, 1, 0], sizes = [8, 8, 128], strides = [1, 1, 1]} : vector<10x10x128xf32> to vector<8x8x128xf32>
    %38 = vector.shape_cast %37 : vector<8x8x128xf32> to vector<64x128xf32>
    %39 = arith.truncf %38 : vector<64x128xf32> to vector<64x128xbf16>
    %c4 = arith.constant 4 : index
    %c0_19 = arith.constant 0 : index
    %c0_20 = arith.constant 0 : index
    %40 = vector.load %arg5[%c4, %c0_19, %c0_20] : memref<27x128x128xbf16, #tpu.memory_space<vmem>>, vector<1x128x128xbf16>
    %41 = vector.shape_cast %40 : vector<1x128x128xbf16> to vector<128x128xbf16>
    %cst_21 = arith.constant dense<0.000000e+00> : vector<64x128xf32>
    %42 = tpu.matmul %39, %41, %cst_21 {dimension_numbers = #tpu.dot_dimension_numbers<[1], [0], [0], [1], [0, 0, 1, 1], [], []>} : vector<64x128xbf16>, vector<128x128xbf16>, vector<64x128xf32> -> vector<64x128xf32>
    %43 = arith.addf %36, %42 : vector<64x128xf32>
    %44 = vector.extract_strided_slice %8 {offsets = [1, 2, 0], sizes = [8, 8, 128], strides = [1, 1, 1]} : vector<10x10x128xf32> to vector<8x8x128xf32>
    %45 = vector.shape_cast %44 : vector<8x8x128xf32> to vector<64x128xf32>
    %46 = arith.truncf %45 : vector<64x128xf32> to vector<64x128xbf16>
    %c5 = arith.constant 5 : index
    %c0_22 = arith.constant 0 : index
    %c0_23 = arith.constant 0 : index
    %47 = vector.load %arg5[%c5, %c0_22, %c0_23] : memref<27x128x128xbf16, #tpu.memory_space<vmem>>, vector<1x128x128xbf16>
    %48 = vector.shape_cast %47 : vector<1x128x128xbf16> to vector<128x128xbf16>
    %cst_24 = arith.constant dense<0.000000e+00> : vector<64x128xf32>
    %49 = tpu.matmul %46, %48, %cst_24 {dimension_numbers = #tpu.dot_dimension_numbers<[1], [0], [0], [1], [0, 0, 1, 1], [], []>} : vector<64x128xbf16>, vector<128x128xbf16>, vector<64x128xf32> -> vector<64x128xf32>
    %50 = arith.addf %43, %49 : vector<64x128xf32>
    %51 = vector.extract_strided_slice %8 {offsets = [2, 0, 0], sizes = [8, 8, 128], strides = [1, 1, 1]} : vector<10x10x128xf32> to vector<8x8x128xf32>
    %52 = vector.shape_cast %51 : vector<8x8x128xf32> to vector<64x128xf32>
    %53 = arith.truncf %52 : vector<64x128xf32> to vector<64x128xbf16>
    %c6 = arith.constant 6 : index
    %c0_25 = arith.constant 0 : index
    %c0_26 = arith.constant 0 : index
    %54 = vector.load %arg5[%c6, %c0_25, %c0_26] : memref<27x128x128xbf16, #tpu.memory_space<vmem>>, vector<1x128x128xbf16>
    %55 = vector.shape_cast %54 : vector<1x128x128xbf16> to vector<128x128xbf16>
    %cst_27 = arith.constant dense<0.000000e+00> : vector<64x128xf32>
    %56 = tpu.matmul %53, %55, %cst_27 {dimension_numbers = #tpu.dot_dimension_numbers<[1], [0], [0], [1], [0, 0, 1, 1], [], []>} : vector<64x128xbf16>, vector<128x128xbf16>, vector<64x128xf32> -> vector<64x128xf32>
    %57 = arith.addf %50, %56 : vector<64x128xf32>
    %58 = vector.extract_strided_slice %8 {offsets = [2, 1, 0], sizes = [8, 8, 128], strides = [1, 1, 1]} : vector<10x10x128xf32> to vector<8x8x128xf32>
    %59 = vector.shape_cast %58 : vector<8x8x128xf32> to vector<64x128xf32>
    %60 = arith.truncf %59 : vector<64x128xf32> to vector<64x128xbf16>
    %c7 = arith.constant 7 : index
    %c0_28 = arith.constant 0 : index
    %c0_29 = arith.constant 0 : index
    %61 = vector.load %arg5[%c7, %c0_28, %c0_29] : memref<27x128x128xbf16, #tpu.memory_space<vmem>>, vector<1x128x128xbf16>
    %62 = vector.shape_cast %61 : vector<1x128x128xbf16> to vector<128x128xbf16>
    %cst_30 = arith.constant dense<0.000000e+00> : vector<64x128xf32>
    %63 = tpu.matmul %60, %62, %cst_30 {dimension_numbers = #tpu.dot_dimension_numbers<[1], [0], [0], [1], [0, 0, 1, 1], [], []>} : vector<64x128xbf16>, vector<128x128xbf16>, vector<64x128xf32> -> vector<64x128xf32>
    %64 = arith.addf %57, %63 : vector<64x128xf32>
    %65 = vector.extract_strided_slice %8 {offsets = [2, 2, 0], sizes = [8, 8, 128], strides = [1, 1, 1]} : vector<10x10x128xf32> to vector<8x8x128xf32>
    %66 = vector.shape_cast %65 : vector<8x8x128xf32> to vector<64x128xf32>
    %67 = arith.truncf %66 : vector<64x128xf32> to vector<64x128xbf16>
    %c8 = arith.constant 8 : index
    %c0_31 = arith.constant 0 : index
    %c0_32 = arith.constant 0 : index
    %68 = vector.load %arg5[%c8, %c0_31, %c0_32] : memref<27x128x128xbf16, #tpu.memory_space<vmem>>, vector<1x128x128xbf16>
    %69 = vector.shape_cast %68 : vector<1x128x128xbf16> to vector<128x128xbf16>
    %cst_33 = arith.constant dense<0.000000e+00> : vector<64x128xf32>
    %70 = tpu.matmul %67, %69, %cst_33 {dimension_numbers = #tpu.dot_dimension_numbers<[1], [0], [0], [1], [0, 0, 1, 1], [], []>} : vector<64x128xbf16>, vector<128x128xbf16>, vector<64x128xf32> -> vector<64x128xf32>
    %71 = arith.addf %64, %70 : vector<64x128xf32>
    %c0_34 = arith.constant 0 : index
    %c0_35 = arith.constant 0 : index
    %c0_36 = arith.constant 0 : index
    %c0_37 = arith.constant 0 : index
    %c0_38 = arith.constant 0 : index
    %72 = vector.load %arg3[%c0_34, %c0_35, %c0_36, %c0_37, %c0_38] : memref<1x1x10x10x128xbf16, #tpu.memory_space<vmem>>, vector<1x1x10x10x128xbf16>
    %73 = vector.shape_cast %72 : vector<1x1x10x10x128xbf16> to vector<10x10x128xbf16>
    %74 = arith.extf %73 : vector<10x10x128xbf16> to vector<10x10x128xf32>
    %75 = vector.extract_strided_slice %74 {offsets = [0, 0, 0], sizes = [8, 8, 128], strides = [1, 1, 1]} : vector<10x10x128xf32> to vector<8x8x128xf32>
    %76 = vector.shape_cast %75 : vector<8x8x128xf32> to vector<64x128xf32>
    %77 = arith.truncf %76 : vector<64x128xf32> to vector<64x128xbf16>
    %c9 = arith.constant 9 : index
    %c0_39 = arith.constant 0 : index
    %c0_40 = arith.constant 0 : index
    %78 = vector.load %arg5[%c9, %c0_39, %c0_40] : memref<27x128x128xbf16, #tpu.memory_space<vmem>>, vector<1x128x128xbf16>
    %79 = vector.shape_cast %78 : vector<1x128x128xbf16> to vector<128x128xbf16>
    %cst_41 = arith.constant dense<0.000000e+00> : vector<64x128xf32>
    %80 = tpu.matmul %77, %79, %cst_41 {dimension_numbers = #tpu.dot_dimension_numbers<[1], [0], [0], [1], [0, 0, 1, 1], [], []>} : vector<64x128xbf16>, vector<128x128xbf16>, vector<64x128xf32> -> vector<64x128xf32>
    %81 = arith.addf %71, %80 : vector<64x128xf32>
    %82 = vector.extract_strided_slice %74 {offsets = [0, 1, 0], sizes = [8, 8, 128], strides = [1, 1, 1]} : vector<10x10x128xf32> to vector<8x8x128xf32>
    %83 = vector.shape_cast %82 : vector<8x8x128xf32> to vector<64x128xf32>
    %84 = arith.truncf %83 : vector<64x128xf32> to vector<64x128xbf16>
    %c10 = arith.constant 10 : index
    %c0_42 = arith.constant 0 : index
    %c0_43 = arith.constant 0 : index
    %85 = vector.load %arg5[%c10, %c0_42, %c0_43] : memref<27x128x128xbf16, #tpu.memory_space<vmem>>, vector<1x128x128xbf16>
    %86 = vector.shape_cast %85 : vector<1x128x128xbf16> to vector<128x128xbf16>
    %cst_44 = arith.constant dense<0.000000e+00> : vector<64x128xf32>
    %87 = tpu.matmul %84, %86, %cst_44 {dimension_numbers = #tpu.dot_dimension_numbers<[1], [0], [0], [1], [0, 0, 1, 1], [], []>} : vector<64x128xbf16>, vector<128x128xbf16>, vector<64x128xf32> -> vector<64x128xf32>
    %88 = arith.addf %81, %87 : vector<64x128xf32>
    %89 = vector.extract_strided_slice %74 {offsets = [0, 2, 0], sizes = [8, 8, 128], strides = [1, 1, 1]} : vector<10x10x128xf32> to vector<8x8x128xf32>
    %90 = vector.shape_cast %89 : vector<8x8x128xf32> to vector<64x128xf32>
    %91 = arith.truncf %90 : vector<64x128xf32> to vector<64x128xbf16>
    %c11 = arith.constant 11 : index
    %c0_45 = arith.constant 0 : index
    %c0_46 = arith.constant 0 : index
    %92 = vector.load %arg5[%c11, %c0_45, %c0_46] : memref<27x128x128xbf16, #tpu.memory_space<vmem>>, vector<1x128x128xbf16>
    %93 = vector.shape_cast %92 : vector<1x128x128xbf16> to vector<128x128xbf16>
    %cst_47 = arith.constant dense<0.000000e+00> : vector<64x128xf32>
    %94 = tpu.matmul %91, %93, %cst_47 {dimension_numbers = #tpu.dot_dimension_numbers<[1], [0], [0], [1], [0, 0, 1, 1], [], []>} : vector<64x128xbf16>, vector<128x128xbf16>, vector<64x128xf32> -> vector<64x128xf32>
    %95 = arith.addf %88, %94 : vector<64x128xf32>
    %96 = vector.extract_strided_slice %74 {offsets = [1, 0, 0], sizes = [8, 8, 128], strides = [1, 1, 1]} : vector<10x10x128xf32> to vector<8x8x128xf32>
    %97 = vector.shape_cast %96 : vector<8x8x128xf32> to vector<64x128xf32>
    %98 = arith.truncf %97 : vector<64x128xf32> to vector<64x128xbf16>
    %c12 = arith.constant 12 : index
    %c0_48 = arith.constant 0 : index
    %c0_49 = arith.constant 0 : index
    %99 = vector.load %arg5[%c12, %c0_48, %c0_49] : memref<27x128x128xbf16, #tpu.memory_space<vmem>>, vector<1x128x128xbf16>
    %100 = vector.shape_cast %99 : vector<1x128x128xbf16> to vector<128x128xbf16>
    %cst_50 = arith.constant dense<0.000000e+00> : vector<64x128xf32>
    %101 = tpu.matmul %98, %100, %cst_50 {dimension_numbers = #tpu.dot_dimension_numbers<[1], [0], [0], [1], [0, 0, 1, 1], [], []>} : vector<64x128xbf16>, vector<128x128xbf16>, vector<64x128xf32> -> vector<64x128xf32>
    %102 = arith.addf %95, %101 : vector<64x128xf32>
    %103 = vector.extract_strided_slice %74 {offsets = [1, 1, 0], sizes = [8, 8, 128], strides = [1, 1, 1]} : vector<10x10x128xf32> to vector<8x8x128xf32>
    %104 = vector.shape_cast %103 : vector<8x8x128xf32> to vector<64x128xf32>
    %105 = arith.truncf %104 : vector<64x128xf32> to vector<64x128xbf16>
    %c13 = arith.constant 13 : index
    %c0_51 = arith.constant 0 : index
    %c0_52 = arith.constant 0 : index
    %106 = vector.load %arg5[%c13, %c0_51, %c0_52] : memref<27x128x128xbf16, #tpu.memory_space<vmem>>, vector<1x128x128xbf16>
    %107 = vector.shape_cast %106 : vector<1x128x128xbf16> to vector<128x128xbf16>
    %cst_53 = arith.constant dense<0.000000e+00> : vector<64x128xf32>
    %108 = tpu.matmul %105, %107, %cst_53 {dimension_numbers = #tpu.dot_dimension_numbers<[1], [0], [0], [1], [0, 0, 1, 1], [], []>} : vector<64x128xbf16>, vector<128x128xbf16>, vector<64x128xf32> -> vector<64x128xf32>
    %109 = arith.addf %102, %108 : vector<64x128xf32>
    %110 = vector.extract_strided_slice %74 {offsets = [1, 2, 0], sizes = [8, 8, 128], strides = [1, 1, 1]} : vector<10x10x128xf32> to vector<8x8x128xf32>
    %111 = vector.shape_cast %110 : vector<8x8x128xf32> to vector<64x128xf32>
    %112 = arith.truncf %111 : vector<64x128xf32> to vector<64x128xbf16>
    %c14 = arith.constant 14 : index
    %c0_54 = arith.constant 0 : index
    %c0_55 = arith.constant 0 : index
    %113 = vector.load %arg5[%c14, %c0_54, %c0_55] : memref<27x128x128xbf16, #tpu.memory_space<vmem>>, vector<1x128x128xbf16>
    %114 = vector.shape_cast %113 : vector<1x128x128xbf16> to vector<128x128xbf16>
    %cst_56 = arith.constant dense<0.000000e+00> : vector<64x128xf32>
    %115 = tpu.matmul %112, %114, %cst_56 {dimension_numbers = #tpu.dot_dimension_numbers<[1], [0], [0], [1], [0, 0, 1, 1], [], []>} : vector<64x128xbf16>, vector<128x128xbf16>, vector<64x128xf32> -> vector<64x128xf32>
    %116 = arith.addf %109, %115 : vector<64x128xf32>
    %117 = vector.extract_strided_slice %74 {offsets = [2, 0, 0], sizes = [8, 8, 128], strides = [1, 1, 1]} : vector<10x10x128xf32> to vector<8x8x128xf32>
    %118 = vector.shape_cast %117 : vector<8x8x128xf32> to vector<64x128xf32>
    %119 = arith.truncf %118 : vector<64x128xf32> to vector<64x128xbf16>
    %c15 = arith.constant 15 : index
    %c0_57 = arith.constant 0 : index
    %c0_58 = arith.constant 0 : index
    %120 = vector.load %arg5[%c15, %c0_57, %c0_58] : memref<27x128x128xbf16, #tpu.memory_space<vmem>>, vector<1x128x128xbf16>
    %121 = vector.shape_cast %120 : vector<1x128x128xbf16> to vector<128x128xbf16>
    %cst_59 = arith.constant dense<0.000000e+00> : vector<64x128xf32>
    %122 = tpu.matmul %119, %121, %cst_59 {dimension_numbers = #tpu.dot_dimension_numbers<[1], [0], [0], [1], [0, 0, 1, 1], [], []>} : vector<64x128xbf16>, vector<128x128xbf16>, vector<64x128xf32> -> vector<64x128xf32>
    %123 = arith.addf %116, %122 : vector<64x128xf32>
    %124 = vector.extract_strided_slice %74 {offsets = [2, 1, 0], sizes = [8, 8, 128], strides = [1, 1, 1]} : vector<10x10x128xf32> to vector<8x8x128xf32>
    %125 = vector.shape_cast %124 : vector<8x8x128xf32> to vector<64x128xf32>
    %126 = arith.truncf %125 : vector<64x128xf32> to vector<64x128xbf16>
    %c16 = arith.constant 16 : index
    %c0_60 = arith.constant 0 : index
    %c0_61 = arith.constant 0 : index
    %127 = vector.load %arg5[%c16, %c0_60, %c0_61] : memref<27x128x128xbf16, #tpu.memory_space<vmem>>, vector<1x128x128xbf16>
    %128 = vector.shape_cast %127 : vector<1x128x128xbf16> to vector<128x128xbf16>
    %cst_62 = arith.constant dense<0.000000e+00> : vector<64x128xf32>
    %129 = tpu.matmul %126, %128, %cst_62 {dimension_numbers = #tpu.dot_dimension_numbers<[1], [0], [0], [1], [0, 0, 1, 1], [], []>} : vector<64x128xbf16>, vector<128x128xbf16>, vector<64x128xf32> -> vector<64x128xf32>
    %130 = arith.addf %123, %129 : vector<64x128xf32>
    %131 = vector.extract_strided_slice %74 {offsets = [2, 2, 0], sizes = [8, 8, 128], strides = [1, 1, 1]} : vector<10x10x128xf32> to vector<8x8x128xf32>
    %132 = vector.shape_cast %131 : vector<8x8x128xf32> to vector<64x128xf32>
    %133 = arith.truncf %132 : vector<64x128xf32> to vector<64x128xbf16>
    %c17 = arith.constant 17 : index
    %c0_63 = arith.constant 0 : index
    %c0_64 = arith.constant 0 : index
    %134 = vector.load %arg5[%c17, %c0_63, %c0_64] : memref<27x128x128xbf16, #tpu.memory_space<vmem>>, vector<1x128x128xbf16>
    %135 = vector.shape_cast %134 : vector<1x128x128xbf16> to vector<128x128xbf16>
    %cst_65 = arith.constant dense<0.000000e+00> : vector<64x128xf32>
    %136 = tpu.matmul %133, %135, %cst_65 {dimension_numbers = #tpu.dot_dimension_numbers<[1], [0], [0], [1], [0, 0, 1, 1], [], []>} : vector<64x128xbf16>, vector<128x128xbf16>, vector<64x128xf32> -> vector<64x128xf32>
    %137 = arith.addf %130, %136 : vector<64x128xf32>
    %c0_66 = arith.constant 0 : index
    %c0_67 = arith.constant 0 : index
    %c0_68 = arith.constant 0 : index
    %c0_69 = arith.constant 0 : index
    %c0_70 = arith.constant 0 : index
    %138 = vector.load %arg4[%c0_66, %c0_67, %c0_68, %c0_69, %c0_70] : memref<1x1x10x10x128xbf16, #tpu.memory_space<vmem>>, vector<1x1x10x10x128xbf16>
    %139 = vector.shape_cast %138 : vector<1x1x10x10x128xbf16> to vector<10x10x128xbf16>
    %140 = arith.extf %139 : vector<10x10x128xbf16> to vector<10x10x128xf32>
    %141 = vector.extract_strided_slice %140 {offsets = [0, 0, 0], sizes = [8, 8, 128], strides = [1, 1, 1]} : vector<10x10x128xf32> to vector<8x8x128xf32>
    %142 = vector.shape_cast %141 : vector<8x8x128xf32> to vector<64x128xf32>
    %143 = arith.truncf %142 : vector<64x128xf32> to vector<64x128xbf16>
    %c18 = arith.constant 18 : index
    %c0_71 = arith.constant 0 : index
    %c0_72 = arith.constant 0 : index
    %144 = vector.load %arg5[%c18, %c0_71, %c0_72] : memref<27x128x128xbf16, #tpu.memory_space<vmem>>, vector<1x128x128xbf16>
    %145 = vector.shape_cast %144 : vector<1x128x128xbf16> to vector<128x128xbf16>
    %cst_73 = arith.constant dense<0.000000e+00> : vector<64x128xf32>
    %146 = tpu.matmul %143, %145, %cst_73 {dimension_numbers = #tpu.dot_dimension_numbers<[1], [0], [0], [1], [0, 0, 1, 1], [], []>} : vector<64x128xbf16>, vector<128x128xbf16>, vector<64x128xf32> -> vector<64x128xf32>
    %147 = arith.addf %137, %146 : vector<64x128xf32>
    %148 = vector.extract_strided_slice %140 {offsets = [0, 1, 0], sizes = [8, 8, 128], strides = [1, 1, 1]} : vector<10x10x128xf32> to vector<8x8x128xf32>
    %149 = vector.shape_cast %148 : vector<8x8x128xf32> to vector<64x128xf32>
    %150 = arith.truncf %149 : vector<64x128xf32> to vector<64x128xbf16>
    %c19 = arith.constant 19 : index
    %c0_74 = arith.constant 0 : index
    %c0_75 = arith.constant 0 : index
    %151 = vector.load %arg5[%c19, %c0_74, %c0_75] : memref<27x128x128xbf16, #tpu.memory_space<vmem>>, vector<1x128x128xbf16>
    %152 = vector.shape_cast %151 : vector<1x128x128xbf16> to vector<128x128xbf16>
    %cst_76 = arith.constant dense<0.000000e+00> : vector<64x128xf32>
    %153 = tpu.matmul %150, %152, %cst_76 {dimension_numbers = #tpu.dot_dimension_numbers<[1], [0], [0], [1], [0, 0, 1, 1], [], []>} : vector<64x128xbf16>, vector<128x128xbf16>, vector<64x128xf32> -> vector<64x128xf32>
    %154 = arith.addf %147, %153 : vector<64x128xf32>
    %155 = vector.extract_strided_slice %140 {offsets = [0, 2, 0], sizes = [8, 8, 128], strides = [1, 1, 1]} : vector<10x10x128xf32> to vector<8x8x128xf32>
    %156 = vector.shape_cast %155 : vector<8x8x128xf32> to vector<64x128xf32>
    %157 = arith.truncf %156 : vector<64x128xf32> to vector<64x128xbf16>
    %c20 = arith.constant 20 : index
    %c0_77 = arith.constant 0 : index
    %c0_78 = arith.constant 0 : index
    %158 = vector.load %arg5[%c20, %c0_77, %c0_78] : memref<27x128x128xbf16, #tpu.memory_space<vmem>>, vector<1x128x128xbf16>
    %159 = vector.shape_cast %158 : vector<1x128x128xbf16> to vector<128x128xbf16>
    %cst_79 = arith.constant dense<0.000000e+00> : vector<64x128xf32>
    %160 = tpu.matmul %157, %159, %cst_79 {dimension_numbers = #tpu.dot_dimension_numbers<[1], [0], [0], [1], [0, 0, 1, 1], [], []>} : vector<64x128xbf16>, vector<128x128xbf16>, vector<64x128xf32> -> vector<64x128xf32>
    %161 = arith.addf %154, %160 : vector<64x128xf32>
    %162 = vector.extract_strided_slice %140 {offsets = [1, 0, 0], sizes = [8, 8, 128], strides = [1, 1, 1]} : vector<10x10x128xf32> to vector<8x8x128xf32>
    %163 = vector.shape_cast %162 : vector<8x8x128xf32> to vector<64x128xf32>
    %164 = arith.truncf %163 : vector<64x128xf32> to vector<64x128xbf16>
    %c21 = arith.constant 21 : index
    %c0_80 = arith.constant 0 : index
    %c0_81 = arith.constant 0 : index
    %165 = vector.load %arg5[%c21, %c0_80, %c0_81] : memref<27x128x128xbf16, #tpu.memory_space<vmem>>, vector<1x128x128xbf16>
    %166 = vector.shape_cast %165 : vector<1x128x128xbf16> to vector<128x128xbf16>
    %cst_82 = arith.constant dense<0.000000e+00> : vector<64x128xf32>
    %167 = tpu.matmul %164, %166, %cst_82 {dimension_numbers = #tpu.dot_dimension_numbers<[1], [0], [0], [1], [0, 0, 1, 1], [], []>} : vector<64x128xbf16>, vector<128x128xbf16>, vector<64x128xf32> -> vector<64x128xf32>
    %168 = arith.addf %161, %167 : vector<64x128xf32>
    %169 = vector.extract_strided_slice %140 {offsets = [1, 1, 0], sizes = [8, 8, 128], strides = [1, 1, 1]} : vector<10x10x128xf32> to vector<8x8x128xf32>
    %170 = vector.shape_cast %169 : vector<8x8x128xf32> to vector<64x128xf32>
    %171 = arith.truncf %170 : vector<64x128xf32> to vector<64x128xbf16>
    %c22 = arith.constant 22 : index
    %c0_83 = arith.constant 0 : index
    %c0_84 = arith.constant 0 : index
    %172 = vector.load %arg5[%c22, %c0_83, %c0_84] : memref<27x128x128xbf16, #tpu.memory_space<vmem>>, vector<1x128x128xbf16>
    %173 = vector.shape_cast %172 : vector<1x128x128xbf16> to vector<128x128xbf16>
    %cst_85 = arith.constant dense<0.000000e+00> : vector<64x128xf32>
    %174 = tpu.matmul %171, %173, %cst_85 {dimension_numbers = #tpu.dot_dimension_numbers<[1], [0], [0], [1], [0, 0, 1, 1], [], []>} : vector<64x128xbf16>, vector<128x128xbf16>, vector<64x128xf32> -> vector<64x128xf32>
    %175 = arith.addf %168, %174 : vector<64x128xf32>
    %176 = vector.extract_strided_slice %140 {offsets = [1, 2, 0], sizes = [8, 8, 128], strides = [1, 1, 1]} : vector<10x10x128xf32> to vector<8x8x128xf32>
    %177 = vector.shape_cast %176 : vector<8x8x128xf32> to vector<64x128xf32>
    %178 = arith.truncf %177 : vector<64x128xf32> to vector<64x128xbf16>
    %c23 = arith.constant 23 : index
    %c0_86 = arith.constant 0 : index
    %c0_87 = arith.constant 0 : index
    %179 = vector.load %arg5[%c23, %c0_86, %c0_87] : memref<27x128x128xbf16, #tpu.memory_space<vmem>>, vector<1x128x128xbf16>
    %180 = vector.shape_cast %179 : vector<1x128x128xbf16> to vector<128x128xbf16>
    %cst_88 = arith.constant dense<0.000000e+00> : vector<64x128xf32>
    %181 = tpu.matmul %178, %180, %cst_88 {dimension_numbers = #tpu.dot_dimension_numbers<[1], [0], [0], [1], [0, 0, 1, 1], [], []>} : vector<64x128xbf16>, vector<128x128xbf16>, vector<64x128xf32> -> vector<64x128xf32>
    %182 = arith.addf %175, %181 : vector<64x128xf32>
    %183 = vector.extract_strided_slice %140 {offsets = [2, 0, 0], sizes = [8, 8, 128], strides = [1, 1, 1]} : vector<10x10x128xf32> to vector<8x8x128xf32>
    %184 = vector.shape_cast %183 : vector<8x8x128xf32> to vector<64x128xf32>
    %185 = arith.truncf %184 : vector<64x128xf32> to vector<64x128xbf16>
    %c24 = arith.constant 24 : index
    %c0_89 = arith.constant 0 : index
    %c0_90 = arith.constant 0 : index
    %186 = vector.load %arg5[%c24, %c0_89, %c0_90] : memref<27x128x128xbf16, #tpu.memory_space<vmem>>, vector<1x128x128xbf16>
    %187 = vector.shape_cast %186 : vector<1x128x128xbf16> to vector<128x128xbf16>
    %cst_91 = arith.constant dense<0.000000e+00> : vector<64x128xf32>
    %188 = tpu.matmul %185, %187, %cst_91 {dimension_numbers = #tpu.dot_dimension_numbers<[1], [0], [0], [1], [0, 0, 1, 1], [], []>} : vector<64x128xbf16>, vector<128x128xbf16>, vector<64x128xf32> -> vector<64x128xf32>
    %189 = arith.addf %182, %188 : vector<64x128xf32>
    %190 = vector.extract_strided_slice %140 {offsets = [2, 1, 0], sizes = [8, 8, 128], strides = [1, 1, 1]} : vector<10x10x128xf32> to vector<8x8x128xf32>
    %191 = vector.shape_cast %190 : vector<8x8x128xf32> to vector<64x128xf32>
    %192 = arith.truncf %191 : vector<64x128xf32> to vector<64x128xbf16>
    %c25 = arith.constant 25 : index
    %c0_92 = arith.constant 0 : index
    %c0_93 = arith.constant 0 : index
    %193 = vector.load %arg5[%c25, %c0_92, %c0_93] : memref<27x128x128xbf16, #tpu.memory_space<vmem>>, vector<1x128x128xbf16>
    %194 = vector.shape_cast %193 : vector<1x128x128xbf16> to vector<128x128xbf16>
    %cst_94 = arith.constant dense<0.000000e+00> : vector<64x128xf32>
    %195 = tpu.matmul %192, %194, %cst_94 {dimension_numbers = #tpu.dot_dimension_numbers<[1], [0], [0], [1], [0, 0, 1, 1], [], []>} : vector<64x128xbf16>, vector<128x128xbf16>, vector<64x128xf32> -> vector<64x128xf32>
    %196 = arith.addf %189, %195 : vector<64x128xf32>
    %197 = vector.extract_strided_slice %140 {offsets = [2, 2, 0], sizes = [8, 8, 128], strides = [1, 1, 1]} : vector<10x10x128xf32> to vector<8x8x128xf32>
    %198 = vector.shape_cast %197 : vector<8x8x128xf32> to vector<64x128xf32>
    %199 = arith.truncf %198 : vector<64x128xf32> to vector<64x128xbf16>
    %c26 = arith.constant 26 : index
    %c0_95 = arith.constant 0 : index
    %c0_96 = arith.constant 0 : index
    %200 = vector.load %arg5[%c26, %c0_95, %c0_96] : memref<27x128x128xbf16, #tpu.memory_space<vmem>>, vector<1x128x128xbf16>
    %201 = vector.shape_cast %200 : vector<1x128x128xbf16> to vector<128x128xbf16>
    %cst_97 = arith.constant dense<0.000000e+00> : vector<64x128xf32>
    %202 = tpu.matmul %199, %201, %cst_97 {dimension_numbers = #tpu.dot_dimension_numbers<[1], [0], [0], [1], [0, 0, 1, 1], [], []>} : vector<64x128xbf16>, vector<128x128xbf16>, vector<64x128xf32> -> vector<64x128xf32>
    %203 = arith.addf %196, %202 : vector<64x128xf32>
    %204 = vector.shape_cast %203 : vector<64x128xf32> to vector<1x1x8x8x128xf32>
    %205 = arith.truncf %204 : vector<1x1x8x8x128xf32> to vector<1x1x8x8x128xbf16>
    %c0_98 = arith.constant 0 : index
    %c0_99 = arith.constant 0 : index
    %c0_100 = arith.constant 0 : index
    %c0_101 = arith.constant 0 : index
    %c0_102 = arith.constant 0 : index
    %206 = vector.load %arg6[%c0_98, %c0_99, %c0_100, %c0_101, %c0_102] : memref<1x1x8x8x128xbf16, #tpu.memory_space<vmem>>, vector<1x1x8x8x128xbf16>
    tpu.vector_store %arg6[%c0_98, %c0_99, %c0_100, %c0_101, %c0_102], %205 {strides = array<i32>} : memref<1x1x8x8x128xbf16, #tpu.memory_space<vmem>>, vector<1x1x8x8x128xbf16>,
    %c0_103 = arith.constant 0 : index
    %c0_104 = arith.constant 0 : index
    %207 = vector.load %arg7[%c0_103, %c0_104] : memref<2x128xf32, #tpu.memory_space<vmem>>, vector<2x128xf32>
    %cst_105 = arith.constant dense<0.000000e+00> : vector<128xf32>
    %208 = vector.multi_reduction <add>, %203, %cst_105 [0] : vector<64x128xf32> to vector<128xf32>
    %209 = vector.shape_cast %208 : vector<128xf32> to vector<1x128xf32>
    %210 = arith.mulf %203, %203 : vector<64x128xf32>
    %cst_106 = arith.constant dense<0.000000e+00> : vector<128xf32>
    %211 = vector.multi_reduction <add>, %210, %cst_106 [0] : vector<64x128xf32> to vector<128xf32>
    %212 = vector.shape_cast %211 : vector<128xf32> to vector<1x128xf32>
    %213 = tpu.concatenate %209, %212 in 0 : vector<1x128xf32>, vector<1x128xf32> -> vector<2x128xf32>
    %214 = arith.addf %207, %213 : vector<2x128xf32>
    %c0_107 = arith.constant 0 : index
    %c0_108 = arith.constant 0 : index
    %215 = vector.load %arg7[%c0_107, %c0_108] : memref<2x128xf32, #tpu.memory_space<vmem>>, vector<2x128xf32>
    tpu.vector_store %arg7[%c0_107, %c0_108], %214 {strides = array<i32>} : memref<2x128xf32, #tpu.memory_space<vmem>>, vector<2x128xf32>,
    return
  }
  func.func @transform_0(%arg0: i32, %arg1: i32) -> (i32, i32, i32, i32, i32) {
    %c0_i32 = arith.constant 0 : i32
    %0 = arith.addi %arg1, %c0_i32 : i32
    %c0_i32_0 = arith.constant 0 : i32
    %c0_i32_1 = arith.constant 0 : i32
    %c0_i32_2 = arith.constant 0 : i32
    %c0_i32_3 = arith.constant 0 : i32
    return %arg0, %0, %c0_i32_0, %c0_i32_1, %c0_i32_2 : i32, i32, i32, i32, i32
  }
  func.func @transform_1(%arg0: i32, %arg1: i32) -> (i32, i32, i32, i32, i32) {
    %c1_i32 = arith.constant 1 : i32
    %0 = arith.addi %arg1, %c1_i32 : i32
    %c0_i32 = arith.constant 0 : i32
    %c0_i32_0 = arith.constant 0 : i32
    %c0_i32_1 = arith.constant 0 : i32
    %c0_i32_2 = arith.constant 0 : i32
    return %arg0, %0, %c0_i32, %c0_i32_0, %c0_i32_1 : i32, i32, i32, i32, i32
  }
  func.func @transform_2(%arg0: i32, %arg1: i32) -> (i32, i32, i32, i32, i32) {
    %c2_i32 = arith.constant 2 : i32
    %0 = arith.addi %arg1, %c2_i32 : i32
    %c0_i32 = arith.constant 0 : i32
    %c0_i32_0 = arith.constant 0 : i32
    %c0_i32_1 = arith.constant 0 : i32
    %c0_i32_2 = arith.constant 0 : i32
    return %arg0, %0, %c0_i32, %c0_i32_0, %c0_i32_1 : i32, i32, i32, i32, i32
  }
  func.func @transform_3(%arg0: i32, %arg1: i32) -> (i32, i32, i32) {
    %c0_i32 = arith.constant 0 : i32
    %c0_i32_0 = arith.constant 0 : i32
    %c0_i32_1 = arith.constant 0 : i32
    %c0_i32_2 = arith.constant 0 : i32
    return %c0_i32, %c0_i32_0, %c0_i32_1 : i32, i32, i32
  }
  func.func @transform_4(%arg0: i32, %arg1: i32) -> (i32, i32, i32, i32, i32) {
    %c0_i32 = arith.constant 0 : i32
    %c0_i32_0 = arith.constant 0 : i32
    %c0_i32_1 = arith.constant 0 : i32
    %c0_i32_2 = arith.constant 0 : i32
    return %arg0, %arg1, %c0_i32, %c0_i32_0, %c0_i32_1 : i32, i32, i32, i32, i32
  }
  func.func @transform_5(%arg0: i32, %arg1: i32) -> (i32, i32) {
    %c0_i32 = arith.constant 0 : i32
    %c0_i32_0 = arith.constant 0 : i32
    %c0_i32_1 = arith.constant 0 : i32
    return %c0_i32, %c0_i32_0 : i32, i32
  }
}

module attributes {stable_mosaic.version = 11 : i64} {
  func.func @stage3_kernel(%arg0: i32, %arg1: memref<512x128xbf16, #tpu.memory_space<vmem>>, %arg2: memref<1x128xf32, #tpu.memory_space<vmem>>, %arg3: memref<1x128xf32, #tpu.memory_space<vmem>>, %arg4: memref<128x128xbf16, #tpu.memory_space<vmem>>, %arg5: memref<512x128xbf16, #tpu.memory_space<vmem>>, %arg6: memref<2x128xf32, #tpu.memory_space<vmem>>) attributes {dimension_semantics = [#tpu.dimension_semantics<arbitrary>], iteration_bounds = array<i64: 2>, scalar_prefetch = 0 : i64, scratch_operands = 0 : i64, tpu.core_type = #tpu.core_type<tc>, window_params = [{transform_indices = @transform_0, window_bounds = array<i64: 512, 128>}, {pipeline_mode = #tpu.pipeline_mode<synchronous>, transform_indices = @transform_1, window_bounds = array<i64: 1, 128>}, {pipeline_mode = #tpu.pipeline_mode<synchronous>, transform_indices = @transform_2, window_bounds = array<i64: 1, 128>}, {pipeline_mode = #tpu.pipeline_mode<synchronous>, transform_indices = @transform_3, window_bounds = array<i64: 128, 128>}, {transform_indices = @transform_4, window_bounds = array<i64: 512, 128>}, {pipeline_mode = #tpu.pipeline_mode<synchronous>, transform_indices = @transform_5, window_bounds = array<i64: 2, 128>}]} {
    %c0_i32 = arith.constant 0 : i32
    %0 = arith.cmpi eq, %arg0, %c0_i32 : i32
    %1 = arith.extui %0 : i1 to i32
    %c0_i32_0 = arith.constant 0 : i32
    %2 = arith.cmpi ne, %1, %c0_i32_0 : i32
    scf.if %2 {
      %cst_17 = arith.constant 0.000000e+00 : f32
      %27 = vector.broadcast %cst_17 : f32 to vector<2x128xf32>
      %c0_18 = arith.constant 0 : index
      %c0_19 = arith.constant 0 : index
      %28 = vector.load %arg6[%c0_18, %c0_19] : memref<2x128xf32, #tpu.memory_space<vmem>>, vector<2x128xf32>
      tpu.vector_store %arg6[%c0_18, %c0_19], %27 {strides = array<i32>} : memref<2x128xf32, #tpu.memory_space<vmem>>, vector<2x128xf32>,
    } else {
    }
    %c0 = arith.constant 0 : index
    %c0_1 = arith.constant 0 : index
    %3 = vector.load %arg1[%c0, %c0_1] : memref<512x128xbf16, #tpu.memory_space<vmem>>, vector<512x128xbf16>
    %4 = arith.extf %3 : vector<512x128xbf16> to vector<512x128xf32>
    %c0_2 = arith.constant 0 : index
    %c0_3 = arith.constant 0 : index
    %5 = vector.load %arg2[%c0_2, %c0_3] : memref<1x128xf32, #tpu.memory_space<vmem>>, vector<1x128xf32>
    %6 = vector.broadcast %5 : vector<1x128xf32> to vector<512x128xf32>
    %7 = arith.mulf %4, %6 : vector<512x128xf32>
    %c0_4 = arith.constant 0 : index
    %c0_5 = arith.constant 0 : index
    %8 = vector.load %arg3[%c0_4, %c0_5] : memref<1x128xf32, #tpu.memory_space<vmem>>, vector<1x128xf32>
    %9 = vector.broadcast %8 : vector<1x128xf32> to vector<512x128xf32>
    %10 = arith.addf %7, %9 : vector<512x128xf32>
    %cst = arith.constant 0.000000e+00 : f32
    %11 = vector.broadcast %cst : f32 to vector<512x128xf32>
    %12 = arith.maximumf %10, %11 : vector<512x128xf32>
    %13 = arith.truncf %12 : vector<512x128xf32> to vector<512x128xbf16>
    %c0_6 = arith.constant 0 : index
    %c0_7 = arith.constant 0 : index
    %14 = vector.load %arg4[%c0_6, %c0_7] : memref<128x128xbf16, #tpu.memory_space<vmem>>, vector<128x128xbf16>
    %cst_8 = arith.constant dense<0.000000e+00> : vector<512x128xf32>
    %15 = tpu.matmul %13, %14, %cst_8 {dimension_numbers = #tpu.dot_dimension_numbers<[1], [0], [0], [1], [0, 0, 1, 1], [], []>} : vector<512x128xbf16>, vector<128x128xbf16>, vector<512x128xf32> -> vector<512x128xf32>
    %16 = arith.truncf %15 : vector<512x128xf32> to vector<512x128xbf16>
    %c0_9 = arith.constant 0 : index
    %c0_10 = arith.constant 0 : index
    %17 = vector.load %arg5[%c0_9, %c0_10] : memref<512x128xbf16, #tpu.memory_space<vmem>>, vector<512x128xbf16>
    tpu.vector_store %arg5[%c0_9, %c0_10], %16 {strides = array<i32>} : memref<512x128xbf16, #tpu.memory_space<vmem>>, vector<512x128xbf16>,
    %c0_11 = arith.constant 0 : index
    %c0_12 = arith.constant 0 : index
    %18 = vector.load %arg6[%c0_11, %c0_12] : memref<2x128xf32, #tpu.memory_space<vmem>>, vector<2x128xf32>
    %cst_13 = arith.constant dense<0.000000e+00> : vector<128xf32>
    %19 = vector.multi_reduction <add>, %15, %cst_13 [0] : vector<512x128xf32> to vector<128xf32>
    %20 = vector.shape_cast %19 : vector<128xf32> to vector<1x128xf32>
    %21 = arith.mulf %15, %15 : vector<512x128xf32>
    %cst_14 = arith.constant dense<0.000000e+00> : vector<128xf32>
    %22 = vector.multi_reduction <add>, %21, %cst_14 [0] : vector<512x128xf32> to vector<128xf32>
    %23 = vector.shape_cast %22 : vector<128xf32> to vector<1x128xf32>
    %24 = tpu.concatenate %20, %23 in 0 : vector<1x128xf32>, vector<1x128xf32> -> vector<2x128xf32>
    %25 = arith.addf %18, %24 : vector<2x128xf32>
    %c0_15 = arith.constant 0 : index
    %c0_16 = arith.constant 0 : index
    %26 = vector.load %arg6[%c0_15, %c0_16] : memref<2x128xf32, #tpu.memory_space<vmem>>, vector<2x128xf32>
    tpu.vector_store %arg6[%c0_15, %c0_16], %25 {strides = array<i32>} : memref<2x128xf32, #tpu.memory_space<vmem>>, vector<2x128xf32>,
    return
  }
  func.func @transform_0(%arg0: i32) -> (i32, i32) {
    %c0_i32 = arith.constant 0 : i32
    %c0_i32_0 = arith.constant 0 : i32
    return %arg0, %c0_i32 : i32, i32
  }
  func.func @transform_1(%arg0: i32) -> (i32, i32) {
    %c0_i32 = arith.constant 0 : i32
    %c0_i32_0 = arith.constant 0 : i32
    %c0_i32_1 = arith.constant 0 : i32
    return %c0_i32, %c0_i32_0 : i32, i32
  }
  func.func @transform_2(%arg0: i32) -> (i32, i32) {
    %c0_i32 = arith.constant 0 : i32
    %c0_i32_0 = arith.constant 0 : i32
    %c0_i32_1 = arith.constant 0 : i32
    return %c0_i32, %c0_i32_0 : i32, i32
  }
  func.func @transform_3(%arg0: i32) -> (i32, i32) {
    %c0_i32 = arith.constant 0 : i32
    %c0_i32_0 = arith.constant 0 : i32
    %c0_i32_1 = arith.constant 0 : i32
    return %c0_i32, %c0_i32_0 : i32, i32
  }
  func.func @transform_4(%arg0: i32) -> (i32, i32) {
    %c0_i32 = arith.constant 0 : i32
    %c0_i32_0 = arith.constant 0 : i32
    return %arg0, %c0_i32 : i32, i32
  }
  func.func @transform_5(%arg0: i32) -> (i32, i32) {
    %c0_i32 = arith.constant 0 : i32
    %c0_i32_0 = arith.constant 0 : i32
    %c0_i32_1 = arith.constant 0 : i32
    return %c0_i32, %c0_i32_0 : i32, i32
  }
}

module attributes {stable_mosaic.version = 11 : i64} {
  func.func @stage4_kernel(%arg0: i32, %arg1: memref<512x128xbf16, #tpu.memory_space<vmem>>, %arg2: memref<512x128xf32, #tpu.memory_space<vmem>>, %arg3: memref<1x128xf32, #tpu.memory_space<vmem>>, %arg4: memref<1x128xf32, #tpu.memory_space<vmem>>, %arg5: memref<512x128xf32, #tpu.memory_space<vmem>>) attributes {dimension_semantics = [#tpu.dimension_semantics<parallel>], iteration_bounds = array<i64: 2>, scalar_prefetch = 0 : i64, scratch_operands = 0 : i64, tpu.core_type = #tpu.core_type<tc>, window_params = [{transform_indices = @transform_0, window_bounds = array<i64: 512, 128>}, {transform_indices = @transform_1, window_bounds = array<i64: 512, 128>}, {pipeline_mode = #tpu.pipeline_mode<synchronous>, transform_indices = @transform_2, window_bounds = array<i64: 1, 128>}, {pipeline_mode = #tpu.pipeline_mode<synchronous>, transform_indices = @transform_3, window_bounds = array<i64: 1, 128>}, {transform_indices = @transform_4, window_bounds = array<i64: 512, 128>}]} {
    %c0 = arith.constant 0 : index
    %c0_0 = arith.constant 0 : index
    %0 = vector.load %arg1[%c0, %c0_0] : memref<512x128xbf16, #tpu.memory_space<vmem>>, vector<512x128xbf16>
    %1 = arith.extf %0 : vector<512x128xbf16> to vector<512x128xf32>
    %c0_1 = arith.constant 0 : index
    %c0_2 = arith.constant 0 : index
    %2 = vector.load %arg3[%c0_1, %c0_2] : memref<1x128xf32, #tpu.memory_space<vmem>>, vector<1x128xf32>
    %3 = vector.broadcast %2 : vector<1x128xf32> to vector<512x128xf32>
    %4 = arith.mulf %1, %3 : vector<512x128xf32>
    %c0_3 = arith.constant 0 : index
    %c0_4 = arith.constant 0 : index
    %5 = vector.load %arg4[%c0_3, %c0_4] : memref<1x128xf32, #tpu.memory_space<vmem>>, vector<1x128xf32>
    %6 = vector.broadcast %5 : vector<1x128xf32> to vector<512x128xf32>
    %7 = arith.addf %4, %6 : vector<512x128xf32>
    %c0_5 = arith.constant 0 : index
    %c0_6 = arith.constant 0 : index
    %8 = vector.load %arg2[%c0_5, %c0_6] : memref<512x128xf32, #tpu.memory_space<vmem>>, vector<512x128xf32>
    %9 = arith.addf %7, %8 : vector<512x128xf32>
    %cst = arith.constant 0.000000e+00 : f32
    %10 = vector.broadcast %cst : f32 to vector<512x128xf32>
    %11 = arith.maximumf %9, %10 : vector<512x128xf32>
    %c0_7 = arith.constant 0 : index
    %c0_8 = arith.constant 0 : index
    %12 = vector.load %arg5[%c0_7, %c0_8] : memref<512x128xf32, #tpu.memory_space<vmem>>, vector<512x128xf32>
    tpu.vector_store %arg5[%c0_7, %c0_8], %11 {strides = array<i32>} : memref<512x128xf32, #tpu.memory_space<vmem>>, vector<512x128xf32>,
    return
  }
  func.func @transform_0(%arg0: i32) -> (i32, i32) {
    %c0_i32 = arith.constant 0 : i32
    %c0_i32_0 = arith.constant 0 : i32
    return %arg0, %c0_i32 : i32, i32
  }
  func.func @transform_1(%arg0: i32) -> (i32, i32) {
    %c0_i32 = arith.constant 0 : i32
    %c0_i32_0 = arith.constant 0 : i32
    return %arg0, %c0_i32 : i32, i32
  }
  func.func @transform_2(%arg0: i32) -> (i32, i32) {
    %c0_i32 = arith.constant 0 : i32
    %c0_i32_0 = arith.constant 0 : i32
    %c0_i32_1 = arith.constant 0 : i32
    return %c0_i32, %c0_i32_0 : i32, i32
  }
  func.func @transform_3(%arg0: i32) -> (i32, i32) {
    %c0_i32 = arith.constant 0 : i32
    %c0_i32_0 = arith.constant 0 : i32
    %c0_i32_1 = arith.constant 0 : i32
    return %c0_i32, %c0_i32_0 : i32, i32
  }
  func.func @transform_4(%arg0: i32) -> (i32, i32) {
    %c0_i32 = arith.constant 0 : i32
    %c0_i32_0 = arith.constant 0 : i32
    return %arg0, %c0_i32 : i32, i32
  }
}

</mosaic_0001>

<llo_original>
// kernel: bottleneck_forward.4
$region0: #{bottleneck_forward.4}
  #allocation0 [shape = 'u32[]', space=smem, size = 0x4, offset = 0x4, fixed_abs, tag = 'smem constant byte address 0x4 - core index']
  #allocation1 [shape = 'u32[144,128]{1,0:T(1,128)}', space=vmem, size = 0x12000, scoped, tag = 'internal scratch']
  %s0 = inlined_call_operand.vmem [shape: f32[1024,128], index: 0, kind: input, shape index: {}]
  %s1 = inlined_call_operand.vmem [shape: bf16[128,128], index: 1, kind: input, shape index: {}]
  %s2 = inlined_call_operand.vmem [shape: bf16[1024,128], index: 2, kind: output, shape index: {0}]
  %s3 = inlined_call_operand.vmem [shape: f32[2,128], index: 3, kind: output, shape index: {1}]
  %4 = xla_tuple %s2, %s3
  %s5 = sld [smem:[#allocation0]]
  $region53: #{bottleneck_forward.4} parent=0
    _
  %s7 = ssub.s32 1, %s5
  %s8 = scalar_select 0, %s7, %s5
  loop: start=0, step=1, limit=4
  $region2: #{bottleneck_forward.4} parent=0 // loop_pre_header
    _
  $region3: #{bottleneck_forward.4} parent=0 // loop_header
    %s10 = sphi 0, %s14
    %p11 = scmp.ge.s32.totalorder %s10, 4
    %s20 = sphi 0, %s22
    %s23 = sphi 0, %s20
    %s24 = sphi 0, %s23
    %s40 = sphi 0, %s24
    %s44 = sphi 0, %s44
    %s46 = sphi 0, %s44
    %s47 = sphi 0, %s46
    %s61 = sphi 0, %s47
    %s67 = sphi 0, %s69
    %s70 = sphi 0, %s67
    %s71 = sphi 0, %s70
    %s87 = sphi 0, %s71
    %s91 = sphi 0, %s91
    %s93 = sphi 0, %s91
    %s94 = sphi 0, %s93
    %s108 = sphi 0, %s94
  $region4: #{bottleneck_forward.4} parent=0 // loop_header_branch
    %13 = sbr.rel (%p11) target = $region8
  $region5: #{bottleneck_forward.4} parent=0 // loop_body
    %s15 = ssub.s32 %s10, 1
    %s16 = ssub.s32 %s10, 2
    %s17 = sadd.s32 %s10, 1
    %s18 = ssub.s32 %s10, %s17
    %p19 = scmp.eq.s32.totalorder %s18, 0
    %s21 = sadd.s32 %s20, 1
    %s22 = scalar_select %p19, %s20, %s21
    %p25 = pneg %p19
    %p26 = scmp.eq.s32.totalorder %s10, 1
    %p27 = por %p25, %p26
    %p28 = scmp.ne.s32.totalorder %s20, %s23
    %p29 = scmp.eq.s32.totalorder %s10, 0
    %p30 = por %p28, %p29
    %p31 = scmp.ne.s32.totalorder %s20, %s23
    %p32 = scmp.eq.s32.totalorder %s15, 1
    %p33 = por %p31, %p32
    %p34 = scmp.ne.s32.totalorder %s23, %s24
    %p35 = scmp.eq.s32.totalorder %s15, 0
    %p36 = por %p34, %p35
    %p37 = scmp.ne.s32.totalorder %s23, %s24
    %p38 = scmp.eq.s32.totalorder %s16, 1
    %p39 = por %p37, %p38
    %p41 = scmp.ne.s32.totalorder %s24, %s40
    %p42 = scmp.eq.s32.totalorder %s16, 0
    %p43 = por %p41, %p42
    %s45 = sadd.s32 %s44, 1
    %p48 = scmp.eq.s32.totalorder %s10, 1
    %p49 = scmp.ne.s32.totalorder %s44, %s46
    %p50 = scmp.eq.s32.totalorder %s10, 0
    %p51 = por %p49, %p50
    %p52 = scmp.ne.s32.totalorder %s44, %s46
    %p53 = scmp.eq.s32.totalorder %s15, 1
    %p54 = por %p52, %p53
    %p55 = scmp.ne.s32.totalorder %s46, %s47
    %p56 = scmp.eq.s32.totalorder %s15, 0
    %p57 = por %p55, %p56
    %p58 = scmp.ne.s32.totalorder %s46, %s47
    %p59 = scmp.eq.s32.totalorder %s16, 1
    %p60 = por %p58, %p59
    %p62 = scmp.ne.s32.totalorder %s47, %s61
    %p63 = scmp.eq.s32.totalorder %s16, 0
    %p64 = por %p62, %p63
    %s65 = ssub.s32 %s10, %s17
    %p66 = scmp.eq.s32.totalorder %s65, 0
    %s68 = sadd.s32 %s67, 1
    %s69 = scalar_select %p66, %s67, %s68
    %p72 = pneg %p66
    %p73 = scmp.eq.s32.totalorder %s10, 1
    %p74 = por %p72, %p73
    %p75 = scmp.ne.s32.totalorder %s67, %s70
    %p76 = scmp.eq.s32.totalorder %s10, 0
    %p77 = por %p75, %p76
    %p78 = scmp.ne.s32.totalorder %s67, %s70
    %p79 = scmp.eq.s32.totalorder %s15, 1
    %p80 = por %p78, %p79
    %p81 = scmp.ne.s32.totalorder %s70, %s71
    %p82 = scmp.eq.s32.totalorder %s15, 0
    %p83 = por %p81, %p82
    %p84 = scmp.ne.s32.totalorder %s70, %s71
    %p85 = scmp.eq.s32.totalorder %s16, 1
    %p86 = por %p84, %p85
    %p88 = scmp.ne.s32.totalorder %s71, %s87
    %p89 = scmp.eq.s32.totalorder %s16, 0
    %p90 = por %p88, %p89
    %s92 = sadd.s32 %s91, 1
    %p95 = scmp.eq.s32.totalorder %s10, 1
    %p96 = scmp.ne.s32.totalorder %s91, %s93
    %p97 = scmp.eq.s32.totalorder %s10, 0
    %p98 = por %p96, %p97
    %p99 = scmp.ne.s32.totalorder %s91, %s93
    %p100 = scmp.eq.s32.totalorder %s15, 1
    %p101 = por %p99, %p100
    %p102 = scmp.ne.s32.totalorder %s93, %s94
    %p103 = scmp.eq.s32.totalorder %s15, 0
    %p104 = por %p102, %p103
    %p105 = scmp.ne.s32.totalorder %s93, %s94
    %p106 = scmp.eq.s32.totalorder %s16, 1
    %p107 = por %p105, %p106
    %p109 = scmp.ne.s32.totalorder %s94, %s108
    %p110 = scmp.eq.s32.totalorder %s16, 0
    %p111 = por %p109, %p110
    %p112 = scmp.le.s32.totalorder 1, %s10
    %p113 = scmp.lt.s32.totalorder %s10, 3
    %p114 = pnand %p112, %p113
    %p115 = pneg %p114
    // Predicated region
    $region9: #{bottleneck_forward.4} parent=5 // pred_check
      _
    $region10: #{bottleneck_forward.4} parent=5 // pred_check_branch
      %117 = sbr.rel (%p114) target = $region12
    $region11: #{bottleneck_forward.4} parent=5 // pred_region
      %s118 = ssub.s32 %s10, 1
      // Predicated region
      $region13: #{bottleneck_forward.4} parent=11 // pred_check
        %p119 = pneg %p57
      $region14: #{bottleneck_forward.4} parent=11 // pred_check_branch
        %121 = sbr.rel (%p119) target = $region16
      $region15: #{bottleneck_forward.4} parent=11 // pred_region
        _
      $region16: #{bottleneck_forward.4} parent=11 // pred_fallthru
        _
    $region12: #{bottleneck_forward.4} parent=5 // pred_fallthru
      _
    %p122 = scmp.lt.s32.totalorder %s10, 2
    // Predicated region
    $region17: #{bottleneck_forward.4} parent=5 // pred_check
      %p123 = pneg %p122
    $region18: #{bottleneck_forward.4} parent=5 // pred_check_branch
      %125 = sbr.rel (%p123) target = $region20
    $region19: #{bottleneck_forward.4} parent=5 // pred_region
      // Predicated region
      $region21: #{bottleneck_forward.4} parent=19 // pred_check
        %p126 = pneg %p30
      $region22: #{bottleneck_forward.4} parent=19 // pred_check_branch
        %128 = sbr.rel (%p126) target = $region24
      $region23: #{bottleneck_forward.4} parent=19 // pred_region
        %s129 = smul.u32 64, %s10
        %p130 = scmp.lt.s32.totalorder %s129, 127
        %s131 = scalar_select %p130, %s129, 127
        %s132 = smul.addr %s131, 8
        %s133 = scalar_lea.vmem %s0, %s132
        %s134 = smul.u32 64, %s10
      $region24: #{bottleneck_forward.4} parent=19 // pred_fallthru
        _
    $region20: #{bottleneck_forward.4} parent=5 // pred_fallthru
      _
    %p135 = scmp.le.s32.totalorder 1, %s10
    %p136 = scmp.lt.s32.totalorder %s10, 3
    %p137 = pnand %p135, %p136
    %p138 = pneg %p137
    // Predicated region
    $region25: #{bottleneck_forward.4} parent=5 // pred_check
      _
    $region26: #{bottleneck_forward.4} parent=5 // pred_check_branch
      %140 = sbr.rel (%p137) target = $region28
    $region27: #{bottleneck_forward.4} parent=5 // pred_region
      %s141 = ssub.s32 %s10, 1
      %s142 = smul.u32 64, %s15
      %p143 = scmp.lt.s32.totalorder %s142, 127
      %s144 = scalar_select %p143, %s142, 127
      %s145 = smul.addr %s144, 8
      %s146 = scalar_lea.vmem %s0, %s145
      %p147 = pneg %p36
      %p148 = pneg %p33
      %p149 = pneg %p57
      %p150 = pneg %p54
      %p151 = pneg %p83
      %p152 = pneg %p80
      %s153 = smul.u32 64, %s15
      %p154 = scmp.lt.s32.totalorder %s153, 127
      %s155 = scalar_select %p154, %s153, 127
      %s156 = smul.addr %s155, 4
      %s157 = scalar_lea.vmem %s2, %s156
      %p158 = pneg %p104
      %p159 = pneg %p101
      %s160 = smul.u32 64, %s15
      %p161 = scmp.lt.s32.totalorder %s160, 127
      %s162 = scalar_select %p161, %s160, 127
      %s163 = smul.addr %s162, 8
      %s164 = scalar_lea.vmem %s0, %s163
      %s165 = smul.u32 64, %s15
      %s166 = smul.u32 64, %s15
      %p167 = scmp.lt.s32.totalorder %s166, 127
      %s168 = scalar_select %p167, %s166, 127
      %s169 = smul.addr %s168, 4
      %s170 = scalar_lea.vmem %s2, %s169
      %s171 = smul.u32 64, %s15
      %p173 = scmp.eq.s32.totalorder %s15, 0
      // Predicated region
      $region29: #{bottleneck_forward.4} parent=27 // pred_check
        %p174 = pneg %p173
      $region30: #{bottleneck_forward.4} parent=27 // pred_check_branch
        %176 = sbr.rel (%p174) target = $region32
      $region31: #{bottleneck_forward.4} parent=27 // pred_region
        %177 = vst [vmem:[%s3] sm:$0x3] 0.0
      $region32: #{bottleneck_forward.4} parent=27 // pred_fallthru
        _
      %v178 = vld [vmem:[%s164] sm:$0xff]
      %v179 = vld [vmem:[%s164 + $0x8] sm:$0xff]
      %v180 = vld [vmem:[%s164 + $0x10] sm:$0xff]
      %v181 = vld [vmem:[%s164 + $0x18] sm:$0xff]
      %v182 = vld [vmem:[%s164 + $0x20] sm:$0xff]
      %v183 = vld [vmem:[%s164 + $0x28] sm:$0xff]
      %v184 = vld [vmem:[%s164 + $0x30] sm:$0xff]
      %v185 = vld [vmem:[%s164 + $0x38] sm:$0xff]
      %v186 = vld [vmem:[%s164 + $0x40] sm:$0xff]
      %v187 = vld [vmem:[%s164 + $0x48] sm:$0xff]
      %v188 = vld [vmem:[%s164 + $0x50] sm:$0xff]
      %v189 = vld [vmem:[%s164 + $0x58] sm:$0xff]
      %v190 = vld [vmem:[%s164 + $0x60] sm:$0xff]
      %v191 = vld [vmem:[%s164 + $0x68] sm:$0xff]
      %v192 = vld [vmem:[%s164 + $0x70] sm:$0xff]
      %v193 = vld [vmem:[%s164 + $0x78] sm:$0xff]
      %v194 = vld [vmem:[%s164 + $0x80] sm:$0xff]
      %v195 = vld [vmem:[%s164 + $0x88] sm:$0xff]
      %v196 = vld [vmem:[%s164 + $0x90] sm:$0xff]
      %v197 = vld [vmem:[%s164 + $0x98] sm:$0xff]
      %v198 = vld [vmem:[%s164 + $0xa0] sm:$0xff]
      %v199 = vld [vmem:[%s164 + $0xa8] sm:$0xff]
      %v200 = vld [vmem:[%s164 + $0xb0] sm:$0xff]
      %v201 = vld [vmem:[%s164 + $0xb8] sm:$0xff]
      %v202 = vld [vmem:[%s164 + $0xc0] sm:$0xff]
      %v203 = vld [vmem:[%s164 + $0xc8] sm:$0xff]
      %v204 = vld [vmem:[%s164 + $0xd0] sm:$0xff]
      %v205 = vld [vmem:[%s164 + $0xd8] sm:$0xff]
      %v206 = vld [vmem:[%s164 + $0xe0] sm:$0xff]
      %v207 = vld [vmem:[%s164 + $0xe8] sm:$0xff]
      %v208 = vld [vmem:[%s164 + $0xf0] sm:$0xff]
      %v209 = vld [vmem:[%s164 + $0xf8] sm:$0xff]
      %v210 = vld [vmem:[%s164 + $0x100] sm:$0xff]
      %v211 = vld [vmem:[%s164 + $0x108] sm:$0xff]
      %v212 = vld [vmem:[%s164 + $0x110] sm:$0xff]
      %v213 = vld [vmem:[%s164 + $0x118] sm:$0xff]
      %v214 = vld [vmem:[%s164 + $0x120] sm:$0xff]
      %v215 = vld [vmem:[%s164 + $0x128] sm:$0xff]
      %v216 = vld [vmem:[%s164 + $0x130] sm:$0xff]
      %v217 = vld [vmem:[%s164 + $0x138] sm:$0xff]
      %v218 = vld [vmem:[%s164 + $0x140] sm:$0xff]
      %v219 = vld [vmem:[%s164 + $0x148] sm:$0xff]
      %v220 = vld [vmem:[%s164 + $0x150] sm:$0xff]
      %v221 = vld [vmem:[%s164 + $0x158] sm:$0xff]
      %v222 = vld [vmem:[%s164 + $0x160] sm:$0xff]
      %v223 = vld [vmem:[%s164 + $0x168] sm:$0xff]
      %v224 = vld [vmem:[%s164 + $0x170] sm:$0xff]
      %v225 = vld [vmem:[%s164 + $0x178] sm:$0xff]
      %v226 = vld [vmem:[%s164 + $0x180] sm:$0xff]
      %v227 = vld [vmem:[%s164 + $0x188] sm:$0xff]
      %v228 = vld [vmem:[%s164 + $0x190] sm:$0xff]
      %v229 = vld [vmem:[%s164 + $0x198] sm:$0xff]
      %v230 = vld [vmem:[%s164 + $0x1a0] sm:$0xff]
      %v231 = vld [vmem:[%s164 + $0x1a8] sm:$0xff]
      %v232 = vld [vmem:[%s164 + $0x1b0] sm:$0xff]
      %v233 = vld [vmem:[%s164 + $0x1b8] sm:$0xff]
      %v234 = vld [vmem:[%s164 + $0x1c0] sm:$0xff]
      %v235 = vld [vmem:[%s164 + $0x1c8] sm:$0xff]
      %v236 = vld [vmem:[%s164 + $0x1d0] sm:$0xff]
      %v237 = vld [vmem:[%s164 + $0x1d8] sm:$0xff]
      %v238 = vld [vmem:[%s164 + $0x1e0] sm:$0xff]
      %v239 = vld [vmem:[%s164 + $0x1e8] sm:$0xff]
      %v240 = vld [vmem:[%s164 + $0x1f0] sm:$0xff]
      %v241 = vld [vmem:[%s164 + $0x1f8] sm:$0xff]
      %v242 = vpack.c.bf16 %v179, %v178
      %v243 = vpack.c.bf16 %v181, %v180
      %v244 = vpack.c.bf16 %v183, %v182
      %v245 = vpack.c.bf16 %v185, %v184
      %v246 = vpack.c.bf16 %v187, %v186
      %v247 = vpack.c.bf16 %v189, %v188
      %v248 = vpack.c.bf16 %v191, %v190
      %v249 = vpack.c.bf16 %v193, %v192
      %v250 = vpack.c.bf16 %v195, %v194
      %v251 = vpack.c.bf16 %v197, %v196
      %v252 = vpack.c.bf16 %v199, %v198
      %v253 = vpack.c.bf16 %v201, %v200
      %v254 = vpack.c.bf16 %v203, %v202
      %v255 = vpack.c.bf16 %v205, %v204
      %v256 = vpack.c.bf16 %v207, %v206
      %v257 = vpack.c.bf16 %v209, %v208
      %v258 = vpack.c.bf16 %v211, %v210
      %v259 = vpack.c.bf16 %v213, %v212
      %v260 = vpack.c.bf16 %v215, %v214
      %v261 = vpack.c.bf16 %v217, %v216
      %v262 = vpack.c.bf16 %v219, %v218
      %v263 = vpack.c.bf16 %v221, %v220
      %v264 = vpack.c.bf16 %v223, %v222
      %v265 = vpack.c.bf16 %v225, %v224
      %v266 = vpack.c.bf16 %v227, %v226
      %v267 = vpack.c.bf16 %v229, %v228
      %v268 = vpack.c.bf16 %v231, %v230
      %v269 = vpack.c.bf16 %v233, %v232
      %v270 = vpack.c.bf16 %v235, %v234
      %v271 = vpack.c.bf16 %v237, %v236
      %v272 = vpack.c.bf16 %v239, %v238
      %v273 = vpack.c.bf16 %v241, %v240
      %v274 = vld [vmem:[%s1] sm:$0xf]
      %v275 = vld [vmem:[%s1 + $0x4] sm:$0xf]
      %v276 = vld [vmem:[%s1 + $0x8] sm:$0xf]
      %v277 = vld [vmem:[%s1 + $0xc] sm:$0xf]
      %v278 = vld [vmem:[%s1 + $0x10] sm:$0xf]
      %v279 = vld [vmem:[%s1 + $0x14] sm:$0xf]
      %v280 = vld [vmem:[%s1 + $0x18] sm:$0xf]
      %v281 = vld [vmem:[%s1 + $0x1c] sm:$0xf]
      %v282 = vld [vmem:[%s1 + $0x20] sm:$0xf]
      %v283 = vld [vmem:[%s1 + $0x24] sm:$0xf]
      %v284 = vld [vmem:[%s1 + $0x28] sm:$0xf]
      %v285 = vld [vmem:[%s1 + $0x2c] sm:$0xf]
      %v286 = vld [vmem:[%s1 + $0x30] sm:$0xf]
      %v287 = vld [vmem:[%s1 + $0x34] sm:$0xf]
      %v288 = vld [vmem:[%s1 + $0x38] sm:$0xf]
      %v289 = vld [vmem:[%s1 + $0x3c] sm:$0xf]
      %v306 = vunpack.c.l.b16 %v274
      %v307 = vunpack.c.l.b16 %v275
      %v308 = vunpack.c.l.b16 %v276
      %v309 = vunpack.c.l.b16 %v277
      %v310 = vunpack.c.l.b16 %v278
      %v311 = vunpack.c.l.b16 %v279
      %v312 = vunpack.c.l.b16 %v280
      %v313 = vunpack.c.l.b16 %v281
      %v314 = vunpack.c.l.b16 %v282
      %v315 = vunpack.c.l.b16 %v283
      %v316 = vunpack.c.l.b16 %v284
      %v317 = vunpack.c.l.b16 %v285
      %v318 = vunpack.c.l.b16 %v286
      %v319 = vunpack.c.l.b16 %v287
      %v320 = vunpack.c.l.b16 %v288
      %v321 = vunpack.c.l.b16 %v289
      %v322 = vpack.c.b16 %v307, %v306
      %v323 = vpack.c.b16 %v309, %v308
      %v324 = vpack.c.b16 %v311, %v310
      %v325 = vpack.c.b16 %v313, %v312
      %v326 = vpack.c.b16 %v315, %v314
      %v327 = vpack.c.b16 %v317, %v316
      %v328 = vpack.c.b16 %v319, %v318
      %v329 = vpack.c.b16 %v321, %v320
      %338 = vmatprep.subr.bf16.mxu0 0
      %339 = vmatpush1.bf16.msra.mxu0 %v322
      %340 = vmatprep.subr.bf16.mxu0 0
      %341 = vmatpush1.bf16.msra.mxu0 %v323
      %342 = vmatprep.subr.bf16.mxu0 0
      %343 = vmatpush1.bf16.msra.mxu0 %v324
      %344 = vmatprep.subr.bf16.mxu0 0
      %345 = vmatpush1.bf16.msra.mxu0 %v325
      %346 = vmatprep.subr.bf16.mxu0 0
      %347 = vmatpush1.bf16.msra.mxu0 %v326
      %348 = vmatprep.subr.bf16.mxu0 0
      %349 = vmatpush1.bf16.msra.mxu0 %v327
      %350 = vmatprep.subr.bf16.mxu0 0
      %351 = vmatpush1.bf16.msra.mxu0 %v328
      %352 = vmatprep.subr.bf16.mxu0 0
      %353 = vmatpush1.bf16.msra.mxu0 %v329
      %354 = vmatprep.subr.bf16.mxu0 0
      %355 = vmatpush1.bf16.msra.mxu0 0
      %356 = vmatprep.subr.bf16.mxu0 0
      %357 = vmatpush1.bf16.msra.mxu0 0
      %358 = vmatprep.subr.bf16.mxu0 0
      %359 = vmatpush1.bf16.msra.mxu0 0
      %360 = vmatprep.subr.bf16.mxu0 0
      %361 = vmatpush1.bf16.msra.mxu0 0
      %362 = vmatprep.subr.bf16.mxu0 0
      %363 = vmatpush1.bf16.msra.mxu0 0
      %364 = vmatprep.subr.bf16.mxu0 0
      %365 = vmatpush1.bf16.msra.mxu0 0
      %366 = vmatprep.subr.bf16.mxu0 0
      %367 = vmatpush1.bf16.msra.mxu0 0
      %368 = vmatprep.subr.bf16.mxu0 0
      %369 = vmatpush1.bf16.msra.mxu0 0
      %370 = vmatprep.mubr.bf16.mxu0 0
      %371 = vmatmul.mubr.bf16.gmra.mrb[0].mxu0 %v242
      %v372 = vpop.f32.mrb[0].mxu0
      %v373 = vadd.f32 0.0, %v372
      %v374 = vpop.f32.mrb[0].mxu0
      %v375 = vpop.f32.mrb[0].mxu0
      %v376 = vadd.f32 0.0, %v375
      %v377 = vpop.f32.mrb[0].mxu0
      %378 = vmatprep.mubr.bf16.mxu0 0
      %379 = vmatmul.mubr.bf16.gmra.mrb[0].mxu0 %v243
      %v380 = vpop.f32.mrb[0].mxu0
      %v381 = vadd.f32 0.0, %v380
      %v382 = vpop.f32.mrb[0].mxu0
      %v383 = vpop.f32.mrb[0].mxu0
      %v384 = vadd.f32 0.0, %v383
      %v385 = vpop.f32.mrb[0].mxu0
      %386 = vmatprep.mubr.bf16.mxu0 0
      %387 = vmatmul.mubr.bf16.gmra.mrb[0].mxu0 %v244
      %v388 = vpop.f32.mrb[0].mxu0
      %v389 = vadd.f32 0.0, %v388
      %v390 = vpop.f32.mrb[0].mxu0
      %v391 = vpop.f32.mrb[0].mxu0
      %v392 = vadd.f32 0.0, %v391
      %v393 = vpop.f32.mrb[0].mxu0
      %394 = vmatprep.mubr.bf16.mxu0 0
      %395 = vmatmul.mubr.bf16.gmra.mrb[0].mxu0 %v245
      %v396 = vpop.f32.mrb[0].mxu0
      %v397 = vadd.f32 0.0, %v396
      %v398 = vpop.f32.mrb[0].mxu0
      %v399 = vpop.f32.mrb[0].mxu0
      %v400 = vadd.f32 0.0, %v399
      %v401 = vpop.f32.mrb[0].mxu0
      %402 = vmatprep.mubr.bf16.mxu0 0
      %403 = vmatmul.mubr.bf16.gmra.mrb[0].mxu0 %v246
      %v404 = vpop.f32.mrb[0].mxu0
      %v405 = vadd.f32 0.0, %v404
      %v406 = vpop.f32.mrb[0].mxu0
      %v407 = vpop.f32.mrb[0].mxu0
      %v408 = vadd.f32 0.0, %v407
      %v409 = vpop.f32.mrb[0].mxu0
      %410 = vmatprep.mubr.bf16.mxu0 0
      %411 = vmatmul.mubr.bf16.gmra.mrb[0].mxu0 %v247
      %v412 = vpop.f32.mrb[0].mxu0
      %v413 = vadd.f32 0.0, %v412
      %v414 = vpop.f32.mrb[0].mxu0
      %v415 = vpop.f32.mrb[0].mxu0
      %v416 = vadd.f32 0.0, %v415
      %v417 = vpop.f32.mrb[0].mxu0
      %418 = vmatprep.mubr.bf16.mxu0 0
      %419 = vmatmul.mubr.bf16.gmra.mrb[0].mxu0 %v248
      %v420 = vpop.f32.mrb[0].mxu0
      %v421 = vadd.f32 0.0, %v420
      %v422 = vpop.f32.mrb[0].mxu0
      %v423 = vpop.f32.mrb[0].mxu0
      %v424 = vadd.f32 0.0, %v423
      %v425 = vpop.f32.mrb[0].mxu0
      %426 = vmatprep.mubr.bf16.mxu0 0
      %427 = vmatmul.mubr.bf16.gmra.mrb[0].mxu0 %v249
      %v428 = vpop.f32.mrb[0].mxu0
      %v429 = vadd.f32 0.0, %v428
      %v430 = vpop.f32.mrb[0].mxu0
      %v431 = vpop.f32.mrb[0].mxu0
      %v432 = vadd.f32 0.0, %v431
      %v433 = vpop.f32.mrb[0].mxu0
      %434 = vmatprep.mubr.bf16.mxu0 0
      %435 = vmatmul.mubr.bf16.gmra.mrb[0].mxu0 %v250
      %v436 = vpop.f32.mrb[0].mxu0
      %v437 = vadd.f32 0.0, %v436
      %v438 = vpop.f32.mrb[0].mxu0
      %v439 = vpop.f32.mrb[0].mxu0
      %v440 = vadd.f32 0.0, %v439
      %v441 = vpop.f32.mrb[0].mxu0
      %442 = vmatprep.mubr.bf16.mxu0 0
      %443 = vmatmul.mubr.bf16.gmra.mrb[0].mxu0 %v251
      %v444 = vpop.f32.mrb[0].mxu0
      %v445 = vadd.f32 0.0, %v444
      %v446 = vpop.f32.mrb[0].mxu0
      %v447 = vpop.f32.mrb[0].mxu0
      %v448 = vadd.f32 0.0, %v447
      %v449 = vpop.f32.mrb[0].mxu0
      %450 = vmatprep.mubr.bf16.mxu0 0
      %451 = vmatmul.mubr.bf16.gmra.mrb[0].mxu0 %v252
      %v452 = vpop.f32.mrb[0].mxu0
      %v453 = vadd.f32 0.0, %v452
      %v454 = vpop.f32.mrb[0].mxu0
      %v455 = vpop.f32.mrb[0].mxu0
      %v456 = vadd.f32 0.0, %v455
      %v457 = vpop.f32.mrb[0].mxu0
      %458 = vmatprep.mubr.bf16.mxu0 0
      %459 = vmatmul.mubr.bf16.gmra.mrb[0].mxu0 %v253
      %v460 = vpop.f32.mrb[0].mxu0
      %v461 = vadd.f32 0.0, %v460
      %v462 = vpop.f32.mrb[0].mxu0
      %v463 = vpop.f32.mrb[0].mxu0
      %v464 = vadd.f32 0.0, %v463
      %v465 = vpop.f32.mrb[0].mxu0
      %466 = vmatprep.mubr.bf16.mxu0 0
      %467 = vmatmul.mubr.bf16.gmra.mrb[0].mxu0 %v254
      %v468 = vpop.f32.mrb[0].mxu0
      %v469 = vadd.f32 0.0, %v468
      %v470 = vpop.f32.mrb[0].mxu0
      %v471 = vpop.f32.mrb[0].mxu0
      %v472 = vadd.f32 0.0, %v471
      %v473 = vpop.f32.mrb[0].mxu0
      %474 = vmatprep.mubr.bf16.mxu0 0
      %475 = vmatmul.mubr.bf16.gmra.mrb[0].mxu0 %v255
      %v476 = vpop.f32.mrb[0].mxu0
      %v477 = vadd.f32 0.0, %v476
      %v478 = vpop.f32.mrb[0].mxu0
      %v479 = vpop.f32.mrb[0].mxu0
      %v480 = vadd.f32 0.0, %v479
      %v481 = vpop.f32.mrb[0].mxu0
      %482 = vmatprep.mubr.bf16.mxu0 0
      %483 = vmatmul.mubr.bf16.gmra.mrb[0].mxu0 %v256
      %v484 = vpop.f32.mrb[0].mxu0
      %v485 = vadd.f32 0.0, %v484
      %v486 = vpop.f32.mrb[0].mxu0
      %v487 = vpop.f32.mrb[0].mxu0
      %v488 = vadd.f32 0.0, %v487
      %v489 = vpop.f32.mrb[0].mxu0
      %490 = vmatprep.mubr.bf16.mxu0 0
      %491 = vmatmul.mubr.bf16.gmra.mrb[0].mxu0 %v257
      %v492 = vpop.f32.mrb[0].mxu0
      %v493 = vadd.f32 0.0, %v492
      %v494 = vpop.f32.mrb[0].mxu0
      %v495 = vpop.f32.mrb[0].mxu0
      %v496 = vadd.f32 0.0, %v495
      %v497 = vpop.f32.mrb[0].mxu0
      %498 = vmatprep.mubr.bf16.mxu0 0
      %499 = vmatmul.mubr.bf16.gmra.mrb[0].mxu0 %v258
      %v500 = vpop.f32.mrb[0].mxu0
      %v501 = vadd.f32 0.0, %v500
      %v502 = vpop.f32.mrb[0].mxu0
      %v503 = vpop.f32.mrb[0].mxu0
      %v504 = vadd.f32 0.0, %v503
      %v505 = vpop.f32.mrb[0].mxu0
      %506 = vmatprep.mubr.bf16.mxu0 0
      %507 = vmatmul.mubr.bf16.gmra.mrb[0].mxu0 %v259
      %v508 = vpop.f32.mrb[0].mxu0
      %v509 = vadd.f32 0.0, %v508
      %v510 = vpop.f32.mrb[0].mxu0
      %v511 = vpop.f32.mrb[0].mxu0
      %v512 = vadd.f32 0.0, %v511
      %v513 = vpop.f32.mrb[0].mxu0
      %514 = vmatprep.mubr.bf16.mxu0 0
      %515 = vmatmul.mubr.bf16.gmra.mrb[0].mxu0 %v260
      %v516 = vpop.f32.mrb[0].mxu0
      %v517 = vadd.f32 0.0, %v516
      %v518 = vpop.f32.mrb[0].mxu0
      %v519 = vpop.f32.mrb[0].mxu0
      %v520 = vadd.f32 0.0, %v519
      %v521 = vpop.f32.mrb[0].mxu0
      %522 = vmatprep.mubr.bf16.mxu0 0
      %523 = vmatmul.mubr.bf16.gmra.mrb[0].mxu0 %v261
      %v524 = vpop.f32.mrb[0].mxu0
      %v525 = vadd.f32 0.0, %v524
      %v526 = vpop.f32.mrb[0].mxu0
      %v527 = vpop.f32.mrb[0].mxu0
      %v528 = vadd.f32 0.0, %v527
      %v529 = vpop.f32.mrb[0].mxu0
      %530 = vmatprep.mubr.bf16.mxu0 0
      %531 = vmatmul.mubr.bf16.gmra.mrb[0].mxu0 %v262
      %v532 = vpop.f32.mrb[0].mxu0
      %v533 = vadd.f32 0.0, %v532
      %v534 = vpop.f32.mrb[0].mxu0
      %v535 = vpop.f32.mrb[0].mxu0
      %v536 = vadd.f32 0.0, %v535
      %v537 = vpop.f32.mrb[0].mxu0
      %538 = vmatprep.mubr.bf16.mxu0 0
      %539 = vmatmul.mubr.bf16.gmra.mrb[0].mxu0 %v263
      %v540 = vpop.f32.mrb[0].mxu0
      %v541 = vadd.f32 0.0, %v540
      %v542 = vpop.f32.mrb[0].mxu0
      %v543 = vpop.f32.mrb[0].mxu0
      %v544 = vadd.f32 0.0, %v543
      %v545 = vpop.f32.mrb[0].mxu0
      %546 = vmatprep.mubr.bf16.mxu0 0
      %547 = vmatmul.mubr.bf16.gmra.mrb[0].mxu0 %v264
      %v548 = vpop.f32.mrb[0].mxu0
      %v549 = vadd.f32 0.0, %v548
      %v550 = vpop.f32.mrb[0].mxu0
      %v551 = vpop.f32.mrb[0].mxu0
      %v552 = vadd.f32 0.0, %v551
      %v553 = vpop.f32.mrb[0].mxu0
      %554 = vmatprep.mubr.bf16.mxu0 0
      %555 = vmatmul.mubr.bf16.gmra.mrb[0].mxu0 %v265
      %v556 = vpop.f32.mrb[0].mxu0
      %v557 = vadd.f32 0.0, %v556
      %v558 = vpop.f32.mrb[0].mxu0
      %v559 = vpop.f32.mrb[0].mxu0
      %v560 = vadd.f32 0.0, %v559
      %v561 = vpop.f32.mrb[0].mxu0
      %562 = vmatprep.mubr.bf16.mxu0 0
      %563 = vmatmul.mubr.bf16.gmra.mrb[0].mxu0 %v266
      %v564 = vpop.f32.mrb[0].mxu0
      %v565 = vadd.f32 0.0, %v564
      %v566 = vpop.f32.mrb[0].mxu0
      %v567 = vpop.f32.mrb[0].mxu0
      %v568 = vadd.f32 0.0, %v567
      %v569 = vpop.f32.mrb[0].mxu0
      %570 = vmatprep.mubr.bf16.mxu0 0
      %571 = vmatmul.mubr.bf16.gmra.mrb[0].mxu0 %v267
      %v572 = vpop.f32.mrb[0].mxu0
      %v573 = vadd.f32 0.0, %v572
      %v574 = vpop.f32.mrb[0].mxu0
      %v575 = vpop.f32.mrb[0].mxu0
      %v576 = vadd.f32 0.0, %v575
      %v577 = vpop.f32.mrb[0].mxu0
      %578 = vmatprep.mubr.bf16.mxu0 0
      %579 = vmatmul.mubr.bf16.gmra.mrb[0].mxu0 %v268
      %v580 = vpop.f32.mrb[0].mxu0
      %v581 = vadd.f32 0.0, %v580
      %v582 = vpop.f32.mrb[0].mxu0
      %v583 = vpop.f32.mrb[0].mxu0
      %v584 = vadd.f32 0.0, %v583
      %v585 = vpop.f32.mrb[0].mxu0
      %586 = vmatprep.mubr.bf16.mxu0 0
      %587 = vmatmul.mubr.bf16.gmra.mrb[0].mxu0 %v269
      %v588 = vpop.f32.mrb[0].mxu0
      %v589 = vadd.f32 0.0, %v588
      %v590 = vpop.f32.mrb[0].mxu0
      %v591 = vpop.f32.mrb[0].mxu0
      %v592 = vadd.f32 0.0, %v591
      %v593 = vpop.f32.mrb[0].mxu0
      %594 = vmatprep.mubr.bf16.mxu0 0
      %595 = vmatmul.mubr.bf16.gmra.mrb[0].mxu0 %v270
      %v596 = vpop.f32.mrb[0].mxu0
      %v597 = vadd.f32 0.0, %v596
      %v598 = vpop.f32.mrb[0].mxu0
      %v599 = vpop.f32.mrb[0].mxu0
      %v600 = vadd.f32 0.0, %v599
      %v601 = vpop.f32.mrb[0].mxu0
      %602 = vmatprep.mubr.bf16.mxu0 0
      %603 = vmatmul.mubr.bf16.gmra.mrb[0].mxu0 %v271
      %v604 = vpop.f32.mrb[0].mxu0
      %v605 = vadd.f32 0.0, %v604
      %v606 = vpop.f32.mrb[0].mxu0
      %v607 = vpop.f32.mrb[0].mxu0
      %v608 = vadd.f32 0.0, %v607
      %v609 = vpop.f32.mrb[0].mxu0
      %610 = vmatprep.mubr.bf16.mxu0 0
      %611 = vmatmul.mubr.bf16.gmra.mrb[0].mxu0 %v272
      %v612 = vpop.f32.mrb[0].mxu0
      %v613 = vadd.f32 0.0, %v612
      %v614 = vpop.f32.mrb[0].mxu0
      %v615 = vpop.f32.mrb[0].mxu0
      %v616 = vadd.f32 0.0, %v615
      %v617 = vpop.f32.mrb[0].mxu0
      %618 = vmatprep.mubr.bf16.mxu0 0
      %619 = vmatmul.mubr.bf16.gmra.mrb[0].mxu0 %v273
      %v620 = vpop.f32.mrb[0].mxu0
      %v621 = vadd.f32 0.0, %v620
      %v622 = vpop.f32.mrb[0].mxu0
      %v623 = vpop.f32.mrb[0].mxu0
      %v624 = vadd.f32 0.0, %v623
      %v625 = vpop.f32.mrb[0].mxu0
      %626 = vdwg.mxu0
      %v627 = vpack.c.bf16 %v376, %v373
      %v628 = vpack.c.bf16 %v384, %v381
      %v629 = vpack.c.bf16 %v392, %v389
      %v630 = vpack.c.bf16 %v400, %v397
      %v631 = vpack.c.bf16 %v408, %v405
      %v632 = vpack.c.bf16 %v416, %v413
      %v633 = vpack.c.bf16 %v424, %v421
      %v634 = vpack.c.bf16 %v432, %v429
      %v635 = vpack.c.bf16 %v440, %v437
      %v636 = vpack.c.bf16 %v448, %v445
      %v637 = vpack.c.bf16 %v456, %v453
      %v638 = vpack.c.bf16 %v464, %v461
      %v639 = vpack.c.bf16 %v472, %v469
      %v640 = vpack.c.bf16 %v480, %v477
      %v641 = vpack.c.bf16 %v488, %v485
      %v642 = vpack.c.bf16 %v496, %v493
      %v643 = vpack.c.bf16 %v504, %v501
      %v644 = vpack.c.bf16 %v512, %v509
      %v645 = vpack.c.bf16 %v520, %v517
      %v646 = vpack.c.bf16 %v528, %v525
      %v647 = vpack.c.bf16 %v536, %v533
      %v648 = vpack.c.bf16 %v544, %v541
      %v649 = vpack.c.bf16 %v552, %v549
      %v650 = vpack.c.bf16 %v560, %v557
      %v651 = vpack.c.bf16 %v568, %v565
      %v652 = vpack.c.bf16 %v576, %v573
      %v653 = vpack.c.bf16 %v584, %v581
      %v654 = vpack.c.bf16 %v592, %v589
      %v655 = vpack.c.bf16 %v600, %v597
      %v656 = vpack.c.bf16 %v608, %v605
      %v657 = vpack.c.bf16 %v616, %v613
      %v658 = vpack.c.bf16 %v624, %v621
      %v691 = vunpack.c.l.b16 %v627
      %v692 = vunpack.c.h.b16 %v627
      %v693 = vunpack.c.l.b16 %v628
      %v694 = vunpack.c.h.b16 %v628
      %v695 = vunpack.c.l.b16 %v629
      %v696 = vunpack.c.h.b16 %v629
      %v697 = vunpack.c.l.b16 %v630
      %v698 = vunpack.c.h.b16 %v630
      %v699 = vunpack.c.l.b16 %v631
      %v700 = vunpack.c.h.b16 %v631
      %v701 = vunpack.c.l.b16 %v632
      %v702 = vunpack.c.h.b16 %v632
      %v703 = vunpack.c.l.b16 %v633
      %v704 = vunpack.c.h.b16 %v633
      %v705 = vunpack.c.l.b16 %v634
      %v706 = vunpack.c.h.b16 %v634
      %v707 = vunpack.c.l.b16 %v635
      %v708 = vunpack.c.h.b16 %v635
      %v709 = vunpack.c.l.b16 %v636
      %v710 = vunpack.c.h.b16 %v636
      %v711 = vunpack.c.l.b16 %v637
      %v712 = vunpack.c.h.b16 %v637
      %v713 = vunpack.c.l.b16 %v638
      %v714 = vunpack.c.h.b16 %v638
      %v715 = vunpack.c.l.b16 %v639
      %v716 = vunpack.c.h.b16 %v639
      %v717 = vunpack.c.l.b16 %v640
      %v718 = vunpack.c.h.b16 %v640
      %v719 = vunpack.c.l.b16 %v641
      %v720 = vunpack.c.h.b16 %v641
      %v721 = vunpack.c.l.b16 %v642
      %v722 = vunpack.c.h.b16 %v642
      %v723 = vunpack.c.l.b16 %v643
      %v724 = vunpack.c.h.b16 %v643
      %v725 = vunpack.c.l.b16 %v644
      %v726 = vunpack.c.h.b16 %v644
      %v727 = vunpack.c.l.b16 %v645
      %v728 = vunpack.c.h.b16 %v645
      %v729 = vunpack.c.l.b16 %v646
      %v730 = vunpack.c.h.b16 %v646
      %v731 = vunpack.c.l.b16 %v647
      %v732 = vunpack.c.h.b16 %v647
      %v733 = vunpack.c.l.b16 %v648
      %v734 = vunpack.c.h.b16 %v648
      %v735 = vunpack.c.l.b16 %v649
      %v736 = vunpack.c.h.b16 %v649
      %v737 = vunpack.c.l.b16 %v650
      %v738 = vunpack.c.h.b16 %v650
      %v739 = vunpack.c.l.b16 %v651
      %v740 = vunpack.c.h.b16 %v651
      %v741 = vunpack.c.l.b16 %v652
      %v742 = vunpack.c.h.b16 %v652
      %v743 = vunpack.c.l.b16 %v653
      %v744 = vunpack.c.h.b16 %v653
      %v745 = vunpack.c.l.b16 %v654
      %v746 = vunpack.c.h.b16 %v654
      %v747 = vunpack.c.l.b16 %v655
      %v748 = vunpack.c.h.b16 %v655
      %v749 = vunpack.c.l.b16 %v656
      %v750 = vunpack.c.h.b16 %v656
      %v751 = vunpack.c.l.b16 %v657
      %v752 = vunpack.c.h.b16 %v657
      %v753 = vunpack.c.l.b16 %v658
      %v754 = vunpack.c.h.b16 %v658
      %v755 = vpack.c.b16 %v691, %v691
      %v756 = vpack.c.b16 %v692, %v692
      %v757 = vpack.c.b16 %v693, %v693
      %v758 = vpack.c.b16 %v694, %v694
      %v759 = vpack.c.b16 %v695, %v695
      %v760 = vpack.c.b16 %v696, %v696
      %v761 = vpack.c.b16 %v697, %v697
      %v762 = vpack.c.b16 %v698, %v698
      %v763 = vpack.c.b16 %v699, %v699
      %v764 = vpack.c.b16 %v700, %v700
      %v765 = vpack.c.b16 %v701, %v701
      %v766 = vpack.c.b16 %v702, %v702
      %v767 = vpack.c.b16 %v703, %v703
      %v768 = vpack.c.b16 %v704, %v704
      %v769 = vpack.c.b16 %v705, %v705
      %v770 = vpack.c.b16 %v706, %v706
      %v771 = vpack.c.b16 %v707, %v707
      %v772 = vpack.c.b16 %v708, %v708
      %v773 = vpack.c.b16 %v709, %v709
      %v774 = vpack.c.b16 %v710, %v710
      %v775 = vpack.c.b16 %v711, %v711
      %v776 = vpack.c.b16 %v712, %v712
      %v777 = vpack.c.b16 %v713, %v713
      %v778 = vpack.c.b16 %v714, %v714
      %v779 = vpack.c.b16 %v715, %v715
      %v780 = vpack.c.b16 %v716, %v716
      %v781 = vpack.c.b16 %v717, %v717
      %v782 = vpack.c.b16 %v718, %v718
      %v783 = vpack.c.b16 %v719, %v719
      %v784 = vpack.c.b16 %v720, %v720
      %v785 = vpack.c.b16 %v721, %v721
      %v786 = vpack.c.b16 %v722, %v722
      %v787 = vpack.c.b16 %v723, %v723
      %v788 = vpack.c.b16 %v724, %v724
      %v789 = vpack.c.b16 %v725, %v725
      %v790 = vpack.c.b16 %v726, %v726
      %v791 = vpack.c.b16 %v727, %v727
      %v792 = vpack.c.b16 %v728, %v728
      %v793 = vpack.c.b16 %v729, %v729
      %v794 = vpack.c.b16 %v730, %v730
      %v795 = vpack.c.b16 %v731, %v731
      %v796 = vpack.c.b16 %v732, %v732
      %v797 = vpack.c.b16 %v733, %v733
      %v798 = vpack.c.b16 %v734, %v734
      %v799 = vpack.c.b16 %v735, %v735
      %v800 = vpack.c.b16 %v736, %v736
      %v801 = vpack.c.b16 %v737, %v737
      %v802 = vpack.c.b16 %v738, %v738
      %v803 = vpack.c.b16 %v739, %v739
      %v804 = vpack.c.b16 %v740, %v740
      %v805 = vpack.c.b16 %v741, %v741
      %v806 = vpack.c.b16 %v742, %v742
      %v807 = vpack.c.b16 %v743, %v743
      %v808 = vpack.c.b16 %v744, %v744
      %v809 = vpack.c.b16 %v745, %v745
      %v810 = vpack.c.b16 %v746, %v746
      %v811 = vpack.c.b16 %v747, %v747
      %v812 = vpack.c.b16 %v748, %v748
      %v813 = vpack.c.b16 %v749, %v749
      %v814 = vpack.c.b16 %v750, %v750
      %v815 = vpack.c.b16 %v751, %v751
      %v816 = vpack.c.b16 %v752, %v752
      %v817 = vpack.c.b16 %v753, %v753
      %v818 = vpack.c.b16 %v754, %v754
      %883 = vst [vmem:[%s170] sm:$0xf] %v755
      %884 = vst [vmem:[%s170 + $0x4] sm:$0xf] %v756
      %885 = vst [vmem:[%s170 + $0x8] sm:$0xf] %v757
      %886 = vst [vmem:[%s170 + $0xc] sm:$0xf] %v758
      %887 = vst [vmem:[%s170 + $0x10] sm:$0xf] %v759
      %888 = vst [vmem:[%s170 + $0x14] sm:$0xf] %v760
      %889 = vst [vmem:[%s170 + $0x18] sm:$0xf] %v761
      %890 = vst [vmem:[%s170 + $0x1c] sm:$0xf] %v762
      %891 = vst [vmem:[%s170 + $0x20] sm:$0xf] %v763
      %892 = vst [vmem:[%s170 + $0x24] sm:$0xf] %v764
      %893 = vst [vmem:[%s170 + $0x28] sm:$0xf] %v765
      %894 = vst [vmem:[%s170 + $0x2c] sm:$0xf] %v766
      %895 = vst [vmem:[%s170 + $0x30] sm:$0xf] %v767
      %896 = vst [vmem:[%s170 + $0x34] sm:$0xf] %v768
      %897 = vst [vmem:[%s170 + $0x38] sm:$0xf] %v769
      %898 = vst [vmem:[%s170 + $0x3c] sm:$0xf] %v770
      %899 = vst [vmem:[%s170 + $0x40] sm:$0xf] %v771
      %900 = vst [vmem:[%s170 + $0x44] sm:$0xf] %v772
      %901 = vst [vmem:[%s170 + $0x48] sm:$0xf] %v773
      %902 = vst [vmem:[%s170 + $0x4c] sm:$0xf] %v774
      %903 = vst [vmem:[%s170 + $0x50] sm:$0xf] %v775
      %904 = vst [vmem:[%s170 + $0x54] sm:$0xf] %v776
      %905 = vst [vmem:[%s170 + $0x58] sm:$0xf] %v777
      %906 = vst [vmem:[%s170 + $0x5c] sm:$0xf] %v778
      %907 = vst [vmem:[%s170 + $0x60] sm:$0xf] %v779
      %908 = vst [vmem:[%s170 + $0x64] sm:$0xf] %v780
      %909 = vst [vmem:[%s170 + $0x68] sm:$0xf] %v781
      %910 = vst [vmem:[%s170 + $0x6c] sm:$0xf] %v782
      %911 = vst [vmem:[%s170 + $0x70] sm:$0xf] %v783
      %912 = vst [vmem:[%s170 + $0x74] sm:$0xf] %v784
      %913 = vst [vmem:[%s170 + $0x78] sm:$0xf] %v785
      %914 = vst [vmem:[%s170 + $0x7c] sm:$0xf] %v786
      %915 = vst [vmem:[%s170 + $0x80] sm:$0xf] %v787
      %916 = vst [vmem:[%s170 + $0x84] sm:$0xf] %v788
      %917 = vst [vmem:[%s170 + $0x88] sm:$0xf] %v789
      %918 = vst [vmem:[%s170 + $0x8c] sm:$0xf] %v790
      %919 = vst [vmem:[%s170 + $0x90] sm:$0xf] %v791
      %920 = vst [vmem:[%s170 + $0x94] sm:$0xf] %v792
      %921 = vst [vmem:[%s170 + $0x98] sm:$0xf] %v793
      %922 = vst [vmem:[%s170 + $0x9c] sm:$0xf] %v794
      %923 = vst [vmem:[%s170 + $0xa0] sm:$0xf] %v795
      %924 = vst [vmem:[%s170 + $0xa4] sm:$0xf] %v796
      %925 = vst [vmem:[%s170 + $0xa8] sm:$0xf] %v797
      %926 = vst [vmem:[%s170 + $0xac] sm:$0xf] %v798
      %927 = vst [vmem:[%s170 + $0xb0] sm:$0xf] %v799
      %928 = vst [vmem:[%s170 + $0xb4] sm:$0xf] %v800
      %929 = vst [vmem:[%s170 + $0xb8] sm:$0xf] %v801
      %930 = vst [vmem:[%s170 + $0xbc] sm:$0xf] %v802
      %931 = vst [vmem:[%s170 + $0xc0] sm:$0xf] %v803
      %932 = vst [vmem:[%s170 + $0xc4] sm:$0xf] %v804
      %933 = vst [vmem:[%s170 + $0xc8] sm:$0xf] %v805
      %934 = vst [vmem:[%s170 + $0xcc] sm:$0xf] %v806
      %935 = vst [vmem:[%s170 + $0xd0] sm:$0xf] %v807
      %936 = vst [vmem:[%s170 + $0xd4] sm:$0xf] %v808
      %937 = vst [vmem:[%s170 + $0xd8] sm:$0xf] %v809
      %938 = vst [vmem:[%s170 + $0xdc] sm:$0xf] %v810
      %939 = vst [vmem:[%s170 + $0xe0] sm:$0xf] %v811
      %940 = vst [vmem:[%s170 + $0xe4] sm:$0xf] %v812
      %941 = vst [vmem:[%s170 + $0xe8] sm:$0xf] %v813
      %942 = vst [vmem:[%s170 + $0xec] sm:$0xf] %v814
      %943 = vst [vmem:[%s170 + $0xf0] sm:$0xf] %v815
      %944 = vst [vmem:[%s170 + $0xf4] sm:$0xf] %v816
      %945 = vst [vmem:[%s170 + $0xf8] sm:$0xf] %v817
      %946 = vst [vmem:[%s170 + $0xfc] sm:$0xf] %v818
      %v947 = vld [vmem:[%s3] sm:$0x3]
      %v948 = vadd.f32 %v373, %v376
      %v949 = vadd.f32 %v948, %v381
      %v950 = vadd.f32 %v949, %v384
      %v951 = vadd.f32 %v950, %v389
      %v952 = vadd.f32 %v951, %v392
      %v953 = vadd.f32 %v952, %v397
      %v954 = vadd.f32 %v953, %v400
      %v955 = vadd.f32 %v954, %v405
      %v956 = vadd.f32 %v955, %v408
      %v957 = vadd.f32 %v956, %v413
      %v958 = vadd.f32 %v957, %v416
      %v959 = vadd.f32 %v958, %v421
      %v960 = vadd.f32 %v959, %v424
      %v961 = vadd.f32 %v960, %v429
      %v962 = vadd.f32 %v961, %v432
      %v963 = vadd.f32 %v962, %v437
      %v964 = vadd.f32 %v963, %v440
      %v965 = vadd.f32 %v964, %v445
      %v966 = vadd.f32 %v965, %v448
      %v967 = vadd.f32 %v966, %v453
      %v968 = vadd.f32 %v967, %v456
      %v969 = vadd.f32 %v968, %v461
      %v970 = vadd.f32 %v969, %v464
      %v971 = vadd.f32 %v970, %v469
      %v972 = vadd.f32 %v971, %v472
      %v973 = vadd.f32 %v972, %v477
      %v974 = vadd.f32 %v973, %v480
      %v975 = vadd.f32 %v974, %v485
      %v976 = vadd.f32 %v975, %v488
      %v977 = vadd.f32 %v976, %v493
      %v978 = vadd.f32 %v977, %v496
      %v979 = vadd.f32 %v978, %v501
      %v980 = vadd.f32 %v979, %v504
      %v981 = vadd.f32 %v980, %v509
      %v982 = vadd.f32 %v981, %v512
      %v983 = vadd.f32 %v982, %v517
      %v984 = vadd.f32 %v983, %v520
      %v985 = vadd.f32 %v984, %v525
      %v986 = vadd.f32 %v985, %v528
      %v987 = vadd.f32 %v986, %v533
      %v988 = vadd.f32 %v987, %v536
      %v989 = vadd.f32 %v988, %v541
      %v990 = vadd.f32 %v989, %v544
      %v991 = vadd.f32 %v990, %v549
      %v992 = vadd.f32 %v991, %v552
      %v993 = vadd.f32 %v992, %v557
      %v994 = vadd.f32 %v993, %v560
      %v995 = vadd.f32 %v994, %v565
      %v996 = vadd.f32 %v995, %v568
      %v997 = vadd.f32 %v996, %v573
      %v998 = vadd.f32 %v997, %v576
      %v999 = vadd.f32 %v998, %v581
      %v1000 = vadd.f32 %v999, %v584
      %v1001 = vadd.f32 %v1000, %v589
      %v1002 = vadd.f32 %v1001, %v592
      %v1003 = vadd.f32 %v1002, %v597
      %v1004 = vadd.f32 %v1003, %v600
      %v1005 = vadd.f32 %v1004, %v605
      %v1006 = vadd.f32 %v1005, %v608
      %v1007 = vadd.f32 %v1006, %v613
      %v1008 = vadd.f32 %v1007, %v616
      %v1009 = vadd.f32 %v1008, %v621
      %v1010 = vadd.f32 %v1009, %v624
      %v1011 = vrot.slane %v1010, 4
      %v1012 = vadd.f32 %v1010, %v1011
      %v1013 = vrot.slane %v1012, 2
      %v1014 = vadd.f32 %v1012, %v1013
      %v1015 = vrot.slane %v1014, 1
      %v1016 = vadd.f32 %v1014, %v1015
      %v1017 = vmul.f32 %v373, %v373
      %v1018 = vmul.f32 %v376, %v376
      %v1019 = vmul.f32 %v381, %v381
      %v1020 = vmul.f32 %v384, %v384
      %v1021 = vmul.f32 %v389, %v389
      %v1022 = vmul.f32 %v392, %v392
      %v1023 = vmul.f32 %v397, %v397
      %v1024 = vmul.f32 %v400, %v400
      %v1025 = vmul.f32 %v405, %v405
      %v1026 = vmul.f32 %v408, %v408
      %v1027 = vmul.f32 %v413, %v413
      %v1028 = vmul.f32 %v416, %v416
      %v1029 = vmul.f32 %v421, %v421
      %v1030 = vmul.f32 %v424, %v424
      %v1031 = vmul.f32 %v429, %v429
      %v1032 = vmul.f32 %v432, %v432
      %v1033 = vmul.f32 %v437, %v437
      %v1034 = vmul.f32 %v440, %v440
      %v1035 = vmul.f32 %v445, %v445
      %v1036 = vmul.f32 %v448, %v448
      %v1037 = vmul.f32 %v453, %v453
      %v1038 = vmul.f32 %v456, %v456
      %v1039 = vmul.f32 %v461, %v461
      %v1040 = vmul.f32 %v464, %v464
      %v1041 = vmul.f32 %v469, %v469
      %v1042 = vmul.f32 %v472, %v472
      %v1043 = vmul.f32 %v477, %v477
      %v1044 = vmul.f32 %v480, %v480
      %v1045 = vmul.f32 %v485, %v485
      %v1046 = vmul.f32 %v488, %v488
      %v1047 = vmul.f32 %v493, %v493
      %v1048 = vmul.f32 %v496, %v496
      %v1049 = vmul.f32 %v501, %v501
      %v1050 = vmul.f32 %v504, %v504
      %v1051 = vmul.f32 %v509, %v509
      %v1052 = vmul.f32 %v512, %v512
      %v1053 = vmul.f32 %v517, %v517
      %v1054 = vmul.f32 %v520, %v520
      %v1055 = vmul.f32 %v525, %v525
      %v1056 = vmul.f32 %v528, %v528
      %v1057 = vmul.f32 %v533, %v533
      %v1058 = vmul.f32 %v536, %v536
      %v1059 = vmul.f32 %v541, %v541
      %v1060 = vmul.f32 %v544, %v544
      %v1061 = vmul.f32 %v549, %v549
      %v1062 = vmul.f32 %v552, %v552
      %v1063 = vmul.f32 %v557, %v557
      %v1064 = vmul.f32 %v560, %v560
      %v1065 = vmul.f32 %v565, %v565
      %v1066 = vmul.f32 %v568, %v568
      %v1067 = vmul.f32 %v573, %v573
      %v1068 = vmul.f32 %v576, %v576
      %v1069 = vmul.f32 %v581, %v581
      %v1070 = vmul.f32 %v584, %v584
      %v1071 = vmul.f32 %v589, %v589
      %v1072 = vmul.f32 %v592, %v592
      %v1073 = vmul.f32 %v597, %v597
      %v1074 = vmul.f32 %v600, %v600
      %v1075 = vmul.f32 %v605, %v605
      %v1076 = vmul.f32 %v608, %v608
      %v1077 = vmul.f32 %v613, %v613
      %v1078 = vmul.f32 %v616, %v616
      %v1079 = vmul.f32 %v621, %v621
      %v1080 = vmul.f32 %v624, %v624
      %v1081 = vadd.f32 %v1017, %v1018
      %v1082 = vadd.f32 %v1081, %v1019
      %v1083 = vadd.f32 %v1082, %v1020
      %v1084 = vadd.f32 %v1083, %v1021
      %v1085 = vadd.f32 %v1084, %v1022
      %v1086 = vadd.f32 %v1085, %v1023
      %v1087 = vadd.f32 %v1086, %v1024
      %v1088 = vadd.f32 %v1087, %v1025
      %v1089 = vadd.f32 %v1088, %v1026
      %v1090 = vadd.f32 %v1089, %v1027
      %v1091 = vadd.f32 %v1090, %v1028
      %v1092 = vadd.f32 %v1091, %v1029
      %v1093 = vadd.f32 %v1092, %v1030
      %v1094 = vadd.f32 %v1093, %v1031
      %v1095 = vadd.f32 %v1094, %v1032
      %v1096 = vadd.f32 %v1095, %v1033
      %v1097 = vadd.f32 %v1096, %v1034
      %v1098 = vadd.f32 %v1097, %v1035
      %v1099 = vadd.f32 %v1098, %v1036
      %v1100 = vadd.f32 %v1099, %v1037
      %v1101 = vadd.f32 %v1100, %v1038
      %v1102 = vadd.f32 %v1101, %v1039
      %v1103 = vadd.f32 %v1102, %v1040
      %v1104 = vadd.f32 %v1103, %v1041
      %v1105 = vadd.f32 %v1104, %v1042
      %v1106 = vadd.f32 %v1105, %v1043
      %v1107 = vadd.f32 %v1106, %v1044
      %v1108 = vadd.f32 %v1107, %v1045
      %v1109 = vadd.f32 %v1108, %v1046
      %v1110 = vadd.f32 %v1109, %v1047
      %v1111 = vadd.f32 %v1110, %v1048
      %v1112 = vadd.f32 %v1111, %v1049
      %v1113 = vadd.f32 %v1112, %v1050
      %v1114 = vadd.f32 %v1113, %v1051
      %v1115 = vadd.f32 %v1114, %v1052
      %v1116 = vadd.f32 %v1115, %v1053
      %v1117 = vadd.f32 %v1116, %v1054
      %v1118 = vadd.f32 %v1117, %v1055
      %v1119 = vadd.f32 %v1118, %v1056
      %v1120 = vadd.f32 %v1119, %v1057
      %v1121 = vadd.f32 %v1120, %v1058
      %v1122 = vadd.f32 %v1121, %v1059
      %v1123 = vadd.f32 %v1122, %v1060
      %v1124 = vadd.f32 %v1123, %v1061
      %v1125 = vadd.f32 %v1124, %v1062
      %v1126 = vadd.f32 %v1125, %v1063
      %v1127 = vadd.f32 %v1126, %v1064
      %v1128 = vadd.f32 %v1127, %v1065
      %v1129 = vadd.f32 %v1128, %v1066
      %v1130 = vadd.f32 %v1129, %v1067
      %v1131 = vadd.f32 %v1130, %v1068
      %v1132 = vadd.f32 %v1131, %v1069
      %v1133 = vadd.f32 %v1132, %v1070
      %v1134 = vadd.f32 %v1133, %v1071
      %v1135 = vadd.f32 %v1134, %v1072
      %v1136 = vadd.f32 %v1135, %v1073
      %v1137 = vadd.f32 %v1136, %v1074
      %v1138 = vadd.f32 %v1137, %v1075
      %v1139 = vadd.f32 %v1138, %v1076
      %v1140 = vadd.f32 %v1139, %v1077
      %v1141 = vadd.f32 %v1140, %v1078
      %v1142 = vadd.f32 %v1141, %v1079
      %v1143 = vadd.f32 %v1142, %v1080
      %v1144 = vrot.slane %v1143, 4
      %v1145 = vadd.f32 %v1143, %v1144
      %v1146 = vrot.slane %v1145, 2
      %v1147 = vadd.f32 %v1145, %v1146
      %v1148 = vrot.slane %v1147, 1
      %v1149 = vadd.f32 %v1147, %v1148
      %vm1150 = vcmask 1040384
      %v1151 = vsel %vm1150, %v1016, %v1149
      %v1152 = vadd.f32 %v947, %v1151
      %1153 = vst [vmem:[%s3] sm:$0x3] %v1152
      %s1154 = smul.u32 64, %s15
      %p1155 = scmp.lt.s32.totalorder %s1154, 127
      %s1156 = scalar_select %p1155, %s1154, 127
      %s1157 = smul.addr %s1156, 4
      %s1158 = scalar_lea.vmem %s2, %s1157
      // Predicated region
      $region33: #{bottleneck_forward.4} parent=27 // pred_check
        %p1159 = pneg %p80
      $region34: #{bottleneck_forward.4} parent=27 // pred_check_branch
        %1161 = sbr.rel (%p1159) target = $region36
      $region35: #{bottleneck_forward.4} parent=27 // pred_region
        %s1162 = smul.u32 64, %s15
      $region36: #{bottleneck_forward.4} parent=27 // pred_fallthru
        _
      // Predicated region
      $region37: #{bottleneck_forward.4} parent=27 // pred_check
        %p1163 = pneg %p101
      $region38: #{bottleneck_forward.4} parent=27 // pred_check_branch
        %1165 = sbr.rel (%p1163) target = $region40
      $region39: #{bottleneck_forward.4} parent=27 // pred_region
        _
      $region40: #{bottleneck_forward.4} parent=27 // pred_fallthru
        _
      // Predicated region
      $region41: #{bottleneck_forward.4} parent=27 // pred_check
        %p1166 = pneg %p101
      $region42: #{bottleneck_forward.4} parent=27 // pred_check_branch
        %1168 = sbr.rel (%p1166) target = $region44
      $region43: #{bottleneck_forward.4} parent=27 // pred_region
        _
      $region44: #{bottleneck_forward.4} parent=27 // pred_fallthru
        _
    $region28: #{bottleneck_forward.4} parent=5 // pred_fallthru
      _
    %p1169 = scmp.le.s32.totalorder 2, %s10
    // Predicated region
    $region45: #{bottleneck_forward.4} parent=5 // pred_check
      %p1170 = pneg %p1169
    $region46: #{bottleneck_forward.4} parent=5 // pred_check_branch
      %1172 = sbr.rel (%p1170) target = $region48
    $region47: #{bottleneck_forward.4} parent=5 // pred_region
      %s1173 = ssub.s32 %s10, 2
      // Predicated region
      $region49: #{bottleneck_forward.4} parent=47 // pred_check
        %p1174 = pneg %p86
      $region50: #{bottleneck_forward.4} parent=47 // pred_check_branch
        %1176 = sbr.rel (%p1174) target = $region52
      $region51: #{bottleneck_forward.4} parent=47 // pred_region
        %s1177 = smul.u32 64, %s16
        %p1178 = scmp.lt.s32.totalorder %s1177, 127
        %s1179 = scalar_select %p1178, %s1177, 127
        %s1180 = smul.addr %s1179, 4
        %s1181 = scalar_lea.vmem %s2, %s1180
      $region52: #{bottleneck_forward.4} parent=47 // pred_fallthru
        _
    $region48: #{bottleneck_forward.4} parent=5 // pred_fallthru
      _
  $region6: #{bottleneck_forward.4} parent=0 // loop_footer
    %s14 = sadd.s32 1, %s10
  $region7: #{bottleneck_forward.4} parent=0 // loop_footer_branch
    %9 = sbr.rel target = $region3
  $region8: #{bottleneck_forward.4} parent=0 // loop_exit
    _

// kernel: bottleneck_forward.7
$region0: #{bottleneck_forward.7}
  #allocation0 [shape = 'u32[]', space=smem, size = 0x4, offset = 0x4, fixed_abs, tag = 'smem constant byte address 0x4 - core index']
  #allocation1 [shape = 'u32[144,128]{1,0:T(1,128)}', space=vmem, size = 0x12000, scoped, tag = 'internal scratch']
  %s0 = inlined_call_operand.vmem [shape: bf16[1024,128], index: 0, kind: input, shape index: {}]
  %s1 = inlined_call_operand.vmem [shape: f32[1024,128], index: 1, kind: input, shape index: {}]
  %s2 = inlined_call_operand.vmem [shape: f32[1,128], index: 2, kind: input, shape index: {}]
  %s3 = inlined_call_operand.vmem [shape: f32[1,128], index: 3, kind: input, shape index: {}]
  %s4 = inlined_call_operand.hbm [shape: f32[1024,128], index: 4, kind: output, shape index: {}]
  %s5 = sld [smem:[#allocation0]]
  $region49: #{bottleneck_forward.7} parent=0
    _
  %s7 = ssub.s32 1, %s5
  %s8 = scalar_select 0, %s7, %s5
  $region1: #{bottleneck_forward.7} parent=0
    #allocation2 [shape = 'u8[524288]{0}', space=vmem, size = 0x80000, scoped, tag = 'output window, operand 0']
    #allocation3 [shape = 's32[2]{0}', space=sflag, size = 0x8, scoped, tag = 'scoped memory for bottleneck_forward.7']
    %9 = vsyncpa [#allocation3], 0
    %s10 = scalar_lea.sflag [#allocation3], 1
    %11 = vsyncpa %s10, 0
    loop: start=0, step=1, limit=4
    $region2: #{bottleneck_forward.7} parent=1 // loop_pre_header
      _
    $region3: #{bottleneck_forward.7} parent=1 // loop_header
      %s13 = sphi 0, %s17
      %p14 = scmp.ge.s32.totalorder %s13, 4
      %s23 = sphi 0, %s25
      %s26 = sphi 0, %s23
      %s27 = sphi 0, %s26
      %s43 = sphi 0, %s27
      %s49 = sphi 0, %s51
      %s52 = sphi 0, %s49
      %s53 = sphi 0, %s52
      %s69 = sphi 0, %s53
      %s73 = sphi 0, %s73
      %s75 = sphi 0, %s73
      %s76 = sphi 0, %s75
      %s90 = sphi 0, %s76
      %s94 = sphi 0, %s94
      %s96 = sphi 0, %s94
      %s97 = sphi 0, %s96
      %s111 = sphi 0, %s97
      %s117 = sphi 0, %s119
      %s120 = sphi 0, %s117
      %s121 = sphi 0, %s120
      %s137 = sphi 0, %s121
    $region4: #{bottleneck_forward.7} parent=1 // loop_header_branch
      %16 = sbr.rel (%p14) target = $region8
    $region5: #{bottleneck_forward.7} parent=1 // loop_body
      %s18 = ssub.s32 %s13, 1
      %s19 = ssub.s32 %s13, 2
      %s20 = sadd.s32 %s13, 1
      %s21 = ssub.s32 %s13, %s20
      %p22 = scmp.eq.s32.totalorder %s21, 0
      %s24 = sadd.s32 %s23, 1
      %s25 = scalar_select %p22, %s23, %s24
      %p28 = pneg %p22
      %p29 = scmp.eq.s32.totalorder %s13, 1
      %p30 = por %p28, %p29
      %p31 = scmp.ne.s32.totalorder %s23, %s26
      %p32 = scmp.eq.s32.totalorder %s13, 0
      %p33 = por %p31, %p32
      %p34 = scmp.ne.s32.totalorder %s23, %s26
      %p35 = scmp.eq.s32.totalorder %s18, 1
      %p36 = por %p34, %p35
      %p37 = scmp.ne.s32.totalorder %s26, %s27
      %p38 = scmp.eq.s32.totalorder %s18, 0
      %p39 = por %p37, %p38
      %p40 = scmp.ne.s32.totalorder %s26, %s27
      %p41 = scmp.eq.s32.totalorder %s19, 1
      %p42 = por %p40, %p41
      %p44 = scmp.ne.s32.totalorder %s27, %s43
      %p45 = scmp.eq.s32.totalorder %s19, 0
      %p46 = por %p44, %p45
      %s47 = ssub.s32 %s13, %s20
      %p48 = scmp.eq.s32.totalorder %s47, 0
      %s50 = sadd.s32 %s49, 1
      %s51 = scalar_select %p48, %s49, %s50
      %p54 = pneg %p48
      %p55 = scmp.eq.s32.totalorder %s13, 1
      %p56 = por %p54, %p55
      %p57 = scmp.ne.s32.totalorder %s49, %s52
      %p58 = scmp.eq.s32.totalorder %s13, 0
      %p59 = por %p57, %p58
      %p60 = scmp.ne.s32.totalorder %s49, %s52
      %p61 = scmp.eq.s32.totalorder %s18, 1
      %p62 = por %p60, %p61
      %p63 = scmp.ne.s32.totalorder %s52, %s53
      %p64 = scmp.eq.s32.totalorder %s18, 0
      %p65 = por %p63, %p64
      %p66 = scmp.ne.s32.totalorder %s52, %s53
      %p67 = scmp.eq.s32.totalorder %s19, 1
      %p68 = por %p66, %p67
      %p70 = scmp.ne.s32.totalorder %s53, %s69
      %p71 = scmp.eq.s32.totalorder %s19, 0
      %p72 = por %p70, %p71
      %s74 = sadd.s32 %s73, 1
      %p77 = scmp.eq.s32.totalorder %s13, 1
      %p78 = scmp.ne.s32.totalorder %s73, %s75
      %p79 = scmp.eq.s32.totalorder %s13, 0
      %p80 = por %p78, %p79
      %p81 = scmp.ne.s32.totalorder %s73, %s75
      %p82 = scmp.eq.s32.totalorder %s18, 1
      %p83 = por %p81, %p82
      %p84 = scmp.ne.s32.totalorder %s75, %s76
      %p85 = scmp.eq.s32.totalorder %s18, 0
      %p86 = por %p84, %p85
      %p87 = scmp.ne.s32.totalorder %s75, %s76
      %p88 = scmp.eq.s32.totalorder %s19, 1
      %p89 = por %p87, %p88
      %p91 = scmp.ne.s32.totalorder %s76, %s90
      %p92 = scmp.eq.s32.totalorder %s19, 0
      %p93 = por %p91, %p92
      %s95 = sadd.s32 %s94, 1
      %p98 = scmp.eq.s32.totalorder %s13, 1
      %p99 = scmp.ne.s32.totalorder %s94, %s96
      %p100 = scmp.eq.s32.totalorder %s13, 0
      %p101 = por %p99, %p100
      %p102 = scmp.ne.s32.totalorder %s94, %s96
      %p103 = scmp.eq.s32.totalorder %s18, 1
      %p104 = por %p102, %p103
      %p105 = scmp.ne.s32.totalorder %s96, %s97
      %p106 = scmp.eq.s32.totalorder %s18, 0
      %p107 = por %p105, %p106
      %p108 = scmp.ne.s32.totalorder %s96, %s97
      %p109 = scmp.eq.s32.totalorder %s19, 1
      %p110 = por %p108, %p109
      %p112 = scmp.ne.s32.totalorder %s97, %s111
      %p113 = scmp.eq.s32.totalorder %s19, 0
      %p114 = por %p112, %p113
      %s115 = ssub.s32 %s13, %s20
      %p116 = scmp.eq.s32.totalorder %s115, 0
      %s118 = sadd.s32 %s117, 1
      %s119 = scalar_select %p116, %s117, %s118
      %p122 = pneg %p116
      %p123 = scmp.eq.s32.totalorder %s13, 1
      %p124 = por %p122, %p123
      %p125 = scmp.ne.s32.totalorder %s117, %s120
      %p126 = scmp.eq.s32.totalorder %s13, 0
      %p127 = por %p125, %p126
      %p128 = scmp.ne.s32.totalorder %s117, %s120
      %p129 = scmp.eq.s32.totalorder %s18, 1
      %p130 = por %p128, %p129
      %p131 = scmp.ne.s32.totalorder %s120, %s121
      %p132 = scmp.eq.s32.totalorder %s18, 0
      %p133 = por %p131, %p132
      %p134 = scmp.ne.s32.totalorder %s120, %s121
      %p135 = scmp.eq.s32.totalorder %s19, 1
      %p136 = por %p134, %p135
      %p138 = scmp.ne.s32.totalorder %s121, %s137
      %p139 = scmp.eq.s32.totalorder %s19, 0
      %p140 = por %p138, %p139
      %p141 = scmp.le.s32.totalorder 1, %s13
      %p142 = scmp.lt.s32.totalorder %s13, 3
      %p143 = pnand %p141, %p142
      %p144 = pneg %p143
      // Predicated region
      $region9: #{bottleneck_forward.7} parent=5 // pred_check
        _
      $region10: #{bottleneck_forward.7} parent=5 // pred_check_branch
        %146 = sbr.rel (%p143) target = $region12
      $region11: #{bottleneck_forward.7} parent=5 // pred_region
        %s147 = ssub.s32 %s13, 1
        // Predicated region
        $region13: #{bottleneck_forward.7} parent=11 // pred_check
          %p148 = pneg %p86
        $region14: #{bottleneck_forward.7} parent=11 // pred_check_branch
          %150 = sbr.rel (%p148) target = $region16
        $region15: #{bottleneck_forward.7} parent=11 // pred_region
          _
        $region16: #{bottleneck_forward.7} parent=11 // pred_fallthru
          _
        // Predicated region
        $region17: #{bottleneck_forward.7} parent=11 // pred_check
          %p151 = pneg %p107
        $region18: #{bottleneck_forward.7} parent=11 // pred_check_branch
          %153 = sbr.rel (%p151) target = $region20
        $region19: #{bottleneck_forward.7} parent=11 // pred_region
          _
        $region20: #{bottleneck_forward.7} parent=11 // pred_fallthru
          _
      $region12: #{bottleneck_forward.7} parent=5 // pred_fallthru
        _
      %p154 = scmp.lt.s32.totalorder %s13, 2
      // Predicated region
      $region21: #{bottleneck_forward.7} parent=5 // pred_check
        %p155 = pneg %p154
      $region22: #{bottleneck_forward.7} parent=5 // pred_check_branch
        %157 = sbr.rel (%p155) target = $region24
      $region23: #{bottleneck_forward.7} parent=5 // pred_region
        // Predicated region
        $region25: #{bottleneck_forward.7} parent=23 // pred_check
          %p158 = pneg %p33
        $region26: #{bottleneck_forward.7} parent=23 // pred_check_branch
          %160 = sbr.rel (%p158) target = $region28
        $region27: #{bottleneck_forward.7} parent=23 // pred_region
          %s161 = smul.u32 64, %s13
          %p162 = scmp.lt.s32.totalorder %s161, 127
          %s163 = scalar_select %p162, %s161, 127
          %s164 = smul.addr %s163, 4
          %s165 = scalar_lea.vmem %s0, %s164
          %s166 = smul.u32 64, %s13
        $region28: #{bottleneck_forward.7} parent=23 // pred_fallthru
          _
        // Predicated region
        $region29: #{bottleneck_forward.7} parent=23 // pred_check
          %p167 = pneg %p59
        $region30: #{bottleneck_forward.7} parent=23 // pred_check_branch
          %169 = sbr.rel (%p167) target = $region32
        $region31: #{bottleneck_forward.7} parent=23 // pred_region
          %s170 = smul.u32 64, %s13
          %p171 = scmp.lt.s32.totalorder %s170, 127
          %s172 = scalar_select %p171, %s170, 127
          %s173 = smul.addr %s172, 8
          %s174 = scalar_lea.vmem %s1, %s173
          %s175 = smul.u32 64, %s13
        $region32: #{bottleneck_forward.7} parent=23 // pred_fallthru
          _
      $region24: #{bottleneck_forward.7} parent=5 // pred_fallthru
        _
      %p176 = scmp.le.s32.totalorder 1, %s13
      %p177 = scmp.lt.s32.totalorder %s13, 3
      %p178 = pnand %p176, %p177
      %p179 = pneg %p178
      // Predicated region
      $region33: #{bottleneck_forward.7} parent=5 // pred_check
        _
      $region34: #{bottleneck_forward.7} parent=5 // pred_check_branch
        %181 = sbr.rel (%p178) target = $region36
      $region35: #{bottleneck_forward.7} parent=5 // pred_region
        %s182 = ssub.s32 %s13, 1
        %s183 = smul.u32 64, %s18
        %p184 = scmp.lt.s32.totalorder %s183, 127
        %s185 = scalar_select %p184, %s183, 127
        %s186 = smul.addr %s185, 4
        %s187 = scalar_lea.vmem %s0, %s186
        %p188 = pneg %p39
        %p189 = pneg %p36
        %s190 = smul.u32 64, %s18
        %p191 = scmp.lt.s32.totalorder %s190, 127
        %s192 = scalar_select %p191, %s190, 127
        %s193 = smul.addr %s192, 8
        %s194 = scalar_lea.vmem %s1, %s193
        %p195 = pneg %p65
        %p196 = pneg %p62
        %p197 = pneg %p86
        %p198 = pneg %p83
        %p199 = pneg %p107
        %p200 = pneg %p104
        %p201 = pneg %p133
        %p202 = pneg %p130
        %s203 = sand.u32 %s120, 1
        %s204 = scalar_lea.sflag [#allocation3], %s203
        %s205 = sand.u32 %s120, 1
        %s206 = smul.addr %s205, 512
        %s207 = scalar_lea.vmem [#allocation2], %s206
        %s208 = smul.u32 64, %s18
        %p209 = scmp.lt.s32.totalorder %s208, 127
        %s210 = scalar_select %p209, %s208, 127
        %s211 = smul.addr %s210, 4
        %s212 = scalar_lea.vmem %s0, %s211
        %s213 = smul.u32 64, %s18
        %s214 = smul.u32 64, %s18
        %p215 = scmp.lt.s32.totalorder %s214, 127
        %s216 = scalar_select %p215, %s214, 127
        %s217 = smul.addr %s216, 8
        %s218 = scalar_lea.vmem %s1, %s217
        %s219 = smul.u32 64, %s18
        %s220 = smul.u32 64, %s18
        %v221 = vld [vmem:[%s212] sm:$0xf]
        %v222 = vld [vmem:[%s212 + $0x4] sm:$0xf]
        %v223 = vld [vmem:[%s212 + $0x8] sm:$0xf]
        %v224 = vld [vmem:[%s212 + $0xc] sm:$0xf]
        %v225 = vld [vmem:[%s212 + $0x10] sm:$0xf]
        %v226 = vld [vmem:[%s212 + $0x14] sm:$0xf]
        %v227 = vld [vmem:[%s212 + $0x18] sm:$0xf]
        %v228 = vld [vmem:[%s212 + $0x1c] sm:$0xf]
        %v229 = vld [vmem:[%s212 + $0x20] sm:$0xf]
        %v230 = vld [vmem:[%s212 + $0x24] sm:$0xf]
        %v231 = vld [vmem:[%s212 + $0x28] sm:$0xf]
        %v232 = vld [vmem:[%s212 + $0x2c] sm:$0xf]
        %v233 = vld [vmem:[%s212 + $0x30] sm:$0xf]
        %v234 = vld [vmem:[%s212 + $0x34] sm:$0xf]
        %v235 = vld [vmem:[%s212 + $0x38] sm:$0xf]
        %v236 = vld [vmem:[%s212 + $0x3c] sm:$0xf]
        %v237 = vld [vmem:[%s212 + $0x40] sm:$0xf]
        %v238 = vld [vmem:[%s212 + $0x44] sm:$0xf]
        %v239 = vld [vmem:[%s212 + $0x48] sm:$0xf]
        %v240 = vld [vmem:[%s212 + $0x4c] sm:$0xf]
        %v241 = vld [vmem:[%s212 + $0x50] sm:$0xf]
        %v242 = vld [vmem:[%s212 + $0x54] sm:$0xf]
        %v243 = vld [vmem:[%s212 + $0x58] sm:$0xf]
        %v244 = vld [vmem:[%s212 + $0x5c] sm:$0xf]
        %v245 = vld [vmem:[%s212 + $0x60] sm:$0xf]
        %v246 = vld [vmem:[%s212 + $0x64] sm:$0xf]
        %v247 = vld [vmem:[%s212 + $0x68] sm:$0xf]
        %v248 = vld [vmem:[%s212 + $0x6c] sm:$0xf]
        %v249 = vld [vmem:[%s212 + $0x70] sm:$0xf]
        %v250 = vld [vmem:[%s212 + $0x74] sm:$0xf]
        %v251 = vld [vmem:[%s212 + $0x78] sm:$0xf]
        %v252 = vld [vmem:[%s212 + $0x7c] sm:$0xf]
        %v253 = vld [vmem:[%s212 + $0x80] sm:$0xf]
        %v254 = vld [vmem:[%s212 + $0x84] sm:$0xf]
        %v255 = vld [vmem:[%s212 + $0x88] sm:$0xf]
        %v256 = vld [vmem:[%s212 + $0x8c] sm:$0xf]
        %v257 = vld [vmem:[%s212 + $0x90] sm:$0xf]
        %v258 = vld [vmem:[%s212 + $0x94] sm:$0xf]
        %v259 = vld [vmem:[%s212 + $0x98] sm:$0xf]
        %v260 = vld [vmem:[%s212 + $0x9c] sm:$0xf]
        %v261 = vld [vmem:[%s212 + $0xa0] sm:$0xf]
        %v262 = vld [vmem:[%s212 + $0xa4] sm:$0xf]
        %v263 = vld [vmem:[%s212 + $0xa8] sm:$0xf]
        %v264 = vld [vmem:[%s212 + $0xac] sm:$0xf]
        %v265 = vld [vmem:[%s212 + $0xb0] sm:$0xf]
        %v266 = vld [vmem:[%s212 + $0xb4] sm:$0xf]
        %v267 = vld [vmem:[%s212 + $0xb8] sm:$0xf]
        %v268 = vld [vmem:[%s212 + $0xbc] sm:$0xf]
        %v269 = vld [vmem:[%s212 + $0xc0] sm:$0xf]
        %v270 = vld [vmem:[%s212 + $0xc4] sm:$0xf]
        %v271 = vld [vmem:[%s212 + $0xc8] sm:$0xf]
        %v272 = vld [vmem:[%s212 + $0xcc] sm:$0xf]
        %v273 = vld [vmem:[%s212 + $0xd0] sm:$0xf]
        %v274 = vld [vmem:[%s212 + $0xd4] sm:$0xf]
        %v275 = vld [vmem:[%s212 + $0xd8] sm:$0xf]
        %v276 = vld [vmem:[%s212 + $0xdc] sm:$0xf]
        %v277 = vld [vmem:[%s212 + $0xe0] sm:$0xf]
        %v278 = vld [vmem:[%s212 + $0xe4] sm:$0xf]
        %v279 = vld [vmem:[%s212 + $0xe8] sm:$0xf]
        %v280 = vld [vmem:[%s212 + $0xec] sm:$0xf]
        %v281 = vld [vmem:[%s212 + $0xf0] sm:$0xf]
        %v282 = vld [vmem:[%s212 + $0xf4] sm:$0xf]
        %v283 = vld [vmem:[%s212 + $0xf8] sm:$0xf]
        %v284 = vld [vmem:[%s212 + $0xfc] sm:$0xf]
        %v285 = vunpack.c.l.bf16 %v221
        %v286 = vunpack.c.l.bf16 %v222
        %v287 = vunpack.c.l.bf16 %v223
        %v288 = vunpack.c.l.bf16 %v224
        %v289 = vunpack.c.l.bf16 %v225
        %v290 = vunpack.c.l.bf16 %v226
        %v291 = vunpack.c.l.bf16 %v227
        %v292 = vunpack.c.l.bf16 %v228
        %v293 = vunpack.c.l.bf16 %v229
        %v294 = vunpack.c.l.bf16 %v230
        %v295 = vunpack.c.l.bf16 %v231
        %v296 = vunpack.c.l.bf16 %v232
        %v297 = vunpack.c.l.bf16 %v233
        %v298 = vunpack.c.l.bf16 %v234
        %v299 = vunpack.c.l.bf16 %v235
        %v300 = vunpack.c.l.bf16 %v236
        %v301 = vunpack.c.l.bf16 %v237
        %v302 = vunpack.c.l.bf16 %v238
        %v303 = vunpack.c.l.bf16 %v239
        %v304 = vunpack.c.l.bf16 %v240
        %v305 = vunpack.c.l.bf16 %v241
        %v306 = vunpack.c.l.bf16 %v242
        %v307 = vunpack.c.l.bf16 %v243
        %v308 = vunpack.c.l.bf16 %v244
        %v309 = vunpack.c.l.bf16 %v245
        %v310 = vunpack.c.l.bf16 %v246
        %v311 = vunpack.c.l.bf16 %v247
        %v312 = vunpack.c.l.bf16 %v248
        %v313 = vunpack.c.l.bf16 %v249
        %v314 = vunpack.c.l.bf16 %v250
        %v315 = vunpack.c.l.bf16 %v251
        %v316 = vunpack.c.l.bf16 %v252
        %v317 = vunpack.c.l.bf16 %v253
        %v318 = vunpack.c.l.bf16 %v254
        %v319 = vunpack.c.l.bf16 %v255
        %v320 = vunpack.c.l.bf16 %v256
        %v321 = vunpack.c.l.bf16 %v257
        %v322 = vunpack.c.l.bf16 %v258
        %v323 = vunpack.c.l.bf16 %v259
        %v324 = vunpack.c.l.bf16 %v260
        %v325 = vunpack.c.l.bf16 %v261
        %v326 = vunpack.c.l.bf16 %v262
        %v327 = vunpack.c.l.bf16 %v263
        %v328 = vunpack.c.l.bf16 %v264
        %v329 = vunpack.c.l.bf16 %v265
        %v330 = vunpack.c.l.bf16 %v266
        %v331 = vunpack.c.l.bf16 %v267
        %v332 = vunpack.c.l.bf16 %v268
        %v333 = vunpack.c.l.bf16 %v269
        %v334 = vunpack.c.l.bf16 %v270
        %v335 = vunpack.c.l.bf16 %v271
        %v336 = vunpack.c.l.bf16 %v272
        %v337 = vunpack.c.l.bf16 %v273
        %v338 = vunpack.c.l.bf16 %v274
        %v339 = vunpack.c.l.bf16 %v275
        %v340 = vunpack.c.l.bf16 %v276
        %v341 = vunpack.c.l.bf16 %v277
        %v342 = vunpack.c.l.bf16 %v278
        %v343 = vunpack.c.l.bf16 %v279
        %v344 = vunpack.c.l.bf16 %v280
        %v345 = vunpack.c.l.bf16 %v281
        %v346 = vunpack.c.l.bf16 %v282
        %v347 = vunpack.c.l.bf16 %v283
        %v348 = vunpack.c.l.bf16 %v284
        %v349 = vld [vmem:[%s2] sm:$0x1]
        %v351 = vlaneseq
        %v352 = vshrl.u32 %v351, 7
        %v353 = vsub.s32 0, %v352
        %v354 = vrot.slane %v349, %v353
        %v356 = vmul.f32 %v285, %v354
        %v357 = vmul.f32 %v286, %v354
        %v358 = vmul.f32 %v287, %v354
        %v359 = vmul.f32 %v288, %v354
        %v360 = vmul.f32 %v289, %v354
        %v361 = vmul.f32 %v290, %v354
        %v362 = vmul.f32 %v291, %v354
        %v363 = vmul.f32 %v292, %v354
        %v364 = vmul.f32 %v293, %v354
        %v365 = vmul.f32 %v294, %v354
        %v366 = vmul.f32 %v295, %v354
        %v367 = vmul.f32 %v296, %v354
        %v368 = vmul.f32 %v297, %v354
        %v369 = vmul.f32 %v298, %v354
        %v370 = vmul.f32 %v299, %v354
        %v371 = vmul.f32 %v300, %v354
        %v372 = vmul.f32 %v301, %v354
        %v373 = vmul.f32 %v302, %v354
        %v374 = vmul.f32 %v303, %v354
        %v375 = vmul.f32 %v304, %v354
        %v376 = vmul.f32 %v305, %v354
        %v377 = vmul.f32 %v306, %v354
        %v378 = vmul.f32 %v307, %v354
        %v379 = vmul.f32 %v308, %v354
        %v380 = vmul.f32 %v309, %v354
        %v381 = vmul.f32 %v310, %v354
        %v382 = vmul.f32 %v311, %v354
        %v383 = vmul.f32 %v312, %v354
        %v384 = vmul.f32 %v313, %v354
        %v385 = vmul.f32 %v314, %v354
        %v386 = vmul.f32 %v315, %v354
        %v387 = vmul.f32 %v316, %v354
        %v388 = vmul.f32 %v317, %v354
        %v389 = vmul.f32 %v318, %v354
        %v390 = vmul.f32 %v319, %v354
        %v391 = vmul.f32 %v320, %v354
        %v392 = vmul.f32 %v321, %v354
        %v393 = vmul.f32 %v322, %v354
        %v394 = vmul.f32 %v323, %v354
        %v395 = vmul.f32 %v324, %v354
        %v396 = vmul.f32 %v325, %v354
        %v397 = vmul.f32 %v326, %v354
        %v398 = vmul.f32 %v327, %v354
        %v399 = vmul.f32 %v328, %v354
        %v400 = vmul.f32 %v329, %v354
        %v401 = vmul.f32 %v330, %v354
        %v402 = vmul.f32 %v331, %v354
        %v403 = vmul.f32 %v332, %v354
        %v404 = vmul.f32 %v333, %v354
        %v405 = vmul.f32 %v334, %v354
        %v406 = vmul.f32 %v335, %v354
        %v407 = vmul.f32 %v336, %v354
        %v408 = vmul.f32 %v337, %v354
        %v409 = vmul.f32 %v338, %v354
        %v410 = vmul.f32 %v339, %v354
        %v411 = vmul.f32 %v340, %v354
        %v412 = vmul.f32 %v341, %v354
        %v413 = vmul.f32 %v342, %v354
        %v414 = vmul.f32 %v343, %v354
        %v415 = vmul.f32 %v344, %v354
        %v416 = vmul.f32 %v345, %v354
        %v417 = vmul.f32 %v346, %v354
        %v418 = vmul.f32 %v347, %v354
        %v419 = vmul.f32 %v348, %v354
        %v420 = vld [vmem:[%s3] sm:$0x1]
        %v422 = vlaneseq
        %v423 = vshrl.u32 %v422, 7
        %v424 = vsub.s32 0, %v423
        %v425 = vrot.slane %v420, %v424
        %v427 = vadd.f32 %v356, %v425
        %v428 = vadd.f32 %v357, %v425
        %v429 = vadd.f32 %v358, %v425
        %v430 = vadd.f32 %v359, %v425
        %v431 = vadd.f32 %v360, %v425
        %v432 = vadd.f32 %v361, %v425
        %v433 = vadd.f32 %v362, %v425
        %v434 = vadd.f32 %v363, %v425
        %v435 = vadd.f32 %v364, %v425
        %v436 = vadd.f32 %v365, %v425
        %v437 = vadd.f32 %v366, %v425
        %v438 = vadd.f32 %v367, %v425
        %v439 = vadd.f32 %v368, %v425
        %v440 = vadd.f32 %v369, %v425
        %v441 = vadd.f32 %v370, %v425
        %v442 = vadd.f32 %v371, %v425
        %v443 = vadd.f32 %v372, %v425
        %v444 = vadd.f32 %v373, %v425
        %v445 = vadd.f32 %v374, %v425
        %v446 = vadd.f32 %v375, %v425
        %v447 = vadd.f32 %v376, %v425
        %v448 = vadd.f32 %v377, %v425
        %v449 = vadd.f32 %v378, %v425
        %v450 = vadd.f32 %v379, %v425
        %v451 = vadd.f32 %v380, %v425
        %v452 = vadd.f32 %v381, %v425
        %v453 = vadd.f32 %v382, %v425
        %v454 = vadd.f32 %v383, %v425
        %v455 = vadd.f32 %v384, %v425
        %v456 = vadd.f32 %v385, %v425
        %v457 = vadd.f32 %v386, %v425
        %v458 = vadd.f32 %v387, %v425
        %v459 = vadd.f32 %v388, %v425
        %v460 = vadd.f32 %v389, %v425
        %v461 = vadd.f32 %v390, %v425
        %v462 = vadd.f32 %v391, %v425
        %v463 = vadd.f32 %v392, %v425
        %v464 = vadd.f32 %v393, %v425
        %v465 = vadd.f32 %v394, %v425
        %v466 = vadd.f32 %v395, %v425
        %v467 = vadd.f32 %v396, %v425
        %v468 = vadd.f32 %v397, %v425
        %v469 = vadd.f32 %v398, %v425
        %v470 = vadd.f32 %v399, %v425
        %v471 = vadd.f32 %v400, %v425
        %v472 = vadd.f32 %v401, %v425
        %v473 = vadd.f32 %v402, %v425
        %v474 = vadd.f32 %v403, %v425
        %v475 = vadd.f32 %v404, %v425
        %v476 = vadd.f32 %v405, %v425
        %v477 = vadd.f32 %v406, %v425
        %v478 = vadd.f32 %v407, %v425
        %v479 = vadd.f32 %v408, %v425
        %v480 = vadd.f32 %v409, %v425
        %v481 = vadd.f32 %v410, %v425
        %v482 = vadd.f32 %v411, %v425
        %v483 = vadd.f32 %v412, %v425
        %v484 = vadd.f32 %v413, %v425
        %v485 = vadd.f32 %v414, %v425
        %v486 = vadd.f32 %v415, %v425
        %v487 = vadd.f32 %v416, %v425
        %v488 = vadd.f32 %v417, %v425
        %v489 = vadd.f32 %v418, %v425
        %v490 = vadd.f32 %v419, %v425
        %v491 = vld [vmem:[%s218] sm:$0xff]
        %v492 = vld [vmem:[%s218 + $0x8] sm:$0xff]
        %v493 = vld [vmem:[%s218 + $0x10] sm:$0xff]
        %v494 = vld [vmem:[%s218 + $0x18] sm:$0xff]
        %v495 = vld [vmem:[%s218 + $0x20] sm:$0xff]
        %v496 = vld [vmem:[%s218 + $0x28] sm:$0xff]
        %v497 = vld [vmem:[%s218 + $0x30] sm:$0xff]
        %v498 = vld [vmem:[%s218 + $0x38] sm:$0xff]
        %v499 = vld [vmem:[%s218 + $0x40] sm:$0xff]
        %v500 = vld [vmem:[%s218 + $0x48] sm:$0xff]
        %v501 = vld [vmem:[%s218 + $0x50] sm:$0xff]
        %v502 = vld [vmem:[%s218 + $0x58] sm:$0xff]
        %v503 = vld [vmem:[%s218 + $0x60] sm:$0xff]
        %v504 = vld [vmem:[%s218 + $0x68] sm:$0xff]
        %v505 = vld [vmem:[%s218 + $0x70] sm:$0xff]
        %v506 = vld [vmem:[%s218 + $0x78] sm:$0xff]
        %v507 = vld [vmem:[%s218 + $0x80] sm:$0xff]
        %v508 = vld [vmem:[%s218 + $0x88] sm:$0xff]
        %v509 = vld [vmem:[%s218 + $0x90] sm:$0xff]
        %v510 = vld [vmem:[%s218 + $0x98] sm:$0xff]
        %v511 = vld [vmem:[%s218 + $0xa0] sm:$0xff]
        %v512 = vld [vmem:[%s218 + $0xa8] sm:$0xff]
        %v513 = vld [vmem:[%s218 + $0xb0] sm:$0xff]
        %v514 = vld [vmem:[%s218 + $0xb8] sm:$0xff]
        %v515 = vld [vmem:[%s218 + $0xc0] sm:$0xff]
        %v516 = vld [vmem:[%s218 + $0xc8] sm:$0xff]
        %v517 = vld [vmem:[%s218 + $0xd0] sm:$0xff]
        %v518 = vld [vmem:[%s218 + $0xd8] sm:$0xff]
        %v519 = vld [vmem:[%s218 + $0xe0] sm:$0xff]
        %v520 = vld [vmem:[%s218 + $0xe8] sm:$0xff]
        %v521 = vld [vmem:[%s218 + $0xf0] sm:$0xff]
        %v522 = vld [vmem:[%s218 + $0xf8] sm:$0xff]
        %v523 = vld [vmem:[%s218 + $0x100] sm:$0xff]
        %v524 = vld [vmem:[%s218 + $0x108] sm:$0xff]
        %v525 = vld [vmem:[%s218 + $0x110] sm:$0xff]
        %v526 = vld [vmem:[%s218 + $0x118] sm:$0xff]
        %v527 = vld [vmem:[%s218 + $0x120] sm:$0xff]
        %v528 = vld [vmem:[%s218 + $0x128] sm:$0xff]
        %v529 = vld [vmem:[%s218 + $0x130] sm:$0xff]
        %v530 = vld [vmem:[%s218 + $0x138] sm:$0xff]
        %v531 = vld [vmem:[%s218 + $0x140] sm:$0xff]
        %v532 = vld [vmem:[%s218 + $0x148] sm:$0xff]
        %v533 = vld [vmem:[%s218 + $0x150] sm:$0xff]
        %v534 = vld [vmem:[%s218 + $0x158] sm:$0xff]
        %v535 = vld [vmem:[%s218 + $0x160] sm:$0xff]
        %v536 = vld [vmem:[%s218 + $0x168] sm:$0xff]
        %v537 = vld [vmem:[%s218 + $0x170] sm:$0xff]
        %v538 = vld [vmem:[%s218 + $0x178] sm:$0xff]
        %v539 = vld [vmem:[%s218 + $0x180] sm:$0xff]
        %v540 = vld [vmem:[%s218 + $0x188] sm:$0xff]
        %v541 = vld [vmem:[%s218 + $0x190] sm:$0xff]
        %v542 = vld [vmem:[%s218 + $0x198] sm:$0xff]
        %v543 = vld [vmem:[%s218 + $0x1a0] sm:$0xff]
        %v544 = vld [vmem:[%s218 + $0x1a8] sm:$0xff]
        %v545 = vld [vmem:[%s218 + $0x1b0] sm:$0xff]
        %v546 = vld [vmem:[%s218 + $0x1b8] sm:$0xff]
        %v547 = vld [vmem:[%s218 + $0x1c0] sm:$0xff]
        %v548 = vld [vmem:[%s218 + $0x1c8] sm:$0xff]
        %v549 = vld [vmem:[%s218 + $0x1d0] sm:$0xff]
        %v550 = vld [vmem:[%s218 + $0x1d8] sm:$0xff]
        %v551 = vld [vmem:[%s218 + $0x1e0] sm:$0xff]
        %v552 = vld [vmem:[%s218 + $0x1e8] sm:$0xff]
        %v553 = vld [vmem:[%s218 + $0x1f0] sm:$0xff]
        %v554 = vld [vmem:[%s218 + $0x1f8] sm:$0xff]
        %v555 = vadd.f32 %v427, %v491
        %v556 = vadd.f32 %v428, %v492
        %v557 = vadd.f32 %v429, %v493
        %v558 = vadd.f32 %v430, %v494
        %v559 = vadd.f32 %v431, %v495
        %v560 = vadd.f32 %v432, %v496
        %v561 = vadd.f32 %v433, %v497
        %v562 = vadd.f32 %v434, %v498
        %v563 = vadd.f32 %v435, %v499
        %v564 = vadd.f32 %v436, %v500
        %v565 = vadd.f32 %v437, %v501
        %v566 = vadd.f32 %v438, %v502
        %v567 = vadd.f32 %v439, %v503
        %v568 = vadd.f32 %v440, %v504
        %v569 = vadd.f32 %v441, %v505
        %v570 = vadd.f32 %v442, %v506
        %v571 = vadd.f32 %v443, %v507
        %v572 = vadd.f32 %v444, %v508
        %v573 = vadd.f32 %v445, %v509
        %v574 = vadd.f32 %v446, %v510
        %v575 = vadd.f32 %v447, %v511
        %v576 = vadd.f32 %v448, %v512
        %v577 = vadd.f32 %v449, %v513
        %v578 = vadd.f32 %v450, %v514
        %v579 = vadd.f32 %v451, %v515
        %v580 = vadd.f32 %v452, %v516
        %v581 = vadd.f32 %v453, %v517
        %v582 = vadd.f32 %v454, %v518
        %v583 = vadd.f32 %v455, %v519
        %v584 = vadd.f32 %v456, %v520
        %v585 = vadd.f32 %v457, %v521
        %v586 = vadd.f32 %v458, %v522
        %v587 = vadd.f32 %v459, %v523
        %v588 = vadd.f32 %v460, %v524
        %v589 = vadd.f32 %v461, %v525
        %v590 = vadd.f32 %v462, %v526
        %v591 = vadd.f32 %v463, %v527
        %v592 = vadd.f32 %v464, %v528
        %v593 = vadd.f32 %v465, %v529
        %v594 = vadd.f32 %v466, %v530
        %v595 = vadd.f32 %v467, %v531
        %v596 = vadd.f32 %v468, %v532
        %v597 = vadd.f32 %v469, %v533
        %v598 = vadd.f32 %v470, %v534
        %v599 = vadd.f32 %v471, %v535
        %v600 = vadd.f32 %v472, %v536
        %v601 = vadd.f32 %v473, %v537
        %v602 = vadd.f32 %v474, %v538
        %v603 = vadd.f32 %v475, %v539
        %v604 = vadd.f32 %v476, %v540
        %v605 = vadd.f32 %v477, %v541
        %v606 = vadd.f32 %v478, %v542
        %v607 = vadd.f32 %v479, %v543
        %v608 = vadd.f32 %v480, %v544
        %v609 = vadd.f32 %v481, %v545
        %v610 = vadd.f32 %v482, %v546
        %v611 = vadd.f32 %v483, %v547
        %v612 = vadd.f32 %v484, %v548
        %v613 = vadd.f32 %v485, %v549
        %v614 = vadd.f32 %v486, %v550
        %v615 = vadd.f32 %v487, %v551
        %v616 = vadd.f32 %v488, %v552
        %v617 = vadd.f32 %v489, %v553
        %v618 = vadd.f32 %v490, %v554
        %v619 = vmax.f32 %v555, 0.0
        %v620 = vmax.f32 %v556, 0.0
        %v621 = vmax.f32 %v557, 0.0
        %v622 = vmax.f32 %v558, 0.0
        %v623 = vmax.f32 %v559, 0.0
        %v624 = vmax.f32 %v560, 0.0
        %v625 = vmax.f32 %v561, 0.0
        %v626 = vmax.f32 %v562, 0.0
        %v627 = vmax.f32 %v563, 0.0
        %v628 = vmax.f32 %v564, 0.0
        %v629 = vmax.f32 %v565, 0.0
        %v630 = vmax.f32 %v566, 0.0
        %v631 = vmax.f32 %v567, 0.0
        %v632 = vmax.f32 %v568, 0.0
        %v633 = vmax.f32 %v569, 0.0
        %v634 = vmax.f32 %v570, 0.0
        %v635 = vmax.f32 %v571, 0.0
        %v636 = vmax.f32 %v572, 0.0
        %v637 = vmax.f32 %v573, 0.0
        %v638 = vmax.f32 %v574, 0.0
        %v639 = vmax.f32 %v575, 0.0
        %v640 = vmax.f32 %v576, 0.0
        %v641 = vmax.f32 %v577, 0.0
        %v642 = vmax.f32 %v578, 0.0
        %v643 = vmax.f32 %v579, 0.0
        %v644 = vmax.f32 %v580, 0.0
        %v645 = vmax.f32 %v581, 0.0
        %v646 = vmax.f32 %v582, 0.0
        %v647 = vmax.f32 %v583, 0.0
        %v648 = vmax.f32 %v584, 0.0
        %v649 = vmax.f32 %v585, 0.0
        %v650 = vmax.f32 %v586, 0.0
        %v651 = vmax.f32 %v587, 0.0
        %v652 = vmax.f32 %v588, 0.0
        %v653 = vmax.f32 %v589, 0.0
        %v654 = vmax.f32 %v590, 0.0
        %v655 = vmax.f32 %v591, 0.0
        %v656 = vmax.f32 %v592, 0.0
        %v657 = vmax.f32 %v593, 0.0
        %v658 = vmax.f32 %v594, 0.0
        %v659 = vmax.f32 %v595, 0.0
        %v660 = vmax.f32 %v596, 0.0
        %v661 = vmax.f32 %v597, 0.0
        %v662 = vmax.f32 %v598, 0.0
        %v663 = vmax.f32 %v599, 0.0
        %v664 = vmax.f32 %v600, 0.0
        %v665 = vmax.f32 %v601, 0.0
        %v666 = vmax.f32 %v602, 0.0
        %v667 = vmax.f32 %v603, 0.0
        %v668 = vmax.f32 %v604, 0.0
        %v669 = vmax.f32 %v605, 0.0
        %v670 = vmax.f32 %v606, 0.0
        %v671 = vmax.f32 %v607, 0.0
        %v672 = vmax.f32 %v608, 0.0
        %v673 = vmax.f32 %v609, 0.0
        %v674 = vmax.f32 %v610, 0.0
        %v675 = vmax.f32 %v611, 0.0
        %v676 = vmax.f32 %v612, 0.0
        %v677 = vmax.f32 %v613, 0.0
        %v678 = vmax.f32 %v614, 0.0
        %v679 = vmax.f32 %v615, 0.0
        %v680 = vmax.f32 %v616, 0.0
        %v681 = vmax.f32 %v617, 0.0
        %v682 = vmax.f32 %v618, 0.0
        %683 = vst [vmem:[%s207] sm:$0xff] %v619
        %684 = vst [vmem:[%s207 + $0x8] sm:$0xff] %v620
        %685 = vst [vmem:[%s207 + $0x10] sm:$0xff] %v621
        %686 = vst [vmem:[%s207 + $0x18] sm:$0xff] %v622
        %687 = vst [vmem:[%s207 + $0x20] sm:$0xff] %v623
        %688 = vst [vmem:[%s207 + $0x28] sm:$0xff] %v624
        %689 = vst [vmem:[%s207 + $0x30] sm:$0xff] %v625
        %690 = vst [vmem:[%s207 + $0x38] sm:$0xff] %v626
        %691 = vst [vmem:[%s207 + $0x40] sm:$0xff] %v627
        %692 = vst [vmem:[%s207 + $0x48] sm:$0xff] %v628
        %693 = vst [vmem:[%s207 + $0x50] sm:$0xff] %v629
        %694 = vst [vmem:[%s207 + $0x58] sm:$0xff] %v630
        %695 = vst [vmem:[%s207 + $0x60] sm:$0xff] %v631
        %696 = vst [vmem:[%s207 + $0x68] sm:$0xff] %v632
        %697 = vst [vmem:[%s207 + $0x70] sm:$0xff] %v633
        %698 = vst [vmem:[%s207 + $0x78] sm:$0xff] %v634
        %699 = vst [vmem:[%s207 + $0x80] sm:$0xff] %v635
        %700 = vst [vmem:[%s207 + $0x88] sm:$0xff] %v636
        %701 = vst [vmem:[%s207 + $0x90] sm:$0xff] %v637
        %702 = vst [vmem:[%s207 + $0x98] sm:$0xff] %v638
        %703 = vst [vmem:[%s207 + $0xa0] sm:$0xff] %v639
        %704 = vst [vmem:[%s207 + $0xa8] sm:$0xff] %v640
        %705 = vst [vmem:[%s207 + $0xb0] sm:$0xff] %v641
        %706 = vst [vmem:[%s207 + $0xb8] sm:$0xff] %v642
        %707 = vst [vmem:[%s207 + $0xc0] sm:$0xff] %v643
        %708 = vst [vmem:[%s207 + $0xc8] sm:$0xff] %v644
        %709 = vst [vmem:[%s207 + $0xd0] sm:$0xff] %v645
        %710 = vst [vmem:[%s207 + $0xd8] sm:$0xff] %v646
        %711 = vst [vmem:[%s207 + $0xe0] sm:$0xff] %v647
        %712 = vst [vmem:[%s207 + $0xe8] sm:$0xff] %v648
        %713 = vst [vmem:[%s207 + $0xf0] sm:$0xff] %v649
        %714 = vst [vmem:[%s207 + $0xf8] sm:$0xff] %v650
        %715 = vst [vmem:[%s207 + $0x100] sm:$0xff] %v651
        %716 = vst [vmem:[%s207 + $0x108] sm:$0xff] %v652
        %717 = vst [vmem:[%s207 + $0x110] sm:$0xff] %v653
        %718 = vst [vmem:[%s207 + $0x118] sm:$0xff] %v654
        %719 = vst [vmem:[%s207 + $0x120] sm:$0xff] %v655
        %720 = vst [vmem:[%s207 + $0x128] sm:$0xff] %v656
        %721 = vst [vmem:[%s207 + $0x130] sm:$0xff] %v657
        %722 = vst [vmem:[%s207 + $0x138] sm:$0xff] %v658
        %723 = vst [vmem:[%s207 + $0x140] sm:$0xff] %v659
        %724 = vst [vmem:[%s207 + $0x148] sm:$0xff] %v660
        %725 = vst [vmem:[%s207 + $0x150] sm:$0xff] %v661
        %726 = vst [vmem:[%s207 + $0x158] sm:$0xff] %v662
        %727 = vst [vmem:[%s207 + $0x160] sm:$0xff] %v663
        %728 = vst [vmem:[%s207 + $0x168] sm:$0xff] %v664
        %729 = vst [vmem:[%s207 + $0x170] sm:$0xff] %v665
        %730 = vst [vmem:[%s207 + $0x178] sm:$0xff] %v666
        %731 = vst [vmem:[%s207 + $0x180] sm:$0xff] %v667
        %732 = vst [vmem:[%s207 + $0x188] sm:$0xff] %v668
        %733 = vst [vmem:[%s207 + $0x190] sm:$0xff] %v669
        %734 = vst [vmem:[%s207 + $0x198] sm:$0xff] %v670
        %735 = vst [vmem:[%s207 + $0x1a0] sm:$0xff] %v671
        %736 = vst [vmem:[%s207 + $0x1a8] sm:$0xff] %v672
        %737 = vst [vmem:[%s207 + $0x1b0] sm:$0xff] %v673
        %738 = vst [vmem:[%s207 + $0x1b8] sm:$0xff] %v674
        %739 = vst [vmem:[%s207 + $0x1c0] sm:$0xff] %v675
        %740 = vst [vmem:[%s207 + $0x1c8] sm:$0xff] %v676
        %741 = vst [vmem:[%s207 + $0x1d0] sm:$0xff] %v677
        %742 = vst [vmem:[%s207 + $0x1d8] sm:$0xff] %v678
        %743 = vst [vmem:[%s207 + $0x1e0] sm:$0xff] %v679
        %744 = vst [vmem:[%s207 + $0x1e8] sm:$0xff] %v680
        %745 = vst [vmem:[%s207 + $0x1f0] sm:$0xff] %v681
        %746 = vst [vmem:[%s207 + $0x1f8] sm:$0xff] %v682
        %s747 = sand.u32 %s120, 1
        %s748 = scalar_lea.sflag [#allocation3], %s747
        %s749 = sand.u32 %s120, 1
        %s750 = smul.addr %s749, 512
        %s751 = scalar_lea.vmem [#allocation2], %s750
        // Predicated region
        $region37: #{bottleneck_forward.7} parent=35 // pred_check
          %p752 = pneg %p130
        $region38: #{bottleneck_forward.7} parent=35 // pred_check_branch
          %754 = sbr.rel (%p752) target = $region40
        $region39: #{bottleneck_forward.7} parent=35 // pred_region
          %s755 = smul.u32 64, %s18
          %s757 = ssub.s32 8192, 8192
          %758 = vsyncadd %s748, %s757
          %s759 = smul.addr %s755, 128
          %s760 = scalar_lea.hbm %s4, %s759
          %s761 = sshll.u32 %s751, 4
          %s762 = int_to_ptr.vmem [resolvable:$true] %s761
          %767 = dma.vmem_to_hbm [thread:$0]  %s762, 8192, %s760, %s748, 128, 128, 8
        $region40: #{bottleneck_forward.7} parent=35 // pred_fallthru
          _
      $region36: #{bottleneck_forward.7} parent=5 // pred_fallthru
        _
      %p768 = scmp.le.s32.totalorder 2, %s13
      // Predicated region
      $region41: #{bottleneck_forward.7} parent=5 // pred_check
        %p769 = pneg %p768
      $region42: #{bottleneck_forward.7} parent=5 // pred_check_branch
        %771 = sbr.rel (%p769) target = $region44
      $region43: #{bottleneck_forward.7} parent=5 // pred_region
        %s772 = ssub.s32 %s13, 2
        // Predicated region
        $region45: #{bottleneck_forward.7} parent=43 // pred_check
          %p773 = pneg %p136
        $region46: #{bottleneck_forward.7} parent=43 // pred_check_branch
          %775 = sbr.rel (%p773) target = $region48
        $region47: #{bottleneck_forward.7} parent=43 // pred_region
          %s776 = sand.u32 %s121, 1
          %s777 = scalar_lea.sflag [#allocation3], %s776
          %s778 = sand.u32 %s121, 1
          %s779 = smul.addr %s778, 512
          %s780 = scalar_lea.vmem [#allocation2], %s779
          %781 = dma.done %s777, 8192
        $region48: #{bottleneck_forward.7} parent=43 // pred_fallthru
          _
      $region44: #{bottleneck_forward.7} parent=5 // pred_fallthru
        _
    $region6: #{bottleneck_forward.7} parent=1 // loop_footer
      %s17 = sadd.s32 1, %s13
    $region7: #{bottleneck_forward.7} parent=1 // loop_footer_branch
      %12 = sbr.rel target = $region3
    $region8: #{bottleneck_forward.7} parent=1 // loop_exit
      _
    %782 = vsyncpa [#allocation3], 1
    %s783 = scalar_lea.sflag [#allocation3], 1
    %784 = vsyncpa %s783, 1

// kernel: bottleneck_forward.6
$region0: #{bottleneck_forward.6}
  #allocation0 [shape = 'u32[]', space=smem, size = 0x4, offset = 0x4, fixed_abs, tag = 'smem constant byte address 0x4 - core index']
  #allocation1 [shape = 'u32[144,128]{1,0:T(1,128)}', space=vmem, size = 0x12000, scoped, tag = 'internal scratch']
  %s0 = inlined_call_operand.vmem [shape: bf16[1024,128], index: 0, kind: input, shape index: {}]
  %s1 = inlined_call_operand.vmem [shape: f32[1,128], index: 1, kind: input, shape index: {}]
  %s2 = inlined_call_operand.vmem [shape: f32[1,128], index: 2, kind: input, shape index: {}]
  %s3 = inlined_call_operand.vmem [shape: bf16[128,128], index: 3, kind: input, shape index: {}]
  %s4 = inlined_call_operand.vmem [shape: bf16[1024,128], index: 4, kind: output, shape index: {0}]
  %s5 = inlined_call_operand.vmem [shape: f32[2,128], index: 5, kind: output, shape index: {1}]
  %6 = xla_tuple %s4, %s5
  %s7 = sld [smem:[#allocation0]]
  $region61: #{bottleneck_forward.6} parent=0
    _
  %s9 = ssub.s32 1, %s7
  %s10 = scalar_select 0, %s9, %s7
  loop: start=0, step=1, limit=4
  $region2: #{bottleneck_forward.6} parent=0 // loop_pre_header
    _
  $region3: #{bottleneck_forward.6} parent=0 // loop_header
    %s12 = sphi 0, %s16
    %p13 = scmp.ge.s32.totalorder %s12, 4
    %s22 = sphi 0, %s24
    %s25 = sphi 0, %s22
    %s26 = sphi 0, %s25
    %s42 = sphi 0, %s26
    %s46 = sphi 0, %s46
    %s48 = sphi 0, %s46
    %s49 = sphi 0, %s48
    %s63 = sphi 0, %s49
    %s67 = sphi 0, %s67
    %s69 = sphi 0, %s67
    %s70 = sphi 0, %s69
    %s84 = sphi 0, %s70
    %s88 = sphi 0, %s88
    %s90 = sphi 0, %s88
    %s91 = sphi 0, %s90
    %s105 = sphi 0, %s91
    %s111 = sphi 0, %s113
    %s114 = sphi 0, %s111
    %s115 = sphi 0, %s114
    %s131 = sphi 0, %s115
    %s135 = sphi 0, %s135
    %s137 = sphi 0, %s135
    %s138 = sphi 0, %s137
    %s152 = sphi 0, %s138
  $region4: #{bottleneck_forward.6} parent=0 // loop_header_branch
    %15 = sbr.rel (%p13) target = $region8
  $region5: #{bottleneck_forward.6} parent=0 // loop_body
    %s17 = ssub.s32 %s12, 1
    %s18 = ssub.s32 %s12, 2
    %s19 = sadd.s32 %s12, 1
    %s20 = ssub.s32 %s12, %s19
    %p21 = scmp.eq.s32.totalorder %s20, 0
    %s23 = sadd.s32 %s22, 1
    %s24 = scalar_select %p21, %s22, %s23
    %p27 = pneg %p21
    %p28 = scmp.eq.s32.totalorder %s12, 1
    %p29 = por %p27, %p28
    %p30 = scmp.ne.s32.totalorder %s22, %s25
    %p31 = scmp.eq.s32.totalorder %s12, 0
    %p32 = por %p30, %p31
    %p33 = scmp.ne.s32.totalorder %s22, %s25
    %p34 = scmp.eq.s32.totalorder %s17, 1
    %p35 = por %p33, %p34
    %p36 = scmp.ne.s32.totalorder %s25, %s26
    %p37 = scmp.eq.s32.totalorder %s17, 0
    %p38 = por %p36, %p37
    %p39 = scmp.ne.s32.totalorder %s25, %s26
    %p40 = scmp.eq.s32.totalorder %s18, 1
    %p41 = por %p39, %p40
    %p43 = scmp.ne.s32.totalorder %s26, %s42
    %p44 = scmp.eq.s32.totalorder %s18, 0
    %p45 = por %p43, %p44
    %s47 = sadd.s32 %s46, 1
    %p50 = scmp.eq.s32.totalorder %s12, 1
    %p51 = scmp.ne.s32.totalorder %s46, %s48
    %p52 = scmp.eq.s32.totalorder %s12, 0
    %p53 = por %p51, %p52
    %p54 = scmp.ne.s32.totalorder %s46, %s48
    %p55 = scmp.eq.s32.totalorder %s17, 1
    %p56 = por %p54, %p55
    %p57 = scmp.ne.s32.totalorder %s48, %s49
    %p58 = scmp.eq.s32.totalorder %s17, 0
    %p59 = por %p57, %p58
    %p60 = scmp.ne.s32.totalorder %s48, %s49
    %p61 = scmp.eq.s32.totalorder %s18, 1
    %p62 = por %p60, %p61
    %p64 = scmp.ne.s32.totalorder %s49, %s63
    %p65 = scmp.eq.s32.totalorder %s18, 0
    %p66 = por %p64, %p65
    %s68 = sadd.s32 %s67, 1
    %p71 = scmp.eq.s32.totalorder %s12, 1
    %p72 = scmp.ne.s32.totalorder %s67, %s69
    %p73 = scmp.eq.s32.totalorder %s12, 0
    %p74 = por %p72, %p73
    %p75 = scmp.ne.s32.totalorder %s67, %s69
    %p76 = scmp.eq.s32.totalorder %s17, 1
    %p77 = por %p75, %p76
    %p78 = scmp.ne.s32.totalorder %s69, %s70
    %p79 = scmp.eq.s32.totalorder %s17, 0
    %p80 = por %p78, %p79
    %p81 = scmp.ne.s32.totalorder %s69, %s70
    %p82 = scmp.eq.s32.totalorder %s18, 1
    %p83 = por %p81, %p82
    %p85 = scmp.ne.s32.totalorder %s70, %s84
    %p86 = scmp.eq.s32.totalorder %s18, 0
    %p87 = por %p85, %p86
    %s89 = sadd.s32 %s88, 1
    %p92 = scmp.eq.s32.totalorder %s12, 1
    %p93 = scmp.ne.s32.totalorder %s88, %s90
    %p94 = scmp.eq.s32.totalorder %s12, 0
    %p95 = por %p93, %p94
    %p96 = scmp.ne.s32.totalorder %s88, %s90
    %p97 = scmp.eq.s32.totalorder %s17, 1
    %p98 = por %p96, %p97
    %p99 = scmp.ne.s32.totalorder %s90, %s91
    %p100 = scmp.eq.s32.totalorder %s17, 0
    %p101 = por %p99, %p100
    %p102 = scmp.ne.s32.totalorder %s90, %s91
    %p103 = scmp.eq.s32.totalorder %s18, 1
    %p104 = por %p102, %p103
    %p106 = scmp.ne.s32.totalorder %s91, %s105
    %p107 = scmp.eq.s32.totalorder %s18, 0
    %p108 = por %p106, %p107
    %s109 = ssub.s32 %s12, %s19
    %p110 = scmp.eq.s32.totalorder %s109, 0
    %s112 = sadd.s32 %s111, 1
    %s113 = scalar_select %p110, %s111, %s112
    %p116 = pneg %p110
    %p117 = scmp.eq.s32.totalorder %s12, 1
    %p118 = por %p116, %p117
    %p119 = scmp.ne.s32.totalorder %s111, %s114
    %p120 = scmp.eq.s32.totalorder %s12, 0
    %p121 = por %p119, %p120
    %p122 = scmp.ne.s32.totalorder %s111, %s114
    %p123 = scmp.eq.s32.totalorder %s17, 1
    %p124 = por %p122, %p123
    %p125 = scmp.ne.s32.totalorder %s114, %s115
    %p126 = scmp.eq.s32.totalorder %s17, 0
    %p127 = por %p125, %p126
    %p128 = scmp.ne.s32.totalorder %s114, %s115
    %p129 = scmp.eq.s32.totalorder %s18, 1
    %p130 = por %p128, %p129
    %p132 = scmp.ne.s32.totalorder %s115, %s131
    %p133 = scmp.eq.s32.totalorder %s18, 0
    %p134 = por %p132, %p133
    %s136 = sadd.s32 %s135, 1
    %p139 = scmp.eq.s32.totalorder %s12, 1
    %p140 = scmp.ne.s32.totalorder %s135, %s137
    %p141 = scmp.eq.s32.totalorder %s12, 0
    %p142 = por %p140, %p141
    %p143 = scmp.ne.s32.totalorder %s135, %s137
    %p144 = scmp.eq.s32.totalorder %s17, 1
    %p145 = por %p143, %p144
    %p146 = scmp.ne.s32.totalorder %s137, %s138
    %p147 = scmp.eq.s32.totalorder %s17, 0
    %p148 = por %p146, %p147
    %p149 = scmp.ne.s32.totalorder %s137, %s138
    %p150 = scmp.eq.s32.totalorder %s18, 1
    %p151 = por %p149, %p150
    %p153 = scmp.ne.s32.totalorder %s138, %s152
    %p154 = scmp.eq.s32.totalorder %s18, 0
    %p155 = por %p153, %p154
    %p156 = scmp.le.s32.totalorder 1, %s12
    %p157 = scmp.lt.s32.totalorder %s12, 3
    %p158 = pnand %p156, %p157
    %p159 = pneg %p158
    // Predicated region
    $region9: #{bottleneck_forward.6} parent=5 // pred_check
      _
    $region10: #{bottleneck_forward.6} parent=5 // pred_check_branch
      %161 = sbr.rel (%p158) target = $region12
    $region11: #{bottleneck_forward.6} parent=5 // pred_region
      %s162 = ssub.s32 %s12, 1
      // Predicated region
      $region13: #{bottleneck_forward.6} parent=11 // pred_check
        %p163 = pneg %p59
      $region14: #{bottleneck_forward.6} parent=11 // pred_check_branch
        %165 = sbr.rel (%p163) target = $region16
      $region15: #{bottleneck_forward.6} parent=11 // pred_region
        _
      $region16: #{bottleneck_forward.6} parent=11 // pred_fallthru
        _
      // Predicated region
      $region17: #{bottleneck_forward.6} parent=11 // pred_check
        %p166 = pneg %p80
      $region18: #{bottleneck_forward.6} parent=11 // pred_check_branch
        %168 = sbr.rel (%p166) target = $region20
      $region19: #{bottleneck_forward.6} parent=11 // pred_region
        _
      $region20: #{bottleneck_forward.6} parent=11 // pred_fallthru
        _
      // Predicated region
      $region21: #{bottleneck_forward.6} parent=11 // pred_check
        %p169 = pneg %p101
      $region22: #{bottleneck_forward.6} parent=11 // pred_check_branch
        %171 = sbr.rel (%p169) target = $region24
      $region23: #{bottleneck_forward.6} parent=11 // pred_region
        _
      $region24: #{bottleneck_forward.6} parent=11 // pred_fallthru
        _
    $region12: #{bottleneck_forward.6} parent=5 // pred_fallthru
      _
    %p172 = scmp.lt.s32.totalorder %s12, 2
    // Predicated region
    $region25: #{bottleneck_forward.6} parent=5 // pred_check
      %p173 = pneg %p172
    $region26: #{bottleneck_forward.6} parent=5 // pred_check_branch
      %175 = sbr.rel (%p173) target = $region28
    $region27: #{bottleneck_forward.6} parent=5 // pred_region
      // Predicated region
      $region29: #{bottleneck_forward.6} parent=27 // pred_check
        %p176 = pneg %p32
      $region30: #{bottleneck_forward.6} parent=27 // pred_check_branch
        %178 = sbr.rel (%p176) target = $region32
      $region31: #{bottleneck_forward.6} parent=27 // pred_region
        %s179 = smul.u32 64, %s12
        %p180 = scmp.lt.s32.totalorder %s179, 127
        %s181 = scalar_select %p180, %s179, 127
        %s182 = smul.addr %s181, 4
        %s183 = scalar_lea.vmem %s0, %s182
        %s184 = smul.u32 64, %s12
      $region32: #{bottleneck_forward.6} parent=27 // pred_fallthru
        _
    $region28: #{bottleneck_forward.6} parent=5 // pred_fallthru
      _
    %p185 = scmp.le.s32.totalorder 1, %s12
    %p186 = scmp.lt.s32.totalorder %s12, 3
    %p187 = pnand %p185, %p186
    %p188 = pneg %p187
    // Predicated region
    $region33: #{bottleneck_forward.6} parent=5 // pred_check
      _
    $region34: #{bottleneck_forward.6} parent=5 // pred_check_branch
      %190 = sbr.rel (%p187) target = $region36
    $region35: #{bottleneck_forward.6} parent=5 // pred_region
      %s191 = ssub.s32 %s12, 1
      %s192 = smul.u32 64, %s17
      %p193 = scmp.lt.s32.totalorder %s192, 127
      %s194 = scalar_select %p193, %s192, 127
      %s195 = smul.addr %s194, 4
      %s196 = scalar_lea.vmem %s0, %s195
      %p197 = pneg %p38
      %p198 = pneg %p35
      %p199 = pneg %p59
      %p200 = pneg %p56
      %p201 = pneg %p80
      %p202 = pneg %p77
      %p203 = pneg %p101
      %p204 = pneg %p98
      %p205 = pneg %p127
      %p206 = pneg %p124
      %s207 = smul.u32 64, %s17
      %p208 = scmp.lt.s32.totalorder %s207, 127
      %s209 = scalar_select %p208, %s207, 127
      %s210 = smul.addr %s209, 4
      %s211 = scalar_lea.vmem %s4, %s210
      %p212 = pneg %p148
      %p213 = pneg %p145
      %s214 = smul.u32 64, %s17
      %p215 = scmp.lt.s32.totalorder %s214, 127
      %s216 = scalar_select %p215, %s214, 127
      %s217 = smul.addr %s216, 4
      %s218 = scalar_lea.vmem %s0, %s217
      %s219 = smul.u32 64, %s17
      %s220 = smul.u32 64, %s17
      %p221 = scmp.lt.s32.totalorder %s220, 127
      %s222 = scalar_select %p221, %s220, 127
      %s223 = smul.addr %s222, 4
      %s224 = scalar_lea.vmem %s4, %s223
      %s225 = smul.u32 64, %s17
      %p227 = scmp.eq.s32.totalorder %s17, 0
      // Predicated region
      $region37: #{bottleneck_forward.6} parent=35 // pred_check
        %p228 = pneg %p227
      $region38: #{bottleneck_forward.6} parent=35 // pred_check_branch
        %230 = sbr.rel (%p228) target = $region40
      $region39: #{bottleneck_forward.6} parent=35 // pred_region
        %231 = vst [vmem:[%s5] sm:$0x3] 0.0
      $region40: #{bottleneck_forward.6} parent=35 // pred_fallthru
        _
      %v232 = vld [vmem:[%s218] sm:$0xf]
      %v233 = vld [vmem:[%s218 + $0x4] sm:$0xf]
      %v234 = vld [vmem:[%s218 + $0x8] sm:$0xf]
      %v235 = vld [vmem:[%s218 + $0xc] sm:$0xf]
      %v236 = vld [vmem:[%s218 + $0x10] sm:$0xf]
      %v237 = vld [vmem:[%s218 + $0x14] sm:$0xf]
      %v238 = vld [vmem:[%s218 + $0x18] sm:$0xf]
      %v239 = vld [vmem:[%s218 + $0x1c] sm:$0xf]
      %v240 = vld [vmem:[%s218 + $0x20] sm:$0xf]
      %v241 = vld [vmem:[%s218 + $0x24] sm:$0xf]
      %v242 = vld [vmem:[%s218 + $0x28] sm:$0xf]
      %v243 = vld [vmem:[%s218 + $0x2c] sm:$0xf]
      %v244 = vld [vmem:[%s218 + $0x30] sm:$0xf]
      %v245 = vld [vmem:[%s218 + $0x34] sm:$0xf]
      %v246 = vld [vmem:[%s218 + $0x38] sm:$0xf]
      %v247 = vld [vmem:[%s218 + $0x3c] sm:$0xf]
      %v248 = vld [vmem:[%s218 + $0x40] sm:$0xf]
      %v249 = vld [vmem:[%s218 + $0x44] sm:$0xf]
      %v250 = vld [vmem:[%s218 + $0x48] sm:$0xf]
      %v251 = vld [vmem:[%s218 + $0x4c] sm:$0xf]
      %v252 = vld [vmem:[%s218 + $0x50] sm:$0xf]
      %v253 = vld [vmem:[%s218 + $0x54] sm:$0xf]
      %v254 = vld [vmem:[%s218 + $0x58] sm:$0xf]
      %v255 = vld [vmem:[%s218 + $0x5c] sm:$0xf]
      %v256 = vld [vmem:[%s218 + $0x60] sm:$0xf]
      %v257 = vld [vmem:[%s218 + $0x64] sm:$0xf]
      %v258 = vld [vmem:[%s218 + $0x68] sm:$0xf]
      %v259 = vld [vmem:[%s218 + $0x6c] sm:$0xf]
      %v260 = vld [vmem:[%s218 + $0x70] sm:$0xf]
      %v261 = vld [vmem:[%s218 + $0x74] sm:$0xf]
      %v262 = vld [vmem:[%s218 + $0x78] sm:$0xf]
      %v263 = vld [vmem:[%s218 + $0x7c] sm:$0xf]
      %v264 = vld [vmem:[%s218 + $0x80] sm:$0xf]
      %v265 = vld [vmem:[%s218 + $0x84] sm:$0xf]
      %v266 = vld [vmem:[%s218 + $0x88] sm:$0xf]
      %v267 = vld [vmem:[%s218 + $0x8c] sm:$0xf]
      %v268 = vld [vmem:[%s218 + $0x90] sm:$0xf]
      %v269 = vld [vmem:[%s218 + $0x94] sm:$0xf]
      %v270 = vld [vmem:[%s218 + $0x98] sm:$0xf]
      %v271 = vld [vmem:[%s218 + $0x9c] sm:$0xf]
      %v272 = vld [vmem:[%s218 + $0xa0] sm:$0xf]
      %v273 = vld [vmem:[%s218 + $0xa4] sm:$0xf]
      %v274 = vld [vmem:[%s218 + $0xa8] sm:$0xf]
      %v275 = vld [vmem:[%s218 + $0xac] sm:$0xf]
      %v276 = vld [vmem:[%s218 + $0xb0] sm:$0xf]
      %v277 = vld [vmem:[%s218 + $0xb4] sm:$0xf]
      %v278 = vld [vmem:[%s218 + $0xb8] sm:$0xf]
      %v279 = vld [vmem:[%s218 + $0xbc] sm:$0xf]
      %v280 = vld [vmem:[%s218 + $0xc0] sm:$0xf]
      %v281 = vld [vmem:[%s218 + $0xc4] sm:$0xf]
      %v282 = vld [vmem:[%s218 + $0xc8] sm:$0xf]
      %v283 = vld [vmem:[%s218 + $0xcc] sm:$0xf]
      %v284 = vld [vmem:[%s218 + $0xd0] sm:$0xf]
      %v285 = vld [vmem:[%s218 + $0xd4] sm:$0xf]
      %v286 = vld [vmem:[%s218 + $0xd8] sm:$0xf]
      %v287 = vld [vmem:[%s218 + $0xdc] sm:$0xf]
      %v288 = vld [vmem:[%s218 + $0xe0] sm:$0xf]
      %v289 = vld [vmem:[%s218 + $0xe4] sm:$0xf]
      %v290 = vld [vmem:[%s218 + $0xe8] sm:$0xf]
      %v291 = vld [vmem:[%s218 + $0xec] sm:$0xf]
      %v292 = vld [vmem:[%s218 + $0xf0] sm:$0xf]
      %v293 = vld [vmem:[%s218 + $0xf4] sm:$0xf]
      %v294 = vld [vmem:[%s218 + $0xf8] sm:$0xf]
      %v295 = vld [vmem:[%s218 + $0xfc] sm:$0xf]
      %v296 = vunpack.c.l.bf16 %v232
      %v297 = vunpack.c.l.bf16 %v233
      %v298 = vunpack.c.l.bf16 %v234
      %v299 = vunpack.c.l.bf16 %v235
      %v300 = vunpack.c.l.bf16 %v236
      %v301 = vunpack.c.l.bf16 %v237
      %v302 = vunpack.c.l.bf16 %v238
      %v303 = vunpack.c.l.bf16 %v239
      %v304 = vunpack.c.l.bf16 %v240
      %v305 = vunpack.c.l.bf16 %v241
      %v306 = vunpack.c.l.bf16 %v242
      %v307 = vunpack.c.l.bf16 %v243
      %v308 = vunpack.c.l.bf16 %v244
      %v309 = vunpack.c.l.bf16 %v245
      %v310 = vunpack.c.l.bf16 %v246
      %v311 = vunpack.c.l.bf16 %v247
      %v312 = vunpack.c.l.bf16 %v248
      %v313 = vunpack.c.l.bf16 %v249
      %v314 = vunpack.c.l.bf16 %v250
      %v315 = vunpack.c.l.bf16 %v251
      %v316 = vunpack.c.l.bf16 %v252
      %v317 = vunpack.c.l.bf16 %v253
      %v318 = vunpack.c.l.bf16 %v254
      %v319 = vunpack.c.l.bf16 %v255
      %v320 = vunpack.c.l.bf16 %v256
      %v321 = vunpack.c.l.bf16 %v257
      %v322 = vunpack.c.l.bf16 %v258
      %v323 = vunpack.c.l.bf16 %v259
      %v324 = vunpack.c.l.bf16 %v260
      %v325 = vunpack.c.l.bf16 %v261
      %v326 = vunpack.c.l.bf16 %v262
      %v327 = vunpack.c.l.bf16 %v263
      %v328 = vunpack.c.l.bf16 %v264
      %v329 = vunpack.c.l.bf16 %v265
      %v330 = vunpack.c.l.bf16 %v266
      %v331 = vunpack.c.l.bf16 %v267
      %v332 = vunpack.c.l.bf16 %v268
      %v333 = vunpack.c.l.bf16 %v269
      %v334 = vunpack.c.l.bf16 %v270
      %v335 = vunpack.c.l.bf16 %v271
      %v336 = vunpack.c.l.bf16 %v272
      %v337 = vunpack.c.l.bf16 %v273
      %v338 = vunpack.c.l.bf16 %v274
      %v339 = vunpack.c.l.bf16 %v275
      %v340 = vunpack.c.l.bf16 %v276
      %v341 = vunpack.c.l.bf16 %v277
      %v342 = vunpack.c.l.bf16 %v278
      %v343 = vunpack.c.l.bf16 %v279
      %v344 = vunpack.c.l.bf16 %v280
      %v345 = vunpack.c.l.bf16 %v281
      %v346 = vunpack.c.l.bf16 %v282
      %v347 = vunpack.c.l.bf16 %v283
      %v348 = vunpack.c.l.bf16 %v284
      %v349 = vunpack.c.l.bf16 %v285
      %v350 = vunpack.c.l.bf16 %v286
      %v351 = vunpack.c.l.bf16 %v287
      %v352 = vunpack.c.l.bf16 %v288
      %v353 = vunpack.c.l.bf16 %v289
      %v354 = vunpack.c.l.bf16 %v290
      %v355 = vunpack.c.l.bf16 %v291
      %v356 = vunpack.c.l.bf16 %v292
      %v357 = vunpack.c.l.bf16 %v293
      %v358 = vunpack.c.l.bf16 %v294
      %v359 = vunpack.c.l.bf16 %v295
      %v360 = vld [vmem:[%s1] sm:$0x1]
      %v362 = vlaneseq
      %v363 = vshrl.u32 %v362, 7
      %v364 = vsub.s32 0, %v363
      %v365 = vrot.slane %v360, %v364
      %v367 = vmul.f32 %v296, %v365
      %v368 = vmul.f32 %v297, %v365
      %v369 = vmul.f32 %v298, %v365
      %v370 = vmul.f32 %v299, %v365
      %v371 = vmul.f32 %v300, %v365
      %v372 = vmul.f32 %v301, %v365
      %v373 = vmul.f32 %v302, %v365
      %v374 = vmul.f32 %v303, %v365
      %v375 = vmul.f32 %v304, %v365
      %v376 = vmul.f32 %v305, %v365
      %v377 = vmul.f32 %v306, %v365
      %v378 = vmul.f32 %v307, %v365
      %v379 = vmul.f32 %v308, %v365
      %v380 = vmul.f32 %v309, %v365
      %v381 = vmul.f32 %v310, %v365
      %v382 = vmul.f32 %v311, %v365
      %v383 = vmul.f32 %v312, %v365
      %v384 = vmul.f32 %v313, %v365
      %v385 = vmul.f32 %v314, %v365
      %v386 = vmul.f32 %v315, %v365
      %v387 = vmul.f32 %v316, %v365
      %v388 = vmul.f32 %v317, %v365
      %v389 = vmul.f32 %v318, %v365
      %v390 = vmul.f32 %v319, %v365
      %v391 = vmul.f32 %v320, %v365
      %v392 = vmul.f32 %v321, %v365
      %v393 = vmul.f32 %v322, %v365
      %v394 = vmul.f32 %v323, %v365
      %v395 = vmul.f32 %v324, %v365
      %v396 = vmul.f32 %v325, %v365
      %v397 = vmul.f32 %v326, %v365
      %v398 = vmul.f32 %v327, %v365
      %v399 = vmul.f32 %v328, %v365
      %v400 = vmul.f32 %v329, %v365
      %v401 = vmul.f32 %v330, %v365
      %v402 = vmul.f32 %v331, %v365
      %v403 = vmul.f32 %v332, %v365
      %v404 = vmul.f32 %v333, %v365
      %v405 = vmul.f32 %v334, %v365
      %v406 = vmul.f32 %v335, %v365
      %v407 = vmul.f32 %v336, %v365
      %v408 = vmul.f32 %v337, %v365
      %v409 = vmul.f32 %v338, %v365
      %v410 = vmul.f32 %v339, %v365
      %v411 = vmul.f32 %v340, %v365
      %v412 = vmul.f32 %v341, %v365
      %v413 = vmul.f32 %v342, %v365
      %v414 = vmul.f32 %v343, %v365
      %v415 = vmul.f32 %v344, %v365
      %v416 = vmul.f32 %v345, %v365
      %v417 = vmul.f32 %v346, %v365
      %v418 = vmul.f32 %v347, %v365
      %v419 = vmul.f32 %v348, %v365
      %v420 = vmul.f32 %v349, %v365
      %v421 = vmul.f32 %v350, %v365
      %v422 = vmul.f32 %v351, %v365
      %v423 = vmul.f32 %v352, %v365
      %v424 = vmul.f32 %v353, %v365
      %v425 = vmul.f32 %v354, %v365
      %v426 = vmul.f32 %v355, %v365
      %v427 = vmul.f32 %v356, %v365
      %v428 = vmul.f32 %v357, %v365
      %v429 = vmul.f32 %v358, %v365
      %v430 = vmul.f32 %v359, %v365
      %v431 = vld [vmem:[%s2] sm:$0x1]
      %v433 = vlaneseq
      %v434 = vshrl.u32 %v433, 7
      %v435 = vsub.s32 0, %v434
      %v436 = vrot.slane %v431, %v435
      %v438 = vadd.f32 %v367, %v436
      %v439 = vadd.f32 %v368, %v436
      %v440 = vadd.f32 %v369, %v436
      %v441 = vadd.f32 %v370, %v436
      %v442 = vadd.f32 %v371, %v436
      %v443 = vadd.f32 %v372, %v436
      %v444 = vadd.f32 %v373, %v436
      %v445 = vadd.f32 %v374, %v436
      %v446 = vadd.f32 %v375, %v436
      %v447 = vadd.f32 %v376, %v436
      %v448 = vadd.f32 %v377, %v436
      %v449 = vadd.f32 %v378, %v436
      %v450 = vadd.f32 %v379, %v436
      %v451 = vadd.f32 %v380, %v436
      %v452 = vadd.f32 %v381, %v436
      %v453 = vadd.f32 %v382, %v436
      %v454 = vadd.f32 %v383, %v436
      %v455 = vadd.f32 %v384, %v436
      %v456 = vadd.f32 %v385, %v436
      %v457 = vadd.f32 %v386, %v436
      %v458 = vadd.f32 %v387, %v436
      %v459 = vadd.f32 %v388, %v436
      %v460 = vadd.f32 %v389, %v436
      %v461 = vadd.f32 %v390, %v436
      %v462 = vadd.f32 %v391, %v436
      %v463 = vadd.f32 %v392, %v436
      %v464 = vadd.f32 %v393, %v436
      %v465 = vadd.f32 %v394, %v436
      %v466 = vadd.f32 %v395, %v436
      %v467 = vadd.f32 %v396, %v436
      %v468 = vadd.f32 %v397, %v436
      %v469 = vadd.f32 %v398, %v436
      %v470 = vadd.f32 %v399, %v436
      %v471 = vadd.f32 %v400, %v436
      %v472 = vadd.f32 %v401, %v436
      %v473 = vadd.f32 %v402, %v436
      %v474 = vadd.f32 %v403, %v436
      %v475 = vadd.f32 %v404, %v436
      %v476 = vadd.f32 %v405, %v436
      %v477 = vadd.f32 %v406, %v436
      %v478 = vadd.f32 %v407, %v436
      %v479 = vadd.f32 %v408, %v436
      %v480 = vadd.f32 %v409, %v436
      %v481 = vadd.f32 %v410, %v436
      %v482 = vadd.f32 %v411, %v436
      %v483 = vadd.f32 %v412, %v436
      %v484 = vadd.f32 %v413, %v436
      %v485 = vadd.f32 %v414, %v436
      %v486 = vadd.f32 %v415, %v436
      %v487 = vadd.f32 %v416, %v436
      %v488 = vadd.f32 %v417, %v436
      %v489 = vadd.f32 %v418, %v436
      %v490 = vadd.f32 %v419, %v436
      %v491 = vadd.f32 %v420, %v436
      %v492 = vadd.f32 %v421, %v436
      %v493 = vadd.f32 %v422, %v436
      %v494 = vadd.f32 %v423, %v436
      %v495 = vadd.f32 %v424, %v436
      %v496 = vadd.f32 %v425, %v436
      %v497 = vadd.f32 %v426, %v436
      %v498 = vadd.f32 %v427, %v436
      %v499 = vadd.f32 %v428, %v436
      %v500 = vadd.f32 %v429, %v436
      %v501 = vadd.f32 %v430, %v436
      %v502 = vmax.f32 %v438, 0.0
      %v503 = vmax.f32 %v439, 0.0
      %v504 = vmax.f32 %v440, 0.0
      %v505 = vmax.f32 %v441, 0.0
      %v506 = vmax.f32 %v442, 0.0
      %v507 = vmax.f32 %v443, 0.0
      %v508 = vmax.f32 %v444, 0.0
      %v509 = vmax.f32 %v445, 0.0
      %v510 = vmax.f32 %v446, 0.0
      %v511 = vmax.f32 %v447, 0.0
      %v512 = vmax.f32 %v448, 0.0
      %v513 = vmax.f32 %v449, 0.0
      %v514 = vmax.f32 %v450, 0.0
      %v515 = vmax.f32 %v451, 0.0
      %v516 = vmax.f32 %v452, 0.0
      %v517 = vmax.f32 %v453, 0.0
      %v518 = vmax.f32 %v454, 0.0
      %v519 = vmax.f32 %v455, 0.0
      %v520 = vmax.f32 %v456, 0.0
      %v521 = vmax.f32 %v457, 0.0
      %v522 = vmax.f32 %v458, 0.0
      %v523 = vmax.f32 %v459, 0.0
      %v524 = vmax.f32 %v460, 0.0
      %v525 = vmax.f32 %v461, 0.0
      %v526 = vmax.f32 %v462, 0.0
      %v527 = vmax.f32 %v463, 0.0
      %v528 = vmax.f32 %v464, 0.0
      %v529 = vmax.f32 %v465, 0.0
      %v530 = vmax.f32 %v466, 0.0
      %v531 = vmax.f32 %v467, 0.0
      %v532 = vmax.f32 %v468, 0.0
      %v533 = vmax.f32 %v469, 0.0
      %v534 = vmax.f32 %v470, 0.0
      %v535 = vmax.f32 %v471, 0.0
      %v536 = vmax.f32 %v472, 0.0
      %v537 = vmax.f32 %v473, 0.0
      %v538 = vmax.f32 %v474, 0.0
      %v539 = vmax.f32 %v475, 0.0
      %v540 = vmax.f32 %v476, 0.0
      %v541 = vmax.f32 %v477, 0.0
      %v542 = vmax.f32 %v478, 0.0
      %v543 = vmax.f32 %v479, 0.0
      %v544 = vmax.f32 %v480, 0.0
      %v545 = vmax.f32 %v481, 0.0
      %v546 = vmax.f32 %v482, 0.0
      %v547 = vmax.f32 %v483, 0.0
      %v548 = vmax.f32 %v484, 0.0
      %v549 = vmax.f32 %v485, 0.0
      %v550 = vmax.f32 %v486, 0.0
      %v551 = vmax.f32 %v487, 0.0
      %v552 = vmax.f32 %v488, 0.0
      %v553 = vmax.f32 %v489, 0.0
      %v554 = vmax.f32 %v490, 0.0
      %v555 = vmax.f32 %v491, 0.0
      %v556 = vmax.f32 %v492, 0.0
      %v557 = vmax.f32 %v493, 0.0
      %v558 = vmax.f32 %v494, 0.0
      %v559 = vmax.f32 %v495, 0.0
      %v560 = vmax.f32 %v496, 0.0
      %v561 = vmax.f32 %v497, 0.0
      %v562 = vmax.f32 %v498, 0.0
      %v563 = vmax.f32 %v499, 0.0
      %v564 = vmax.f32 %v500, 0.0
      %v565 = vmax.f32 %v501, 0.0
      %v566 = vpack.c.bf16 %v503, %v502
      %v567 = vpack.c.bf16 %v505, %v504
      %v568 = vpack.c.bf16 %v507, %v506
      %v569 = vpack.c.bf16 %v509, %v508
      %v570 = vpack.c.bf16 %v511, %v510
      %v571 = vpack.c.bf16 %v513, %v512
      %v572 = vpack.c.bf16 %v515, %v514
      %v573 = vpack.c.bf16 %v517, %v516
      %v574 = vpack.c.bf16 %v519, %v518
      %v575 = vpack.c.bf16 %v521, %v520
      %v576 = vpack.c.bf16 %v523, %v522
      %v577 = vpack.c.bf16 %v525, %v524
      %v578 = vpack.c.bf16 %v527, %v526
      %v579 = vpack.c.bf16 %v529, %v528
      %v580 = vpack.c.bf16 %v531, %v530
      %v581 = vpack.c.bf16 %v533, %v532
      %v582 = vpack.c.bf16 %v535, %v534
      %v583 = vpack.c.bf16 %v537, %v536
      %v584 = vpack.c.bf16 %v539, %v538
      %v585 = vpack.c.bf16 %v541, %v540
      %v586 = vpack.c.bf16 %v543, %v542
      %v587 = vpack.c.bf16 %v545, %v544
      %v588 = vpack.c.bf16 %v547, %v546
      %v589 = vpack.c.bf16 %v549, %v548
      %v590 = vpack.c.bf16 %v551, %v550
      %v591 = vpack.c.bf16 %v553, %v552
      %v592 = vpack.c.bf16 %v555, %v554
      %v593 = vpack.c.bf16 %v557, %v556
      %v594 = vpack.c.bf16 %v559, %v558
      %v595 = vpack.c.bf16 %v561, %v560
      %v596 = vpack.c.bf16 %v563, %v562
      %v597 = vpack.c.bf16 %v565, %v564
      %v598 = vld [vmem:[%s3] sm:$0xf]
      %v599 = vld [vmem:[%s3 + $0x4] sm:$0xf]
      %v600 = vld [vmem:[%s3 + $0x8] sm:$0xf]
      %v601 = vld [vmem:[%s3 + $0xc] sm:$0xf]
      %v602 = vld [vmem:[%s3 + $0x10] sm:$0xf]
      %v603 = vld [vmem:[%s3 + $0x14] sm:$0xf]
      %v604 = vld [vmem:[%s3 + $0x18] sm:$0xf]
      %v605 = vld [vmem:[%s3 + $0x1c] sm:$0xf]
      %v606 = vld [vmem:[%s3 + $0x20] sm:$0xf]
      %v607 = vld [vmem:[%s3 + $0x24] sm:$0xf]
      %v608 = vld [vmem:[%s3 + $0x28] sm:$0xf]
      %v609 = vld [vmem:[%s3 + $0x2c] sm:$0xf]
      %v610 = vld [vmem:[%s3 + $0x30] sm:$0xf]
      %v611 = vld [vmem:[%s3 + $0x34] sm:$0xf]
      %v612 = vld [vmem:[%s3 + $0x38] sm:$0xf]
      %v613 = vld [vmem:[%s3 + $0x3c] sm:$0xf]
      %v630 = vunpack.c.l.b16 %v598
      %v631 = vunpack.c.l.b16 %v599
      %v632 = vunpack.c.l.b16 %v600
      %v633 = vunpack.c.l.b16 %v601
      %v634 = vunpack.c.l.b16 %v602
      %v635 = vunpack.c.l.b16 %v603
      %v636 = vunpack.c.l.b16 %v604
      %v637 = vunpack.c.l.b16 %v605
      %v638 = vunpack.c.l.b16 %v606
      %v639 = vunpack.c.l.b16 %v607
      %v640 = vunpack.c.l.b16 %v608
      %v641 = vunpack.c.l.b16 %v609
      %v642 = vunpack.c.l.b16 %v610
      %v643 = vunpack.c.l.b16 %v611
      %v644 = vunpack.c.l.b16 %v612
      %v645 = vunpack.c.l.b16 %v613
      %v646 = vpack.c.b16 %v631, %v630
      %v647 = vpack.c.b16 %v633, %v632
      %v648 = vpack.c.b16 %v635, %v634
      %v649 = vpack.c.b16 %v637, %v636
      %v650 = vpack.c.b16 %v639, %v638
      %v651 = vpack.c.b16 %v641, %v640
      %v652 = vpack.c.b16 %v643, %v642
      %v653 = vpack.c.b16 %v645, %v644
      %662 = vmatprep.subr.bf16.mxu0 0
      %663 = vmatpush1.bf16.msra.mxu0 %v646
      %664 = vmatprep.subr.bf16.mxu0 0
      %665 = vmatpush1.bf16.msra.mxu0 %v647
      %666 = vmatprep.subr.bf16.mxu0 0
      %667 = vmatpush1.bf16.msra.mxu0 %v648
      %668 = vmatprep.subr.bf16.mxu0 0
      %669 = vmatpush1.bf16.msra.mxu0 %v649
      %670 = vmatprep.subr.bf16.mxu0 0
      %671 = vmatpush1.bf16.msra.mxu0 %v650
      %672 = vmatprep.subr.bf16.mxu0 0
      %673 = vmatpush1.bf16.msra.mxu0 %v651
      %674 = vmatprep.subr.bf16.mxu0 0
      %675 = vmatpush1.bf16.msra.mxu0 %v652
      %676 = vmatprep.subr.bf16.mxu0 0
      %677 = vmatpush1.bf16.msra.mxu0 %v653
      %678 = vmatprep.subr.bf16.mxu0 0
      %679 = vmatpush1.bf16.msra.mxu0 0
      %680 = vmatprep.subr.bf16.mxu0 0
      %681 = vmatpush1.bf16.msra.mxu0 0
      %682 = vmatprep.subr.bf16.mxu0 0
      %683 = vmatpush1.bf16.msra.mxu0 0
      %684 = vmatprep.subr.bf16.mxu0 0
      %685 = vmatpush1.bf16.msra.mxu0 0
      %686 = vmatprep.subr.bf16.mxu0 0
      %687 = vmatpush1.bf16.msra.mxu0 0
      %688 = vmatprep.subr.bf16.mxu0 0
      %689 = vmatpush1.bf16.msra.mxu0 0
      %690 = vmatprep.subr.bf16.mxu0 0
      %691 = vmatpush1.bf16.msra.mxu0 0
      %692 = vmatprep.subr.bf16.mxu0 0
      %693 = vmatpush1.bf16.msra.mxu0 0
      %694 = vmatprep.mubr.bf16.mxu0 0
      %695 = vmatmul.mubr.bf16.gmra.mrb[0].mxu0 %v566
      %v696 = vpop.f32.mrb[0].mxu0
      %v697 = vadd.f32 0.0, %v696
      %v698 = vpop.f32.mrb[0].mxu0
      %v699 = vpop.f32.mrb[0].mxu0
      %v700 = vadd.f32 0.0, %v699
      %v701 = vpop.f32.mrb[0].mxu0
      %702 = vmatprep.mubr.bf16.mxu0 0
      %703 = vmatmul.mubr.bf16.gmra.mrb[0].mxu0 %v567
      %v704 = vpop.f32.mrb[0].mxu0
      %v705 = vadd.f32 0.0, %v704
      %v706 = vpop.f32.mrb[0].mxu0
      %v707 = vpop.f32.mrb[0].mxu0
      %v708 = vadd.f32 0.0, %v707
      %v709 = vpop.f32.mrb[0].mxu0
      %710 = vmatprep.mubr.bf16.mxu0 0
      %711 = vmatmul.mubr.bf16.gmra.mrb[0].mxu0 %v568
      %v712 = vpop.f32.mrb[0].mxu0
      %v713 = vadd.f32 0.0, %v712
      %v714 = vpop.f32.mrb[0].mxu0
      %v715 = vpop.f32.mrb[0].mxu0
      %v716 = vadd.f32 0.0, %v715
      %v717 = vpop.f32.mrb[0].mxu0
      %718 = vmatprep.mubr.bf16.mxu0 0
      %719 = vmatmul.mubr.bf16.gmra.mrb[0].mxu0 %v569
      %v720 = vpop.f32.mrb[0].mxu0
      %v721 = vadd.f32 0.0, %v720
      %v722 = vpop.f32.mrb[0].mxu0
      %v723 = vpop.f32.mrb[0].mxu0
      %v724 = vadd.f32 0.0, %v723
      %v725 = vpop.f32.mrb[0].mxu0
      %726 = vmatprep.mubr.bf16.mxu0 0
      %727 = vmatmul.mubr.bf16.gmra.mrb[0].mxu0 %v570
      %v728 = vpop.f32.mrb[0].mxu0
      %v729 = vadd.f32 0.0, %v728
      %v730 = vpop.f32.mrb[0].mxu0
      %v731 = vpop.f32.mrb[0].mxu0
      %v732 = vadd.f32 0.0, %v731
      %v733 = vpop.f32.mrb[0].mxu0
      %734 = vmatprep.mubr.bf16.mxu0 0
      %735 = vmatmul.mubr.bf16.gmra.mrb[0].mxu0 %v571
      %v736 = vpop.f32.mrb[0].mxu0
      %v737 = vadd.f32 0.0, %v736
      %v738 = vpop.f32.mrb[0].mxu0
      %v739 = vpop.f32.mrb[0].mxu0
      %v740 = vadd.f32 0.0, %v739
      %v741 = vpop.f32.mrb[0].mxu0
      %742 = vmatprep.mubr.bf16.mxu0 0
      %743 = vmatmul.mubr.bf16.gmra.mrb[0].mxu0 %v572
      %v744 = vpop.f32.mrb[0].mxu0
      %v745 = vadd.f32 0.0, %v744
      %v746 = vpop.f32.mrb[0].mxu0
      %v747 = vpop.f32.mrb[0].mxu0
      %v748 = vadd.f32 0.0, %v747
      %v749 = vpop.f32.mrb[0].mxu0
      %750 = vmatprep.mubr.bf16.mxu0 0
      %751 = vmatmul.mubr.bf16.gmra.mrb[0].mxu0 %v573
      %v752 = vpop.f32.mrb[0].mxu0
      %v753 = vadd.f32 0.0, %v752
      %v754 = vpop.f32.mrb[0].mxu0
      %v755 = vpop.f32.mrb[0].mxu0
      %v756 = vadd.f32 0.0, %v755
      %v757 = vpop.f32.mrb[0].mxu0
      %758 = vmatprep.mubr.bf16.mxu0 0
      %759 = vmatmul.mubr.bf16.gmra.mrb[0].mxu0 %v574
      %v760 = vpop.f32.mrb[0].mxu0
      %v761 = vadd.f32 0.0, %v760
      %v762 = vpop.f32.mrb[0].mxu0
      %v763 = vpop.f32.mrb[0].mxu0
      %v764 = vadd.f32 0.0, %v763
      %v765 = vpop.f32.mrb[0].mxu0
      %766 = vmatprep.mubr.bf16.mxu0 0
      %767 = vmatmul.mubr.bf16.gmra.mrb[0].mxu0 %v575
      %v768 = vpop.f32.mrb[0].mxu0
      %v769 = vadd.f32 0.0, %v768
      %v770 = vpop.f32.mrb[0].mxu0
      %v771 = vpop.f32.mrb[0].mxu0
      %v772 = vadd.f32 0.0, %v771
      %v773 = vpop.f32.mrb[0].mxu0
      %774 = vmatprep.mubr.bf16.mxu0 0
      %775 = vmatmul.mubr.bf16.gmra.mrb[0].mxu0 %v576
      %v776 = vpop.f32.mrb[0].mxu0
      %v777 = vadd.f32 0.0, %v776
      %v778 = vpop.f32.mrb[0].mxu0
      %v779 = vpop.f32.mrb[0].mxu0
      %v780 = vadd.f32 0.0, %v779
      %v781 = vpop.f32.mrb[0].mxu0
      %782 = vmatprep.mubr.bf16.mxu0 0
      %783 = vmatmul.mubr.bf16.gmra.mrb[0].mxu0 %v577
      %v784 = vpop.f32.mrb[0].mxu0
      %v785 = vadd.f32 0.0, %v784
      %v786 = vpop.f32.mrb[0].mxu0
      %v787 = vpop.f32.mrb[0].mxu0
      %v788 = vadd.f32 0.0, %v787
      %v789 = vpop.f32.mrb[0].mxu0
      %790 = vmatprep.mubr.bf16.mxu0 0
      %791 = vmatmul.mubr.bf16.gmra.mrb[0].mxu0 %v578
      %v792 = vpop.f32.mrb[0].mxu0
      %v793 = vadd.f32 0.0, %v792
      %v794 = vpop.f32.mrb[0].mxu0
      %v795 = vpop.f32.mrb[0].mxu0
      %v796 = vadd.f32 0.0, %v795
      %v797 = vpop.f32.mrb[0].mxu0
      %798 = vmatprep.mubr.bf16.mxu0 0
      %799 = vmatmul.mubr.bf16.gmra.mrb[0].mxu0 %v579
      %v800 = vpop.f32.mrb[0].mxu0
      %v801 = vadd.f32 0.0, %v800
      %v802 = vpop.f32.mrb[0].mxu0
      %v803 = vpop.f32.mrb[0].mxu0
      %v804 = vadd.f32 0.0, %v803
      %v805 = vpop.f32.mrb[0].mxu0
      %806 = vmatprep.mubr.bf16.mxu0 0
      %807 = vmatmul.mubr.bf16.gmra.mrb[0].mxu0 %v580
      %v808 = vpop.f32.mrb[0].mxu0
      %v809 = vadd.f32 0.0, %v808
      %v810 = vpop.f32.mrb[0].mxu0
      %v811 = vpop.f32.mrb[0].mxu0
      %v812 = vadd.f32 0.0, %v811
      %v813 = vpop.f32.mrb[0].mxu0
      %814 = vmatprep.mubr.bf16.mxu0 0
      %815 = vmatmul.mubr.bf16.gmra.mrb[0].mxu0 %v581
      %v816 = vpop.f32.mrb[0].mxu0
      %v817 = vadd.f32 0.0, %v816
      %v818 = vpop.f32.mrb[0].mxu0
      %v819 = vpop.f32.mrb[0].mxu0
      %v820 = vadd.f32 0.0, %v819
      %v821 = vpop.f32.mrb[0].mxu0
      %822 = vmatprep.mubr.bf16.mxu0 0
      %823 = vmatmul.mubr.bf16.gmra.mrb[0].mxu0 %v582
      %v824 = vpop.f32.mrb[0].mxu0
      %v825 = vadd.f32 0.0, %v824
      %v826 = vpop.f32.mrb[0].mxu0
      %v827 = vpop.f32.mrb[0].mxu0
      %v828 = vadd.f32 0.0, %v827
      %v829 = vpop.f32.mrb[0].mxu0
      %830 = vmatprep.mubr.bf16.mxu0 0
      %831 = vmatmul.mubr.bf16.gmra.mrb[0].mxu0 %v583
      %v832 = vpop.f32.mrb[0].mxu0
      %v833 = vadd.f32 0.0, %v832
      %v834 = vpop.f32.mrb[0].mxu0
      %v835 = vpop.f32.mrb[0].mxu0
      %v836 = vadd.f32 0.0, %v835
      %v837 = vpop.f32.mrb[0].mxu0
      %838 = vmatprep.mubr.bf16.mxu0 0
      %839 = vmatmul.mubr.bf16.gmra.mrb[0].mxu0 %v584
      %v840 = vpop.f32.mrb[0].mxu0
      %v841 = vadd.f32 0.0, %v840
      %v842 = vpop.f32.mrb[0].mxu0
      %v843 = vpop.f32.mrb[0].mxu0
      %v844 = vadd.f32 0.0, %v843
      %v845 = vpop.f32.mrb[0].mxu0
      %846 = vmatprep.mubr.bf16.mxu0 0
      %847 = vmatmul.mubr.bf16.gmra.mrb[0].mxu0 %v585
      %v848 = vpop.f32.mrb[0].mxu0
      %v849 = vadd.f32 0.0, %v848
      %v850 = vpop.f32.mrb[0].mxu0
      %v851 = vpop.f32.mrb[0].mxu0
      %v852 = vadd.f32 0.0, %v851
      %v853 = vpop.f32.mrb[0].mxu0
      %854 = vmatprep.mubr.bf16.mxu0 0
      %855 = vmatmul.mubr.bf16.gmra.mrb[0].mxu0 %v586
      %v856 = vpop.f32.mrb[0].mxu0
      %v857 = vadd.f32 0.0, %v856
      %v858 = vpop.f32.mrb[0].mxu0
      %v859 = vpop.f32.mrb[0].mxu0
      %v860 = vadd.f32 0.0, %v859
      %v861 = vpop.f32.mrb[0].mxu0
      %862 = vmatprep.mubr.bf16.mxu0 0
      %863 = vmatmul.mubr.bf16.gmra.mrb[0].mxu0 %v587
      %v864 = vpop.f32.mrb[0].mxu0
      %v865 = vadd.f32 0.0, %v864
      %v866 = vpop.f32.mrb[0].mxu0
      %v867 = vpop.f32.mrb[0].mxu0
      %v868 = vadd.f32 0.0, %v867
      %v869 = vpop.f32.mrb[0].mxu0
      %870 = vmatprep.mubr.bf16.mxu0 0
      %871 = vmatmul.mubr.bf16.gmra.mrb[0].mxu0 %v588
      %v872 = vpop.f32.mrb[0].mxu0
      %v873 = vadd.f32 0.0, %v872
      %v874 = vpop.f32.mrb[0].mxu0
      %v875 = vpop.f32.mrb[0].mxu0
      %v876 = vadd.f32 0.0, %v875
      %v877 = vpop.f32.mrb[0].mxu0
      %878 = vmatprep.mubr.bf16.mxu0 0
      %879 = vmatmul.mubr.bf16.gmra.mrb[0].mxu0 %v589
      %v880 = vpop.f32.mrb[0].mxu0
      %v881 = vadd.f32 0.0, %v880
      %v882 = vpop.f32.mrb[0].mxu0
      %v883 = vpop.f32.mrb[0].mxu0
      %v884 = vadd.f32 0.0, %v883
      %v885 = vpop.f32.mrb[0].mxu0
      %886 = vmatprep.mubr.bf16.mxu0 0
      %887 = vmatmul.mubr.bf16.gmra.mrb[0].mxu0 %v590
      %v888 = vpop.f32.mrb[0].mxu0
      %v889 = vadd.f32 0.0, %v888
      %v890 = vpop.f32.mrb[0].mxu0
      %v891 = vpop.f32.mrb[0].mxu0
      %v892 = vadd.f32 0.0, %v891
      %v893 = vpop.f32.mrb[0].mxu0
      %894 = vmatprep.mubr.bf16.mxu0 0
      %895 = vmatmul.mubr.bf16.gmra.mrb[0].mxu0 %v591
      %v896 = vpop.f32.mrb[0].mxu0
      %v897 = vadd.f32 0.0, %v896
      %v898 = vpop.f32.mrb[0].mxu0
      %v899 = vpop.f32.mrb[0].mxu0
      %v900 = vadd.f32 0.0, %v899
      %v901 = vpop.f32.mrb[0].mxu0
      %902 = vmatprep.mubr.bf16.mxu0 0
      %903 = vmatmul.mubr.bf16.gmra.mrb[0].mxu0 %v592
      %v904 = vpop.f32.mrb[0].mxu0
      %v905 = vadd.f32 0.0, %v904
      %v906 = vpop.f32.mrb[0].mxu0
      %v907 = vpop.f32.mrb[0].mxu0
      %v908 = vadd.f32 0.0, %v907
      %v909 = vpop.f32.mrb[0].mxu0
      %910 = vmatprep.mubr.bf16.mxu0 0
      %911 = vmatmul.mubr.bf16.gmra.mrb[0].mxu0 %v593
      %v912 = vpop.f32.mrb[0].mxu0
      %v913 = vadd.f32 0.0, %v912
      %v914 = vpop.f32.mrb[0].mxu0
      %v915 = vpop.f32.mrb[0].mxu0
      %v916 = vadd.f32 0.0, %v915
      %v917 = vpop.f32.mrb[0].mxu0
      %918 = vmatprep.mubr.bf16.mxu0 0
      %919 = vmatmul.mubr.bf16.gmra.mrb[0].mxu0 %v594
      %v920 = vpop.f32.mrb[0].mxu0
      %v921 = vadd.f32 0.0, %v920
      %v922 = vpop.f32.mrb[0].mxu0
      %v923 = vpop.f32.mrb[0].mxu0
      %v924 = vadd.f32 0.0, %v923
      %v925 = vpop.f32.mrb[0].mxu0
      %926 = vmatprep.mubr.bf16.mxu0 0
      %927 = vmatmul.mubr.bf16.gmra.mrb[0].mxu0 %v595
      %v928 = vpop.f32.mrb[0].mxu0
      %v929 = vadd.f32 0.0, %v928
      %v930 = vpop.f32.mrb[0].mxu0
      %v931 = vpop.f32.mrb[0].mxu0
      %v932 = vadd.f32 0.0, %v931
      %v933 = vpop.f32.mrb[0].mxu0
      %934 = vmatprep.mubr.bf16.mxu0 0
      %935 = vmatmul.mubr.bf16.gmra.mrb[0].mxu0 %v596
      %v936 = vpop.f32.mrb[0].mxu0
      %v937 = vadd.f32 0.0, %v936
      %v938 = vpop.f32.mrb[0].mxu0
      %v939 = vpop.f32.mrb[0].mxu0
      %v940 = vadd.f32 0.0, %v939
      %v941 = vpop.f32.mrb[0].mxu0
      %942 = vmatprep.mubr.bf16.mxu0 0
      %943 = vmatmul.mubr.bf16.gmra.mrb[0].mxu0 %v597
      %v944 = vpop.f32.mrb[0].mxu0
      %v945 = vadd.f32 0.0, %v944
      %v946 = vpop.f32.mrb[0].mxu0
      %v947 = vpop.f32.mrb[0].mxu0
      %v948 = vadd.f32 0.0, %v947
      %v949 = vpop.f32.mrb[0].mxu0
      %950 = vdwg.mxu0
      %v951 = vpack.c.bf16 %v700, %v697
      %v952 = vpack.c.bf16 %v708, %v705
      %v953 = vpack.c.bf16 %v716, %v713
      %v954 = vpack.c.bf16 %v724, %v721
      %v955 = vpack.c.bf16 %v732, %v729
      %v956 = vpack.c.bf16 %v740, %v737
      %v957 = vpack.c.bf16 %v748, %v745
      %v958 = vpack.c.bf16 %v756, %v753
      %v959 = vpack.c.bf16 %v764, %v761
      %v960 = vpack.c.bf16 %v772, %v769
      %v961 = vpack.c.bf16 %v780, %v777
      %v962 = vpack.c.bf16 %v788, %v785
      %v963 = vpack.c.bf16 %v796, %v793
      %v964 = vpack.c.bf16 %v804, %v801
      %v965 = vpack.c.bf16 %v812, %v809
      %v966 = vpack.c.bf16 %v820, %v817
      %v967 = vpack.c.bf16 %v828, %v825
      %v968 = vpack.c.bf16 %v836, %v833
      %v969 = vpack.c.bf16 %v844, %v841
      %v970 = vpack.c.bf16 %v852, %v849
      %v971 = vpack.c.bf16 %v860, %v857
      %v972 = vpack.c.bf16 %v868, %v865
      %v973 = vpack.c.bf16 %v876, %v873
      %v974 = vpack.c.bf16 %v884, %v881
      %v975 = vpack.c.bf16 %v892, %v889
      %v976 = vpack.c.bf16 %v900, %v897
      %v977 = vpack.c.bf16 %v908, %v905
      %v978 = vpack.c.bf16 %v916, %v913
      %v979 = vpack.c.bf16 %v924, %v921
      %v980 = vpack.c.bf16 %v932, %v929
      %v981 = vpack.c.bf16 %v940, %v937
      %v982 = vpack.c.bf16 %v948, %v945
      %v1015 = vunpack.c.l.b16 %v951
      %v1016 = vunpack.c.h.b16 %v951
      %v1017 = vunpack.c.l.b16 %v952
      %v1018 = vunpack.c.h.b16 %v952
      %v1019 = vunpack.c.l.b16 %v953
      %v1020 = vunpack.c.h.b16 %v953
      %v1021 = vunpack.c.l.b16 %v954
      %v1022 = vunpack.c.h.b16 %v954
      %v1023 = vunpack.c.l.b16 %v955
      %v1024 = vunpack.c.h.b16 %v955
      %v1025 = vunpack.c.l.b16 %v956
      %v1026 = vunpack.c.h.b16 %v956
      %v1027 = vunpack.c.l.b16 %v957
      %v1028 = vunpack.c.h.b16 %v957
      %v1029 = vunpack.c.l.b16 %v958
      %v1030 = vunpack.c.h.b16 %v958
      %v1031 = vunpack.c.l.b16 %v959
      %v1032 = vunpack.c.h.b16 %v959
      %v1033 = vunpack.c.l.b16 %v960
      %v1034 = vunpack.c.h.b16 %v960
      %v1035 = vunpack.c.l.b16 %v961
      %v1036 = vunpack.c.h.b16 %v961
      %v1037 = vunpack.c.l.b16 %v962
      %v1038 = vunpack.c.h.b16 %v962
      %v1039 = vunpack.c.l.b16 %v963
      %v1040 = vunpack.c.h.b16 %v963
      %v1041 = vunpack.c.l.b16 %v964
      %v1042 = vunpack.c.h.b16 %v964
      %v1043 = vunpack.c.l.b16 %v965
      %v1044 = vunpack.c.h.b16 %v965
      %v1045 = vunpack.c.l.b16 %v966
      %v1046 = vunpack.c.h.b16 %v966
      %v1047 = vunpack.c.l.b16 %v967
      %v1048 = vunpack.c.h.b16 %v967
      %v1049 = vunpack.c.l.b16 %v968
      %v1050 = vunpack.c.h.b16 %v968
      %v1051 = vunpack.c.l.b16 %v969
      %v1052 = vunpack.c.h.b16 %v969
      %v1053 = vunpack.c.l.b16 %v970
      %v1054 = vunpack.c.h.b16 %v970
      %v1055 = vunpack.c.l.b16 %v971
      %v1056 = vunpack.c.h.b16 %v971
      %v1057 = vunpack.c.l.b16 %v972
      %v1058 = vunpack.c.h.b16 %v972
      %v1059 = vunpack.c.l.b16 %v973
      %v1060 = vunpack.c.h.b16 %v973
      %v1061 = vunpack.c.l.b16 %v974
      %v1062 = vunpack.c.h.b16 %v974
      %v1063 = vunpack.c.l.b16 %v975
      %v1064 = vunpack.c.h.b16 %v975
      %v1065 = vunpack.c.l.b16 %v976
      %v1066 = vunpack.c.h.b16 %v976
      %v1067 = vunpack.c.l.b16 %v977
      %v1068 = vunpack.c.h.b16 %v977
      %v1069 = vunpack.c.l.b16 %v978
      %v1070 = vunpack.c.h.b16 %v978
      %v1071 = vunpack.c.l.b16 %v979
      %v1072 = vunpack.c.h.b16 %v979
      %v1073 = vunpack.c.l.b16 %v980
      %v1074 = vunpack.c.h.b16 %v980
      %v1075 = vunpack.c.l.b16 %v981
      %v1076 = vunpack.c.h.b16 %v981
      %v1077 = vunpack.c.l.b16 %v982
      %v1078 = vunpack.c.h.b16 %v982
      %v1079 = vpack.c.b16 %v1015, %v1015
      %v1080 = vpack.c.b16 %v1016, %v1016
      %v1081 = vpack.c.b16 %v1017, %v1017
      %v1082 = vpack.c.b16 %v1018, %v1018
      %v1083 = vpack.c.b16 %v1019, %v1019
      %v1084 = vpack.c.b16 %v1020, %v1020
      %v1085 = vpack.c.b16 %v1021, %v1021
      %v1086 = vpack.c.b16 %v1022, %v1022
      %v1087 = vpack.c.b16 %v1023, %v1023
      %v1088 = vpack.c.b16 %v1024, %v1024
      %v1089 = vpack.c.b16 %v1025, %v1025
      %v1090 = vpack.c.b16 %v1026, %v1026
      %v1091 = vpack.c.b16 %v1027, %v1027
      %v1092 = vpack.c.b16 %v1028, %v1028
      %v1093 = vpack.c.b16 %v1029, %v1029
      %v1094 = vpack.c.b16 %v1030, %v1030
      %v1095 = vpack.c.b16 %v1031, %v1031
      %v1096 = vpack.c.b16 %v1032, %v1032
      %v1097 = vpack.c.b16 %v1033, %v1033
      %v1098 = vpack.c.b16 %v1034, %v1034
      %v1099 = vpack.c.b16 %v1035, %v1035
      %v1100 = vpack.c.b16 %v1036, %v1036
      %v1101 = vpack.c.b16 %v1037, %v1037
      %v1102 = vpack.c.b16 %v1038, %v1038
      %v1103 = vpack.c.b16 %v1039, %v1039
      %v1104 = vpack.c.b16 %v1040, %v1040
      %v1105 = vpack.c.b16 %v1041, %v1041
      %v1106 = vpack.c.b16 %v1042, %v1042
      %v1107 = vpack.c.b16 %v1043, %v1043
      %v1108 = vpack.c.b16 %v1044, %v1044
      %v1109 = vpack.c.b16 %v1045, %v1045
      %v1110 = vpack.c.b16 %v1046, %v1046
      %v1111 = vpack.c.b16 %v1047, %v1047
      %v1112 = vpack.c.b16 %v1048, %v1048
      %v1113 = vpack.c.b16 %v1049, %v1049
      %v1114 = vpack.c.b16 %v1050, %v1050
      %v1115 = vpack.c.b16 %v1051, %v1051
      %v1116 = vpack.c.b16 %v1052, %v1052
      %v1117 = vpack.c.b16 %v1053, %v1053
      %v1118 = vpack.c.b16 %v1054, %v1054
      %v1119 = vpack.c.b16 %v1055, %v1055
      %v1120 = vpack.c.b16 %v1056, %v1056
      %v1121 = vpack.c.b16 %v1057, %v1057
      %v1122 = vpack.c.b16 %v1058, %v1058
      %v1123 = vpack.c.b16 %v1059, %v1059
      %v1124 = vpack.c.b16 %v1060, %v1060
      %v1125 = vpack.c.b16 %v1061, %v1061
      %v1126 = vpack.c.b16 %v1062, %v1062
      %v1127 = vpack.c.b16 %v1063, %v1063
      %v1128 = vpack.c.b16 %v1064, %v1064
      %v1129 = vpack.c.b16 %v1065, %v1065
      %v1130 = vpack.c.b16 %v1066, %v1066
      %v1131 = vpack.c.b16 %v1067, %v1067
      %v1132 = vpack.c.b16 %v1068, %v1068
      %v1133 = vpack.c.b16 %v1069, %v1069
      %v1134 = vpack.c.b16 %v1070, %v1070
      %v1135 = vpack.c.b16 %v1071, %v1071
      %v1136 = vpack.c.b16 %v1072, %v1072
      %v1137 = vpack.c.b16 %v1073, %v1073
      %v1138 = vpack.c.b16 %v1074, %v1074
      %v1139 = vpack.c.b16 %v1075, %v1075
      %v1140 = vpack.c.b16 %v1076, %v1076
      %v1141 = vpack.c.b16 %v1077, %v1077
      %v1142 = vpack.c.b16 %v1078, %v1078
      %1207 = vst [vmem:[%s224] sm:$0xf] %v1079
      %1208 = vst [vmem:[%s224 + $0x4] sm:$0xf] %v1080
      %1209 = vst [vmem:[%s224 + $0x8] sm:$0xf] %v1081
      %1210 = vst [vmem:[%s224 + $0xc] sm:$0xf] %v1082
      %1211 = vst [vmem:[%s224 + $0x10] sm:$0xf] %v1083
      %1212 = vst [vmem:[%s224 + $0x14] sm:$0xf] %v1084
      %1213 = vst [vmem:[%s224 + $0x18] sm:$0xf] %v1085
      %1214 = vst [vmem:[%s224 + $0x1c] sm:$0xf] %v1086
      %1215 = vst [vmem:[%s224 + $0x20] sm:$0xf] %v1087
      %1216 = vst [vmem:[%s224 + $0x24] sm:$0xf] %v1088
      %1217 = vst [vmem:[%s224 + $0x28] sm:$0xf] %v1089
      %1218 = vst [vmem:[%s224 + $0x2c] sm:$0xf] %v1090
      %1219 = vst [vmem:[%s224 + $0x30] sm:$0xf] %v1091
      %1220 = vst [vmem:[%s224 + $0x34] sm:$0xf] %v1092
      %1221 = vst [vmem:[%s224 + $0x38] sm:$0xf] %v1093
      %1222 = vst [vmem:[%s224 + $0x3c] sm:$0xf] %v1094
      %1223 = vst [vmem:[%s224 + $0x40] sm:$0xf] %v1095
      %1224 = vst [vmem:[%s224 + $0x44] sm:$0xf] %v1096
      %1225 = vst [vmem:[%s224 + $0x48] sm:$0xf] %v1097
      %1226 = vst [vmem:[%s224 + $0x4c] sm:$0xf] %v1098
      %1227 = vst [vmem:[%s224 + $0x50] sm:$0xf] %v1099
      %1228 = vst [vmem:[%s224 + $0x54] sm:$0xf] %v1100
      %1229 = vst [vmem:[%s224 + $0x58] sm:$0xf] %v1101
      %1230 = vst [vmem:[%s224 + $0x5c] sm:$0xf] %v1102
      %1231 = vst [vmem:[%s224 + $0x60] sm:$0xf] %v1103
      %1232 = vst [vmem:[%s224 + $0x64] sm:$0xf] %v1104
      %1233 = vst [vmem:[%s224 + $0x68] sm:$0xf] %v1105
      %1234 = vst [vmem:[%s224 + $0x6c] sm:$0xf] %v1106
      %1235 = vst [vmem:[%s224 + $0x70] sm:$0xf] %v1107
      %1236 = vst [vmem:[%s224 + $0x74] sm:$0xf] %v1108
      %1237 = vst [vmem:[%s224 + $0x78] sm:$0xf] %v1109
      %1238 = vst [vmem:[%s224 + $0x7c] sm:$0xf] %v1110
      %1239 = vst [vmem:[%s224 + $0x80] sm:$0xf] %v1111
      %1240 = vst [vmem:[%s224 + $0x84] sm:$0xf] %v1112
      %1241 = vst [vmem:[%s224 + $0x88] sm:$0xf] %v1113
      %1242 = vst [vmem:[%s224 + $0x8c] sm:$0xf] %v1114
      %1243 = vst [vmem:[%s224 + $0x90] sm:$0xf] %v1115
      %1244 = vst [vmem:[%s224 + $0x94] sm:$0xf] %v1116
      %1245 = vst [vmem:[%s224 + $0x98] sm:$0xf] %v1117
      %1246 = vst [vmem:[%s224 + $0x9c] sm:$0xf] %v1118
      %1247 = vst [vmem:[%s224 + $0xa0] sm:$0xf] %v1119
      %1248 = vst [vmem:[%s224 + $0xa4] sm:$0xf] %v1120
      %1249 = vst [vmem:[%s224 + $0xa8] sm:$0xf] %v1121
      %1250 = vst [vmem:[%s224 + $0xac] sm:$0xf] %v1122
      %1251 = vst [vmem:[%s224 + $0xb0] sm:$0xf] %v1123
      %1252 = vst [vmem:[%s224 + $0xb4] sm:$0xf] %v1124
      %1253 = vst [vmem:[%s224 + $0xb8] sm:$0xf] %v1125
      %1254 = vst [vmem:[%s224 + $0xbc] sm:$0xf] %v1126
      %1255 = vst [vmem:[%s224 + $0xc0] sm:$0xf] %v1127
      %1256 = vst [vmem:[%s224 + $0xc4] sm:$0xf] %v1128
      %1257 = vst [vmem:[%s224 + $0xc8] sm:$0xf] %v1129
      %1258 = vst [vmem:[%s224 + $0xcc] sm:$0xf] %v1130
      %1259 = vst [vmem:[%s224 + $0xd0] sm:$0xf] %v1131
      %1260 = vst [vmem:[%s224 + $0xd4] sm:$0xf] %v1132
      %1261 = vst [vmem:[%s224 + $0xd8] sm:$0xf] %v1133
      %1262 = vst [vmem:[%s224 + $0xdc] sm:$0xf] %v1134
      %1263 = vst [vmem:[%s224 + $0xe0] sm:$0xf] %v1135
      %1264 = vst [vmem:[%s224 + $0xe4] sm:$0xf] %v1136
      %1265 = vst [vmem:[%s224 + $0xe8] sm:$0xf] %v1137
      %1266 = vst [vmem:[%s224 + $0xec] sm:$0xf] %v1138
      %1267 = vst [vmem:[%s224 + $0xf0] sm:$0xf] %v1139
      %1268 = vst [vmem:[%s224 + $0xf4] sm:$0xf] %v1140
      %1269 = vst [vmem:[%s224 + $0xf8] sm:$0xf] %v1141
      %1270 = vst [vmem:[%s224 + $0xfc] sm:$0xf] %v1142
      %v1271 = vld [vmem:[%s5] sm:$0x3]
      %v1272 = vadd.f32 %v697, %v700
      %v1273 = vadd.f32 %v1272, %v705
      %v1274 = vadd.f32 %v1273, %v708
      %v1275 = vadd.f32 %v1274, %v713
      %v1276 = vadd.f32 %v1275, %v716
      %v1277 = vadd.f32 %v1276, %v721
      %v1278 = vadd.f32 %v1277, %v724
      %v1279 = vadd.f32 %v1278, %v729
      %v1280 = vadd.f32 %v1279, %v732
      %v1281 = vadd.f32 %v1280, %v737
      %v1282 = vadd.f32 %v1281, %v740
      %v1283 = vadd.f32 %v1282, %v745
      %v1284 = vadd.f32 %v1283, %v748
      %v1285 = vadd.f32 %v1284, %v753
      %v1286 = vadd.f32 %v1285, %v756
      %v1287 = vadd.f32 %v1286, %v761
      %v1288 = vadd.f32 %v1287, %v764
      %v1289 = vadd.f32 %v1288, %v769
      %v1290 = vadd.f32 %v1289, %v772
      %v1291 = vadd.f32 %v1290, %v777
      %v1292 = vadd.f32 %v1291, %v780
      %v1293 = vadd.f32 %v1292, %v785
      %v1294 = vadd.f32 %v1293, %v788
      %v1295 = vadd.f32 %v1294, %v793
      %v1296 = vadd.f32 %v1295, %v796
      %v1297 = vadd.f32 %v1296, %v801
      %v1298 = vadd.f32 %v1297, %v804
      %v1299 = vadd.f32 %v1298, %v809
      %v1300 = vadd.f32 %v1299, %v812
      %v1301 = vadd.f32 %v1300, %v817
      %v1302 = vadd.f32 %v1301, %v820
      %v1303 = vadd.f32 %v1302, %v825
      %v1304 = vadd.f32 %v1303, %v828
      %v1305 = vadd.f32 %v1304, %v833
      %v1306 = vadd.f32 %v1305, %v836
      %v1307 = vadd.f32 %v1306, %v841
      %v1308 = vadd.f32 %v1307, %v844
      %v1309 = vadd.f32 %v1308, %v849
      %v1310 = vadd.f32 %v1309, %v852
      %v1311 = vadd.f32 %v1310, %v857
      %v1312 = vadd.f32 %v1311, %v860
      %v1313 = vadd.f32 %v1312, %v865
      %v1314 = vadd.f32 %v1313, %v868
      %v1315 = vadd.f32 %v1314, %v873
      %v1316 = vadd.f32 %v1315, %v876
      %v1317 = vadd.f32 %v1316, %v881
      %v1318 = vadd.f32 %v1317, %v884
      %v1319 = vadd.f32 %v1318, %v889
      %v1320 = vadd.f32 %v1319, %v892
      %v1321 = vadd.f32 %v1320, %v897
      %v1322 = vadd.f32 %v1321, %v900
      %v1323 = vadd.f32 %v1322, %v905
      %v1324 = vadd.f32 %v1323, %v908
      %v1325 = vadd.f32 %v1324, %v913
      %v1326 = vadd.f32 %v1325, %v916
      %v1327 = vadd.f32 %v1326, %v921
      %v1328 = vadd.f32 %v1327, %v924
      %v1329 = vadd.f32 %v1328, %v929
      %v1330 = vadd.f32 %v1329, %v932
      %v1331 = vadd.f32 %v1330, %v937
      %v1332 = vadd.f32 %v1331, %v940
      %v1333 = vadd.f32 %v1332, %v945
      %v1334 = vadd.f32 %v1333, %v948
      %v1335 = vrot.slane %v1334, 4
      %v1336 = vadd.f32 %v1334, %v1335
      %v1337 = vrot.slane %v1336, 2
      %v1338 = vadd.f32 %v1336, %v1337
      %v1339 = vrot.slane %v1338, 1
      %v1340 = vadd.f32 %v1338, %v1339
      %v1341 = vmul.f32 %v697, %v697
      %v1342 = vmul.f32 %v700, %v700
      %v1343 = vmul.f32 %v705, %v705
      %v1344 = vmul.f32 %v708, %v708
      %v1345 = vmul.f32 %v713, %v713
      %v1346 = vmul.f32 %v716, %v716
      %v1347 = vmul.f32 %v721, %v721
      %v1348 = vmul.f32 %v724, %v724
      %v1349 = vmul.f32 %v729, %v729
      %v1350 = vmul.f32 %v732, %v732
      %v1351 = vmul.f32 %v737, %v737
      %v1352 = vmul.f32 %v740, %v740
      %v1353 = vmul.f32 %v745, %v745
      %v1354 = vmul.f32 %v748, %v748
      %v1355 = vmul.f32 %v753, %v753
      %v1356 = vmul.f32 %v756, %v756
      %v1357 = vmul.f32 %v761, %v761
      %v1358 = vmul.f32 %v764, %v764
      %v1359 = vmul.f32 %v769, %v769
      %v1360 = vmul.f32 %v772, %v772
      %v1361 = vmul.f32 %v777, %v777
      %v1362 = vmul.f32 %v780, %v780
      %v1363 = vmul.f32 %v785, %v785
      %v1364 = vmul.f32 %v788, %v788
      %v1365 = vmul.f32 %v793, %v793
      %v1366 = vmul.f32 %v796, %v796
      %v1367 = vmul.f32 %v801, %v801
      %v1368 = vmul.f32 %v804, %v804
      %v1369 = vmul.f32 %v809, %v809
      %v1370 = vmul.f32 %v812, %v812
      %v1371 = vmul.f32 %v817, %v817
      %v1372 = vmul.f32 %v820, %v820
      %v1373 = vmul.f32 %v825, %v825
      %v1374 = vmul.f32 %v828, %v828
      %v1375 = vmul.f32 %v833, %v833
      %v1376 = vmul.f32 %v836, %v836
      %v1377 = vmul.f32 %v841, %v841
      %v1378 = vmul.f32 %v844, %v844
      %v1379 = vmul.f32 %v849, %v849
      %v1380 = vmul.f32 %v852, %v852
      %v1381 = vmul.f32 %v857, %v857
      %v1382 = vmul.f32 %v860, %v860
      %v1383 = vmul.f32 %v865, %v865
      %v1384 = vmul.f32 %v868, %v868
      %v1385 = vmul.f32 %v873, %v873
      %v1386 = vmul.f32 %v876, %v876
      %v1387 = vmul.f32 %v881, %v881
      %v1388 = vmul.f32 %v884, %v884
      %v1389 = vmul.f32 %v889, %v889
      %v1390 = vmul.f32 %v892, %v892
      %v1391 = vmul.f32 %v897, %v897
      %v1392 = vmul.f32 %v900, %v900
      %v1393 = vmul.f32 %v905, %v905
      %v1394 = vmul.f32 %v908, %v908
      %v1395 = vmul.f32 %v913, %v913
      %v1396 = vmul.f32 %v916, %v916
      %v1397 = vmul.f32 %v921, %v921
      %v1398 = vmul.f32 %v924, %v924
      %v1399 = vmul.f32 %v929, %v929
      %v1400 = vmul.f32 %v932, %v932
      %v1401 = vmul.f32 %v937, %v937
      %v1402 = vmul.f32 %v940, %v940
      %v1403 = vmul.f32 %v945, %v945
      %v1404 = vmul.f32 %v948, %v948
      %v1405 = vadd.f32 %v1341, %v1342
      %v1406 = vadd.f32 %v1405, %v1343
      %v1407 = vadd.f32 %v1406, %v1344
      %v1408 = vadd.f32 %v1407, %v1345
      %v1409 = vadd.f32 %v1408, %v1346
      %v1410 = vadd.f32 %v1409, %v1347
      %v1411 = vadd.f32 %v1410, %v1348
      %v1412 = vadd.f32 %v1411, %v1349
      %v1413 = vadd.f32 %v1412, %v1350
      %v1414 = vadd.f32 %v1413, %v1351
      %v1415 = vadd.f32 %v1414, %v1352
      %v1416 = vadd.f32 %v1415, %v1353
      %v1417 = vadd.f32 %v1416, %v1354
      %v1418 = vadd.f32 %v1417, %v1355
      %v1419 = vadd.f32 %v1418, %v1356
      %v1420 = vadd.f32 %v1419, %v1357
      %v1421 = vadd.f32 %v1420, %v1358
      %v1422 = vadd.f32 %v1421, %v1359
      %v1423 = vadd.f32 %v1422, %v1360
      %v1424 = vadd.f32 %v1423, %v1361
      %v1425 = vadd.f32 %v1424, %v1362
      %v1426 = vadd.f32 %v1425, %v1363
      %v1427 = vadd.f32 %v1426, %v1364
      %v1428 = vadd.f32 %v1427, %v1365
      %v1429 = vadd.f32 %v1428, %v1366
      %v1430 = vadd.f32 %v1429, %v1367
      %v1431 = vadd.f32 %v1430, %v1368
      %v1432 = vadd.f32 %v1431, %v1369
      %v1433 = vadd.f32 %v1432, %v1370
      %v1434 = vadd.f32 %v1433, %v1371
      %v1435 = vadd.f32 %v1434, %v1372
      %v1436 = vadd.f32 %v1435, %v1373
      %v1437 = vadd.f32 %v1436, %v1374
      %v1438 = vadd.f32 %v1437, %v1375
      %v1439 = vadd.f32 %v1438, %v1376
      %v1440 = vadd.f32 %v1439, %v1377
      %v1441 = vadd.f32 %v1440, %v1378
      %v1442 = vadd.f32 %v1441, %v1379
      %v1443 = vadd.f32 %v1442, %v1380
      %v1444 = vadd.f32 %v1443, %v1381
      %v1445 = vadd.f32 %v1444, %v1382
      %v1446 = vadd.f32 %v1445, %v1383
      %v1447 = vadd.f32 %v1446, %v1384
      %v1448 = vadd.f32 %v1447, %v1385
      %v1449 = vadd.f32 %v1448, %v1386
      %v1450 = vadd.f32 %v1449, %v1387
      %v1451 = vadd.f32 %v1450, %v1388
      %v1452 = vadd.f32 %v1451, %v1389
      %v1453 = vadd.f32 %v1452, %v1390
      %v1454 = vadd.f32 %v1453, %v1391
      %v1455 = vadd.f32 %v1454, %v1392
      %v1456 = vadd.f32 %v1455, %v1393
      %v1457 = vadd.f32 %v1456, %v1394
      %v1458 = vadd.f32 %v1457, %v1395
      %v1459 = vadd.f32 %v1458, %v1396
      %v1460 = vadd.f32 %v1459, %v1397
      %v1461 = vadd.f32 %v1460, %v1398
      %v1462 = vadd.f32 %v1461, %v1399
      %v1463 = vadd.f32 %v1462, %v1400
      %v1464 = vadd.f32 %v1463, %v1401
      %v1465 = vadd.f32 %v1464, %v1402
      %v1466 = vadd.f32 %v1465, %v1403
      %v1467 = vadd.f32 %v1466, %v1404
      %v1468 = vrot.slane %v1467, 4
      %v1469 = vadd.f32 %v1467, %v1468
      %v1470 = vrot.slane %v1469, 2
      %v1471 = vadd.f32 %v1469, %v1470
      %v1472 = vrot.slane %v1471, 1
      %v1473 = vadd.f32 %v1471, %v1472
      %vm1474 = vcmask 1040384
      %v1475 = vsel %vm1474, %v1340, %v1473
      %v1476 = vadd.f32 %v1271, %v1475
      %1477 = vst [vmem:[%s5] sm:$0x3] %v1476
      %s1478 = smul.u32 64, %s17
      %p1479 = scmp.lt.s32.totalorder %s1478, 127
      %s1480 = scalar_select %p1479, %s1478, 127
      %s1481 = smul.addr %s1480, 4
      %s1482 = scalar_lea.vmem %s4, %s1481
      // Predicated region
      $region41: #{bottleneck_forward.6} parent=35 // pred_check
        %p1483 = pneg %p124
      $region42: #{bottleneck_forward.6} parent=35 // pred_check_branch
        %1485 = sbr.rel (%p1483) target = $region44
      $region43: #{bottleneck_forward.6} parent=35 // pred_region
        %s1486 = smul.u32 64, %s17
      $region44: #{bottleneck_forward.6} parent=35 // pred_fallthru
        _
      // Predicated region
      $region45: #{bottleneck_forward.6} parent=35 // pred_check
        %p1487 = pneg %p145
      $region46: #{bottleneck_forward.6} parent=35 // pred_check_branch
        %1489 = sbr.rel (%p1487) target = $region48
      $region47: #{bottleneck_forward.6} parent=35 // pred_region
        _
      $region48: #{bottleneck_forward.6} parent=35 // pred_fallthru
        _
      // Predicated region
      $region49: #{bottleneck_forward.6} parent=35 // pred_check
        %p1490 = pneg %p145
      $region50: #{bottleneck_forward.6} parent=35 // pred_check_branch
        %1492 = sbr.rel (%p1490) target = $region52
      $region51: #{bottleneck_forward.6} parent=35 // pred_region
        _
      $region52: #{bottleneck_forward.6} parent=35 // pred_fallthru
        _
    $region36: #{bottleneck_forward.6} parent=5 // pred_fallthru
      _
    %p1493 = scmp.le.s32.totalorder 2, %s12
    // Predicated region
    $region53: #{bottleneck_forward.6} parent=5 // pred_check
      %p1494 = pneg %p1493
    $region54: #{bottleneck_forward.6} parent=5 // pred_check_branch
      %1496 = sbr.rel (%p1494) target = $region56
    $region55: #{bottleneck_forward.6} parent=5 // pred_region
      %s1497 = ssub.s32 %s12, 2
      // Predicated region
      $region57: #{bottleneck_forward.6} parent=55 // pred_check
        %p1498 = pneg %p130
      $region58: #{bottleneck_forward.6} parent=55 // pred_check_branch
        %1500 = sbr.rel (%p1498) target = $region60
      $region59: #{bottleneck_forward.6} parent=55 // pred_region
        %s1501 = smul.u32 64, %s18
        %p1502 = scmp.lt.s32.totalorder %s1501, 127
        %s1503 = scalar_select %p1502, %s1501, 127
        %s1504 = smul.addr %s1503, 4
        %s1505 = scalar_lea.vmem %s4, %s1504
      $region60: #{bottleneck_forward.6} parent=55 // pred_fallthru
        _
    $region56: #{bottleneck_forward.6} parent=5 // pred_fallthru
      _
  $region6: #{bottleneck_forward.6} parent=0 // loop_footer
    %s16 = sadd.s32 1, %s12
  $region7: #{bottleneck_forward.6} parent=0 // loop_footer_branch
    %11 = sbr.rel target = $region3
  $region8: #{bottleneck_forward.6} parent=0 // loop_exit
    _

// kernel: bottleneck_forward.5
$region0: #{bottleneck_forward.5}
  #allocation0 [shape = 'u32[]', space=smem, size = 0x4, offset = 0x4, fixed_abs, tag = 'smem constant byte address 0x4 - core index']
  #allocation1 [shape = 'u32[144,128]{1,0:T(1,128)}', space=vmem, size = 0x12000, scoped, tag = 'internal scratch']
  %s0 = inlined_call_operand.vmem [shape: bf16[2,10,10,10,128], index: 0, kind: input, shape index: {}, may-alias: {0,1,2}]
  %s1 = inlined_call_operand.vmem [shape: bf16[2,10,10,10,128], index: 1, kind: input, shape index: {}, may-alias: {0,1,2}]
  %s2 = inlined_call_operand.vmem [shape: bf16[2,10,10,10,128], index: 2, kind: input, shape index: {}, may-alias: {0,1,2}]
  %s3 = inlined_call_operand.vmem [shape: bf16[27,128,128], index: 3, kind: input, shape index: {}]
  %s4 = inlined_call_operand.vmem [shape: bf16[2,8,8,8,128], index: 4, kind: output, shape index: {0}]
  %s5 = inlined_call_operand.vmem [shape: f32[2,128], index: 5, kind: output, shape index: {1}]
  %6 = xla_tuple %s4, %s5
  %s7 = sld [smem:[#allocation0]]
  $region61: #{bottleneck_forward.5} parent=0
    _
  %s9 = ssub.s32 1, %s7
  %s10 = scalar_select 0, %s9, %s7
  loop: start=0, step=1, limit=18
  $region2: #{bottleneck_forward.5} parent=0 // loop_pre_header
    _
  $region3: #{bottleneck_forward.5} parent=0 // loop_header
    %s12 = sphi 0, %s16
    %p13 = scmp.ge.s32.totalorder %s12, 18
    %s19 = sphi 0, %s31
    %s20 = sphi 0, %s27
    %s21 = sphi 0, %s19
    %s22 = sphi 0, %s20
    %s23 = sphi 0, %s21
    %s24 = sphi 0, %s22
    %s36 = sphi 0, %s38
    %s39 = sphi 0, %s36
    %s40 = sphi 0, %s39
    %s56 = sphi 0, %s40
    %s66 = sphi 0, %s68
    %s69 = sphi 0, %s66
    %s70 = sphi 0, %s69
    %s86 = sphi 0, %s70
    %s96 = sphi 0, %s98
    %s99 = sphi 0, %s96
    %s100 = sphi 0, %s99
    %s116 = sphi 0, %s100
    %s120 = sphi 0, %s120
    %s122 = sphi 0, %s120
    %s123 = sphi 0, %s122
    %s137 = sphi 0, %s123
    %s145 = sphi 0, %s147
    %s148 = sphi 0, %s145
    %s149 = sphi 0, %s148
    %s165 = sphi 0, %s149
    %s169 = sphi 0, %s169
    %s171 = sphi 0, %s169
    %s172 = sphi 0, %s171
    %s186 = sphi 0, %s172
  $region4: #{bottleneck_forward.5} parent=0 // loop_header_branch
    %15 = sbr.rel (%p13) target = $region8
  $region5: #{bottleneck_forward.5} parent=0 // loop_body
    %s17 = ssub.s32 %s12, 1
    %s18 = ssub.s32 %s12, 2
    %s25 = sadd.s32 1, %s20
    %p26 = scmp.ge.s32.totalorder %s25, 8
    %s27 = scalar_select %p26, 0, %s25
    %s28 = sadd.s32 1, %s19
    %s29 = scalar_select %p26, %s28, %s19
    %p30 = scmp.ge.s32.totalorder %s29, 2
    %s31 = scalar_select %p30, 0, %s29
    %s32 = ssub.s32 %s19, %s31
    %s33 = ssub.s32 %s20, %s27
    %s34 = sor.u32 %s32, %s33
    %p35 = scmp.eq.s32.totalorder %s34, 0
    %s37 = sadd.s32 %s36, 1
    %s38 = scalar_select %p35, %s36, %s37
    %p41 = pneg %p35
    %p42 = scmp.eq.s32.totalorder %s12, 15
    %p43 = por %p41, %p42
    %p44 = scmp.ne.s32.totalorder %s36, %s39
    %p45 = scmp.eq.s32.totalorder %s12, 0
    %p46 = por %p44, %p45
    %p47 = scmp.ne.s32.totalorder %s36, %s39
    %p48 = scmp.eq.s32.totalorder %s17, 15
    %p49 = por %p47, %p48
    %p50 = scmp.ne.s32.totalorder %s39, %s40
    %p51 = scmp.eq.s32.totalorder %s17, 0
    %p52 = por %p50, %p51
    %p53 = scmp.ne.s32.totalorder %s39, %s40
    %p54 = scmp.eq.s32.totalorder %s18, 15
    %p55 = por %p53, %p54
    %p57 = scmp.ne.s32.totalorder %s40, %s56
    %p58 = scmp.eq.s32.totalorder %s18, 0
    %p59 = por %p57, %p58
    %s60 = sadd.s32 %s20, 1
    %s61 = sadd.s32 %s27, 1
    %s62 = ssub.s32 %s19, %s31
    %s63 = ssub.s32 %s60, %s61
    %s64 = sor.u32 %s62, %s63
    %p65 = scmp.eq.s32.totalorder %s64, 0
    %s67 = sadd.s32 %s66, 1
    %s68 = scalar_select %p65, %s66, %s67
    %p71 = pneg %p65
    %p72 = scmp.eq.s32.totalorder %s12, 15
    %p73 = por %p71, %p72
    %p74 = scmp.ne.s32.totalorder %s66, %s69
    %p75 = scmp.eq.s32.totalorder %s12, 0
    %p76 = por %p74, %p75
    %p77 = scmp.ne.s32.totalorder %s66, %s69
    %p78 = scmp.eq.s32.totalorder %s17, 15
    %p79 = por %p77, %p78
    %p80 = scmp.ne.s32.totalorder %s69, %s70
    %p81 = scmp.eq.s32.totalorder %s17, 0
    %p82 = por %p80, %p81
    %p83 = scmp.ne.s32.totalorder %s69, %s70
    %p84 = scmp.eq.s32.totalorder %s18, 15
    %p85 = por %p83, %p84
    %p87 = scmp.ne.s32.totalorder %s70, %s86
    %p88 = scmp.eq.s32.totalorder %s18, 0
    %p89 = por %p87, %p88
    %s90 = sadd.s32 %s20, 2
    %s91 = sadd.s32 %s27, 2
    %s92 = ssub.s32 %s19, %s31
    %s93 = ssub.s32 %s90, %s91
    %s94 = sor.u32 %s92, %s93
    %p95 = scmp.eq.s32.totalorder %s94, 0
    %s97 = sadd.s32 %s96, 1
    %s98 = scalar_select %p95, %s96, %s97
    %p101 = pneg %p95
    %p102 = scmp.eq.s32.totalorder %s12, 15
    %p103 = por %p101, %p102
    %p104 = scmp.ne.s32.totalorder %s96, %s99
    %p105 = scmp.eq.s32.totalorder %s12, 0
    %p106 = por %p104, %p105
    %p107 = scmp.ne.s32.totalorder %s96, %s99
    %p108 = scmp.eq.s32.totalorder %s17, 15
    %p109 = por %p107, %p108
    %p110 = scmp.ne.s32.totalorder %s99, %s100
    %p111 = scmp.eq.s32.totalorder %s17, 0
    %p112 = por %p110, %p111
    %p113 = scmp.ne.s32.totalorder %s99, %s100
    %p114 = scmp.eq.s32.totalorder %s18, 15
    %p115 = por %p113, %p114
    %p117 = scmp.ne.s32.totalorder %s100, %s116
    %p118 = scmp.eq.s32.totalorder %s18, 0
    %p119 = por %p117, %p118
    %s121 = sadd.s32 %s120, 1
    %p124 = scmp.eq.s32.totalorder %s12, 15
    %p125 = scmp.ne.s32.totalorder %s120, %s122
    %p126 = scmp.eq.s32.totalorder %s12, 0
    %p127 = por %p125, %p126
    %p128 = scmp.ne.s32.totalorder %s120, %s122
    %p129 = scmp.eq.s32.totalorder %s17, 15
    %p130 = por %p128, %p129
    %p131 = scmp.ne.s32.totalorder %s122, %s123
    %p132 = scmp.eq.s32.totalorder %s17, 0
    %p133 = por %p131, %p132
    %p134 = scmp.ne.s32.totalorder %s122, %s123
    %p135 = scmp.eq.s32.totalorder %s18, 15
    %p136 = por %p134, %p135
    %p138 = scmp.ne.s32.totalorder %s123, %s137
    %p139 = scmp.eq.s32.totalorder %s18, 0
    %p140 = por %p138, %p139
    %s141 = ssub.s32 %s19, %s31
    %s142 = ssub.s32 %s20, %s27
    %s143 = sor.u32 %s141, %s142
    %p144 = scmp.eq.s32.totalorder %s143, 0
    %s146 = sadd.s32 %s145, 1
    %s147 = scalar_select %p144, %s145, %s146
    %p150 = pneg %p144
    %p151 = scmp.eq.s32.totalorder %s12, 15
    %p152 = por %p150, %p151
    %p153 = scmp.ne.s32.totalorder %s145, %s148
    %p154 = scmp.eq.s32.totalorder %s12, 0
    %p155 = por %p153, %p154
    %p156 = scmp.ne.s32.totalorder %s145, %s148
    %p157 = scmp.eq.s32.totalorder %s17, 15
    %p158 = por %p156, %p157
    %p159 = scmp.ne.s32.totalorder %s148, %s149
    %p160 = scmp.eq.s32.totalorder %s17, 0
    %p161 = por %p159, %p160
    %p162 = scmp.ne.s32.totalorder %s148, %s149
    %p163 = scmp.eq.s32.totalorder %s18, 15
    %p164 = por %p162, %p163
    %p166 = scmp.ne.s32.totalorder %s149, %s165
    %p167 = scmp.eq.s32.totalorder %s18, 0
    %p168 = por %p166, %p167
    %s170 = sadd.s32 %s169, 1
    %p173 = scmp.eq.s32.totalorder %s12, 15
    %p174 = scmp.ne.s32.totalorder %s169, %s171
    %p175 = scmp.eq.s32.totalorder %s12, 0
    %p176 = por %p174, %p175
    %p177 = scmp.ne.s32.totalorder %s169, %s171
    %p178 = scmp.eq.s32.totalorder %s17, 15
    %p179 = por %p177, %p178
    %p180 = scmp.ne.s32.totalorder %s171, %s172
    %p181 = scmp.eq.s32.totalorder %s17, 0
    %p182 = por %p180, %p181
    %p183 = scmp.ne.s32.totalorder %s171, %s172
    %p184 = scmp.eq.s32.totalorder %s18, 15
    %p185 = por %p183, %p184
    %p187 = scmp.ne.s32.totalorder %s172, %s186
    %p188 = scmp.eq.s32.totalorder %s18, 0
    %p189 = por %p187, %p188
    %p190 = scmp.le.s32.totalorder 1, %s12
    %p191 = scmp.lt.s32.totalorder %s12, 17
    %p192 = pnand %p190, %p191
    %p193 = pneg %p192
    // Predicated region
    $region9: #{bottleneck_forward.5} parent=5 // pred_check
      _
    $region10: #{bottleneck_forward.5} parent=5 // pred_check_branch
      %195 = sbr.rel (%p192) target = $region12
    $region11: #{bottleneck_forward.5} parent=5 // pred_region
      %s196 = ssub.s32 %s12, 1
      // Predicated region
      $region13: #{bottleneck_forward.5} parent=11 // pred_check
        %p197 = pneg %p133
      $region14: #{bottleneck_forward.5} parent=11 // pred_check_branch
        %199 = sbr.rel (%p197) target = $region16
      $region15: #{bottleneck_forward.5} parent=11 // pred_region
        _
      $region16: #{bottleneck_forward.5} parent=11 // pred_fallthru
        _
    $region12: #{bottleneck_forward.5} parent=5 // pred_fallthru
      _
    %p200 = scmp.lt.s32.totalorder %s12, 16
    // Predicated region
    $region17: #{bottleneck_forward.5} parent=5 // pred_check
      %p201 = pneg %p200
    $region18: #{bottleneck_forward.5} parent=5 // pred_check_branch
      %203 = sbr.rel (%p201) target = $region20
    $region19: #{bottleneck_forward.5} parent=5 // pred_region
      // Predicated region
      $region21: #{bottleneck_forward.5} parent=19 // pred_check
        %p204 = pneg %p46
      $region22: #{bottleneck_forward.5} parent=19 // pred_check_branch
        %206 = sbr.rel (%p204) target = $region24
      $region23: #{bottleneck_forward.5} parent=19 // pred_region
        %p207 = scmp.lt.s32.totalorder %s19, 1
        %s208 = scalar_select %p207, %s19, 1
        %p209 = scmp.lt.s32.totalorder %s20, 9
        %s210 = scalar_select %p209, %s20, 9
        %s211 = smul.addr %s210, 20
        %s212 = smul.addr %s208, 200
        %s213 = sadd.s32 %s211, %s212
        %s214 = smul.addr %s213, 4
        %s215 = scalar_lea.vmem %s0, %s214
      $region24: #{bottleneck_forward.5} parent=19 // pred_fallthru
        _
      // Predicated region
      $region25: #{bottleneck_forward.5} parent=19 // pred_check
        %p216 = pneg %p76
      $region26: #{bottleneck_forward.5} parent=19 // pred_check_branch
        %218 = sbr.rel (%p216) target = $region28
      $region27: #{bottleneck_forward.5} parent=19 // pred_region
        %s219 = sadd.s32 %s20, 1
        %p220 = scmp.lt.s32.totalorder %s19, 1
        %s221 = scalar_select %p220, %s19, 1
        %p222 = scmp.lt.s32.totalorder %s219, 9
        %s223 = scalar_select %p222, %s219, 9
        %s224 = smul.addr %s223, 20
        %s225 = smul.addr %s221, 200
        %s226 = sadd.s32 %s224, %s225
        %s227 = smul.addr %s226, 4
        %s228 = scalar_lea.vmem %s1, %s227
        %s229 = sadd.s32 %s20, 1
      $region28: #{bottleneck_forward.5} parent=19 // pred_fallthru
        _
      // Predicated region
      $region29: #{bottleneck_forward.5} parent=19 // pred_check
        %p230 = pneg %p106
      $region30: #{bottleneck_forward.5} parent=19 // pred_check_branch
        %232 = sbr.rel (%p230) target = $region32
      $region31: #{bottleneck_forward.5} parent=19 // pred_region
        %s233 = sadd.s32 %s20, 2
        %p234 = scmp.lt.s32.totalorder %s19, 1
        %s235 = scalar_select %p234, %s19, 1
        %p236 = scmp.lt.s32.totalorder %s233, 9
        %s237 = scalar_select %p236, %s233, 9
        %s238 = smul.addr %s237, 20
        %s239 = smul.addr %s235, 200
        %s240 = sadd.s32 %s238, %s239
        %s241 = smul.addr %s240, 4
        %s242 = scalar_lea.vmem %s2, %s241
        %s243 = sadd.s32 %s20, 2
      $region32: #{bottleneck_forward.5} parent=19 // pred_fallthru
        _
    $region20: #{bottleneck_forward.5} parent=5 // pred_fallthru
      _
    %p244 = scmp.le.s32.totalorder 1, %s12
    %p245 = scmp.lt.s32.totalorder %s12, 17
    %p246 = pnand %p244, %p245
    %p247 = pneg %p246
    // Predicated region
    $region33: #{bottleneck_forward.5} parent=5 // pred_check
      _
    $region34: #{bottleneck_forward.5} parent=5 // pred_check_branch
      %249 = sbr.rel (%p246) target = $region36
    $region35: #{bottleneck_forward.5} parent=5 // pred_region
      %s250 = ssub.s32 %s12, 1
      %p251 = scmp.lt.s32.totalorder %s21, 1
      %s252 = scalar_select %p251, %s21, 1
      %p253 = scmp.lt.s32.totalorder %s22, 9
      %s254 = scalar_select %p253, %s22, 9
      %s255 = smul.addr %s254, 20
      %s256 = smul.addr %s252, 200
      %s257 = sadd.s32 %s255, %s256
      %s258 = smul.addr %s257, 4
      %s259 = scalar_lea.vmem %s0, %s258
      %p260 = pneg %p52
      %p261 = pneg %p49
      %s262 = sadd.s32 %s22, 1
      %p263 = scmp.lt.s32.totalorder %s21, 1
      %s264 = scalar_select %p263, %s21, 1
      %p265 = scmp.lt.s32.totalorder %s262, 9
      %s266 = scalar_select %p265, %s262, 9
      %s267 = smul.addr %s266, 20
      %s268 = smul.addr %s264, 200
      %s269 = sadd.s32 %s267, %s268
      %s270 = smul.addr %s269, 4
      %s271 = scalar_lea.vmem %s1, %s270
      %p272 = pneg %p82
      %p273 = pneg %p79
      %s274 = sadd.s32 %s22, 2
      %p275 = scmp.lt.s32.totalorder %s21, 1
      %s276 = scalar_select %p275, %s21, 1
      %p277 = scmp.lt.s32.totalorder %s274, 9
      %s278 = scalar_select %p277, %s274, 9
      %s279 = smul.addr %s278, 20
      %s280 = smul.addr %s276, 200
      %s281 = sadd.s32 %s279, %s280
      %s282 = smul.addr %s281, 4
      %s283 = scalar_lea.vmem %s2, %s282
      %p284 = pneg %p112
      %p285 = pneg %p109
      %p286 = pneg %p133
      %p287 = pneg %p130
      %p288 = pneg %p161
      %p289 = pneg %p158
      %p290 = scmp.lt.s32.totalorder %s21, 1
      %s291 = scalar_select %p290, %s21, 1
      %p292 = scmp.lt.s32.totalorder %s22, 7
      %s293 = scalar_select %p292, %s22, 7
      %s294 = smul.addr %s293, 8
      %s295 = smul.addr %s291, 64
      %s296 = sadd.s32 %s294, %s295
      %s297 = smul.addr %s296, 4
      %s298 = scalar_lea.vmem %s4, %s297
      %p299 = pneg %p182
      %p300 = pneg %p179
      %p301 = scmp.lt.s32.totalorder %s21, 1
      %s302 = scalar_select %p301, %s21, 1
      %p303 = scmp.lt.s32.totalorder %s22, 9
      %s304 = scalar_select %p303, %s22, 9
      %s305 = smul.addr %s304, 20
      %s306 = smul.addr %s302, 200
      %s307 = sadd.s32 %s305, %s306
      %s308 = smul.addr %s307, 4
      %s309 = scalar_lea.vmem %s0, %s308
      %s310 = sadd.s32 %s22, 1
      %p311 = scmp.lt.s32.totalorder %s21, 1
      %s312 = scalar_select %p311, %s21, 1
      %p313 = scmp.lt.s32.totalorder %s310, 9
      %s314 = scalar_select %p313, %s310, 9
      %s315 = smul.addr %s314, 20
      %s316 = smul.addr %s312, 200
      %s317 = sadd.s32 %s315, %s316
      %s318 = smul.addr %s317, 4
      %s319 = scalar_lea.vmem %s1, %s318
      %s320 = sadd.s32 %s22, 1
      %s321 = sadd.s32 %s22, 2
      %p322 = scmp.lt.s32.totalorder %s21, 1
      %s323 = scalar_select %p322, %s21, 1
      %p324 = scmp.lt.s32.totalorder %s321, 9
      %s325 = scalar_select %p324, %s321, 9
      %s326 = smul.addr %s325, 20
      %s327 = smul.addr %s323, 200
      %s328 = sadd.s32 %s326, %s327
      %s329 = smul.addr %s328, 4
      %s330 = scalar_lea.vmem %s2, %s329
      %s331 = sadd.s32 %s22, 2
      %p332 = scmp.lt.s32.totalorder %s21, 1
      %s333 = scalar_select %p332, %s21, 1
      %p334 = scmp.lt.s32.totalorder %s22, 7
      %s335 = scalar_select %p334, %s22, 7
      %s336 = smul.addr %s335, 8
      %s337 = smul.addr %s333, 64
      %s338 = sadd.s32 %s336, %s337
      %s339 = smul.addr %s338, 4
      %s340 = scalar_lea.vmem %s4, %s339
      %p342 = scmp.eq.s32.totalorder %s21, 0
      %p343 = scmp.eq.s32.totalorder %s22, 0
      %p344 = pnand %p342, %p343
      %p345 = pneg %p344
      // Predicated region
      $region37: #{bottleneck_forward.5} parent=35 // pred_check
        _
      $region38: #{bottleneck_forward.5} parent=35 // pred_check_branch
        %347 = sbr.rel (%p344) target = $region40
      $region39: #{bottleneck_forward.5} parent=35 // pred_region
        %348 = vst [vmem:[%s5] sm:$0x3] 0.0
      $region40: #{bottleneck_forward.5} parent=35 // pred_fallthru
        _
      %v349 = vld [vmem:[%s309] sm:$0xf]
      %v350 = vld [vmem:[%s309 + $0x4] sm:$0x1]
      %v351 = vld [vmem:[%s309 + $0x8] sm:$0xf]
      %v352 = vld [vmem:[%s309 + $0xc] sm:$0x1]
      %v353 = vld [vmem:[%s309 + $0x10] sm:$0xf]
      %v354 = vld [vmem:[%s309 + $0x14] sm:$0x1]
      %v355 = vld [vmem:[%s309 + $0x18] sm:$0xf]
      %v356 = vld [vmem:[%s309 + $0x1c] sm:$0x1]
      %v357 = vld [vmem:[%s309 + $0x20] sm:$0xf]
      %v358 = vld [vmem:[%s309 + $0x24] sm:$0x1]
      %v359 = vld [vmem:[%s309 + $0x28] sm:$0xf]
      %v360 = vld [vmem:[%s309 + $0x2c] sm:$0x1]
      %v361 = vld [vmem:[%s309 + $0x30] sm:$0xf]
      %v362 = vld [vmem:[%s309 + $0x34] sm:$0x1]
      %v363 = vld [vmem:[%s309 + $0x38] sm:$0xf]
      %v364 = vld [vmem:[%s309 + $0x3c] sm:$0x1]
      %v365 = vld [vmem:[%s309 + $0x40] sm:$0xf]
      %v366 = vld [vmem:[%s309 + $0x44] sm:$0x1]
      %v367 = vld [vmem:[%s309 + $0x48] sm:$0xf]
      %v368 = vld [vmem:[%s309 + $0x4c] sm:$0x1]
      %v369 = vunpack.c.l.bf16 %v349
      %v370 = vunpack.c.l.bf16 %v350
      %v371 = vunpack.c.l.bf16 %v351
      %v372 = vunpack.c.l.bf16 %v352
      %v373 = vunpack.c.l.bf16 %v353
      %v374 = vunpack.c.l.bf16 %v354
      %v375 = vunpack.c.l.bf16 %v355
      %v376 = vunpack.c.l.bf16 %v356
      %v377 = vunpack.c.l.bf16 %v357
      %v378 = vunpack.c.l.bf16 %v358
      %v379 = vunpack.c.l.bf16 %v359
      %v380 = vunpack.c.l.bf16 %v360
      %v381 = vunpack.c.l.bf16 %v361
      %v382 = vunpack.c.l.bf16 %v362
      %v383 = vunpack.c.l.bf16 %v363
      %v384 = vunpack.c.l.bf16 %v364
      %v385 = vunpack.c.l.bf16 %v365
      %v386 = vunpack.c.l.bf16 %v366
      %v387 = vunpack.c.l.bf16 %v367
      %v388 = vunpack.c.l.bf16 %v368
      %v389 = vpack.c.bf16 %v371, %v369
      %v390 = vpack.c.bf16 %v375, %v373
      %v391 = vpack.c.bf16 %v379, %v377
      %v392 = vpack.c.bf16 %v383, %v381
      %v393 = vld [vmem:[%s3] sm:$0xf]
      %v394 = vld [vmem:[%s3 + $0x4] sm:$0xf]
      %v395 = vld [vmem:[%s3 + $0x8] sm:$0xf]
      %v396 = vld [vmem:[%s3 + $0xc] sm:$0xf]
      %v397 = vld [vmem:[%s3 + $0x10] sm:$0xf]
      %v398 = vld [vmem:[%s3 + $0x14] sm:$0xf]
      %v399 = vld [vmem:[%s3 + $0x18] sm:$0xf]
      %v400 = vld [vmem:[%s3 + $0x1c] sm:$0xf]
      %v401 = vld [vmem:[%s3 + $0x20] sm:$0xf]
      %v402 = vld [vmem:[%s3 + $0x24] sm:$0xf]
      %v403 = vld [vmem:[%s3 + $0x28] sm:$0xf]
      %v404 = vld [vmem:[%s3 + $0x2c] sm:$0xf]
      %v405 = vld [vmem:[%s3 + $0x30] sm:$0xf]
      %v406 = vld [vmem:[%s3 + $0x34] sm:$0xf]
      %v407 = vld [vmem:[%s3 + $0x38] sm:$0xf]
      %v408 = vld [vmem:[%s3 + $0x3c] sm:$0xf]
      %vm425 = vcmask 1046528
      %v426 = vrot.slane %v369, 1
      %v427 = vrot.slane %v370, 1
      %v428 = vsel %vm425, %v426, %v427
      %v429 = vrot.slane %v371, 1
      %v430 = vrot.slane %v372, 1
      %v431 = vsel %vm425, %v429, %v430
      %v432 = vrot.slane %v373, 1
      %v433 = vrot.slane %v374, 1
      %v434 = vsel %vm425, %v432, %v433
      %v435 = vrot.slane %v375, 1
      %v436 = vrot.slane %v376, 1
      %v437 = vsel %vm425, %v435, %v436
      %v438 = vrot.slane %v377, 1
      %v439 = vrot.slane %v378, 1
      %v440 = vsel %vm425, %v438, %v439
      %v441 = vrot.slane %v379, 1
      %v442 = vrot.slane %v380, 1
      %v443 = vsel %vm425, %v441, %v442
      %v444 = vrot.slane %v381, 1
      %v445 = vrot.slane %v382, 1
      %v446 = vsel %vm425, %v444, %v445
      %v447 = vrot.slane %v383, 1
      %v448 = vrot.slane %v384, 1
      %v449 = vsel %vm425, %v447, %v448
      %v458 = vpack.c.bf16 %v431, %v428
      %v459 = vpack.c.bf16 %v437, %v434
      %v460 = vpack.c.bf16 %v443, %v440
      %v461 = vpack.c.bf16 %v449, %v446
      %s462 = scalar_lea.vmem %s3, 64
      %v463 = vld [vmem:[%s462] sm:$0xf]
      %v464 = vld [vmem:[%s462 + $0x4] sm:$0xf]
      %v465 = vld [vmem:[%s462 + $0x8] sm:$0xf]
      %v466 = vld [vmem:[%s462 + $0xc] sm:$0xf]
      %v467 = vld [vmem:[%s462 + $0x10] sm:$0xf]
      %v468 = vld [vmem:[%s462 + $0x14] sm:$0xf]
      %v469 = vld [vmem:[%s462 + $0x18] sm:$0xf]
      %v470 = vld [vmem:[%s462 + $0x1c] sm:$0xf]
      %v471 = vld [vmem:[%s462 + $0x20] sm:$0xf]
      %v472 = vld [vmem:[%s462 + $0x24] sm:$0xf]
      %v473 = vld [vmem:[%s462 + $0x28] sm:$0xf]
      %v474 = vld [vmem:[%s462 + $0x2c] sm:$0xf]
      %v475 = vld [vmem:[%s462 + $0x30] sm:$0xf]
      %v476 = vld [vmem:[%s462 + $0x34] sm:$0xf]
      %v477 = vld [vmem:[%s462 + $0x38] sm:$0xf]
      %v478 = vld [vmem:[%s462 + $0x3c] sm:$0xf]
      %v495 = vunpack.c.l.b16 %v463
      %v496 = vunpack.c.l.b16 %v464
      %v497 = vunpack.c.l.b16 %v465
      %v498 = vunpack.c.l.b16 %v466
      %v499 = vunpack.c.l.b16 %v467
      %v500 = vunpack.c.l.b16 %v468
      %v501 = vunpack.c.l.b16 %v469
      %v502 = vunpack.c.l.b16 %v470
      %v503 = vunpack.c.l.b16 %v471
      %v504 = vunpack.c.l.b16 %v472
      %v505 = vunpack.c.l.b16 %v473
      %v506 = vunpack.c.l.b16 %v474
      %v507 = vunpack.c.l.b16 %v475
      %v508 = vunpack.c.l.b16 %v476
      %v509 = vunpack.c.l.b16 %v477
      %v510 = vunpack.c.l.b16 %v478
      %v511 = vpack.c.b16 %v496, %v495
      %v512 = vpack.c.b16 %v498, %v497
      %v513 = vpack.c.b16 %v500, %v499
      %v514 = vpack.c.b16 %v502, %v501
      %v515 = vpack.c.b16 %v504, %v503
      %v516 = vpack.c.b16 %v506, %v505
      %v517 = vpack.c.b16 %v508, %v507
      %v518 = vpack.c.b16 %v510, %v509
      %527 = vmatprep.subr.bf16.mxu0 0
      %528 = vmatpush1.bf16.msra.mxu0 %v511
      %529 = vmatprep.subr.bf16.mxu0 0
      %530 = vmatpush1.bf16.msra.mxu0 %v512
      %531 = vmatprep.subr.bf16.mxu0 0
      %532 = vmatpush1.bf16.msra.mxu0 %v513
      %533 = vmatprep.subr.bf16.mxu0 0
      %534 = vmatpush1.bf16.msra.mxu0 %v514
      %535 = vmatprep.subr.bf16.mxu0 0
      %536 = vmatpush1.bf16.msra.mxu0 %v515
      %537 = vmatprep.subr.bf16.mxu0 0
      %538 = vmatpush1.bf16.msra.mxu0 %v516
      %539 = vmatprep.subr.bf16.mxu0 0
      %540 = vmatpush1.bf16.msra.mxu0 %v517
      %541 = vmatprep.subr.bf16.mxu0 0
      %542 = vmatpush1.bf16.msra.mxu0 %v518
      %543 = vmatprep.subr.bf16.mxu0 0
      %544 = vmatpush1.bf16.msra.mxu0 0
      %545 = vmatprep.subr.bf16.mxu0 0
      %546 = vmatpush1.bf16.msra.mxu0 0
      %547 = vmatprep.subr.bf16.mxu0 0
      %548 = vmatpush1.bf16.msra.mxu0 0
      %549 = vmatprep.subr.bf16.mxu0 0
      %550 = vmatpush1.bf16.msra.mxu0 0
      %551 = vmatprep.subr.bf16.mxu0 0
      %552 = vmatpush1.bf16.msra.mxu0 0
      %553 = vmatprep.subr.bf16.mxu0 0
      %554 = vmatpush1.bf16.msra.mxu0 0
      %555 = vmatprep.subr.bf16.mxu0 0
      %556 = vmatpush1.bf16.msra.mxu0 0
      %557 = vmatprep.subr.bf16.mxu0 0
      %558 = vmatpush1.bf16.msra.mxu0 0
      %559 = vmatprep.mubr.bf16.mxu0 0
      %560 = vmatmul.mubr.bf16.gmra.mrb[0].mxu0 %v458
      %v561 = vpop.f32.mrb[0].mxu0
      %v562 = vadd.f32 0.0, %v561
      %v563 = vpop.f32.mrb[0].mxu0
      %v564 = vpop.f32.mrb[0].mxu0
      %v565 = vadd.f32 0.0, %v564
      %v566 = vpop.f32.mrb[0].mxu0
      %567 = vmatprep.mubr.bf16.mxu0 0
      %568 = vmatmul.mubr.bf16.gmra.mrb[0].mxu0 %v459
      %v569 = vpop.f32.mrb[0].mxu0
      %v570 = vadd.f32 0.0, %v569
      %v571 = vpop.f32.mrb[0].mxu0
      %v572 = vpop.f32.mrb[0].mxu0
      %v573 = vadd.f32 0.0, %v572
      %v574 = vpop.f32.mrb[0].mxu0
      %575 = vmatprep.mubr.bf16.mxu0 0
      %576 = vmatmul.mubr.bf16.gmra.mrb[0].mxu0 %v460
      %v577 = vpop.f32.mrb[0].mxu0
      %v578 = vadd.f32 0.0, %v577
      %v579 = vpop.f32.mrb[0].mxu0
      %v580 = vpop.f32.mrb[0].mxu0
      %v581 = vadd.f32 0.0, %v580
      %v582 = vpop.f32.mrb[0].mxu0
      %583 = vmatprep.mubr.bf16.mxu0 0
      %584 = vmatmul.mubr.bf16.gmra.mrb[0].mxu0 %v461
      %v585 = vpop.f32.mrb[0].mxu0
      %v586 = vadd.f32 0.0, %v585
      %v587 = vpop.f32.mrb[0].mxu0
      %v588 = vpop.f32.mrb[0].mxu0
      %v589 = vadd.f32 0.0, %v588
      %v590 = vpop.f32.mrb[0].mxu0
      %591 = vdwg.mxu0
      %v608 = vunpack.c.l.b16 %v393
      %v609 = vunpack.c.l.b16 %v394
      %v610 = vunpack.c.l.b16 %v395
      %v611 = vunpack.c.l.b16 %v396
      %v612 = vunpack.c.l.b16 %v397
      %v613 = vunpack.c.l.b16 %v398
      %v614 = vunpack.c.l.b16 %v399
      %v615 = vunpack.c.l.b16 %v400
      %v616 = vunpack.c.l.b16 %v401
      %v617 = vunpack.c.l.b16 %v402
      %v618 = vunpack.c.l.b16 %v403
      %v619 = vunpack.c.l.b16 %v404
      %v620 = vunpack.c.l.b16 %v405
      %v621 = vunpack.c.l.b16 %v406
      %v622 = vunpack.c.l.b16 %v407
      %v623 = vunpack.c.l.b16 %v408
      %v624 = vpack.c.b16 %v609, %v608
      %v625 = vpack.c.b16 %v611, %v610
      %v626 = vpack.c.b16 %v613, %v612
      %v627 = vpack.c.b16 %v615, %v614
      %v628 = vpack.c.b16 %v617, %v616
      %v629 = vpack.c.b16 %v619, %v618
      %v630 = vpack.c.b16 %v621, %v620
      %v631 = vpack.c.b16 %v623, %v622
      %640 = vmatprep.subr.bf16.mxu0 0
      %641 = vmatpush1.bf16.msra.mxu0 %v624
      %642 = vmatprep.subr.bf16.mxu0 0
      %643 = vmatpush1.bf16.msra.mxu0 %v625
      %644 = vmatprep.subr.bf16.mxu0 0
      %645 = vmatpush1.bf16.msra.mxu0 %v626
      %646 = vmatprep.subr.bf16.mxu0 0
      %647 = vmatpush1.bf16.msra.mxu0 %v627
      %648 = vmatprep.subr.bf16.mxu0 0
      %649 = vmatpush1.bf16.msra.mxu0 %v628
      %650 = vmatprep.subr.bf16.mxu0 0
      %651 = vmatpush1.bf16.msra.mxu0 %v629
      %652 = vmatprep.subr.bf16.mxu0 0
      %653 = vmatpush1.bf16.msra.mxu0 %v630
      %654 = vmatprep.subr.bf16.mxu0 0
      %655 = vmatpush1.bf16.msra.mxu0 %v631
      %656 = vmatprep.subr.bf16.mxu0 0
      %657 = vmatpush1.bf16.msra.mxu0 0
      %658 = vmatprep.subr.bf16.mxu0 0
      %659 = vmatpush1.bf16.msra.mxu0 0
      %660 = vmatprep.subr.bf16.mxu0 0
      %661 = vmatpush1.bf16.msra.mxu0 0
      %662 = vmatprep.subr.bf16.mxu0 0
      %663 = vmatpush1.bf16.msra.mxu0 0
      %664 = vmatprep.subr.bf16.mxu0 0
      %665 = vmatpush1.bf16.msra.mxu0 0
      %666 = vmatprep.subr.bf16.mxu0 0
      %667 = vmatpush1.bf16.msra.mxu0 0
      %668 = vmatprep.subr.bf16.mxu0 0
      %669 = vmatpush1.bf16.msra.mxu0 0
      %670 = vmatprep.subr.bf16.mxu0 0
      %671 = vmatpush1.bf16.msra.mxu0 0
      %672 = vmatprep.mubr.bf16.mxu0 0
      %673 = vmatmul.mubr.bf16.gmra.mrb[0].mxu0 %v389
      %v674 = vpop.f32.mrb[0].mxu0
      %v675 = vadd.f32 %v562, %v674
      %v676 = vpop.f32.mrb[0].mxu0
      %v677 = vpop.f32.mrb[0].mxu0
      %v678 = vadd.f32 %v565, %v677
      %v679 = vpop.f32.mrb[0].mxu0
      %680 = vmatprep.mubr.bf16.mxu0 0
      %681 = vmatmul.mubr.bf16.gmra.mrb[0].mxu0 %v390
      %v682 = vpop.f32.mrb[0].mxu0
      %v683 = vadd.f32 %v570, %v682
      %v684 = vpop.f32.mrb[0].mxu0
      %v685 = vpop.f32.mrb[0].mxu0
      %v686 = vadd.f32 %v573, %v685
      %v687 = vpop.f32.mrb[0].mxu0
      %688 = vmatprep.mubr.bf16.mxu0 0
      %689 = vmatmul.mubr.bf16.gmra.mrb[0].mxu0 %v391
      %v690 = vpop.f32.mrb[0].mxu0
      %v691 = vadd.f32 %v578, %v690
      %v692 = vpop.f32.mrb[0].mxu0
      %v693 = vpop.f32.mrb[0].mxu0
      %v694 = vadd.f32 %v581, %v693
      %v695 = vpop.f32.mrb[0].mxu0
      %696 = vmatprep.mubr.bf16.mxu0 0
      %697 = vmatmul.mubr.bf16.gmra.mrb[0].mxu0 %v392
      %v698 = vpop.f32.mrb[0].mxu0
      %v699 = vadd.f32 %v586, %v698
      %v700 = vpop.f32.mrb[0].mxu0
      %v701 = vpop.f32.mrb[0].mxu0
      %v702 = vadd.f32 %v589, %v701
      %v703 = vpop.f32.mrb[0].mxu0
      %704 = vdwg.mxu0
      %vm705 = vcmask 1045504
      %v706 = vrot.slane %v369, 2
      %v707 = vrot.slane %v370, 2
      %v708 = vsel %vm705, %v706, %v707
      %v709 = vrot.slane %v371, 2
      %v710 = vrot.slane %v372, 2
      %v711 = vsel %vm705, %v709, %v710
      %v712 = vrot.slane %v373, 2
      %v713 = vrot.slane %v374, 2
      %v714 = vsel %vm705, %v712, %v713
      %v715 = vrot.slane %v375, 2
      %v716 = vrot.slane %v376, 2
      %v717 = vsel %vm705, %v715, %v716
      %v718 = vrot.slane %v377, 2
      %v719 = vrot.slane %v378, 2
      %v720 = vsel %vm705, %v718, %v719
      %v721 = vrot.slane %v379, 2
      %v722 = vrot.slane %v380, 2
      %v723 = vsel %vm705, %v721, %v722
      %v724 = vrot.slane %v381, 2
      %v725 = vrot.slane %v382, 2
      %v726 = vsel %vm705, %v724, %v725
      %v727 = vrot.slane %v383, 2
      %v728 = vrot.slane %v384, 2
      %v729 = vsel %vm705, %v727, %v728
      %v738 = vpack.c.bf16 %v711, %v708
      %v739 = vpack.c.bf16 %v717, %v714
      %v740 = vpack.c.bf16 %v723, %v720
      %v741 = vpack.c.bf16 %v729, %v726
      %s742 = scalar_lea.vmem %s3, 128
      %v743 = vld [vmem:[%s742] sm:$0xf]
      %v744 = vld [vmem:[%s742 + $0x4] sm:$0xf]
      %v745 = vld [vmem:[%s742 + $0x8] sm:$0xf]
      %v746 = vld [vmem:[%s742 + $0xc] sm:$0xf]
      %v747 = vld [vmem:[%s742 + $0x10] sm:$0xf]
      %v748 = vld [vmem:[%s742 + $0x14] sm:$0xf]
      %v749 = vld [vmem:[%s742 + $0x18] sm:$0xf]
      %v750 = vld [vmem:[%s742 + $0x1c] sm:$0xf]
      %v751 = vld [vmem:[%s742 + $0x20] sm:$0xf]
      %v752 = vld [vmem:[%s742 + $0x24] sm:$0xf]
      %v753 = vld [vmem:[%s742 + $0x28] sm:$0xf]
      %v754 = vld [vmem:[%s742 + $0x2c] sm:$0xf]
      %v755 = vld [vmem:[%s742 + $0x30] sm:$0xf]
      %v756 = vld [vmem:[%s742 + $0x34] sm:$0xf]
      %v757 = vld [vmem:[%s742 + $0x38] sm:$0xf]
      %v758 = vld [vmem:[%s742 + $0x3c] sm:$0xf]
      %v775 = vunpack.c.l.b16 %v743
      %v776 = vunpack.c.l.b16 %v744
      %v777 = vunpack.c.l.b16 %v745
      %v778 = vunpack.c.l.b16 %v746
      %v779 = vunpack.c.l.b16 %v747
      %v780 = vunpack.c.l.b16 %v748
      %v781 = vunpack.c.l.b16 %v749
      %v782 = vunpack.c.l.b16 %v750
      %v783 = vunpack.c.l.b16 %v751
      %v784 = vunpack.c.l.b16 %v752
      %v785 = vunpack.c.l.b16 %v753
      %v786 = vunpack.c.l.b16 %v754
      %v787 = vunpack.c.l.b16 %v755
      %v788 = vunpack.c.l.b16 %v756
      %v789 = vunpack.c.l.b16 %v757
      %v790 = vunpack.c.l.b16 %v758
      %v791 = vpack.c.b16 %v776, %v775
      %v792 = vpack.c.b16 %v778, %v777
      %v793 = vpack.c.b16 %v780, %v779
      %v794 = vpack.c.b16 %v782, %v781
      %v795 = vpack.c.b16 %v784, %v783
      %v796 = vpack.c.b16 %v786, %v785
      %v797 = vpack.c.b16 %v788, %v787
      %v798 = vpack.c.b16 %v790, %v789
      %807 = vmatprep.subr.bf16.mxu0 0
      %808 = vmatpush1.bf16.msra.mxu0 %v791
      %809 = vmatprep.subr.bf16.mxu0 0
      %810 = vmatpush1.bf16.msra.mxu0 %v792
      %811 = vmatprep.subr.bf16.mxu0 0
      %812 = vmatpush1.bf16.msra.mxu0 %v793
      %813 = vmatprep.subr.bf16.mxu0 0
      %814 = vmatpush1.bf16.msra.mxu0 %v794
      %815 = vmatprep.subr.bf16.mxu0 0
      %816 = vmatpush1.bf16.msra.mxu0 %v795
      %817 = vmatprep.subr.bf16.mxu0 0
      %818 = vmatpush1.bf16.msra.mxu0 %v796
      %819 = vmatprep.subr.bf16.mxu0 0
      %820 = vmatpush1.bf16.msra.mxu0 %v797
      %821 = vmatprep.subr.bf16.mxu0 0
      %822 = vmatpush1.bf16.msra.mxu0 %v798
      %823 = vmatprep.subr.bf16.mxu0 0
      %824 = vmatpush1.bf16.msra.mxu0 0
      %825 = vmatprep.subr.bf16.mxu0 0
      %826 = vmatpush1.bf16.msra.mxu0 0
      %827 = vmatprep.subr.bf16.mxu0 0
      %828 = vmatpush1.bf16.msra.mxu0 0
      %829 = vmatprep.subr.bf16.mxu0 0
      %830 = vmatpush1.bf16.msra.mxu0 0
      %831 = vmatprep.subr.bf16.mxu0 0
      %832 = vmatpush1.bf16.msra.mxu0 0
      %833 = vmatprep.subr.bf16.mxu0 0
      %834 = vmatpush1.bf16.msra.mxu0 0
      %835 = vmatprep.subr.bf16.mxu0 0
      %836 = vmatpush1.bf16.msra.mxu0 0
      %837 = vmatprep.subr.bf16.mxu0 0
      %838 = vmatpush1.bf16.msra.mxu0 0
      %839 = vmatprep.mubr.bf16.mxu0 0
      %840 = vmatmul.mubr.bf16.gmra.mrb[0].mxu0 %v738
      %v841 = vpop.f32.mrb[0].mxu0
      %v842 = vadd.f32 0.0, %v841
      %v843 = vpop.f32.mrb[0].mxu0
      %v844 = vpop.f32.mrb[0].mxu0
      %v845 = vadd.f32 0.0, %v844
      %v846 = vpop.f32.mrb[0].mxu0
      %847 = vmatprep.mubr.bf16.mxu0 0
      %848 = vmatmul.mubr.bf16.gmra.mrb[0].mxu0 %v739
      %v849 = vpop.f32.mrb[0].mxu0
      %v850 = vadd.f32 0.0, %v849
      %v851 = vpop.f32.mrb[0].mxu0
      %v852 = vpop.f32.mrb[0].mxu0
      %v853 = vadd.f32 0.0, %v852
      %v854 = vpop.f32.mrb[0].mxu0
      %855 = vmatprep.mubr.bf16.mxu0 0
      %856 = vmatmul.mubr.bf16.gmra.mrb[0].mxu0 %v740
      %v857 = vpop.f32.mrb[0].mxu0
      %v858 = vadd.f32 0.0, %v857
      %v859 = vpop.f32.mrb[0].mxu0
      %v860 = vpop.f32.mrb[0].mxu0
      %v861 = vadd.f32 0.0, %v860
      %v862 = vpop.f32.mrb[0].mxu0
      %863 = vmatprep.mubr.bf16.mxu0 0
      %864 = vmatmul.mubr.bf16.gmra.mrb[0].mxu0 %v741
      %v865 = vpop.f32.mrb[0].mxu0
      %v866 = vadd.f32 0.0, %v865
      %v867 = vpop.f32.mrb[0].mxu0
      %v868 = vpop.f32.mrb[0].mxu0
      %v869 = vadd.f32 0.0, %v868
      %v870 = vpop.f32.mrb[0].mxu0
      %871 = vdwg.mxu0
      %v872 = vadd.f32 %v675, %v842
      %v873 = vadd.f32 %v678, %v845
      %v874 = vadd.f32 %v683, %v850
      %v875 = vadd.f32 %v686, %v853
      %v876 = vadd.f32 %v691, %v858
      %v877 = vadd.f32 %v694, %v861
      %v878 = vadd.f32 %v699, %v866
      %v879 = vadd.f32 %v702, %v869
      %v880 = vpack.c.bf16 %v373, %v371
      %v881 = vpack.c.bf16 %v377, %v375
      %v882 = vpack.c.bf16 %v381, %v379
      %v883 = vpack.c.bf16 %v385, %v383
      %s884 = scalar_lea.vmem %s3, 192
      %v885 = vld [vmem:[%s884] sm:$0xf]
      %v886 = vld [vmem:[%s884 + $0x4] sm:$0xf]
      %v887 = vld [vmem:[%s884 + $0x8] sm:$0xf]
      %v888 = vld [vmem:[%s884 + $0xc] sm:$0xf]
      %v889 = vld [vmem:[%s884 + $0x10] sm:$0xf]
      %v890 = vld [vmem:[%s884 + $0x14] sm:$0xf]
      %v891 = vld [vmem:[%s884 + $0x18] sm:$0xf]
      %v892 = vld [vmem:[%s884 + $0x1c] sm:$0xf]
      %v893 = vld [vmem:[%s884 + $0x20] sm:$0xf]
      %v894 = vld [vmem:[%s884 + $0x24] sm:$0xf]
      %v895 = vld [vmem:[%s884 + $0x28] sm:$0xf]
      %v896 = vld [vmem:[%s884 + $0x2c] sm:$0xf]
      %v897 = vld [vmem:[%s884 + $0x30] sm:$0xf]
      %v898 = vld [vmem:[%s884 + $0x34] sm:$0xf]
      %v899 = vld [vmem:[%s884 + $0x38] sm:$0xf]
      %v900 = vld [vmem:[%s884 + $0x3c] sm:$0xf]
      %v917 = vunpack.c.l.b16 %v885
      %v918 = vunpack.c.l.b16 %v886
      %v919 = vunpack.c.l.b16 %v887
      %v920 = vunpack.c.l.b16 %v888
      %v921 = vunpack.c.l.b16 %v889
      %v922 = vunpack.c.l.b16 %v890
      %v923 = vunpack.c.l.b16 %v891
      %v924 = vunpack.c.l.b16 %v892
      %v925 = vunpack.c.l.b16 %v893
      %v926 = vunpack.c.l.b16 %v894
      %v927 = vunpack.c.l.b16 %v895
      %v928 = vunpack.c.l.b16 %v896
      %v929 = vunpack.c.l.b16 %v897
      %v930 = vunpack.c.l.b16 %v898
      %v931 = vunpack.c.l.b16 %v899
      %v932 = vunpack.c.l.b16 %v900
      %v933 = vpack.c.b16 %v918, %v917
      %v934 = vpack.c.b16 %v920, %v919
      %v935 = vpack.c.b16 %v922, %v921
      %v936 = vpack.c.b16 %v924, %v923
      %v937 = vpack.c.b16 %v926, %v925
      %v938 = vpack.c.b16 %v928, %v927
      %v939 = vpack.c.b16 %v930, %v929
      %v940 = vpack.c.b16 %v932, %v931
      %949 = vmatprep.subr.bf16.mxu0 0
      %950 = vmatpush1.bf16.msra.mxu0 %v933
      %951 = vmatprep.subr.bf16.mxu0 0
      %952 = vmatpush1.bf16.msra.mxu0 %v934
      %953 = vmatprep.subr.bf16.mxu0 0
      %954 = vmatpush1.bf16.msra.mxu0 %v935
      %955 = vmatprep.subr.bf16.mxu0 0
      %956 = vmatpush1.bf16.msra.mxu0 %v936
      %957 = vmatprep.subr.bf16.mxu0 0
      %958 = vmatpush1.bf16.msra.mxu0 %v937
      %959 = vmatprep.subr.bf16.mxu0 0
      %960 = vmatpush1.bf16.msra.mxu0 %v938
      %961 = vmatprep.subr.bf16.mxu0 0
      %962 = vmatpush1.bf16.msra.mxu0 %v939
      %963 = vmatprep.subr.bf16.mxu0 0
      %964 = vmatpush1.bf16.msra.mxu0 %v940
      %965 = vmatprep.subr.bf16.mxu0 0
      %966 = vmatpush1.bf16.msra.mxu0 0
      %967 = vmatprep.subr.bf16.mxu0 0
      %968 = vmatpush1.bf16.msra.mxu0 0
      %969 = vmatprep.subr.bf16.mxu0 0
      %970 = vmatpush1.bf16.msra.mxu0 0
      %971 = vmatprep.subr.bf16.mxu0 0
      %972 = vmatpush1.bf16.msra.mxu0 0
      %973 = vmatprep.subr.bf16.mxu0 0
      %974 = vmatpush1.bf16.msra.mxu0 0
      %975 = vmatprep.subr.bf16.mxu0 0
      %976 = vmatpush1.bf16.msra.mxu0 0
      %977 = vmatprep.subr.bf16.mxu0 0
      %978 = vmatpush1.bf16.msra.mxu0 0
      %979 = vmatprep.subr.bf16.mxu0 0
      %980 = vmatpush1.bf16.msra.mxu0 0
      %981 = vmatprep.mubr.bf16.mxu0 0
      %982 = vmatmul.mubr.bf16.gmra.mrb[0].mxu0 %v880
      %v983 = vpop.f32.mrb[0].mxu0
      %v984 = vadd.f32 0.0, %v983
      %v985 = vpop.f32.mrb[0].mxu0
      %v986 = vpop.f32.mrb[0].mxu0
      %v987 = vadd.f32 0.0, %v986
      %v988 = vpop.f32.mrb[0].mxu0
      %989 = vmatprep.mubr.bf16.mxu0 0
      %990 = vmatmul.mubr.bf16.gmra.mrb[0].mxu0 %v881
      %v991 = vpop.f32.mrb[0].mxu0
      %v992 = vadd.f32 0.0, %v991
      %v993 = vpop.f32.mrb[0].mxu0
      %v994 = vpop.f32.mrb[0].mxu0
      %v995 = vadd.f32 0.0, %v994
      %v996 = vpop.f32.mrb[0].mxu0
      %997 = vmatprep.mubr.bf16.mxu0 0
      %998 = vmatmul.mubr.bf16.gmra.mrb[0].mxu0 %v882
      %v999 = vpop.f32.mrb[0].mxu0
      %v1000 = vadd.f32 0.0, %v999
      %v1001 = vpop.f32.mrb[0].mxu0
      %v1002 = vpop.f32.mrb[0].mxu0
      %v1003 = vadd.f32 0.0, %v1002
      %v1004 = vpop.f32.mrb[0].mxu0
      %1005 = vmatprep.mubr.bf16.mxu0 0
      %1006 = vmatmul.mubr.bf16.gmra.mrb[0].mxu0 %v883
      %v1007 = vpop.f32.mrb[0].mxu0
      %v1008 = vadd.f32 0.0, %v1007
      %v1009 = vpop.f32.mrb[0].mxu0
      %v1010 = vpop.f32.mrb[0].mxu0
      %v1011 = vadd.f32 0.0, %v1010
      %v1012 = vpop.f32.mrb[0].mxu0
      %1013 = vdwg.mxu0
      %v1014 = vadd.f32 %v872, %v984
      %v1015 = vadd.f32 %v873, %v987
      %v1016 = vadd.f32 %v874, %v992
      %v1017 = vadd.f32 %v875, %v995
      %v1018 = vadd.f32 %v876, %v1000
      %v1019 = vadd.f32 %v877, %v1003
      %v1020 = vadd.f32 %v878, %v1008
      %v1021 = vadd.f32 %v879, %v1011
      %v1024 = vrot.slane %v385, 1
      %v1025 = vrot.slane %v386, 1
      %v1026 = vsel %vm425, %v1024, %v1025
      %v1028 = vpack.c.bf16 %v434, %v431
      %v1029 = vpack.c.bf16 %v440, %v437
      %v1030 = vpack.c.bf16 %v446, %v443
      %v1031 = vpack.c.bf16 %v1026, %v449
      %s1032 = scalar_lea.vmem %s3, 256
      %v1033 = vld [vmem:[%s1032] sm:$0xf]
      %v1034 = vld [vmem:[%s1032 + $0x4] sm:$0xf]
      %v1035 = vld [vmem:[%s1032 + $0x8] sm:$0xf]
      %v1036 = vld [vmem:[%s1032 + $0xc] sm:$0xf]
      %v1037 = vld [vmem:[%s1032 + $0x10] sm:$0xf]
      %v1038 = vld [vmem:[%s1032 + $0x14] sm:$0xf]
      %v1039 = vld [vmem:[%s1032 + $0x18] sm:$0xf]
      %v1040 = vld [vmem:[%s1032 + $0x1c] sm:$0xf]
      %v1041 = vld [vmem:[%s1032 + $0x20] sm:$0xf]
      %v1042 = vld [vmem:[%s1032 + $0x24] sm:$0xf]
      %v1043 = vld [vmem:[%s1032 + $0x28] sm:$0xf]
      %v1044 = vld [vmem:[%s1032 + $0x2c] sm:$0xf]
      %v1045 = vld [vmem:[%s1032 + $0x30] sm:$0xf]
      %v1046 = vld [vmem:[%s1032 + $0x34] sm:$0xf]
      %v1047 = vld [vmem:[%s1032 + $0x38] sm:$0xf]
      %v1048 = vld [vmem:[%s1032 + $0x3c] sm:$0xf]
      %v1065 = vunpack.c.l.b16 %v1033
      %v1066 = vunpack.c.l.b16 %v1034
      %v1067 = vunpack.c.l.b16 %v1035
      %v1068 = vunpack.c.l.b16 %v1036
      %v1069 = vunpack.c.l.b16 %v1037
      %v1070 = vunpack.c.l.b16 %v1038
      %v1071 = vunpack.c.l.b16 %v1039
      %v1072 = vunpack.c.l.b16 %v1040
      %v1073 = vunpack.c.l.b16 %v1041
      %v1074 = vunpack.c.l.b16 %v1042
      %v1075 = vunpack.c.l.b16 %v1043
      %v1076 = vunpack.c.l.b16 %v1044
      %v1077 = vunpack.c.l.b16 %v1045
      %v1078 = vunpack.c.l.b16 %v1046
      %v1079 = vunpack.c.l.b16 %v1047
      %v1080 = vunpack.c.l.b16 %v1048
      %v1081 = vpack.c.b16 %v1066, %v1065
      %v1082 = vpack.c.b16 %v1068, %v1067
      %v1083 = vpack.c.b16 %v1070, %v1069
      %v1084 = vpack.c.b16 %v1072, %v1071
      %v1085 = vpack.c.b16 %v1074, %v1073
      %v1086 = vpack.c.b16 %v1076, %v1075
      %v1087 = vpack.c.b16 %v1078, %v1077
      %v1088 = vpack.c.b16 %v1080, %v1079
      %1097 = vmatprep.subr.bf16.mxu0 0
      %1098 = vmatpush1.bf16.msra.mxu0 %v1081
      %1099 = vmatprep.subr.bf16.mxu0 0
      %1100 = vmatpush1.bf16.msra.mxu0 %v1082
      %1101 = vmatprep.subr.bf16.mxu0 0
      %1102 = vmatpush1.bf16.msra.mxu0 %v1083
      %1103 = vmatprep.subr.bf16.mxu0 0
      %1104 = vmatpush1.bf16.msra.mxu0 %v1084
      %1105 = vmatprep.subr.bf16.mxu0 0
      %1106 = vmatpush1.bf16.msra.mxu0 %v1085
      %1107 = vmatprep.subr.bf16.mxu0 0
      %1108 = vmatpush1.bf16.msra.mxu0 %v1086
      %1109 = vmatprep.subr.bf16.mxu0 0
      %1110 = vmatpush1.bf16.msra.mxu0 %v1087
      %1111 = vmatprep.subr.bf16.mxu0 0
      %1112 = vmatpush1.bf16.msra.mxu0 %v1088
      %1113 = vmatprep.subr.bf16.mxu0 0
      %1114 = vmatpush1.bf16.msra.mxu0 0
      %1115 = vmatprep.subr.bf16.mxu0 0
      %1116 = vmatpush1.bf16.msra.mxu0 0
      %1117 = vmatprep.subr.bf16.mxu0 0
      %1118 = vmatpush1.bf16.msra.mxu0 0
      %1119 = vmatprep.subr.bf16.mxu0 0
      %1120 = vmatpush1.bf16.msra.mxu0 0
      %1121 = vmatprep.subr.bf16.mxu0 0
      %1122 = vmatpush1.bf16.msra.mxu0 0
      %1123 = vmatprep.subr.bf16.mxu0 0
      %1124 = vmatpush1.bf16.msra.mxu0 0
      %1125 = vmatprep.subr.bf16.mxu0 0
      %1126 = vmatpush1.bf16.msra.mxu0 0
      %1127 = vmatprep.subr.bf16.mxu0 0
      %1128 = vmatpush1.bf16.msra.mxu0 0
      %1129 = vmatprep.mubr.bf16.mxu0 0
      %1130 = vmatmul.mubr.bf16.gmra.mrb[0].mxu0 %v1028
      %v1131 = vpop.f32.mrb[0].mxu0
      %v1132 = vadd.f32 0.0, %v1131
      %v1133 = vpop.f32.mrb[0].mxu0
      %v1134 = vpop.f32.mrb[0].mxu0
      %v1135 = vadd.f32 0.0, %v1134
      %v1136 = vpop.f32.mrb[0].mxu0
      %1137 = vmatprep.mubr.bf16.mxu0 0
      %1138 = vmatmul.mubr.bf16.gmra.mrb[0].mxu0 %v1029
      %v1139 = vpop.f32.mrb[0].mxu0
      %v1140 = vadd.f32 0.0, %v1139
      %v1141 = vpop.f32.mrb[0].mxu0
      %v1142 = vpop.f32.mrb[0].mxu0
      %v1143 = vadd.f32 0.0, %v1142
      %v1144 = vpop.f32.mrb[0].mxu0
      %1145 = vmatprep.mubr.bf16.mxu0 0
      %1146 = vmatmul.mubr.bf16.gmra.mrb[0].mxu0 %v1030
      %v1147 = vpop.f32.mrb[0].mxu0
      %v1148 = vadd.f32 0.0, %v1147
      %v1149 = vpop.f32.mrb[0].mxu0
      %v1150 = vpop.f32.mrb[0].mxu0
      %v1151 = vadd.f32 0.0, %v1150
      %v1152 = vpop.f32.mrb[0].mxu0
      %1153 = vmatprep.mubr.bf16.mxu0 0
      %1154 = vmatmul.mubr.bf16.gmra.mrb[0].mxu0 %v1031
      %v1155 = vpop.f32.mrb[0].mxu0
      %v1156 = vadd.f32 0.0, %v1155
      %v1157 = vpop.f32.mrb[0].mxu0
      %v1158 = vpop.f32.mrb[0].mxu0
      %v1159 = vadd.f32 0.0, %v1158
      %v1160 = vpop.f32.mrb[0].mxu0
      %1161 = vdwg.mxu0
      %v1162 = vadd.f32 %v1014, %v1132
      %v1163 = vadd.f32 %v1015, %v1135
      %v1164 = vadd.f32 %v1016, %v1140
      %v1165 = vadd.f32 %v1017, %v1143
      %v1166 = vadd.f32 %v1018, %v1148
      %v1167 = vadd.f32 %v1019, %v1151
      %v1168 = vadd.f32 %v1020, %v1156
      %v1169 = vadd.f32 %v1021, %v1159
      %v1170 = vrot.slane %v385, 2
      %v1171 = vrot.slane %v386, 2
      %v1172 = vsel %vm705, %v1170, %v1171
      %v1174 = vpack.c.bf16 %v714, %v711
      %v1175 = vpack.c.bf16 %v720, %v717
      %v1176 = vpack.c.bf16 %v726, %v723
      %v1177 = vpack.c.bf16 %v1172, %v729
      %s1178 = scalar_lea.vmem %s3, 320
      %v1179 = vld [vmem:[%s1178] sm:$0xf]
      %v1180 = vld [vmem:[%s1178 + $0x4] sm:$0xf]
      %v1181 = vld [vmem:[%s1178 + $0x8] sm:$0xf]
      %v1182 = vld [vmem:[%s1178 + $0xc] sm:$0xf]
      %v1183 = vld [vmem:[%s1178 + $0x10] sm:$0xf]
      %v1184 = vld [vmem:[%s1178 + $0x14] sm:$0xf]
      %v1185 = vld [vmem:[%s1178 + $0x18] sm:$0xf]
      %v1186 = vld [vmem:[%s1178 + $0x1c] sm:$0xf]
      %v1187 = vld [vmem:[%s1178 + $0x20] sm:$0xf]
      %v1188 = vld [vmem:[%s1178 + $0x24] sm:$0xf]
      %v1189 = vld [vmem:[%s1178 + $0x28] sm:$0xf]
      %v1190 = vld [vmem:[%s1178 + $0x2c] sm:$0xf]
      %v1191 = vld [vmem:[%s1178 + $0x30] sm:$0xf]
      %v1192 = vld [vmem:[%s1178 + $0x34] sm:$0xf]
      %v1193 = vld [vmem:[%s1178 + $0x38] sm:$0xf]
      %v1194 = vld [vmem:[%s1178 + $0x3c] sm:$0xf]
      %v1211 = vunpack.c.l.b16 %v1179
      %v1212 = vunpack.c.l.b16 %v1180
      %v1213 = vunpack.c.l.b16 %v1181
      %v1214 = vunpack.c.l.b16 %v1182
      %v1215 = vunpack.c.l.b16 %v1183
      %v1216 = vunpack.c.l.b16 %v1184
      %v1217 = vunpack.c.l.b16 %v1185
      %v1218 = vunpack.c.l.b16 %v1186
      %v1219 = vunpack.c.l.b16 %v1187
      %v1220 = vunpack.c.l.b16 %v1188
      %v1221 = vunpack.c.l.b16 %v1189
      %v1222 = vunpack.c.l.b16 %v1190
      %v1223 = vunpack.c.l.b16 %v1191
      %v1224 = vunpack.c.l.b16 %v1192
      %v1225 = vunpack.c.l.b16 %v1193
      %v1226 = vunpack.c.l.b16 %v1194
      %v1227 = vpack.c.b16 %v1212, %v1211
      %v1228 = vpack.c.b16 %v1214, %v1213
      %v1229 = vpack.c.b16 %v1216, %v1215
      %v1230 = vpack.c.b16 %v1218, %v1217
      %v1231 = vpack.c.b16 %v1220, %v1219
      %v1232 = vpack.c.b16 %v1222, %v1221
      %v1233 = vpack.c.b16 %v1224, %v1223
      %v1234 = vpack.c.b16 %v1226, %v1225
      %1243 = vmatprep.subr.bf16.mxu0 0
      %1244 = vmatpush1.bf16.msra.mxu0 %v1227
      %1245 = vmatprep.subr.bf16.mxu0 0
      %1246 = vmatpush1.bf16.msra.mxu0 %v1228
      %1247 = vmatprep.subr.bf16.mxu0 0
      %1248 = vmatpush1.bf16.msra.mxu0 %v1229
      %1249 = vmatprep.subr.bf16.mxu0 0
      %1250 = vmatpush1.bf16.msra.mxu0 %v1230
      %1251 = vmatprep.subr.bf16.mxu0 0
      %1252 = vmatpush1.bf16.msra.mxu0 %v1231
      %1253 = vmatprep.subr.bf16.mxu0 0
      %1254 = vmatpush1.bf16.msra.mxu0 %v1232
      %1255 = vmatprep.subr.bf16.mxu0 0
      %1256 = vmatpush1.bf16.msra.mxu0 %v1233
      %1257 = vmatprep.subr.bf16.mxu0 0
      %1258 = vmatpush1.bf16.msra.mxu0 %v1234
      %1259 = vmatprep.subr.bf16.mxu0 0
      %1260 = vmatpush1.bf16.msra.mxu0 0
      %1261 = vmatprep.subr.bf16.mxu0 0
      %1262 = vmatpush1.bf16.msra.mxu0 0
      %1263 = vmatprep.subr.bf16.mxu0 0
      %1264 = vmatpush1.bf16.msra.mxu0 0
      %1265 = vmatprep.subr.bf16.mxu0 0
      %1266 = vmatpush1.bf16.msra.mxu0 0
      %1267 = vmatprep.subr.bf16.mxu0 0
      %1268 = vmatpush1.bf16.msra.mxu0 0
      %1269 = vmatprep.subr.bf16.mxu0 0
      %1270 = vmatpush1.bf16.msra.mxu0 0
      %1271 = vmatprep.subr.bf16.mxu0 0
      %1272 = vmatpush1.bf16.msra.mxu0 0
      %1273 = vmatprep.subr.bf16.mxu0 0
      %1274 = vmatpush1.bf16.msra.mxu0 0
      %1275 = vmatprep.mubr.bf16.mxu0 0
      %1276 = vmatmul.mubr.bf16.gmra.mrb[0].mxu0 %v1174
      %v1277 = vpop.f32.mrb[0].mxu0
      %v1278 = vadd.f32 0.0, %v1277
      %v1279 = vpop.f32.mrb[0].mxu0
      %v1280 = vpop.f32.mrb[0].mxu0
      %v1281 = vadd.f32 0.0, %v1280
      %v1282 = vpop.f32.mrb[0].mxu0
      %1283 = vmatprep.mubr.bf16.mxu0 0
      %1284 = vmatmul.mubr.bf16.gmra.mrb[0].mxu0 %v1175
      %v1285 = vpop.f32.mrb[0].mxu0
      %v1286 = vadd.f32 0.0, %v1285
      %v1287 = vpop.f32.mrb[0].mxu0
      %v1288 = vpop.f32.mrb[0].mxu0
      %v1289 = vadd.f32 0.0, %v1288
      %v1290 = vpop.f32.mrb[0].mxu0
      %1291 = vmatprep.mubr.bf16.mxu0 0
      %1292 = vmatmul.mubr.bf16.gmra.mrb[0].mxu0 %v1176
      %v1293 = vpop.f32.mrb[0].mxu0
      %v1294 = vadd.f32 0.0, %v1293
      %v1295 = vpop.f32.mrb[0].mxu0
      %v1296 = vpop.f32.mrb[0].mxu0
      %v1297 = vadd.f32 0.0, %v1296
      %v1298 = vpop.f32.mrb[0].mxu0
      %1299 = vmatprep.mubr.bf16.mxu0 0
      %1300 = vmatmul.mubr.bf16.gmra.mrb[0].mxu0 %v1177
      %v1301 = vpop.f32.mrb[0].mxu0
      %v1302 = vadd.f32 0.0, %v1301
      %v1303 = vpop.f32.mrb[0].mxu0
      %v1304 = vpop.f32.mrb[0].mxu0
      %v1305 = vadd.f32 0.0, %v1304
      %v1306 = vpop.f32.mrb[0].mxu0
      %1307 = vdwg.mxu0
      %v1308 = vadd.f32 %v1162, %v1278
      %v1309 = vadd.f32 %v1163, %v1281
      %v1310 = vadd.f32 %v1164, %v1286
      %v1311 = vadd.f32 %v1165, %v1289
      %v1312 = vadd.f32 %v1166, %v1294
      %v1313 = vadd.f32 %v1167, %v1297
      %v1314 = vadd.f32 %v1168, %v1302
      %v1315 = vadd.f32 %v1169, %v1305
      %v1316 = vpack.c.bf16 %v387, %v385
      %s1317 = scalar_lea.vmem %s3, 384
      %v1318 = vld [vmem:[%s1317] sm:$0xf]
      %v1319 = vld [vmem:[%s1317 + $0x4] sm:$0xf]
      %v1320 = vld [vmem:[%s1317 + $0x8] sm:$0xf]
      %v1321 = vld [vmem:[%s1317 + $0xc] sm:$0xf]
      %v1322 = vld [vmem:[%s1317 + $0x10] sm:$0xf]
      %v1323 = vld [vmem:[%s1317 + $0x14] sm:$0xf]
      %v1324 = vld [vmem:[%s1317 + $0x18] sm:$0xf]
      %v1325 = vld [vmem:[%s1317 + $0x1c] sm:$0xf]
      %v1326 = vld [vmem:[%s1317 + $0x20] sm:$0xf]
      %v1327 = vld [vmem:[%s1317 + $0x24] sm:$0xf]
      %v1328 = vld [vmem:[%s1317 + $0x28] sm:$0xf]
      %v1329 = vld [vmem:[%s1317 + $0x2c] sm:$0xf]
      %v1330 = vld [vmem:[%s1317 + $0x30] sm:$0xf]
      %v1331 = vld [vmem:[%s1317 + $0x34] sm:$0xf]
      %v1332 = vld [vmem:[%s1317 + $0x38] sm:$0xf]
      %v1333 = vld [vmem:[%s1317 + $0x3c] sm:$0xf]
      %v1350 = vunpack.c.l.b16 %v1318
      %v1351 = vunpack.c.l.b16 %v1319
      %v1352 = vunpack.c.l.b16 %v1320
      %v1353 = vunpack.c.l.b16 %v1321
      %v1354 = vunpack.c.l.b16 %v1322
      %v1355 = vunpack.c.l.b16 %v1323
      %v1356 = vunpack.c.l.b16 %v1324
      %v1357 = vunpack.c.l.b16 %v1325
      %v1358 = vunpack.c.l.b16 %v1326
      %v1359 = vunpack.c.l.b16 %v1327
      %v1360 = vunpack.c.l.b16 %v1328
      %v1361 = vunpack.c.l.b16 %v1329
      %v1362 = vunpack.c.l.b16 %v1330
      %v1363 = vunpack.c.l.b16 %v1331
      %v1364 = vunpack.c.l.b16 %v1332
      %v1365 = vunpack.c.l.b16 %v1333
      %v1366 = vpack.c.b16 %v1351, %v1350
      %v1367 = vpack.c.b16 %v1353, %v1352
      %v1368 = vpack.c.b16 %v1355, %v1354
      %v1369 = vpack.c.b16 %v1357, %v1356
      %v1370 = vpack.c.b16 %v1359, %v1358
      %v1371 = vpack.c.b16 %v1361, %v1360
      %v1372 = vpack.c.b16 %v1363, %v1362
      %v1373 = vpack.c.b16 %v1365, %v1364
      %1382 = vmatprep.subr.bf16.mxu0 0
      %1383 = vmatpush1.bf16.msra.mxu0 %v1366
      %1384 = vmatprep.subr.bf16.mxu0 0
      %1385 = vmatpush1.bf16.msra.mxu0 %v1367
      %1386 = vmatprep.subr.bf16.mxu0 0
      %1387 = vmatpush1.bf16.msra.mxu0 %v1368
      %1388 = vmatprep.subr.bf16.mxu0 0
      %1389 = vmatpush1.bf16.msra.mxu0 %v1369
      %1390 = vmatprep.subr.bf16.mxu0 0
      %1391 = vmatpush1.bf16.msra.mxu0 %v1370
      %1392 = vmatprep.subr.bf16.mxu0 0
      %1393 = vmatpush1.bf16.msra.mxu0 %v1371
      %1394 = vmatprep.subr.bf16.mxu0 0
      %1395 = vmatpush1.bf16.msra.mxu0 %v1372
      %1396 = vmatprep.subr.bf16.mxu0 0
      %1397 = vmatpush1.bf16.msra.mxu0 %v1373
      %1398 = vmatprep.subr.bf16.mxu0 0
      %1399 = vmatpush1.bf16.msra.mxu0 0
      %1400 = vmatprep.subr.bf16.mxu0 0
      %1401 = vmatpush1.bf16.msra.mxu0 0
      %1402 = vmatprep.subr.bf16.mxu0 0
      %1403 = vmatpush1.bf16.msra.mxu0 0
      %1404 = vmatprep.subr.bf16.mxu0 0
      %1405 = vmatpush1.bf16.msra.mxu0 0
      %1406 = vmatprep.subr.bf16.mxu0 0
      %1407 = vmatpush1.bf16.msra.mxu0 0
      %1408 = vmatprep.subr.bf16.mxu0 0
      %1409 = vmatpush1.bf16.msra.mxu0 0
      %1410 = vmatprep.subr.bf16.mxu0 0
      %1411 = vmatpush1.bf16.msra.mxu0 0
      %1412 = vmatprep.subr.bf16.mxu0 0
      %1413 = vmatpush1.bf16.msra.mxu0 0
      %1414 = vmatprep.mubr.bf16.mxu0 0
      %1415 = vmatmul.mubr.bf16.gmra.mrb[0].mxu0 %v390
      %v1416 = vpop.f32.mrb[0].mxu0
      %v1417 = vadd.f32 0.0, %v1416
      %v1418 = vpop.f32.mrb[0].mxu0
      %v1419 = vpop.f32.mrb[0].mxu0
      %v1420 = vadd.f32 0.0, %v1419
      %v1421 = vpop.f32.mrb[0].mxu0
      %1422 = vmatprep.mubr.bf16.mxu0 0
      %1423 = vmatmul.mubr.bf16.gmra.mrb[0].mxu0 %v391
      %v1424 = vpop.f32.mrb[0].mxu0
      %v1425 = vadd.f32 0.0, %v1424
      %v1426 = vpop.f32.mrb[0].mxu0
      %v1427 = vpop.f32.mrb[0].mxu0
      %v1428 = vadd.f32 0.0, %v1427
      %v1429 = vpop.f32.mrb[0].mxu0
      %1430 = vmatprep.mubr.bf16.mxu0 0
      %1431 = vmatmul.mubr.bf16.gmra.mrb[0].mxu0 %v392
      %v1432 = vpop.f32.mrb[0].mxu0
      %v1433 = vadd.f32 0.0, %v1432
      %v1434 = vpop.f32.mrb[0].mxu0
      %v1435 = vpop.f32.mrb[0].mxu0
      %v1436 = vadd.f32 0.0, %v1435
      %v1437 = vpop.f32.mrb[0].mxu0
      %1438 = vmatprep.mubr.bf16.mxu0 0
      %1439 = vmatmul.mubr.bf16.gmra.mrb[0].mxu0 %v1316
      %v1440 = vpop.f32.mrb[0].mxu0
      %v1441 = vadd.f32 0.0, %v1440
      %v1442 = vpop.f32.mrb[0].mxu0
      %v1443 = vpop.f32.mrb[0].mxu0
      %v1444 = vadd.f32 0.0, %v1443
      %v1445 = vpop.f32.mrb[0].mxu0
      %1446 = vdwg.mxu0
      %v1447 = vadd.f32 %v1308, %v1417
      %v1448 = vadd.f32 %v1309, %v1420
      %v1449 = vadd.f32 %v1310, %v1425
      %v1450 = vadd.f32 %v1311, %v1428
      %v1451 = vadd.f32 %v1312, %v1433
      %v1452 = vadd.f32 %v1313, %v1436
      %v1453 = vadd.f32 %v1314, %v1441
      %v1454 = vadd.f32 %v1315, %v1444
      %v1457 = vrot.slane %v387, 1
      %v1458 = vrot.slane %v388, 1
      %v1459 = vsel %vm425, %v1457, %v1458
      %v1461 = vpack.c.bf16 %v1459, %v1026
      %s1462 = scalar_lea.vmem %s3, 448
      %v1463 = vld [vmem:[%s1462] sm:$0xf]
      %v1464 = vld [vmem:[%s1462 + $0x4] sm:$0xf]
      %v1465 = vld [vmem:[%s1462 + $0x8] sm:$0xf]
      %v1466 = vld [vmem:[%s1462 + $0xc] sm:$0xf]
      %v1467 = vld [vmem:[%s1462 + $0x10] sm:$0xf]
      %v1468 = vld [vmem:[%s1462 + $0x14] sm:$0xf]
      %v1469 = vld [vmem:[%s1462 + $0x18] sm:$0xf]
      %v1470 = vld [vmem:[%s1462 + $0x1c] sm:$0xf]
      %v1471 = vld [vmem:[%s1462 + $0x20] sm:$0xf]
      %v1472 = vld [vmem:[%s1462 + $0x24] sm:$0xf]
      %v1473 = vld [vmem:[%s1462 + $0x28] sm:$0xf]
      %v1474 = vld [vmem:[%s1462 + $0x2c] sm:$0xf]
      %v1475 = vld [vmem:[%s1462 + $0x30] sm:$0xf]
      %v1476 = vld [vmem:[%s1462 + $0x34] sm:$0xf]
      %v1477 = vld [vmem:[%s1462 + $0x38] sm:$0xf]
      %v1478 = vld [vmem:[%s1462 + $0x3c] sm:$0xf]
      %v1495 = vunpack.c.l.b16 %v1463
      %v1496 = vunpack.c.l.b16 %v1464
      %v1497 = vunpack.c.l.b16 %v1465
      %v1498 = vunpack.c.l.b16 %v1466
      %v1499 = vunpack.c.l.b16 %v1467
      %v1500 = vunpack.c.l.b16 %v1468
      %v1501 = vunpack.c.l.b16 %v1469
      %v1502 = vunpack.c.l.b16 %v1470
      %v1503 = vunpack.c.l.b16 %v1471
      %v1504 = vunpack.c.l.b16 %v1472
      %v1505 = vunpack.c.l.b16 %v1473
      %v1506 = vunpack.c.l.b16 %v1474
      %v1507 = vunpack.c.l.b16 %v1475
      %v1508 = vunpack.c.l.b16 %v1476
      %v1509 = vunpack.c.l.b16 %v1477
      %v1510 = vunpack.c.l.b16 %v1478
      %v1511 = vpack.c.b16 %v1496, %v1495
      %v1512 = vpack.c.b16 %v1498, %v1497
      %v1513 = vpack.c.b16 %v1500, %v1499
      %v1514 = vpack.c.b16 %v1502, %v1501
      %v1515 = vpack.c.b16 %v1504, %v1503
      %v1516 = vpack.c.b16 %v1506, %v1505
      %v1517 = vpack.c.b16 %v1508, %v1507
      %v1518 = vpack.c.b16 %v1510, %v1509
      %1527 = vmatprep.subr.bf16.mxu0 0
      %1528 = vmatpush1.bf16.msra.mxu0 %v1511
      %1529 = vmatprep.subr.bf16.mxu0 0
      %1530 = vmatpush1.bf16.msra.mxu0 %v1512
      %1531 = vmatprep.subr.bf16.mxu0 0
      %1532 = vmatpush1.bf16.msra.mxu0 %v1513
      %1533 = vmatprep.subr.bf16.mxu0 0
      %1534 = vmatpush1.bf16.msra.mxu0 %v1514
      %1535 = vmatprep.subr.bf16.mxu0 0
      %1536 = vmatpush1.bf16.msra.mxu0 %v1515
      %1537 = vmatprep.subr.bf16.mxu0 0
      %1538 = vmatpush1.bf16.msra.mxu0 %v1516
      %1539 = vmatprep.subr.bf16.mxu0 0
      %1540 = vmatpush1.bf16.msra.mxu0 %v1517
      %1541 = vmatprep.subr.bf16.mxu0 0
      %1542 = vmatpush1.bf16.msra.mxu0 %v1518
      %1543 = vmatprep.subr.bf16.mxu0 0
      %1544 = vmatpush1.bf16.msra.mxu0 0
      %1545 = vmatprep.subr.bf16.mxu0 0
      %1546 = vmatpush1.bf16.msra.mxu0 0
      %1547 = vmatprep.subr.bf16.mxu0 0
      %1548 = vmatpush1.bf16.msra.mxu0 0
      %1549 = vmatprep.subr.bf16.mxu0 0
      %1550 = vmatpush1.bf16.msra.mxu0 0
      %1551 = vmatprep.subr.bf16.mxu0 0
      %1552 = vmatpush1.bf16.msra.mxu0 0
      %1553 = vmatprep.subr.bf16.mxu0 0
      %1554 = vmatpush1.bf16.msra.mxu0 0
      %1555 = vmatprep.subr.bf16.mxu0 0
      %1556 = vmatpush1.bf16.msra.mxu0 0
      %1557 = vmatprep.subr.bf16.mxu0 0
      %1558 = vmatpush1.bf16.msra.mxu0 0
      %1559 = vmatprep.mubr.bf16.mxu0 0
      %1560 = vmatmul.mubr.bf16.gmra.mrb[0].mxu0 %v459
      %v1561 = vpop.f32.mrb[0].mxu0
      %v1562 = vadd.f32 0.0, %v1561
      %v1563 = vpop.f32.mrb[0].mxu0
      %v1564 = vpop.f32.mrb[0].mxu0
      %v1565 = vadd.f32 0.0, %v1564
      %v1566 = vpop.f32.mrb[0].mxu0
      %1567 = vmatprep.mubr.bf16.mxu0 0
      %1568 = vmatmul.mubr.bf16.gmra.mrb[0].mxu0 %v460
      %v1569 = vpop.f32.mrb[0].mxu0
      %v1570 = vadd.f32 0.0, %v1569
      %v1571 = vpop.f32.mrb[0].mxu0
      %v1572 = vpop.f32.mrb[0].mxu0
      %v1573 = vadd.f32 0.0, %v1572
      %v1574 = vpop.f32.mrb[0].mxu0
      %1575 = vmatprep.mubr.bf16.mxu0 0
      %1576 = vmatmul.mubr.bf16.gmra.mrb[0].mxu0 %v461
      %v1577 = vpop.f32.mrb[0].mxu0
      %v1578 = vadd.f32 0.0, %v1577
      %v1579 = vpop.f32.mrb[0].mxu0
      %v1580 = vpop.f32.mrb[0].mxu0
      %v1581 = vadd.f32 0.0, %v1580
      %v1582 = vpop.f32.mrb[0].mxu0
      %1583 = vmatprep.mubr.bf16.mxu0 0
      %1584 = vmatmul.mubr.bf16.gmra.mrb[0].mxu0 %v1461
      %v1585 = vpop.f32.mrb[0].mxu0
      %v1586 = vadd.f32 0.0, %v1585
      %v1587 = vpop.f32.mrb[0].mxu0
      %v1588 = vpop.f32.mrb[0].mxu0
      %v1589 = vadd.f32 0.0, %v1588
      %v1590 = vpop.f32.mrb[0].mxu0
      %1591 = vdwg.mxu0
      %v1592 = vadd.f32 %v1447, %v1562
      %v1593 = vadd.f32 %v1448, %v1565
      %v1594 = vadd.f32 %v1449, %v1570
      %v1595 = vadd.f32 %v1450, %v1573
      %v1596 = vadd.f32 %v1451, %v1578
      %v1597 = vadd.f32 %v1452, %v1581
      %v1598 = vadd.f32 %v1453, %v1586
      %v1599 = vadd.f32 %v1454, %v1589
      %v1600 = vrot.slane %v387, 2
      %v1601 = vrot.slane %v388, 2
      %v1602 = vsel %vm705, %v1600, %v1601
      %v1604 = vpack.c.bf16 %v1602, %v1172
      %s1605 = scalar_lea.vmem %s3, 512
      %v1606 = vld [vmem:[%s1605] sm:$0xf]
      %v1607 = vld [vmem:[%s1605 + $0x4] sm:$0xf]
      %v1608 = vld [vmem:[%s1605 + $0x8] sm:$0xf]
      %v1609 = vld [vmem:[%s1605 + $0xc] sm:$0xf]
      %v1610 = vld [vmem:[%s1605 + $0x10] sm:$0xf]
      %v1611 = vld [vmem:[%s1605 + $0x14] sm:$0xf]
      %v1612 = vld [vmem:[%s1605 + $0x18] sm:$0xf]
      %v1613 = vld [vmem:[%s1605 + $0x1c] sm:$0xf]
      %v1614 = vld [vmem:[%s1605 + $0x20] sm:$0xf]
      %v1615 = vld [vmem:[%s1605 + $0x24] sm:$0xf]
      %v1616 = vld [vmem:[%s1605 + $0x28] sm:$0xf]
      %v1617 = vld [vmem:[%s1605 + $0x2c] sm:$0xf]
      %v1618 = vld [vmem:[%s1605 + $0x30] sm:$0xf]
      %v1619 = vld [vmem:[%s1605 + $0x34] sm:$0xf]
      %v1620 = vld [vmem:[%s1605 + $0x38] sm:$0xf]
      %v1621 = vld [vmem:[%s1605 + $0x3c] sm:$0xf]
      %v1638 = vunpack.c.l.b16 %v1606
      %v1639 = vunpack.c.l.b16 %v1607
      %v1640 = vunpack.c.l.b16 %v1608
      %v1641 = vunpack.c.l.b16 %v1609
      %v1642 = vunpack.c.l.b16 %v1610
      %v1643 = vunpack.c.l.b16 %v1611
      %v1644 = vunpack.c.l.b16 %v1612
      %v1645 = vunpack.c.l.b16 %v1613
      %v1646 = vunpack.c.l.b16 %v1614
      %v1647 = vunpack.c.l.b16 %v1615
      %v1648 = vunpack.c.l.b16 %v1616
      %v1649 = vunpack.c.l.b16 %v1617
      %v1650 = vunpack.c.l.b16 %v1618
      %v1651 = vunpack.c.l.b16 %v1619
      %v1652 = vunpack.c.l.b16 %v1620
      %v1653 = vunpack.c.l.b16 %v1621
      %v1654 = vpack.c.b16 %v1639, %v1638
      %v1655 = vpack.c.b16 %v1641, %v1640
      %v1656 = vpack.c.b16 %v1643, %v1642
      %v1657 = vpack.c.b16 %v1645, %v1644
      %v1658 = vpack.c.b16 %v1647, %v1646
      %v1659 = vpack.c.b16 %v1649, %v1648
      %v1660 = vpack.c.b16 %v1651, %v1650
      %v1661 = vpack.c.b16 %v1653, %v1652
      %1670 = vmatprep.subr.bf16.mxu0 0
      %1671 = vmatpush1.bf16.msra.mxu0 %v1654
      %1672 = vmatprep.subr.bf16.mxu0 0
      %1673 = vmatpush1.bf16.msra.mxu0 %v1655
      %1674 = vmatprep.subr.bf16.mxu0 0
      %1675 = vmatpush1.bf16.msra.mxu0 %v1656
      %1676 = vmatprep.subr.bf16.mxu0 0
      %1677 = vmatpush1.bf16.msra.mxu0 %v1657
      %1678 = vmatprep.subr.bf16.mxu0 0
      %1679 = vmatpush1.bf16.msra.mxu0 %v1658
      %1680 = vmatprep.subr.bf16.mxu0 0
      %1681 = vmatpush1.bf16.msra.mxu0 %v1659
      %1682 = vmatprep.subr.bf16.mxu0 0
      %1683 = vmatpush1.bf16.msra.mxu0 %v1660
      %1684 = vmatprep.subr.bf16.mxu0 0
      %1685 = vmatpush1.bf16.msra.mxu0 %v1661
      %1686 = vmatprep.subr.bf16.mxu0 0
      %1687 = vmatpush1.bf16.msra.mxu0 0
      %1688 = vmatprep.subr.bf16.mxu0 0
      %1689 = vmatpush1.bf16.msra.mxu0 0
      %1690 = vmatprep.subr.bf16.mxu0 0
      %1691 = vmatpush1.bf16.msra.mxu0 0
      %1692 = vmatprep.subr.bf16.mxu0 0
      %1693 = vmatpush1.bf16.msra.mxu0 0
      %1694 = vmatprep.subr.bf16.mxu0 0
      %1695 = vmatpush1.bf16.msra.mxu0 0
      %1696 = vmatprep.subr.bf16.mxu0 0
      %1697 = vmatpush1.bf16.msra.mxu0 0
      %1698 = vmatprep.subr.bf16.mxu0 0
      %1699 = vmatpush1.bf16.msra.mxu0 0
      %1700 = vmatprep.subr.bf16.mxu0 0
      %1701 = vmatpush1.bf16.msra.mxu0 0
      %1702 = vmatprep.mubr.bf16.mxu0 0
      %1703 = vmatmul.mubr.bf16.gmra.mrb[0].mxu0 %v739
      %v1704 = vpop.f32.mrb[0].mxu0
      %v1705 = vadd.f32 0.0, %v1704
      %v1706 = vpop.f32.mrb[0].mxu0
      %v1707 = vpop.f32.mrb[0].mxu0
      %v1708 = vadd.f32 0.0, %v1707
      %v1709 = vpop.f32.mrb[0].mxu0
      %1710 = vmatprep.mubr.bf16.mxu0 0
      %1711 = vmatmul.mubr.bf16.gmra.mrb[0].mxu0 %v740
      %v1712 = vpop.f32.mrb[0].mxu0
      %v1713 = vadd.f32 0.0, %v1712
      %v1714 = vpop.f32.mrb[0].mxu0
      %v1715 = vpop.f32.mrb[0].mxu0
      %v1716 = vadd.f32 0.0, %v1715
      %v1717 = vpop.f32.mrb[0].mxu0
      %1718 = vmatprep.mubr.bf16.mxu0 0
      %1719 = vmatmul.mubr.bf16.gmra.mrb[0].mxu0 %v741
      %v1720 = vpop.f32.mrb[0].mxu0
      %v1721 = vadd.f32 0.0, %v1720
      %v1722 = vpop.f32.mrb[0].mxu0
      %v1723 = vpop.f32.mrb[0].mxu0
      %v1724 = vadd.f32 0.0, %v1723
      %v1725 = vpop.f32.mrb[0].mxu0
      %1726 = vmatprep.mubr.bf16.mxu0 0
      %1727 = vmatmul.mubr.bf16.gmra.mrb[0].mxu0 %v1604
      %v1728 = vpop.f32.mrb[0].mxu0
      %v1729 = vadd.f32 0.0, %v1728
      %v1730 = vpop.f32.mrb[0].mxu0
      %v1731 = vpop.f32.mrb[0].mxu0
      %v1732 = vadd.f32 0.0, %v1731
      %v1733 = vpop.f32.mrb[0].mxu0
      %1734 = vdwg.mxu0
      %v1735 = vadd.f32 %v1592, %v1705
      %v1736 = vadd.f32 %v1593, %v1708
      %v1737 = vadd.f32 %v1594, %v1713
      %v1738 = vadd.f32 %v1595, %v1716
      %v1739 = vadd.f32 %v1596, %v1721
      %v1740 = vadd.f32 %v1597, %v1724
      %v1741 = vadd.f32 %v1598, %v1729
      %v1742 = vadd.f32 %v1599, %v1732
      %v1743 = vld [vmem:[%s319] sm:$0xf]
      %v1744 = vld [vmem:[%s319 + $0x4] sm:$0x1]
      %v1745 = vld [vmem:[%s319 + $0x8] sm:$0xf]
      %v1746 = vld [vmem:[%s319 + $0xc] sm:$0x1]
      %v1747 = vld [vmem:[%s319 + $0x10] sm:$0xf]
      %v1748 = vld [vmem:[%s319 + $0x14] sm:$0x1]
      %v1749 = vld [vmem:[%s319 + $0x18] sm:$0xf]
      %v1750 = vld [vmem:[%s319 + $0x1c] sm:$0x1]
      %v1751 = vld [vmem:[%s319 + $0x20] sm:$0xf]
      %v1752 = vld [vmem:[%s319 + $0x24] sm:$0x1]
      %v1753 = vld [vmem:[%s319 + $0x28] sm:$0xf]
      %v1754 = vld [vmem:[%s319 + $0x2c] sm:$0x1]
      %v1755 = vld [vmem:[%s319 + $0x30] sm:$0xf]
      %v1756 = vld [vmem:[%s319 + $0x34] sm:$0x1]
      %v1757 = vld [vmem:[%s319 + $0x38] sm:$0xf]
      %v1758 = vld [vmem:[%s319 + $0x3c] sm:$0x1]
      %v1759 = vld [vmem:[%s319 + $0x40] sm:$0xf]
      %v1760 = vld [vmem:[%s319 + $0x44] sm:$0x1]
      %v1761 = vld [vmem:[%s319 + $0x48] sm:$0xf]
      %v1762 = vld [vmem:[%s319 + $0x4c] sm:$0x1]
      %v1763 = vunpack.c.l.bf16 %v1743
      %v1764 = vunpack.c.l.bf16 %v1744
      %v1765 = vunpack.c.l.bf16 %v1745
      %v1766 = vunpack.c.l.bf16 %v1746
      %v1767 = vunpack.c.l.bf16 %v1747
      %v1768 = vunpack.c.l.bf16 %v1748
      %v1769 = vunpack.c.l.bf16 %v1749
      %v1770 = vunpack.c.l.bf16 %v1750
      %v1771 = vunpack.c.l.bf16 %v1751
      %v1772 = vunpack.c.l.bf16 %v1752
      %v1773 = vunpack.c.l.bf16 %v1753
      %v1774 = vunpack.c.l.bf16 %v1754
      %v1775 = vunpack.c.l.bf16 %v1755
      %v1776 = vunpack.c.l.bf16 %v1756
      %v1777 = vunpack.c.l.bf16 %v1757
      %v1778 = vunpack.c.l.bf16 %v1758
      %v1779 = vunpack.c.l.bf16 %v1759
      %v1780 = vunpack.c.l.bf16 %v1760
      %v1781 = vunpack.c.l.bf16 %v1761
      %v1782 = vunpack.c.l.bf16 %v1762
      %v1783 = vpack.c.bf16 %v1765, %v1763
      %v1784 = vpack.c.bf16 %v1769, %v1767
      %v1785 = vpack.c.bf16 %v1773, %v1771
      %v1786 = vpack.c.bf16 %v1777, %v1775
      %s1787 = scalar_lea.vmem %s3, 576
      %v1788 = vld [vmem:[%s1787] sm:$0xf]
      %v1789 = vld [vmem:[%s1787 + $0x4] sm:$0xf]
      %v1790 = vld [vmem:[%s1787 + $0x8] sm:$0xf]
      %v1791 = vld [vmem:[%s1787 + $0xc] sm:$0xf]
      %v1792 = vld [vmem:[%s1787 + $0x10] sm:$0xf]
      %v1793 = vld [vmem:[%s1787 + $0x14] sm:$0xf]
      %v1794 = vld [vmem:[%s1787 + $0x18] sm:$0xf]
      %v1795 = vld [vmem:[%s1787 + $0x1c] sm:$0xf]
      %v1796 = vld [vmem:[%s1787 + $0x20] sm:$0xf]
      %v1797 = vld [vmem:[%s1787 + $0x24] sm:$0xf]
      %v1798 = vld [vmem:[%s1787 + $0x28] sm:$0xf]
      %v1799 = vld [vmem:[%s1787 + $0x2c] sm:$0xf]
      %v1800 = vld [vmem:[%s1787 + $0x30] sm:$0xf]
      %v1801 = vld [vmem:[%s1787 + $0x34] sm:$0xf]
      %v1802 = vld [vmem:[%s1787 + $0x38] sm:$0xf]
      %v1803 = vld [vmem:[%s1787 + $0x3c] sm:$0xf]
      %v1820 = vunpack.c.l.b16 %v1788
      %v1821 = vunpack.c.l.b16 %v1789
      %v1822 = vunpack.c.l.b16 %v1790
      %v1823 = vunpack.c.l.b16 %v1791
      %v1824 = vunpack.c.l.b16 %v1792
      %v1825 = vunpack.c.l.b16 %v1793
      %v1826 = vunpack.c.l.b16 %v1794
      %v1827 = vunpack.c.l.b16 %v1795
      %v1828 = vunpack.c.l.b16 %v1796
      %v1829 = vunpack.c.l.b16 %v1797
      %v1830 = vunpack.c.l.b16 %v1798
      %v1831 = vunpack.c.l.b16 %v1799
      %v1832 = vunpack.c.l.b16 %v1800
      %v1833 = vunpack.c.l.b16 %v1801
      %v1834 = vunpack.c.l.b16 %v1802
      %v1835 = vunpack.c.l.b16 %v1803
      %v1836 = vpack.c.b16 %v1821, %v1820
      %v1837 = vpack.c.b16 %v1823, %v1822
      %v1838 = vpack.c.b16 %v1825, %v1824
      %v1839 = vpack.c.b16 %v1827, %v1826
      %v1840 = vpack.c.b16 %v1829, %v1828
      %v1841 = vpack.c.b16 %v1831, %v1830
      %v1842 = vpack.c.b16 %v1833, %v1832
      %v1843 = vpack.c.b16 %v1835, %v1834
      %1852 = vmatprep.subr.bf16.mxu0 0
      %1853 = vmatpush1.bf16.msra.mxu0 %v1836
      %1854 = vmatprep.subr.bf16.mxu0 0
      %1855 = vmatpush1.bf16.msra.mxu0 %v1837
      %1856 = vmatprep.subr.bf16.mxu0 0
      %1857 = vmatpush1.bf16.msra.mxu0 %v1838
      %1858 = vmatprep.subr.bf16.mxu0 0
      %1859 = vmatpush1.bf16.msra.mxu0 %v1839
      %1860 = vmatprep.subr.bf16.mxu0 0
      %1861 = vmatpush1.bf16.msra.mxu0 %v1840
      %1862 = vmatprep.subr.bf16.mxu0 0
      %1863 = vmatpush1.bf16.msra.mxu0 %v1841
      %1864 = vmatprep.subr.bf16.mxu0 0
      %1865 = vmatpush1.bf16.msra.mxu0 %v1842
      %1866 = vmatprep.subr.bf16.mxu0 0
      %1867 = vmatpush1.bf16.msra.mxu0 %v1843
      %1868 = vmatprep.subr.bf16.mxu0 0
      %1869 = vmatpush1.bf16.msra.mxu0 0
      %1870 = vmatprep.subr.bf16.mxu0 0
      %1871 = vmatpush1.bf16.msra.mxu0 0
      %1872 = vmatprep.subr.bf16.mxu0 0
      %1873 = vmatpush1.bf16.msra.mxu0 0
      %1874 = vmatprep.subr.bf16.mxu0 0
      %1875 = vmatpush1.bf16.msra.mxu0 0
      %1876 = vmatprep.subr.bf16.mxu0 0
      %1877 = vmatpush1.bf16.msra.mxu0 0
      %1878 = vmatprep.subr.bf16.mxu0 0
      %1879 = vmatpush1.bf16.msra.mxu0 0
      %1880 = vmatprep.subr.bf16.mxu0 0
      %1881 = vmatpush1.bf16.msra.mxu0 0
      %1882 = vmatprep.subr.bf16.mxu0 0
      %1883 = vmatpush1.bf16.msra.mxu0 0
      %1884 = vmatprep.mubr.bf16.mxu0 0
      %1885 = vmatmul.mubr.bf16.gmra.mrb[0].mxu0 %v1783
      %v1886 = vpop.f32.mrb[0].mxu0
      %v1887 = vadd.f32 0.0, %v1886
      %v1888 = vpop.f32.mrb[0].mxu0
      %v1889 = vpop.f32.mrb[0].mxu0
      %v1890 = vadd.f32 0.0, %v1889
      %v1891 = vpop.f32.mrb[0].mxu0
      %1892 = vmatprep.mubr.bf16.mxu0 0
      %1893 = vmatmul.mubr.bf16.gmra.mrb[0].mxu0 %v1784
      %v1894 = vpop.f32.mrb[0].mxu0
      %v1895 = vadd.f32 0.0, %v1894
      %v1896 = vpop.f32.mrb[0].mxu0
      %v1897 = vpop.f32.mrb[0].mxu0
      %v1898 = vadd.f32 0.0, %v1897
      %v1899 = vpop.f32.mrb[0].mxu0
      %1900 = vmatprep.mubr.bf16.mxu0 0
      %1901 = vmatmul.mubr.bf16.gmra.mrb[0].mxu0 %v1785
      %v1902 = vpop.f32.mrb[0].mxu0
      %v1903 = vadd.f32 0.0, %v1902
      %v1904 = vpop.f32.mrb[0].mxu0
      %v1905 = vpop.f32.mrb[0].mxu0
      %v1906 = vadd.f32 0.0, %v1905
      %v1907 = vpop.f32.mrb[0].mxu0
      %1908 = vmatprep.mubr.bf16.mxu0 0
      %1909 = vmatmul.mubr.bf16.gmra.mrb[0].mxu0 %v1786
      %v1910 = vpop.f32.mrb[0].mxu0
      %v1911 = vadd.f32 0.0, %v1910
      %v1912 = vpop.f32.mrb[0].mxu0
      %v1913 = vpop.f32.mrb[0].mxu0
      %v1914 = vadd.f32 0.0, %v1913
      %v1915 = vpop.f32.mrb[0].mxu0
      %1916 = vdwg.mxu0
      %v1917 = vadd.f32 %v1735, %v1887
      %v1918 = vadd.f32 %v1736, %v1890
      %v1919 = vadd.f32 %v1737, %v1895
      %v1920 = vadd.f32 %v1738, %v1898
      %v1921 = vadd.f32 %v1739, %v1903
      %v1922 = vadd.f32 %v1740, %v1906
      %v1923 = vadd.f32 %v1741, %v1911
      %v1924 = vadd.f32 %v1742, %v1914
      %v1941 = vrot.slane %v1763, 1
      %v1942 = vrot.slane %v1764, 1
      %v1943 = vsel %vm425, %v1941, %v1942
      %v1944 = vrot.slane %v1765, 1
      %v1945 = vrot.slane %v1766, 1
      %v1946 = vsel %vm425, %v1944, %v1945
      %v1947 = vrot.slane %v1767, 1
      %v1948 = vrot.slane %v1768, 1
      %v1949 = vsel %vm425, %v1947, %v1948
      %v1950 = vrot.slane %v1769, 1
      %v1951 = vrot.slane %v1770, 1
      %v1952 = vsel %vm425, %v1950, %v1951
      %v1953 = vrot.slane %v1771, 1
      %v1954 = vrot.slane %v1772, 1
      %v1955 = vsel %vm425, %v1953, %v1954
      %v1956 = vrot.slane %v1773, 1
      %v1957 = vrot.slane %v1774, 1
      %v1958 = vsel %vm425, %v1956, %v1957
      %v1959 = vrot.slane %v1775, 1
      %v1960 = vrot.slane %v1776, 1
      %v1961 = vsel %vm425, %v1959, %v1960
      %v1962 = vrot.slane %v1777, 1
      %v1963 = vrot.slane %v1778, 1
      %v1964 = vsel %vm425, %v1962, %v1963
      %v1973 = vpack.c.bf16 %v1946, %v1943
      %v1974 = vpack.c.bf16 %v1952, %v1949
      %v1975 = vpack.c.bf16 %v1958, %v1955
      %v1976 = vpack.c.bf16 %v1964, %v1961
      %s1977 = scalar_lea.vmem %s3, 640
      %v1978 = vld [vmem:[%s1977] sm:$0xf]
      %v1979 = vld [vmem:[%s1977 + $0x4] sm:$0xf]
      %v1980 = vld [vmem:[%s1977 + $0x8] sm:$0xf]
      %v1981 = vld [vmem:[%s1977 + $0xc] sm:$0xf]
      %v1982 = vld [vmem:[%s1977 + $0x10] sm:$0xf]
      %v1983 = vld [vmem:[%s1977 + $0x14] sm:$0xf]
      %v1984 = vld [vmem:[%s1977 + $0x18] sm:$0xf]
      %v1985 = vld [vmem:[%s1977 + $0x1c] sm:$0xf]
      %v1986 = vld [vmem:[%s1977 + $0x20] sm:$0xf]
      %v1987 = vld [vmem:[%s1977 + $0x24] sm:$0xf]
      %v1988 = vld [vmem:[%s1977 + $0x28] sm:$0xf]
      %v1989 = vld [vmem:[%s1977 + $0x2c] sm:$0xf]
      %v1990 = vld [vmem:[%s1977 + $0x30] sm:$0xf]
      %v1991 = vld [vmem:[%s1977 + $0x34] sm:$0xf]
      %v1992 = vld [vmem:[%s1977 + $0x38] sm:$0xf]
      %v1993 = vld [vmem:[%s1977 + $0x3c] sm:$0xf]
      %v2010 = vunpack.c.l.b16 %v1978
      %v2011 = vunpack.c.l.b16 %v1979
      %v2012 = vunpack.c.l.b16 %v1980
      %v2013 = vunpack.c.l.b16 %v1981
      %v2014 = vunpack.c.l.b16 %v1982
      %v2015 = vunpack.c.l.b16 %v1983
      %v2016 = vunpack.c.l.b16 %v1984
      %v2017 = vunpack.c.l.b16 %v1985
      %v2018 = vunpack.c.l.b16 %v1986
      %v2019 = vunpack.c.l.b16 %v1987
      %v2020 = vunpack.c.l.b16 %v1988
      %v2021 = vunpack.c.l.b16 %v1989
      %v2022 = vunpack.c.l.b16 %v1990
      %v2023 = vunpack.c.l.b16 %v1991
      %v2024 = vunpack.c.l.b16 %v1992
      %v2025 = vunpack.c.l.b16 %v1993
      %v2026 = vpack.c.b16 %v2011, %v2010
      %v2027 = vpack.c.b16 %v2013, %v2012
      %v2028 = vpack.c.b16 %v2015, %v2014
      %v2029 = vpack.c.b16 %v2017, %v2016
      %v2030 = vpack.c.b16 %v2019, %v2018
      %v2031 = vpack.c.b16 %v2021, %v2020
      %v2032 = vpack.c.b16 %v2023, %v2022
      %v2033 = vpack.c.b16 %v2025, %v2024
      %2042 = vmatprep.subr.bf16.mxu0 0
      %2043 = vmatpush1.bf16.msra.mxu0 %v2026
      %2044 = vmatprep.subr.bf16.mxu0 0
      %2045 = vmatpush1.bf16.msra.mxu0 %v2027
      %2046 = vmatprep.subr.bf16.mxu0 0
      %2047 = vmatpush1.bf16.msra.mxu0 %v2028
      %2048 = vmatprep.subr.bf16.mxu0 0
      %2049 = vmatpush1.bf16.msra.mxu0 %v2029
      %2050 = vmatprep.subr.bf16.mxu0 0
      %2051 = vmatpush1.bf16.msra.mxu0 %v2030
      %2052 = vmatprep.subr.bf16.mxu0 0
      %2053 = vmatpush1.bf16.msra.mxu0 %v2031
      %2054 = vmatprep.subr.bf16.mxu0 0
      %2055 = vmatpush1.bf16.msra.mxu0 %v2032
      %2056 = vmatprep.subr.bf16.mxu0 0
      %2057 = vmatpush1.bf16.msra.mxu0 %v2033
      %2058 = vmatprep.subr.bf16.mxu0 0
      %2059 = vmatpush1.bf16.msra.mxu0 0
      %2060 = vmatprep.subr.bf16.mxu0 0
      %2061 = vmatpush1.bf16.msra.mxu0 0
      %2062 = vmatprep.subr.bf16.mxu0 0
      %2063 = vmatpush1.bf16.msra.mxu0 0
      %2064 = vmatprep.subr.bf16.mxu0 0
      %2065 = vmatpush1.bf16.msra.mxu0 0
      %2066 = vmatprep.subr.bf16.mxu0 0
      %2067 = vmatpush1.bf16.msra.mxu0 0
      %2068 = vmatprep.subr.bf16.mxu0 0
      %2069 = vmatpush1.bf16.msra.mxu0 0
      %2070 = vmatprep.subr.bf16.mxu0 0
      %2071 = vmatpush1.bf16.msra.mxu0 0
      %2072 = vmatprep.subr.bf16.mxu0 0
      %2073 = vmatpush1.bf16.msra.mxu0 0
      %2074 = vmatprep.mubr.bf16.mxu0 0
      %2075 = vmatmul.mubr.bf16.gmra.mrb[0].mxu0 %v1973
      %v2076 = vpop.f32.mrb[0].mxu0
      %v2077 = vadd.f32 0.0, %v2076
      %v2078 = vpop.f32.mrb[0].mxu0
      %v2079 = vpop.f32.mrb[0].mxu0
      %v2080 = vadd.f32 0.0, %v2079
      %v2081 = vpop.f32.mrb[0].mxu0
      %2082 = vmatprep.mubr.bf16.mxu0 0
      %2083 = vmatmul.mubr.bf16.gmra.mrb[0].mxu0 %v1974
      %v2084 = vpop.f32.mrb[0].mxu0
      %v2085 = vadd.f32 0.0, %v2084
      %v2086 = vpop.f32.mrb[0].mxu0
      %v2087 = vpop.f32.mrb[0].mxu0
      %v2088 = vadd.f32 0.0, %v2087
      %v2089 = vpop.f32.mrb[0].mxu0
      %2090 = vmatprep.mubr.bf16.mxu0 0
      %2091 = vmatmul.mubr.bf16.gmra.mrb[0].mxu0 %v1975
      %v2092 = vpop.f32.mrb[0].mxu0
      %v2093 = vadd.f32 0.0, %v2092
      %v2094 = vpop.f32.mrb[0].mxu0
      %v2095 = vpop.f32.mrb[0].mxu0
      %v2096 = vadd.f32 0.0, %v2095
      %v2097 = vpop.f32.mrb[0].mxu0
      %2098 = vmatprep.mubr.bf16.mxu0 0
      %2099 = vmatmul.mubr.bf16.gmra.mrb[0].mxu0 %v1976
      %v2100 = vpop.f32.mrb[0].mxu0
      %v2101 = vadd.f32 0.0, %v2100
      %v2102 = vpop.f32.mrb[0].mxu0
      %v2103 = vpop.f32.mrb[0].mxu0
      %v2104 = vadd.f32 0.0, %v2103
      %v2105 = vpop.f32.mrb[0].mxu0
      %2106 = vdwg.mxu0
      %v2107 = vadd.f32 %v1917, %v2077
      %v2108 = vadd.f32 %v1918, %v2080
      %v2109 = vadd.f32 %v1919, %v2085
      %v2110 = vadd.f32 %v1920, %v2088
      %v2111 = vadd.f32 %v1921, %v2093
      %v2112 = vadd.f32 %v1922, %v2096
      %v2113 = vadd.f32 %v1923, %v2101
      %v2114 = vadd.f32 %v1924, %v2104
      %v2115 = vrot.slane %v1763, 2
      %v2116 = vrot.slane %v1764, 2
      %v2117 = vsel %vm705, %v2115, %v2116
      %v2118 = vrot.slane %v1765, 2
      %v2119 = vrot.slane %v1766, 2
      %v2120 = vsel %vm705, %v2118, %v2119
      %v2121 = vrot.slane %v1767, 2
      %v2122 = vrot.slane %v1768, 2
      %v2123 = vsel %vm705, %v2121, %v2122
      %v2124 = vrot.slane %v1769, 2
      %v2125 = vrot.slane %v1770, 2
      %v2126 = vsel %vm705, %v2124, %v2125
      %v2127 = vrot.slane %v1771, 2
      %v2128 = vrot.slane %v1772, 2
      %v2129 = vsel %vm705, %v2127, %v2128
      %v2130 = vrot.slane %v1773, 2
      %v2131 = vrot.slane %v1774, 2
      %v2132 = vsel %vm705, %v2130, %v2131
      %v2133 = vrot.slane %v1775, 2
      %v2134 = vrot.slane %v1776, 2
      %v2135 = vsel %vm705, %v2133, %v2134
      %v2136 = vrot.slane %v1777, 2
      %v2137 = vrot.slane %v1778, 2
      %v2138 = vsel %vm705, %v2136, %v2137
      %v2147 = vpack.c.bf16 %v2120, %v2117
      %v2148 = vpack.c.bf16 %v2126, %v2123
      %v2149 = vpack.c.bf16 %v2132, %v2129
      %v2150 = vpack.c.bf16 %v2138, %v2135
      %s2151 = scalar_lea.vmem %s3, 704
      %v2152 = vld [vmem:[%s2151] sm:$0xf]
      %v2153 = vld [vmem:[%s2151 + $0x4] sm:$0xf]
      %v2154 = vld [vmem:[%s2151 + $0x8] sm:$0xf]
      %v2155 = vld [vmem:[%s2151 + $0xc] sm:$0xf]
      %v2156 = vld [vmem:[%s2151 + $0x10] sm:$0xf]
      %v2157 = vld [vmem:[%s2151 + $0x14] sm:$0xf]
      %v2158 = vld [vmem:[%s2151 + $0x18] sm:$0xf]
      %v2159 = vld [vmem:[%s2151 + $0x1c] sm:$0xf]
      %v2160 = vld [vmem:[%s2151 + $0x20] sm:$0xf]
      %v2161 = vld [vmem:[%s2151 + $0x24] sm:$0xf]
      %v2162 = vld [vmem:[%s2151 + $0x28] sm:$0xf]
      %v2163 = vld [vmem:[%s2151 + $0x2c] sm:$0xf]
      %v2164 = vld [vmem:[%s2151 + $0x30] sm:$0xf]
      %v2165 = vld [vmem:[%s2151 + $0x34] sm:$0xf]
      %v2166 = vld [vmem:[%s2151 + $0x38] sm:$0xf]
      %v2167 = vld [vmem:[%s2151 + $0x3c] sm:$0xf]
      %v2184 = vunpack.c.l.b16 %v2152
      %v2185 = vunpack.c.l.b16 %v2153
      %v2186 = vunpack.c.l.b16 %v2154
      %v2187 = vunpack.c.l.b16 %v2155
      %v2188 = vunpack.c.l.b16 %v2156
      %v2189 = vunpack.c.l.b16 %v2157
      %v2190 = vunpack.c.l.b16 %v2158
      %v2191 = vunpack.c.l.b16 %v2159
      %v2192 = vunpack.c.l.b16 %v2160
      %v2193 = vunpack.c.l.b16 %v2161
      %v2194 = vunpack.c.l.b16 %v2162
      %v2195 = vunpack.c.l.b16 %v2163
      %v2196 = vunpack.c.l.b16 %v2164
      %v2197 = vunpack.c.l.b16 %v2165
      %v2198 = vunpack.c.l.b16 %v2166
      %v2199 = vunpack.c.l.b16 %v2167
      %v2200 = vpack.c.b16 %v2185, %v2184
      %v2201 = vpack.c.b16 %v2187, %v2186
      %v2202 = vpack.c.b16 %v2189, %v2188
      %v2203 = vpack.c.b16 %v2191, %v2190
      %v2204 = vpack.c.b16 %v2193, %v2192
      %v2205 = vpack.c.b16 %v2195, %v2194
      %v2206 = vpack.c.b16 %v2197, %v2196
      %v2207 = vpack.c.b16 %v2199, %v2198
      %2216 = vmatprep.subr.bf16.mxu0 0
      %2217 = vmatpush1.bf16.msra.mxu0 %v2200
      %2218 = vmatprep.subr.bf16.mxu0 0
      %2219 = vmatpush1.bf16.msra.mxu0 %v2201
      %2220 = vmatprep.subr.bf16.mxu0 0
      %2221 = vmatpush1.bf16.msra.mxu0 %v2202
      %2222 = vmatprep.subr.bf16.mxu0 0
      %2223 = vmatpush1.bf16.msra.mxu0 %v2203
      %2224 = vmatprep.subr.bf16.mxu0 0
      %2225 = vmatpush1.bf16.msra.mxu0 %v2204
      %2226 = vmatprep.subr.bf16.mxu0 0
      %2227 = vmatpush1.bf16.msra.mxu0 %v2205
      %2228 = vmatprep.subr.bf16.mxu0 0
      %2229 = vmatpush1.bf16.msra.mxu0 %v2206
      %2230 = vmatprep.subr.bf16.mxu0 0
      %2231 = vmatpush1.bf16.msra.mxu0 %v2207
      %2232 = vmatprep.subr.bf16.mxu0 0
      %2233 = vmatpush1.bf16.msra.mxu0 0
      %2234 = vmatprep.subr.bf16.mxu0 0
      %2235 = vmatpush1.bf16.msra.mxu0 0
      %2236 = vmatprep.subr.bf16.mxu0 0
      %2237 = vmatpush1.bf16.msra.mxu0 0
      %2238 = vmatprep.subr.bf16.mxu0 0
      %2239 = vmatpush1.bf16.msra.mxu0 0
      %2240 = vmatprep.subr.bf16.mxu0 0
      %2241 = vmatpush1.bf16.msra.mxu0 0
      %2242 = vmatprep.subr.bf16.mxu0 0
      %2243 = vmatpush1.bf16.msra.mxu0 0
      %2244 = vmatprep.subr.bf16.mxu0 0
      %2245 = vmatpush1.bf16.msra.mxu0 0
      %2246 = vmatprep.subr.bf16.mxu0 0
      %2247 = vmatpush1.bf16.msra.mxu0 0
      %2248 = vmatprep.mubr.bf16.mxu0 0
      %2249 = vmatmul.mubr.bf16.gmra.mrb[0].mxu0 %v2147
      %v2250 = vpop.f32.mrb[0].mxu0
      %v2251 = vadd.f32 0.0, %v2250
      %v2252 = vpop.f32.mrb[0].mxu0
      %v2253 = vpop.f32.mrb[0].mxu0
      %v2254 = vadd.f32 0.0, %v2253
      %v2255 = vpop.f32.mrb[0].mxu0
      %2256 = vmatprep.mubr.bf16.mxu0 0
      %2257 = vmatmul.mubr.bf16.gmra.mrb[0].mxu0 %v2148
      %v2258 = vpop.f32.mrb[0].mxu0
      %v2259 = vadd.f32 0.0, %v2258
      %v2260 = vpop.f32.mrb[0].mxu0
      %v2261 = vpop.f32.mrb[0].mxu0
      %v2262 = vadd.f32 0.0, %v2261
      %v2263 = vpop.f32.mrb[0].mxu0
      %2264 = vmatprep.mubr.bf16.mxu0 0
      %2265 = vmatmul.mubr.bf16.gmra.mrb[0].mxu0 %v2149
      %v2266 = vpop.f32.mrb[0].mxu0
      %v2267 = vadd.f32 0.0, %v2266
      %v2268 = vpop.f32.mrb[0].mxu0
      %v2269 = vpop.f32.mrb[0].mxu0
      %v2270 = vadd.f32 0.0, %v2269
      %v2271 = vpop.f32.mrb[0].mxu0
      %2272 = vmatprep.mubr.bf16.mxu0 0
      %2273 = vmatmul.mubr.bf16.gmra.mrb[0].mxu0 %v2150
      %v2274 = vpop.f32.mrb[0].mxu0
      %v2275 = vadd.f32 0.0, %v2274
      %v2276 = vpop.f32.mrb[0].mxu0
      %v2277 = vpop.f32.mrb[0].mxu0
      %v2278 = vadd.f32 0.0, %v2277
      %v2279 = vpop.f32.mrb[0].mxu0
      %2280 = vdwg.mxu0
      %v2281 = vadd.f32 %v2107, %v2251
      %v2282 = vadd.f32 %v2108, %v2254
      %v2283 = vadd.f32 %v2109, %v2259
      %v2284 = vadd.f32 %v2110, %v2262
      %v2285 = vadd.f32 %v2111, %v2267
      %v2286 = vadd.f32 %v2112, %v2270
      %v2287 = vadd.f32 %v2113, %v2275
      %v2288 = vadd.f32 %v2114, %v2278
      %v2289 = vpack.c.bf16 %v1767, %v1765
      %v2290 = vpack.c.bf16 %v1771, %v1769
      %v2291 = vpack.c.bf16 %v1775, %v1773
      %v2292 = vpack.c.bf16 %v1779, %v1777
      %s2293 = scalar_lea.vmem %s3, 768
      %v2294 = vld [vmem:[%s2293] sm:$0xf]
      %v2295 = vld [vmem:[%s2293 + $0x4] sm:$0xf]
      %v2296 = vld [vmem:[%s2293 + $0x8] sm:$0xf]
      %v2297 = vld [vmem:[%s2293 + $0xc] sm:$0xf]
      %v2298 = vld [vmem:[%s2293 + $0x10] sm:$0xf]
      %v2299 = vld [vmem:[%s2293 + $0x14] sm:$0xf]
      %v2300 = vld [vmem:[%s2293 + $0x18] sm:$0xf]
      %v2301 = vld [vmem:[%s2293 + $0x1c] sm:$0xf]
      %v2302 = vld [vmem:[%s2293 + $0x20] sm:$0xf]
      %v2303 = vld [vmem:[%s2293 + $0x24] sm:$0xf]
      %v2304 = vld [vmem:[%s2293 + $0x28] sm:$0xf]
      %v2305 = vld [vmem:[%s2293 + $0x2c] sm:$0xf]
      %v2306 = vld [vmem:[%s2293 + $0x30] sm:$0xf]
      %v2307 = vld [vmem:[%s2293 + $0x34] sm:$0xf]
      %v2308 = vld [vmem:[%s2293 + $0x38] sm:$0xf]
      %v2309 = vld [vmem:[%s2293 + $0x3c] sm:$0xf]
      %v2326 = vunpack.c.l.b16 %v2294
      %v2327 = vunpack.c.l.b16 %v2295
      %v2328 = vunpack.c.l.b16 %v2296
      %v2329 = vunpack.c.l.b16 %v2297
      %v2330 = vunpack.c.l.b16 %v2298
      %v2331 = vunpack.c.l.b16 %v2299
      %v2332 = vunpack.c.l.b16 %v2300
      %v2333 = vunpack.c.l.b16 %v2301
      %v2334 = vunpack.c.l.b16 %v2302
      %v2335 = vunpack.c.l.b16 %v2303
      %v2336 = vunpack.c.l.b16 %v2304
      %v2337 = vunpack.c.l.b16 %v2305
      %v2338 = vunpack.c.l.b16 %v2306
      %v2339 = vunpack.c.l.b16 %v2307
      %v2340 = vunpack.c.l.b16 %v2308
      %v2341 = vunpack.c.l.b16 %v2309
      %v2342 = vpack.c.b16 %v2327, %v2326
      %v2343 = vpack.c.b16 %v2329, %v2328
      %v2344 = vpack.c.b16 %v2331, %v2330
      %v2345 = vpack.c.b16 %v2333, %v2332
      %v2346 = vpack.c.b16 %v2335, %v2334
      %v2347 = vpack.c.b16 %v2337, %v2336
      %v2348 = vpack.c.b16 %v2339, %v2338
      %v2349 = vpack.c.b16 %v2341, %v2340
      %2358 = vmatprep.subr.bf16.mxu0 0
      %2359 = vmatpush1.bf16.msra.mxu0 %v2342
      %2360 = vmatprep.subr.bf16.mxu0 0
      %2361 = vmatpush1.bf16.msra.mxu0 %v2343
      %2362 = vmatprep.subr.bf16.mxu0 0
      %2363 = vmatpush1.bf16.msra.mxu0 %v2344
      %2364 = vmatprep.subr.bf16.mxu0 0
      %2365 = vmatpush1.bf16.msra.mxu0 %v2345
      %2366 = vmatprep.subr.bf16.mxu0 0
      %2367 = vmatpush1.bf16.msra.mxu0 %v2346
      %2368 = vmatprep.subr.bf16.mxu0 0
      %2369 = vmatpush1.bf16.msra.mxu0 %v2347
      %2370 = vmatprep.subr.bf16.mxu0 0
      %2371 = vmatpush1.bf16.msra.mxu0 %v2348
      %2372 = vmatprep.subr.bf16.mxu0 0
      %2373 = vmatpush1.bf16.msra.mxu0 %v2349
      %2374 = vmatprep.subr.bf16.mxu0 0
      %2375 = vmatpush1.bf16.msra.mxu0 0
      %2376 = vmatprep.subr.bf16.mxu0 0
      %2377 = vmatpush1.bf16.msra.mxu0 0
      %2378 = vmatprep.subr.bf16.mxu0 0
      %2379 = vmatpush1.bf16.msra.mxu0 0
      %2380 = vmatprep.subr.bf16.mxu0 0
      %2381 = vmatpush1.bf16.msra.mxu0 0
      %2382 = vmatprep.subr.bf16.mxu0 0
      %2383 = vmatpush1.bf16.msra.mxu0 0
      %2384 = vmatprep.subr.bf16.mxu0 0
      %2385 = vmatpush1.bf16.msra.mxu0 0
      %2386 = vmatprep.subr.bf16.mxu0 0
      %2387 = vmatpush1.bf16.msra.mxu0 0
      %2388 = vmatprep.subr.bf16.mxu0 0
      %2389 = vmatpush1.bf16.msra.mxu0 0
      %2390 = vmatprep.mubr.bf16.mxu0 0
      %2391 = vmatmul.mubr.bf16.gmra.mrb[0].mxu0 %v2289
      %v2392 = vpop.f32.mrb[0].mxu0
      %v2393 = vadd.f32 0.0, %v2392
      %v2394 = vpop.f32.mrb[0].mxu0
      %v2395 = vpop.f32.mrb[0].mxu0
      %v2396 = vadd.f32 0.0, %v2395
      %v2397 = vpop.f32.mrb[0].mxu0
      %2398 = vmatprep.mubr.bf16.mxu0 0
      %2399 = vmatmul.mubr.bf16.gmra.mrb[0].mxu0 %v2290
      %v2400 = vpop.f32.mrb[0].mxu0
      %v2401 = vadd.f32 0.0, %v2400
      %v2402 = vpop.f32.mrb[0].mxu0
      %v2403 = vpop.f32.mrb[0].mxu0
      %v2404 = vadd.f32 0.0, %v2403
      %v2405 = vpop.f32.mrb[0].mxu0
      %2406 = vmatprep.mubr.bf16.mxu0 0
      %2407 = vmatmul.mubr.bf16.gmra.mrb[0].mxu0 %v2291
      %v2408 = vpop.f32.mrb[0].mxu0
      %v2409 = vadd.f32 0.0, %v2408
      %v2410 = vpop.f32.mrb[0].mxu0
      %v2411 = vpop.f32.mrb[0].mxu0
      %v2412 = vadd.f32 0.0, %v2411
      %v2413 = vpop.f32.mrb[0].mxu0
      %2414 = vmatprep.mubr.bf16.mxu0 0
      %2415 = vmatmul.mubr.bf16.gmra.mrb[0].mxu0 %v2292
      %v2416 = vpop.f32.mrb[0].mxu0
      %v2417 = vadd.f32 0.0, %v2416
      %v2418 = vpop.f32.mrb[0].mxu0
      %v2419 = vpop.f32.mrb[0].mxu0
      %v2420 = vadd.f32 0.0, %v2419
      %v2421 = vpop.f32.mrb[0].mxu0
      %2422 = vdwg.mxu0
      %v2423 = vadd.f32 %v2281, %v2393
      %v2424 = vadd.f32 %v2282, %v2396
      %v2425 = vadd.f32 %v2283, %v2401
      %v2426 = vadd.f32 %v2284, %v2404
      %v2427 = vadd.f32 %v2285, %v2409
      %v2428 = vadd.f32 %v2286, %v2412
      %v2429 = vadd.f32 %v2287, %v2417
      %v2430 = vadd.f32 %v2288, %v2420
      %v2433 = vrot.slane %v1779, 1
      %v2434 = vrot.slane %v1780, 1
      %v2435 = vsel %vm425, %v2433, %v2434
      %v2437 = vpack.c.bf16 %v1949, %v1946
      %v2438 = vpack.c.bf16 %v1955, %v1952
      %v2439 = vpack.c.bf16 %v1961, %v1958
      %v2440 = vpack.c.bf16 %v2435, %v1964
      %s2441 = scalar_lea.vmem %s3, 832
      %v2442 = vld [vmem:[%s2441] sm:$0xf]
      %v2443 = vld [vmem:[%s2441 + $0x4] sm:$0xf]
      %v2444 = vld [vmem:[%s2441 + $0x8] sm:$0xf]
      %v2445 = vld [vmem:[%s2441 + $0xc] sm:$0xf]
      %v2446 = vld [vmem:[%s2441 + $0x10] sm:$0xf]
      %v2447 = vld [vmem:[%s2441 + $0x14] sm:$0xf]
      %v2448 = vld [vmem:[%s2441 + $0x18] sm:$0xf]
      %v2449 = vld [vmem:[%s2441 + $0x1c] sm:$0xf]
      %v2450 = vld [vmem:[%s2441 + $0x20] sm:$0xf]
      %v2451 = vld [vmem:[%s2441 + $0x24] sm:$0xf]
      %v2452 = vld [vmem:[%s2441 + $0x28] sm:$0xf]
      %v2453 = vld [vmem:[%s2441 + $0x2c] sm:$0xf]
      %v2454 = vld [vmem:[%s2441 + $0x30] sm:$0xf]
      %v2455 = vld [vmem:[%s2441 + $0x34] sm:$0xf]
      %v2456 = vld [vmem:[%s2441 + $0x38] sm:$0xf]
      %v2457 = vld [vmem:[%s2441 + $0x3c] sm:$0xf]
      %v2474 = vunpack.c.l.b16 %v2442
      %v2475 = vunpack.c.l.b16 %v2443
      %v2476 = vunpack.c.l.b16 %v2444
      %v2477 = vunpack.c.l.b16 %v2445
      %v2478 = vunpack.c.l.b16 %v2446
      %v2479 = vunpack.c.l.b16 %v2447
      %v2480 = vunpack.c.l.b16 %v2448
      %v2481 = vunpack.c.l.b16 %v2449
      %v2482 = vunpack.c.l.b16 %v2450
      %v2483 = vunpack.c.l.b16 %v2451
      %v2484 = vunpack.c.l.b16 %v2452
      %v2485 = vunpack.c.l.b16 %v2453
      %v2486 = vunpack.c.l.b16 %v2454
      %v2487 = vunpack.c.l.b16 %v2455
      %v2488 = vunpack.c.l.b16 %v2456
      %v2489 = vunpack.c.l.b16 %v2457
      %v2490 = vpack.c.b16 %v2475, %v2474
      %v2491 = vpack.c.b16 %v2477, %v2476
      %v2492 = vpack.c.b16 %v2479, %v2478
      %v2493 = vpack.c.b16 %v2481, %v2480
      %v2494 = vpack.c.b16 %v2483, %v2482
      %v2495 = vpack.c.b16 %v2485, %v2484
      %v2496 = vpack.c.b16 %v2487, %v2486
      %v2497 = vpack.c.b16 %v2489, %v2488
      %2506 = vmatprep.subr.bf16.mxu0 0
      %2507 = vmatpush1.bf16.msra.mxu0 %v2490
      %2508 = vmatprep.subr.bf16.mxu0 0
      %2509 = vmatpush1.bf16.msra.mxu0 %v2491
      %2510 = vmatprep.subr.bf16.mxu0 0
      %2511 = vmatpush1.bf16.msra.mxu0 %v2492
      %2512 = vmatprep.subr.bf16.mxu0 0
      %2513 = vmatpush1.bf16.msra.mxu0 %v2493
      %2514 = vmatprep.subr.bf16.mxu0 0
      %2515 = vmatpush1.bf16.msra.mxu0 %v2494
      %2516 = vmatprep.subr.bf16.mxu0 0
      %2517 = vmatpush1.bf16.msra.mxu0 %v2495
      %2518 = vmatprep.subr.bf16.mxu0 0
      %2519 = vmatpush1.bf16.msra.mxu0 %v2496
      %2520 = vmatprep.subr.bf16.mxu0 0
      %2521 = vmatpush1.bf16.msra.mxu0 %v2497
      %2522 = vmatprep.subr.bf16.mxu0 0
      %2523 = vmatpush1.bf16.msra.mxu0 0
      %2524 = vmatprep.subr.bf16.mxu0 0
      %2525 = vmatpush1.bf16.msra.mxu0 0
      %2526 = vmatprep.subr.bf16.mxu0 0
      %2527 = vmatpush1.bf16.msra.mxu0 0
      %2528 = vmatprep.subr.bf16.mxu0 0
      %2529 = vmatpush1.bf16.msra.mxu0 0
      %2530 = vmatprep.subr.bf16.mxu0 0
      %2531 = vmatpush1.bf16.msra.mxu0 0
      %2532 = vmatprep.subr.bf16.mxu0 0
      %2533 = vmatpush1.bf16.msra.mxu0 0
      %2534 = vmatprep.subr.bf16.mxu0 0
      %2535 = vmatpush1.bf16.msra.mxu0 0
      %2536 = vmatprep.subr.bf16.mxu0 0
      %2537 = vmatpush1.bf16.msra.mxu0 0
      %2538 = vmatprep.mubr.bf16.mxu0 0
      %2539 = vmatmul.mubr.bf16.gmra.mrb[0].mxu0 %v2437
      %v2540 = vpop.f32.mrb[0].mxu0
      %v2541 = vadd.f32 0.0, %v2540
      %v2542 = vpop.f32.mrb[0].mxu0
      %v2543 = vpop.f32.mrb[0].mxu0
      %v2544 = vadd.f32 0.0, %v2543
      %v2545 = vpop.f32.mrb[0].mxu0
      %2546 = vmatprep.mubr.bf16.mxu0 0
      %2547 = vmatmul.mubr.bf16.gmra.mrb[0].mxu0 %v2438
      %v2548 = vpop.f32.mrb[0].mxu0
      %v2549 = vadd.f32 0.0, %v2548
      %v2550 = vpop.f32.mrb[0].mxu0
      %v2551 = vpop.f32.mrb[0].mxu0
      %v2552 = vadd.f32 0.0, %v2551
      %v2553 = vpop.f32.mrb[0].mxu0
      %2554 = vmatprep.mubr.bf16.mxu0 0
      %2555 = vmatmul.mubr.bf16.gmra.mrb[0].mxu0 %v2439
      %v2556 = vpop.f32.mrb[0].mxu0
      %v2557 = vadd.f32 0.0, %v2556
      %v2558 = vpop.f32.mrb[0].mxu0
      %v2559 = vpop.f32.mrb[0].mxu0
      %v2560 = vadd.f32 0.0, %v2559
      %v2561 = vpop.f32.mrb[0].mxu0
      %2562 = vmatprep.mubr.bf16.mxu0 0
      %2563 = vmatmul.mubr.bf16.gmra.mrb[0].mxu0 %v2440
      %v2564 = vpop.f32.mrb[0].mxu0
      %v2565 = vadd.f32 0.0, %v2564
      %v2566 = vpop.f32.mrb[0].mxu0
      %v2567 = vpop.f32.mrb[0].mxu0
      %v2568 = vadd.f32 0.0, %v2567
      %v2569 = vpop.f32.mrb[0].mxu0
      %2570 = vdwg.mxu0
      %v2571 = vadd.f32 %v2423, %v2541
      %v2572 = vadd.f32 %v2424, %v2544
      %v2573 = vadd.f32 %v2425, %v2549
      %v2574 = vadd.f32 %v2426, %v2552
      %v2575 = vadd.f32 %v2427, %v2557
      %v2576 = vadd.f32 %v2428, %v2560
      %v2577 = vadd.f32 %v2429, %v2565
      %v2578 = vadd.f32 %v2430, %v2568
      %v2579 = vrot.slane %v1779, 2
      %v2580 = vrot.slane %v1780, 2
      %v2581 = vsel %vm705, %v2579, %v2580
      %v2583 = vpack.c.bf16 %v2123, %v2120
      %v2584 = vpack.c.bf16 %v2129, %v2126
      %v2585 = vpack.c.bf16 %v2135, %v2132
      %v2586 = vpack.c.bf16 %v2581, %v2138
      %s2587 = scalar_lea.vmem %s3, 896
      %v2588 = vld [vmem:[%s2587] sm:$0xf]
      %v2589 = vld [vmem:[%s2587 + $0x4] sm:$0xf]
      %v2590 = vld [vmem:[%s2587 + $0x8] sm:$0xf]
      %v2591 = vld [vmem:[%s2587 + $0xc] sm:$0xf]
      %v2592 = vld [vmem:[%s2587 + $0x10] sm:$0xf]
      %v2593 = vld [vmem:[%s2587 + $0x14] sm:$0xf]
      %v2594 = vld [vmem:[%s2587 + $0x18] sm:$0xf]
      %v2595 = vld [vmem:[%s2587 + $0x1c] sm:$0xf]
      %v2596 = vld [vmem:[%s2587 + $0x20] sm:$0xf]
      %v2597 = vld [vmem:[%s2587 + $0x24] sm:$0xf]
      %v2598 = vld [vmem:[%s2587 + $0x28] sm:$0xf]
      %v2599 = vld [vmem:[%s2587 + $0x2c] sm:$0xf]
      %v2600 = vld [vmem:[%s2587 + $0x30] sm:$0xf]
      %v2601 = vld [vmem:[%s2587 + $0x34] sm:$0xf]
      %v2602 = vld [vmem:[%s2587 + $0x38] sm:$0xf]
      %v2603 = vld [vmem:[%s2587 + $0x3c] sm:$0xf]
      %v2620 = vunpack.c.l.b16 %v2588
      %v2621 = vunpack.c.l.b16 %v2589
      %v2622 = vunpack.c.l.b16 %v2590
      %v2623 = vunpack.c.l.b16 %v2591
      %v2624 = vunpack.c.l.b16 %v2592
      %v2625 = vunpack.c.l.b16 %v2593
      %v2626 = vunpack.c.l.b16 %v2594
      %v2627 = vunpack.c.l.b16 %v2595
      %v2628 = vunpack.c.l.b16 %v2596
      %v2629 = vunpack.c.l.b16 %v2597
      %v2630 = vunpack.c.l.b16 %v2598
      %v2631 = vunpack.c.l.b16 %v2599
      %v2632 = vunpack.c.l.b16 %v2600
      %v2633 = vunpack.c.l.b16 %v2601
      %v2634 = vunpack.c.l.b16 %v2602
      %v2635 = vunpack.c.l.b16 %v2603
      %v2636 = vpack.c.b16 %v2621, %v2620
      %v2637 = vpack.c.b16 %v2623, %v2622
      %v2638 = vpack.c.b16 %v2625, %v2624
      %v2639 = vpack.c.b16 %v2627, %v2626
      %v2640 = vpack.c.b16 %v2629, %v2628
      %v2641 = vpack.c.b16 %v2631, %v2630
      %v2642 = vpack.c.b16 %v2633, %v2632
      %v2643 = vpack.c.b16 %v2635, %v2634
      %2652 = vmatprep.subr.bf16.mxu0 0
      %2653 = vmatpush1.bf16.msra.mxu0 %v2636
      %2654 = vmatprep.subr.bf16.mxu0 0
      %2655 = vmatpush1.bf16.msra.mxu0 %v2637
      %2656 = vmatprep.subr.bf16.mxu0 0
      %2657 = vmatpush1.bf16.msra.mxu0 %v2638
      %2658 = vmatprep.subr.bf16.mxu0 0
      %2659 = vmatpush1.bf16.msra.mxu0 %v2639
      %2660 = vmatprep.subr.bf16.mxu0 0
      %2661 = vmatpush1.bf16.msra.mxu0 %v2640
      %2662 = vmatprep.subr.bf16.mxu0 0
      %2663 = vmatpush1.bf16.msra.mxu0 %v2641
      %2664 = vmatprep.subr.bf16.mxu0 0
      %2665 = vmatpush1.bf16.msra.mxu0 %v2642
      %2666 = vmatprep.subr.bf16.mxu0 0
      %2667 = vmatpush1.bf16.msra.mxu0 %v2643
      %2668 = vmatprep.subr.bf16.mxu0 0
      %2669 = vmatpush1.bf16.msra.mxu0 0
      %2670 = vmatprep.subr.bf16.mxu0 0
      %2671 = vmatpush1.bf16.msra.mxu0 0
      %2672 = vmatprep.subr.bf16.mxu0 0
      %2673 = vmatpush1.bf16.msra.mxu0 0
      %2674 = vmatprep.subr.bf16.mxu0 0
      %2675 = vmatpush1.bf16.msra.mxu0 0
      %2676 = vmatprep.subr.bf16.mxu0 0
      %2677 = vmatpush1.bf16.msra.mxu0 0
      %2678 = vmatprep.subr.bf16.mxu0 0
      %2679 = vmatpush1.bf16.msra.mxu0 0
      %2680 = vmatprep.subr.bf16.mxu0 0
      %2681 = vmatpush1.bf16.msra.mxu0 0
      %2682 = vmatprep.subr.bf16.mxu0 0
      %2683 = vmatpush1.bf16.msra.mxu0 0
      %2684 = vmatprep.mubr.bf16.mxu0 0
      %2685 = vmatmul.mubr.bf16.gmra.mrb[0].mxu0 %v2583
      %v2686 = vpop.f32.mrb[0].mxu0
      %v2687 = vadd.f32 0.0, %v2686
      %v2688 = vpop.f32.mrb[0].mxu0
      %v2689 = vpop.f32.mrb[0].mxu0
      %v2690 = vadd.f32 0.0, %v2689
      %v2691 = vpop.f32.mrb[0].mxu0
      %2692 = vmatprep.mubr.bf16.mxu0 0
      %2693 = vmatmul.mubr.bf16.gmra.mrb[0].mxu0 %v2584
      %v2694 = vpop.f32.mrb[0].mxu0
      %v2695 = vadd.f32 0.0, %v2694
      %v2696 = vpop.f32.mrb[0].mxu0
      %v2697 = vpop.f32.mrb[0].mxu0
      %v2698 = vadd.f32 0.0, %v2697
      %v2699 = vpop.f32.mrb[0].mxu0
      %2700 = vmatprep.mubr.bf16.mxu0 0
      %2701 = vmatmul.mubr.bf16.gmra.mrb[0].mxu0 %v2585
      %v2702 = vpop.f32.mrb[0].mxu0
      %v2703 = vadd.f32 0.0, %v2702
      %v2704 = vpop.f32.mrb[0].mxu0
      %v2705 = vpop.f32.mrb[0].mxu0
      %v2706 = vadd.f32 0.0, %v2705
      %v2707 = vpop.f32.mrb[0].mxu0
      %2708 = vmatprep.mubr.bf16.mxu0 0
      %2709 = vmatmul.mubr.bf16.gmra.mrb[0].mxu0 %v2586
      %v2710 = vpop.f32.mrb[0].mxu0
      %v2711 = vadd.f32 0.0, %v2710
      %v2712 = vpop.f32.mrb[0].mxu0
      %v2713 = vpop.f32.mrb[0].mxu0
      %v2714 = vadd.f32 0.0, %v2713
      %v2715 = vpop.f32.mrb[0].mxu0
      %2716 = vdwg.mxu0
      %v2717 = vadd.f32 %v2571, %v2687
      %v2718 = vadd.f32 %v2572, %v2690
      %v2719 = vadd.f32 %v2573, %v2695
      %v2720 = vadd.f32 %v2574, %v2698
      %v2721 = vadd.f32 %v2575, %v2703
      %v2722 = vadd.f32 %v2576, %v2706
      %v2723 = vadd.f32 %v2577, %v2711
      %v2724 = vadd.f32 %v2578, %v2714
      %v2725 = vpack.c.bf16 %v1781, %v1779
      %s2726 = scalar_lea.vmem %s3, 960
      %v2727 = vld [vmem:[%s2726] sm:$0xf]
      %v2728 = vld [vmem:[%s2726 + $0x4] sm:$0xf]
      %v2729 = vld [vmem:[%s2726 + $0x8] sm:$0xf]
      %v2730 = vld [vmem:[%s2726 + $0xc] sm:$0xf]
      %v2731 = vld [vmem:[%s2726 + $0x10] sm:$0xf]
      %v2732 = vld [vmem:[%s2726 + $0x14] sm:$0xf]
      %v2733 = vld [vmem:[%s2726 + $0x18] sm:$0xf]
      %v2734 = vld [vmem:[%s2726 + $0x1c] sm:$0xf]
      %v2735 = vld [vmem:[%s2726 + $0x20] sm:$0xf]
      %v2736 = vld [vmem:[%s2726 + $0x24] sm:$0xf]
      %v2737 = vld [vmem:[%s2726 + $0x28] sm:$0xf]
      %v2738 = vld [vmem:[%s2726 + $0x2c] sm:$0xf]
      %v2739 = vld [vmem:[%s2726 + $0x30] sm:$0xf]
      %v2740 = vld [vmem:[%s2726 + $0x34] sm:$0xf]
      %v2741 = vld [vmem:[%s2726 + $0x38] sm:$0xf]
      %v2742 = vld [vmem:[%s2726 + $0x3c] sm:$0xf]
      %v2759 = vunpack.c.l.b16 %v2727
      %v2760 = vunpack.c.l.b16 %v2728
      %v2761 = vunpack.c.l.b16 %v2729
      %v2762 = vunpack.c.l.b16 %v2730
      %v2763 = vunpack.c.l.b16 %v2731
      %v2764 = vunpack.c.l.b16 %v2732
      %v2765 = vunpack.c.l.b16 %v2733
      %v2766 = vunpack.c.l.b16 %v2734
      %v2767 = vunpack.c.l.b16 %v2735
      %v2768 = vunpack.c.l.b16 %v2736
      %v2769 = vunpack.c.l.b16 %v2737
      %v2770 = vunpack.c.l.b16 %v2738
      %v2771 = vunpack.c.l.b16 %v2739
      %v2772 = vunpack.c.l.b16 %v2740
      %v2773 = vunpack.c.l.b16 %v2741
      %v2774 = vunpack.c.l.b16 %v2742
      %v2775 = vpack.c.b16 %v2760, %v2759
      %v2776 = vpack.c.b16 %v2762, %v2761
      %v2777 = vpack.c.b16 %v2764, %v2763
      %v2778 = vpack.c.b16 %v2766, %v2765
      %v2779 = vpack.c.b16 %v2768, %v2767
      %v2780 = vpack.c.b16 %v2770, %v2769
      %v2781 = vpack.c.b16 %v2772, %v2771
      %v2782 = vpack.c.b16 %v2774, %v2773
      %2791 = vmatprep.subr.bf16.mxu0 0
      %2792 = vmatpush1.bf16.msra.mxu0 %v2775
      %2793 = vmatprep.subr.bf16.mxu0 0
      %2794 = vmatpush1.bf16.msra.mxu0 %v2776
      %2795 = vmatprep.subr.bf16.mxu0 0
      %2796 = vmatpush1.bf16.msra.mxu0 %v2777
      %2797 = vmatprep.subr.bf16.mxu0 0
      %2798 = vmatpush1.bf16.msra.mxu0 %v2778
      %2799 = vmatprep.subr.bf16.mxu0 0
      %2800 = vmatpush1.bf16.msra.mxu0 %v2779
      %2801 = vmatprep.subr.bf16.mxu0 0
      %2802 = vmatpush1.bf16.msra.mxu0 %v2780
      %2803 = vmatprep.subr.bf16.mxu0 0
      %2804 = vmatpush1.bf16.msra.mxu0 %v2781
      %2805 = vmatprep.subr.bf16.mxu0 0
      %2806 = vmatpush1.bf16.msra.mxu0 %v2782
      %2807 = vmatprep.subr.bf16.mxu0 0
      %2808 = vmatpush1.bf16.msra.mxu0 0
      %2809 = vmatprep.subr.bf16.mxu0 0
      %2810 = vmatpush1.bf16.msra.mxu0 0
      %2811 = vmatprep.subr.bf16.mxu0 0
      %2812 = vmatpush1.bf16.msra.mxu0 0
      %2813 = vmatprep.subr.bf16.mxu0 0
      %2814 = vmatpush1.bf16.msra.mxu0 0
      %2815 = vmatprep.subr.bf16.mxu0 0
      %2816 = vmatpush1.bf16.msra.mxu0 0
      %2817 = vmatprep.subr.bf16.mxu0 0
      %2818 = vmatpush1.bf16.msra.mxu0 0
      %2819 = vmatprep.subr.bf16.mxu0 0
      %2820 = vmatpush1.bf16.msra.mxu0 0
      %2821 = vmatprep.subr.bf16.mxu0 0
      %2822 = vmatpush1.bf16.msra.mxu0 0
      %2823 = vmatprep.mubr.bf16.mxu0 0
      %2824 = vmatmul.mubr.bf16.gmra.mrb[0].mxu0 %v1784
      %v2825 = vpop.f32.mrb[0].mxu0
      %v2826 = vadd.f32 0.0, %v2825
      %v2827 = vpop.f32.mrb[0].mxu0
      %v2828 = vpop.f32.mrb[0].mxu0
      %v2829 = vadd.f32 0.0, %v2828
      %v2830 = vpop.f32.mrb[0].mxu0
      %2831 = vmatprep.mubr.bf16.mxu0 0
      %2832 = vmatmul.mubr.bf16.gmra.mrb[0].mxu0 %v1785
      %v2833 = vpop.f32.mrb[0].mxu0
      %v2834 = vadd.f32 0.0, %v2833
      %v2835 = vpop.f32.mrb[0].mxu0
      %v2836 = vpop.f32.mrb[0].mxu0
      %v2837 = vadd.f32 0.0, %v2836
      %v2838 = vpop.f32.mrb[0].mxu0
      %2839 = vmatprep.mubr.bf16.mxu0 0
      %2840 = vmatmul.mubr.bf16.gmra.mrb[0].mxu0 %v1786
      %v2841 = vpop.f32.mrb[0].mxu0
      %v2842 = vadd.f32 0.0, %v2841
      %v2843 = vpop.f32.mrb[0].mxu0
      %v2844 = vpop.f32.mrb[0].mxu0
      %v2845 = vadd.f32 0.0, %v2844
      %v2846 = vpop.f32.mrb[0].mxu0
      %2847 = vmatprep.mubr.bf16.mxu0 0
      %2848 = vmatmul.mubr.bf16.gmra.mrb[0].mxu0 %v2725
      %v2849 = vpop.f32.mrb[0].mxu0
      %v2850 = vadd.f32 0.0, %v2849
      %v2851 = vpop.f32.mrb[0].mxu0
      %v2852 = vpop.f32.mrb[0].mxu0
      %v2853 = vadd.f32 0.0, %v2852
      %v2854 = vpop.f32.mrb[0].mxu0
      %2855 = vdwg.mxu0
      %v2856 = vadd.f32 %v2717, %v2826
      %v2857 = vadd.f32 %v2718, %v2829
      %v2858 = vadd.f32 %v2719, %v2834
      %v2859 = vadd.f32 %v2720, %v2837
      %v2860 = vadd.f32 %v2721, %v2842
      %v2861 = vadd.f32 %v2722, %v2845
      %v2862 = vadd.f32 %v2723, %v2850
      %v2863 = vadd.f32 %v2724, %v2853
      %v2866 = vrot.slane %v1781, 1
      %v2867 = vrot.slane %v1782, 1
      %v2868 = vsel %vm425, %v2866, %v2867
      %v2870 = vpack.c.bf16 %v2868, %v2435
      %s2871 = scalar_lea.vmem %s3, 1024
      %v2872 = vld [vmem:[%s2871] sm:$0xf]
      %v2873 = vld [vmem:[%s2871 + $0x4] sm:$0xf]
      %v2874 = vld [vmem:[%s2871 + $0x8] sm:$0xf]
      %v2875 = vld [vmem:[%s2871 + $0xc] sm:$0xf]
      %v2876 = vld [vmem:[%s2871 + $0x10] sm:$0xf]
      %v2877 = vld [vmem:[%s2871 + $0x14] sm:$0xf]
      %v2878 = vld [vmem:[%s2871 + $0x18] sm:$0xf]
      %v2879 = vld [vmem:[%s2871 + $0x1c] sm:$0xf]
      %v2880 = vld [vmem:[%s2871 + $0x20] sm:$0xf]
      %v2881 = vld [vmem:[%s2871 + $0x24] sm:$0xf]
      %v2882 = vld [vmem:[%s2871 + $0x28] sm:$0xf]
      %v2883 = vld [vmem:[%s2871 + $0x2c] sm:$0xf]
      %v2884 = vld [vmem:[%s2871 + $0x30] sm:$0xf]
      %v2885 = vld [vmem:[%s2871 + $0x34] sm:$0xf]
      %v2886 = vld [vmem:[%s2871 + $0x38] sm:$0xf]
      %v2887 = vld [vmem:[%s2871 + $0x3c] sm:$0xf]
      %v2904 = vunpack.c.l.b16 %v2872
      %v2905 = vunpack.c.l.b16 %v2873
      %v2906 = vunpack.c.l.b16 %v2874
      %v2907 = vunpack.c.l.b16 %v2875
      %v2908 = vunpack.c.l.b16 %v2876
      %v2909 = vunpack.c.l.b16 %v2877
      %v2910 = vunpack.c.l.b16 %v2878
      %v2911 = vunpack.c.l.b16 %v2879
      %v2912 = vunpack.c.l.b16 %v2880
      %v2913 = vunpack.c.l.b16 %v2881
      %v2914 = vunpack.c.l.b16 %v2882
      %v2915 = vunpack.c.l.b16 %v2883
      %v2916 = vunpack.c.l.b16 %v2884
      %v2917 = vunpack.c.l.b16 %v2885
      %v2918 = vunpack.c.l.b16 %v2886
      %v2919 = vunpack.c.l.b16 %v2887
      %v2920 = vpack.c.b16 %v2905, %v2904
      %v2921 = vpack.c.b16 %v2907, %v2906
      %v2922 = vpack.c.b16 %v2909, %v2908
      %v2923 = vpack.c.b16 %v2911, %v2910
      %v2924 = vpack.c.b16 %v2913, %v2912
      %v2925 = vpack.c.b16 %v2915, %v2914
      %v2926 = vpack.c.b16 %v2917, %v2916
      %v2927 = vpack.c.b16 %v2919, %v2918
      %2936 = vmatprep.subr.bf16.mxu0 0
      %2937 = vmatpush1.bf16.msra.mxu0 %v2920
      %2938 = vmatprep.subr.bf16.mxu0 0
      %2939 = vmatpush1.bf16.msra.mxu0 %v2921
      %2940 = vmatprep.subr.bf16.mxu0 0
      %2941 = vmatpush1.bf16.msra.mxu0 %v2922
      %2942 = vmatprep.subr.bf16.mxu0 0
      %2943 = vmatpush1.bf16.msra.mxu0 %v2923
      %2944 = vmatprep.subr.bf16.mxu0 0
      %2945 = vmatpush1.bf16.msra.mxu0 %v2924
      %2946 = vmatprep.subr.bf16.mxu0 0
      %2947 = vmatpush1.bf16.msra.mxu0 %v2925
      %2948 = vmatprep.subr.bf16.mxu0 0
      %2949 = vmatpush1.bf16.msra.mxu0 %v2926
      %2950 = vmatprep.subr.bf16.mxu0 0
      %2951 = vmatpush1.bf16.msra.mxu0 %v2927
      %2952 = vmatprep.subr.bf16.mxu0 0
      %2953 = vmatpush1.bf16.msra.mxu0 0
      %2954 = vmatprep.subr.bf16.mxu0 0
      %2955 = vmatpush1.bf16.msra.mxu0 0
      %2956 = vmatprep.subr.bf16.mxu0 0
      %2957 = vmatpush1.bf16.msra.mxu0 0
      %2958 = vmatprep.subr.bf16.mxu0 0
      %2959 = vmatpush1.bf16.msra.mxu0 0
      %2960 = vmatprep.subr.bf16.mxu0 0
      %2961 = vmatpush1.bf16.msra.mxu0 0
      %2962 = vmatprep.subr.bf16.mxu0 0
      %2963 = vmatpush1.bf16.msra.mxu0 0
      %2964 = vmatprep.subr.bf16.mxu0 0
      %2965 = vmatpush1.bf16.msra.mxu0 0
      %2966 = vmatprep.subr.bf16.mxu0 0
      %2967 = vmatpush1.bf16.msra.mxu0 0
      %2968 = vmatprep.mubr.bf16.mxu0 0
      %2969 = vmatmul.mubr.bf16.gmra.mrb[0].mxu0 %v1974
      %v2970 = vpop.f32.mrb[0].mxu0
      %v2971 = vadd.f32 0.0, %v2970
      %v2972 = vpop.f32.mrb[0].mxu0
      %v2973 = vpop.f32.mrb[0].mxu0
      %v2974 = vadd.f32 0.0, %v2973
      %v2975 = vpop.f32.mrb[0].mxu0
      %2976 = vmatprep.mubr.bf16.mxu0 0
      %2977 = vmatmul.mubr.bf16.gmra.mrb[0].mxu0 %v1975
      %v2978 = vpop.f32.mrb[0].mxu0
      %v2979 = vadd.f32 0.0, %v2978
      %v2980 = vpop.f32.mrb[0].mxu0
      %v2981 = vpop.f32.mrb[0].mxu0
      %v2982 = vadd.f32 0.0, %v2981
      %v2983 = vpop.f32.mrb[0].mxu0
      %2984 = vmatprep.mubr.bf16.mxu0 0
      %2985 = vmatmul.mubr.bf16.gmra.mrb[0].mxu0 %v1976
      %v2986 = vpop.f32.mrb[0].mxu0
      %v2987 = vadd.f32 0.0, %v2986
      %v2988 = vpop.f32.mrb[0].mxu0
      %v2989 = vpop.f32.mrb[0].mxu0
      %v2990 = vadd.f32 0.0, %v2989
      %v2991 = vpop.f32.mrb[0].mxu0
      %2992 = vmatprep.mubr.bf16.mxu0 0
      %2993 = vmatmul.mubr.bf16.gmra.mrb[0].mxu0 %v2870
      %v2994 = vpop.f32.mrb[0].mxu0
      %v2995 = vadd.f32 0.0, %v2994
      %v2996 = vpop.f32.mrb[0].mxu0
      %v2997 = vpop.f32.mrb[0].mxu0
      %v2998 = vadd.f32 0.0, %v2997
      %v2999 = vpop.f32.mrb[0].mxu0
      %3000 = vdwg.mxu0
      %v3001 = vadd.f32 %v2856, %v2971
      %v3002 = vadd.f32 %v2857, %v2974
      %v3003 = vadd.f32 %v2858, %v2979
      %v3004 = vadd.f32 %v2859, %v2982
      %v3005 = vadd.f32 %v2860, %v2987
      %v3006 = vadd.f32 %v2861, %v2990
      %v3007 = vadd.f32 %v2862, %v2995
      %v3008 = vadd.f32 %v2863, %v2998
      %v3009 = vrot.slane %v1781, 2
      %v3010 = vrot.slane %v1782, 2
      %v3011 = vsel %vm705, %v3009, %v3010
      %v3013 = vpack.c.bf16 %v3011, %v2581
      %s3014 = scalar_lea.vmem %s3, 1088
      %v3015 = vld [vmem:[%s3014] sm:$0xf]
      %v3016 = vld [vmem:[%s3014 + $0x4] sm:$0xf]
      %v3017 = vld [vmem:[%s3014 + $0x8] sm:$0xf]
      %v3018 = vld [vmem:[%s3014 + $0xc] sm:$0xf]
      %v3019 = vld [vmem:[%s3014 + $0x10] sm:$0xf]
      %v3020 = vld [vmem:[%s3014 + $0x14] sm:$0xf]
      %v3021 = vld [vmem:[%s3014 + $0x18] sm:$0xf]
      %v3022 = vld [vmem:[%s3014 + $0x1c] sm:$0xf]
      %v3023 = vld [vmem:[%s3014 + $0x20] sm:$0xf]
      %v3024 = vld [vmem:[%s3014 + $0x24] sm:$0xf]
      %v3025 = vld [vmem:[%s3014 + $0x28] sm:$0xf]
      %v3026 = vld [vmem:[%s3014 + $0x2c] sm:$0xf]
      %v3027 = vld [vmem:[%s3014 + $0x30] sm:$0xf]
      %v3028 = vld [vmem:[%s3014 + $0x34] sm:$0xf]
      %v3029 = vld [vmem:[%s3014 + $0x38] sm:$0xf]
      %v3030 = vld [vmem:[%s3014 + $0x3c] sm:$0xf]
      %v3047 = vunpack.c.l.b16 %v3015
      %v3048 = vunpack.c.l.b16 %v3016
      %v3049 = vunpack.c.l.b16 %v3017
      %v3050 = vunpack.c.l.b16 %v3018
      %v3051 = vunpack.c.l.b16 %v3019
      %v3052 = vunpack.c.l.b16 %v3020
      %v3053 = vunpack.c.l.b16 %v3021
      %v3054 = vunpack.c.l.b16 %v3022
      %v3055 = vunpack.c.l.b16 %v3023
      %v3056 = vunpack.c.l.b16 %v3024
      %v3057 = vunpack.c.l.b16 %v3025
      %v3058 = vunpack.c.l.b16 %v3026
      %v3059 = vunpack.c.l.b16 %v3027
      %v3060 = vunpack.c.l.b16 %v3028
      %v3061 = vunpack.c.l.b16 %v3029
      %v3062 = vunpack.c.l.b16 %v3030
      %v3063 = vpack.c.b16 %v3048, %v3047
      %v3064 = vpack.c.b16 %v3050, %v3049
      %v3065 = vpack.c.b16 %v3052, %v3051
      %v3066 = vpack.c.b16 %v3054, %v3053
      %v3067 = vpack.c.b16 %v3056, %v3055
      %v3068 = vpack.c.b16 %v3058, %v3057
      %v3069 = vpack.c.b16 %v3060, %v3059
      %v3070 = vpack.c.b16 %v3062, %v3061
      %3079 = vmatprep.subr.bf16.mxu0 0
      %3080 = vmatpush1.bf16.msra.mxu0 %v3063
      %3081 = vmatprep.subr.bf16.mxu0 0
      %3082 = vmatpush1.bf16.msra.mxu0 %v3064
      %3083 = vmatprep.subr.bf16.mxu0 0
      %3084 = vmatpush1.bf16.msra.mxu0 %v3065
      %3085 = vmatprep.subr.bf16.mxu0 0
      %3086 = vmatpush1.bf16.msra.mxu0 %v3066
      %3087 = vmatprep.subr.bf16.mxu0 0
      %3088 = vmatpush1.bf16.msra.mxu0 %v3067
      %3089 = vmatprep.subr.bf16.mxu0 0
      %3090 = vmatpush1.bf16.msra.mxu0 %v3068
      %3091 = vmatprep.subr.bf16.mxu0 0
      %3092 = vmatpush1.bf16.msra.mxu0 %v3069
      %3093 = vmatprep.subr.bf16.mxu0 0
      %3094 = vmatpush1.bf16.msra.mxu0 %v3070
      %3095 = vmatprep.subr.bf16.mxu0 0
      %3096 = vmatpush1.bf16.msra.mxu0 0
      %3097 = vmatprep.subr.bf16.mxu0 0
      %3098 = vmatpush1.bf16.msra.mxu0 0
      %3099 = vmatprep.subr.bf16.mxu0 0
      %3100 = vmatpush1.bf16.msra.mxu0 0
      %3101 = vmatprep.subr.bf16.mxu0 0
      %3102 = vmatpush1.bf16.msra.mxu0 0
      %3103 = vmatprep.subr.bf16.mxu0 0
      %3104 = vmatpush1.bf16.msra.mxu0 0
      %3105 = vmatprep.subr.bf16.mxu0 0
      %3106 = vmatpush1.bf16.msra.mxu0 0
      %3107 = vmatprep.subr.bf16.mxu0 0
      %3108 = vmatpush1.bf16.msra.mxu0 0
      %3109 = vmatprep.subr.bf16.mxu0 0
      %3110 = vmatpush1.bf16.msra.mxu0 0
      %3111 = vmatprep.mubr.bf16.mxu0 0
      %3112 = vmatmul.mubr.bf16.gmra.mrb[0].mxu0 %v2148
      %v3113 = vpop.f32.mrb[0].mxu0
      %v3114 = vadd.f32 0.0, %v3113
      %v3115 = vpop.f32.mrb[0].mxu0
      %v3116 = vpop.f32.mrb[0].mxu0
      %v3117 = vadd.f32 0.0, %v3116
      %v3118 = vpop.f32.mrb[0].mxu0
      %3119 = vmatprep.mubr.bf16.mxu0 0
      %3120 = vmatmul.mubr.bf16.gmra.mrb[0].mxu0 %v2149
      %v3121 = vpop.f32.mrb[0].mxu0
      %v3122 = vadd.f32 0.0, %v3121
      %v3123 = vpop.f32.mrb[0].mxu0
      %v3124 = vpop.f32.mrb[0].mxu0
      %v3125 = vadd.f32 0.0, %v3124
      %v3126 = vpop.f32.mrb[0].mxu0
      %3127 = vmatprep.mubr.bf16.mxu0 0
      %3128 = vmatmul.mubr.bf16.gmra.mrb[0].mxu0 %v2150
      %v3129 = vpop.f32.mrb[0].mxu0
      %v3130 = vadd.f32 0.0, %v3129
      %v3131 = vpop.f32.mrb[0].mxu0
      %v3132 = vpop.f32.mrb[0].mxu0
      %v3133 = vadd.f32 0.0, %v3132
      %v3134 = vpop.f32.mrb[0].mxu0
      %3135 = vmatprep.mubr.bf16.mxu0 0
      %3136 = vmatmul.mubr.bf16.gmra.mrb[0].mxu0 %v3013
      %v3137 = vpop.f32.mrb[0].mxu0
      %v3138 = vadd.f32 0.0, %v3137
      %v3139 = vpop.f32.mrb[0].mxu0
      %v3140 = vpop.f32.mrb[0].mxu0
      %v3141 = vadd.f32 0.0, %v3140
      %v3142 = vpop.f32.mrb[0].mxu0
      %3143 = vdwg.mxu0
      %v3144 = vadd.f32 %v3001, %v3114
      %v3145 = vadd.f32 %v3002, %v3117
      %v3146 = vadd.f32 %v3003, %v3122
      %v3147 = vadd.f32 %v3004, %v3125
      %v3148 = vadd.f32 %v3005, %v3130
      %v3149 = vadd.f32 %v3006, %v3133
      %v3150 = vadd.f32 %v3007, %v3138
      %v3151 = vadd.f32 %v3008, %v3141
      %v3152 = vld [vmem:[%s330] sm:$0xf]
      %v3153 = vld [vmem:[%s330 + $0x4] sm:$0x1]
      %v3154 = vld [vmem:[%s330 + $0x8] sm:$0xf]
      %v3155 = vld [vmem:[%s330 + $0xc] sm:$0x1]
      %v3156 = vld [vmem:[%s330 + $0x10] sm:$0xf]
      %v3157 = vld [vmem:[%s330 + $0x14] sm:$0x1]
      %v3158 = vld [vmem:[%s330 + $0x18] sm:$0xf]
      %v3159 = vld [vmem:[%s330 + $0x1c] sm:$0x1]
      %v3160 = vld [vmem:[%s330 + $0x20] sm:$0xf]
      %v3161 = vld [vmem:[%s330 + $0x24] sm:$0x1]
      %v3162 = vld [vmem:[%s330 + $0x28] sm:$0xf]
      %v3163 = vld [vmem:[%s330 + $0x2c] sm:$0x1]
      %v3164 = vld [vmem:[%s330 + $0x30] sm:$0xf]
      %v3165 = vld [vmem:[%s330 + $0x34] sm:$0x1]
      %v3166 = vld [vmem:[%s330 + $0x38] sm:$0xf]
      %v3167 = vld [vmem:[%s330 + $0x3c] sm:$0x1]
      %v3168 = vld [vmem:[%s330 + $0x40] sm:$0xf]
      %v3169 = vld [vmem:[%s330 + $0x44] sm:$0x1]
      %v3170 = vld [vmem:[%s330 + $0x48] sm:$0xf]
      %v3171 = vld [vmem:[%s330 + $0x4c] sm:$0x1]
      %v3172 = vunpack.c.l.bf16 %v3152
      %v3173 = vunpack.c.l.bf16 %v3153
      %v3174 = vunpack.c.l.bf16 %v3154
      %v3175 = vunpack.c.l.bf16 %v3155
      %v3176 = vunpack.c.l.bf16 %v3156
      %v3177 = vunpack.c.l.bf16 %v3157
      %v3178 = vunpack.c.l.bf16 %v3158
      %v3179 = vunpack.c.l.bf16 %v3159
      %v3180 = vunpack.c.l.bf16 %v3160
      %v3181 = vunpack.c.l.bf16 %v3161
      %v3182 = vunpack.c.l.bf16 %v3162
      %v3183 = vunpack.c.l.bf16 %v3163
      %v3184 = vunpack.c.l.bf16 %v3164
      %v3185 = vunpack.c.l.bf16 %v3165
      %v3186 = vunpack.c.l.bf16 %v3166
      %v3187 = vunpack.c.l.bf16 %v3167
      %v3188 = vunpack.c.l.bf16 %v3168
      %v3189 = vunpack.c.l.bf16 %v3169
      %v3190 = vunpack.c.l.bf16 %v3170
      %v3191 = vunpack.c.l.bf16 %v3171
      %v3192 = vpack.c.bf16 %v3174, %v3172
      %v3193 = vpack.c.bf16 %v3178, %v3176
      %v3194 = vpack.c.bf16 %v3182, %v3180
      %v3195 = vpack.c.bf16 %v3186, %v3184
      %s3196 = scalar_lea.vmem %s3, 1152
      %v3197 = vld [vmem:[%s3196] sm:$0xf]
      %v3198 = vld [vmem:[%s3196 + $0x4] sm:$0xf]
      %v3199 = vld [vmem:[%s3196 + $0x8] sm:$0xf]
      %v3200 = vld [vmem:[%s3196 + $0xc] sm:$0xf]
      %v3201 = vld [vmem:[%s3196 + $0x10] sm:$0xf]
      %v3202 = vld [vmem:[%s3196 + $0x14] sm:$0xf]
      %v3203 = vld [vmem:[%s3196 + $0x18] sm:$0xf]
      %v3204 = vld [vmem:[%s3196 + $0x1c] sm:$0xf]
      %v3205 = vld [vmem:[%s3196 + $0x20] sm:$0xf]
      %v3206 = vld [vmem:[%s3196 + $0x24] sm:$0xf]
      %v3207 = vld [vmem:[%s3196 + $0x28] sm:$0xf]
      %v3208 = vld [vmem:[%s3196 + $0x2c] sm:$0xf]
      %v3209 = vld [vmem:[%s3196 + $0x30] sm:$0xf]
      %v3210 = vld [vmem:[%s3196 + $0x34] sm:$0xf]
      %v3211 = vld [vmem:[%s3196 + $0x38] sm:$0xf]
      %v3212 = vld [vmem:[%s3196 + $0x3c] sm:$0xf]
      %v3229 = vunpack.c.l.b16 %v3197
      %v3230 = vunpack.c.l.b16 %v3198
      %v3231 = vunpack.c.l.b16 %v3199
      %v3232 = vunpack.c.l.b16 %v3200
      %v3233 = vunpack.c.l.b16 %v3201
      %v3234 = vunpack.c.l.b16 %v3202
      %v3235 = vunpack.c.l.b16 %v3203
      %v3236 = vunpack.c.l.b16 %v3204
      %v3237 = vunpack.c.l.b16 %v3205
      %v3238 = vunpack.c.l.b16 %v3206
      %v3239 = vunpack.c.l.b16 %v3207
      %v3240 = vunpack.c.l.b16 %v3208
      %v3241 = vunpack.c.l.b16 %v3209
      %v3242 = vunpack.c.l.b16 %v3210
      %v3243 = vunpack.c.l.b16 %v3211
      %v3244 = vunpack.c.l.b16 %v3212
      %v3245 = vpack.c.b16 %v3230, %v3229
      %v3246 = vpack.c.b16 %v3232, %v3231
      %v3247 = vpack.c.b16 %v3234, %v3233
      %v3248 = vpack.c.b16 %v3236, %v3235
      %v3249 = vpack.c.b16 %v3238, %v3237
      %v3250 = vpack.c.b16 %v3240, %v3239
      %v3251 = vpack.c.b16 %v3242, %v3241
      %v3252 = vpack.c.b16 %v3244, %v3243
      %3261 = vmatprep.subr.bf16.mxu0 0
      %3262 = vmatpush1.bf16.msra.mxu0 %v3245
      %3263 = vmatprep.subr.bf16.mxu0 0
      %3264 = vmatpush1.bf16.msra.mxu0 %v3246
      %3265 = vmatprep.subr.bf16.mxu0 0
      %3266 = vmatpush1.bf16.msra.mxu0 %v3247
      %3267 = vmatprep.subr.bf16.mxu0 0
      %3268 = vmatpush1.bf16.msra.mxu0 %v3248
      %3269 = vmatprep.subr.bf16.mxu0 0
      %3270 = vmatpush1.bf16.msra.mxu0 %v3249
      %3271 = vmatprep.subr.bf16.mxu0 0
      %3272 = vmatpush1.bf16.msra.mxu0 %v3250
      %3273 = vmatprep.subr.bf16.mxu0 0
      %3274 = vmatpush1.bf16.msra.mxu0 %v3251
      %3275 = vmatprep.subr.bf16.mxu0 0
      %3276 = vmatpush1.bf16.msra.mxu0 %v3252
      %3277 = vmatprep.subr.bf16.mxu0 0
      %3278 = vmatpush1.bf16.msra.mxu0 0
      %3279 = vmatprep.subr.bf16.mxu0 0
      %3280 = vmatpush1.bf16.msra.mxu0 0
      %3281 = vmatprep.subr.bf16.mxu0 0
      %3282 = vmatpush1.bf16.msra.mxu0 0
      %3283 = vmatprep.subr.bf16.mxu0 0
      %3284 = vmatpush1.bf16.msra.mxu0 0
      %3285 = vmatprep.subr.bf16.mxu0 0
      %3286 = vmatpush1.bf16.msra.mxu0 0
      %3287 = vmatprep.subr.bf16.mxu0 0
      %3288 = vmatpush1.bf16.msra.mxu0 0
      %3289 = vmatprep.subr.bf16.mxu0 0
      %3290 = vmatpush1.bf16.msra.mxu0 0
      %3291 = vmatprep.subr.bf16.mxu0 0
      %3292 = vmatpush1.bf16.msra.mxu0 0
      %3293 = vmatprep.mubr.bf16.mxu0 0
      %3294 = vmatmul.mubr.bf16.gmra.mrb[0].mxu0 %v3192
      %v3295 = vpop.f32.mrb[0].mxu0
      %v3296 = vadd.f32 0.0, %v3295
      %v3297 = vpop.f32.mrb[0].mxu0
      %v3298 = vpop.f32.mrb[0].mxu0
      %v3299 = vadd.f32 0.0, %v3298
      %v3300 = vpop.f32.mrb[0].mxu0
      %3301 = vmatprep.mubr.bf16.mxu0 0
      %3302 = vmatmul.mubr.bf16.gmra.mrb[0].mxu0 %v3193
      %v3303 = vpop.f32.mrb[0].mxu0
      %v3304 = vadd.f32 0.0, %v3303
      %v3305 = vpop.f32.mrb[0].mxu0
      %v3306 = vpop.f32.mrb[0].mxu0
      %v3307 = vadd.f32 0.0, %v3306
      %v3308 = vpop.f32.mrb[0].mxu0
      %3309 = vmatprep.mubr.bf16.mxu0 0
      %3310 = vmatmul.mubr.bf16.gmra.mrb[0].mxu0 %v3194
      %v3311 = vpop.f32.mrb[0].mxu0
      %v3312 = vadd.f32 0.0, %v3311
      %v3313 = vpop.f32.mrb[0].mxu0
      %v3314 = vpop.f32.mrb[0].mxu0
      %v3315 = vadd.f32 0.0, %v3314
      %v3316 = vpop.f32.mrb[0].mxu0
      %3317 = vmatprep.mubr.bf16.mxu0 0
      %3318 = vmatmul.mubr.bf16.gmra.mrb[0].mxu0 %v3195
      %v3319 = vpop.f32.mrb[0].mxu0
      %v3320 = vadd.f32 0.0, %v3319
      %v3321 = vpop.f32.mrb[0].mxu0
      %v3322 = vpop.f32.mrb[0].mxu0
      %v3323 = vadd.f32 0.0, %v3322
      %v3324 = vpop.f32.mrb[0].mxu0
      %3325 = vdwg.mxu0
      %v3326 = vadd.f32 %v3144, %v3296
      %v3327 = vadd.f32 %v3145, %v3299
      %v3328 = vadd.f32 %v3146, %v3304
      %v3329 = vadd.f32 %v3147, %v3307
      %v3330 = vadd.f32 %v3148, %v3312
      %v3331 = vadd.f32 %v3149, %v3315
      %v3332 = vadd.f32 %v3150, %v3320
      %v3333 = vadd.f32 %v3151, %v3323
      %v3350 = vrot.slane %v3172, 1
      %v3351 = vrot.slane %v3173, 1
      %v3352 = vsel %vm425, %v3350, %v3351
      %v3353 = vrot.slane %v3174, 1
      %v3354 = vrot.slane %v3175, 1
      %v3355 = vsel %vm425, %v3353, %v3354
      %v3356 = vrot.slane %v3176, 1
      %v3357 = vrot.slane %v3177, 1
      %v3358 = vsel %vm425, %v3356, %v3357
      %v3359 = vrot.slane %v3178, 1
      %v3360 = vrot.slane %v3179, 1
      %v3361 = vsel %vm425, %v3359, %v3360
      %v3362 = vrot.slane %v3180, 1
      %v3363 = vrot.slane %v3181, 1
      %v3364 = vsel %vm425, %v3362, %v3363
      %v3365 = vrot.slane %v3182, 1
      %v3366 = vrot.slane %v3183, 1
      %v3367 = vsel %vm425, %v3365, %v3366
      %v3368 = vrot.slane %v3184, 1
      %v3369 = vrot.slane %v3185, 1
      %v3370 = vsel %vm425, %v3368, %v3369
      %v3371 = vrot.slane %v3186, 1
      %v3372 = vrot.slane %v3187, 1
      %v3373 = vsel %vm425, %v3371, %v3372
      %v3382 = vpack.c.bf16 %v3355, %v3352
      %v3383 = vpack.c.bf16 %v3361, %v3358
      %v3384 = vpack.c.bf16 %v3367, %v3364
      %v3385 = vpack.c.bf16 %v3373, %v3370
      %s3386 = scalar_lea.vmem %s3, 1216
      %v3387 = vld [vmem:[%s3386] sm:$0xf]
      %v3388 = vld [vmem:[%s3386 + $0x4] sm:$0xf]
      %v3389 = vld [vmem:[%s3386 + $0x8] sm:$0xf]
      %v3390 = vld [vmem:[%s3386 + $0xc] sm:$0xf]
      %v3391 = vld [vmem:[%s3386 + $0x10] sm:$0xf]
      %v3392 = vld [vmem:[%s3386 + $0x14] sm:$0xf]
      %v3393 = vld [vmem:[%s3386 + $0x18] sm:$0xf]
      %v3394 = vld [vmem:[%s3386 + $0x1c] sm:$0xf]
      %v3395 = vld [vmem:[%s3386 + $0x20] sm:$0xf]
      %v3396 = vld [vmem:[%s3386 + $0x24] sm:$0xf]
      %v3397 = vld [vmem:[%s3386 + $0x28] sm:$0xf]
      %v3398 = vld [vmem:[%s3386 + $0x2c] sm:$0xf]
      %v3399 = vld [vmem:[%s3386 + $0x30] sm:$0xf]
      %v3400 = vld [vmem:[%s3386 + $0x34] sm:$0xf]
      %v3401 = vld [vmem:[%s3386 + $0x38] sm:$0xf]
      %v3402 = vld [vmem:[%s3386 + $0x3c] sm:$0xf]
      %v3419 = vunpack.c.l.b16 %v3387
      %v3420 = vunpack.c.l.b16 %v3388
      %v3421 = vunpack.c.l.b16 %v3389
      %v3422 = vunpack.c.l.b16 %v3390
      %v3423 = vunpack.c.l.b16 %v3391
      %v3424 = vunpack.c.l.b16 %v3392
      %v3425 = vunpack.c.l.b16 %v3393
      %v3426 = vunpack.c.l.b16 %v3394
      %v3427 = vunpack.c.l.b16 %v3395
      %v3428 = vunpack.c.l.b16 %v3396
      %v3429 = vunpack.c.l.b16 %v3397
      %v3430 = vunpack.c.l.b16 %v3398
      %v3431 = vunpack.c.l.b16 %v3399
      %v3432 = vunpack.c.l.b16 %v3400
      %v3433 = vunpack.c.l.b16 %v3401
      %v3434 = vunpack.c.l.b16 %v3402
      %v3435 = vpack.c.b16 %v3420, %v3419
      %v3436 = vpack.c.b16 %v3422, %v3421
      %v3437 = vpack.c.b16 %v3424, %v3423
      %v3438 = vpack.c.b16 %v3426, %v3425
      %v3439 = vpack.c.b16 %v3428, %v3427
      %v3440 = vpack.c.b16 %v3430, %v3429
      %v3441 = vpack.c.b16 %v3432, %v3431
      %v3442 = vpack.c.b16 %v3434, %v3433
      %3451 = vmatprep.subr.bf16.mxu0 0
      %3452 = vmatpush1.bf16.msra.mxu0 %v3435
      %3453 = vmatprep.subr.bf16.mxu0 0
      %3454 = vmatpush1.bf16.msra.mxu0 %v3436
      %3455 = vmatprep.subr.bf16.mxu0 0
      %3456 = vmatpush1.bf16.msra.mxu0 %v3437
      %3457 = vmatprep.subr.bf16.mxu0 0
      %3458 = vmatpush1.bf16.msra.mxu0 %v3438
      %3459 = vmatprep.subr.bf16.mxu0 0
      %3460 = vmatpush1.bf16.msra.mxu0 %v3439
      %3461 = vmatprep.subr.bf16.mxu0 0
      %3462 = vmatpush1.bf16.msra.mxu0 %v3440
      %3463 = vmatprep.subr.bf16.mxu0 0
      %3464 = vmatpush1.bf16.msra.mxu0 %v3441
      %3465 = vmatprep.subr.bf16.mxu0 0
      %3466 = vmatpush1.bf16.msra.mxu0 %v3442
      %3467 = vmatprep.subr.bf16.mxu0 0
      %3468 = vmatpush1.bf16.msra.mxu0 0
      %3469 = vmatprep.subr.bf16.mxu0 0
      %3470 = vmatpush1.bf16.msra.mxu0 0
      %3471 = vmatprep.subr.bf16.mxu0 0
      %3472 = vmatpush1.bf16.msra.mxu0 0
      %3473 = vmatprep.subr.bf16.mxu0 0
      %3474 = vmatpush1.bf16.msra.mxu0 0
      %3475 = vmatprep.subr.bf16.mxu0 0
      %3476 = vmatpush1.bf16.msra.mxu0 0
      %3477 = vmatprep.subr.bf16.mxu0 0
      %3478 = vmatpush1.bf16.msra.mxu0 0
      %3479 = vmatprep.subr.bf16.mxu0 0
      %3480 = vmatpush1.bf16.msra.mxu0 0
      %3481 = vmatprep.subr.bf16.mxu0 0
      %3482 = vmatpush1.bf16.msra.mxu0 0
      %3483 = vmatprep.mubr.bf16.mxu0 0
      %3484 = vmatmul.mubr.bf16.gmra.mrb[0].mxu0 %v3382
      %v3485 = vpop.f32.mrb[0].mxu0
      %v3486 = vadd.f32 0.0, %v3485
      %v3487 = vpop.f32.mrb[0].mxu0
      %v3488 = vpop.f32.mrb[0].mxu0
      %v3489 = vadd.f32 0.0, %v3488
      %v3490 = vpop.f32.mrb[0].mxu0
      %3491 = vmatprep.mubr.bf16.mxu0 0
      %3492 = vmatmul.mubr.bf16.gmra.mrb[0].mxu0 %v3383
      %v3493 = vpop.f32.mrb[0].mxu0
      %v3494 = vadd.f32 0.0, %v3493
      %v3495 = vpop.f32.mrb[0].mxu0
      %v3496 = vpop.f32.mrb[0].mxu0
      %v3497 = vadd.f32 0.0, %v3496
      %v3498 = vpop.f32.mrb[0].mxu0
      %3499 = vmatprep.mubr.bf16.mxu0 0
      %3500 = vmatmul.mubr.bf16.gmra.mrb[0].mxu0 %v3384
      %v3501 = vpop.f32.mrb[0].mxu0
      %v3502 = vadd.f32 0.0, %v3501
      %v3503 = vpop.f32.mrb[0].mxu0
      %v3504 = vpop.f32.mrb[0].mxu0
      %v3505 = vadd.f32 0.0, %v3504
      %v3506 = vpop.f32.mrb[0].mxu0
      %3507 = vmatprep.mubr.bf16.mxu0 0
      %3508 = vmatmul.mubr.bf16.gmra.mrb[0].mxu0 %v3385
      %v3509 = vpop.f32.mrb[0].mxu0
      %v3510 = vadd.f32 0.0, %v3509
      %v3511 = vpop.f32.mrb[0].mxu0
      %v3512 = vpop.f32.mrb[0].mxu0
      %v3513 = vadd.f32 0.0, %v3512
      %v3514 = vpop.f32.mrb[0].mxu0
      %3515 = vdwg.mxu0
      %v3516 = vadd.f32 %v3326, %v3486
      %v3517 = vadd.f32 %v3327, %v3489
      %v3518 = vadd.f32 %v3328, %v3494
      %v3519 = vadd.f32 %v3329, %v3497
      %v3520 = vadd.f32 %v3330, %v3502
      %v3521 = vadd.f32 %v3331, %v3505
      %v3522 = vadd.f32 %v3332, %v3510
      %v3523 = vadd.f32 %v3333, %v3513
      %v3524 = vrot.slane %v3172, 2
      %v3525 = vrot.slane %v3173, 2
      %v3526 = vsel %vm705, %v3524, %v3525
      %v3527 = vrot.slane %v3174, 2
      %v3528 = vrot.slane %v3175, 2
      %v3529 = vsel %vm705, %v3527, %v3528
      %v3530 = vrot.slane %v3176, 2
      %v3531 = vrot.slane %v3177, 2
      %v3532 = vsel %vm705, %v3530, %v3531
      %v3533 = vrot.slane %v3178, 2
      %v3534 = vrot.slane %v3179, 2
      %v3535 = vsel %vm705, %v3533, %v3534
      %v3536 = vrot.slane %v3180, 2
      %v3537 = vrot.slane %v3181, 2
      %v3538 = vsel %vm705, %v3536, %v3537
      %v3539 = vrot.slane %v3182, 2
      %v3540 = vrot.slane %v3183, 2
      %v3541 = vsel %vm705, %v3539, %v3540
      %v3542 = vrot.slane %v3184, 2
      %v3543 = vrot.slane %v3185, 2
      %v3544 = vsel %vm705, %v3542, %v3543
      %v3545 = vrot.slane %v3186, 2
      %v3546 = vrot.slane %v3187, 2
      %v3547 = vsel %vm705, %v3545, %v3546
      %v3556 = vpack.c.bf16 %v3529, %v3526
      %v3557 = vpack.c.bf16 %v3535, %v3532
      %v3558 = vpack.c.bf16 %v3541, %v3538
      %v3559 = vpack.c.bf16 %v3547, %v3544
      %s3560 = scalar_lea.vmem %s3, 1280
      %v3561 = vld [vmem:[%s3560] sm:$0xf]
      %v3562 = vld [vmem:[%s3560 + $0x4] sm:$0xf]
      %v3563 = vld [vmem:[%s3560 + $0x8] sm:$0xf]
      %v3564 = vld [vmem:[%s3560 + $0xc] sm:$0xf]
      %v3565 = vld [vmem:[%s3560 + $0x10] sm:$0xf]
      %v3566 = vld [vmem:[%s3560 + $0x14] sm:$0xf]
      %v3567 = vld [vmem:[%s3560 + $0x18] sm:$0xf]
      %v3568 = vld [vmem:[%s3560 + $0x1c] sm:$0xf]
      %v3569 = vld [vmem:[%s3560 + $0x20] sm:$0xf]
      %v3570 = vld [vmem:[%s3560 + $0x24] sm:$0xf]
      %v3571 = vld [vmem:[%s3560 + $0x28] sm:$0xf]
      %v3572 = vld [vmem:[%s3560 + $0x2c] sm:$0xf]
      %v3573 = vld [vmem:[%s3560 + $0x30] sm:$0xf]
      %v3574 = vld [vmem:[%s3560 + $0x34] sm:$0xf]
      %v3575 = vld [vmem:[%s3560 + $0x38] sm:$0xf]
      %v3576 = vld [vmem:[%s3560 + $0x3c] sm:$0xf]
      %v3593 = vunpack.c.l.b16 %v3561
      %v3594 = vunpack.c.l.b16 %v3562
      %v3595 = vunpack.c.l.b16 %v3563
      %v3596 = vunpack.c.l.b16 %v3564
      %v3597 = vunpack.c.l.b16 %v3565
      %v3598 = vunpack.c.l.b16 %v3566
      %v3599 = vunpack.c.l.b16 %v3567
      %v3600 = vunpack.c.l.b16 %v3568
      %v3601 = vunpack.c.l.b16 %v3569
      %v3602 = vunpack.c.l.b16 %v3570
      %v3603 = vunpack.c.l.b16 %v3571
      %v3604 = vunpack.c.l.b16 %v3572
      %v3605 = vunpack.c.l.b16 %v3573
      %v3606 = vunpack.c.l.b16 %v3574
      %v3607 = vunpack.c.l.b16 %v3575
      %v3608 = vunpack.c.l.b16 %v3576
      %v3609 = vpack.c.b16 %v3594, %v3593
      %v3610 = vpack.c.b16 %v3596, %v3595
      %v3611 = vpack.c.b16 %v3598, %v3597
      %v3612 = vpack.c.b16 %v3600, %v3599
      %v3613 = vpack.c.b16 %v3602, %v3601
      %v3614 = vpack.c.b16 %v3604, %v3603
      %v3615 = vpack.c.b16 %v3606, %v3605
      %v3616 = vpack.c.b16 %v3608, %v3607
      %3625 = vmatprep.subr.bf16.mxu0 0
      %3626 = vmatpush1.bf16.msra.mxu0 %v3609
      %3627 = vmatprep.subr.bf16.mxu0 0
      %3628 = vmatpush1.bf16.msra.mxu0 %v3610
      %3629 = vmatprep.subr.bf16.mxu0 0
      %3630 = vmatpush1.bf16.msra.mxu0 %v3611
      %3631 = vmatprep.subr.bf16.mxu0 0
      %3632 = vmatpush1.bf16.msra.mxu0 %v3612
      %3633 = vmatprep.subr.bf16.mxu0 0
      %3634 = vmatpush1.bf16.msra.mxu0 %v3613
      %3635 = vmatprep.subr.bf16.mxu0 0
      %3636 = vmatpush1.bf16.msra.mxu0 %v3614
      %3637 = vmatprep.subr.bf16.mxu0 0
      %3638 = vmatpush1.bf16.msra.mxu0 %v3615
      %3639 = vmatprep.subr.bf16.mxu0 0
      %3640 = vmatpush1.bf16.msra.mxu0 %v3616
      %3641 = vmatprep.subr.bf16.mxu0 0
      %3642 = vmatpush1.bf16.msra.mxu0 0
      %3643 = vmatprep.subr.bf16.mxu0 0
      %3644 = vmatpush1.bf16.msra.mxu0 0
      %3645 = vmatprep.subr.bf16.mxu0 0
      %3646 = vmatpush1.bf16.msra.mxu0 0
      %3647 = vmatprep.subr.bf16.mxu0 0
      %3648 = vmatpush1.bf16.msra.mxu0 0
      %3649 = vmatprep.subr.bf16.mxu0 0
      %3650 = vmatpush1.bf16.msra.mxu0 0
      %3651 = vmatprep.subr.bf16.mxu0 0
      %3652 = vmatpush1.bf16.msra.mxu0 0
      %3653 = vmatprep.subr.bf16.mxu0 0
      %3654 = vmatpush1.bf16.msra.mxu0 0
      %3655 = vmatprep.subr.bf16.mxu0 0
      %3656 = vmatpush1.bf16.msra.mxu0 0
      %3657 = vmatprep.mubr.bf16.mxu0 0
      %3658 = vmatmul.mubr.bf16.gmra.mrb[0].mxu0 %v3556
      %v3659 = vpop.f32.mrb[0].mxu0
      %v3660 = vadd.f32 0.0, %v3659
      %v3661 = vpop.f32.mrb[0].mxu0
      %v3662 = vpop.f32.mrb[0].mxu0
      %v3663 = vadd.f32 0.0, %v3662
      %v3664 = vpop.f32.mrb[0].mxu0
      %3665 = vmatprep.mubr.bf16.mxu0 0
      %3666 = vmatmul.mubr.bf16.gmra.mrb[0].mxu0 %v3557
      %v3667 = vpop.f32.mrb[0].mxu0
      %v3668 = vadd.f32 0.0, %v3667
      %v3669 = vpop.f32.mrb[0].mxu0
      %v3670 = vpop.f32.mrb[0].mxu0
      %v3671 = vadd.f32 0.0, %v3670
      %v3672 = vpop.f32.mrb[0].mxu0
      %3673 = vmatprep.mubr.bf16.mxu0 0
      %3674 = vmatmul.mubr.bf16.gmra.mrb[0].mxu0 %v3558
      %v3675 = vpop.f32.mrb[0].mxu0
      %v3676 = vadd.f32 0.0, %v3675
      %v3677 = vpop.f32.mrb[0].mxu0
      %v3678 = vpop.f32.mrb[0].mxu0
      %v3679 = vadd.f32 0.0, %v3678
      %v3680 = vpop.f32.mrb[0].mxu0
      %3681 = vmatprep.mubr.bf16.mxu0 0
      %3682 = vmatmul.mubr.bf16.gmra.mrb[0].mxu0 %v3559
      %v3683 = vpop.f32.mrb[0].mxu0
      %v3684 = vadd.f32 0.0, %v3683
      %v3685 = vpop.f32.mrb[0].mxu0
      %v3686 = vpop.f32.mrb[0].mxu0
      %v3687 = vadd.f32 0.0, %v3686
      %v3688 = vpop.f32.mrb[0].mxu0
      %3689 = vdwg.mxu0
      %v3690 = vadd.f32 %v3516, %v3660
      %v3691 = vadd.f32 %v3517, %v3663
      %v3692 = vadd.f32 %v3518, %v3668
      %v3693 = vadd.f32 %v3519, %v3671
      %v3694 = vadd.f32 %v3520, %v3676
      %v3695 = vadd.f32 %v3521, %v3679
      %v3696 = vadd.f32 %v3522, %v3684
      %v3697 = vadd.f32 %v3523, %v3687
      %v3698 = vpack.c.bf16 %v3176, %v3174
      %v3699 = vpack.c.bf16 %v3180, %v3178
      %v3700 = vpack.c.bf16 %v3184, %v3182
      %v3701 = vpack.c.bf16 %v3188, %v3186
      %s3702 = scalar_lea.vmem %s3, 1344
      %v3703 = vld [vmem:[%s3702] sm:$0xf]
      %v3704 = vld [vmem:[%s3702 + $0x4] sm:$0xf]
      %v3705 = vld [vmem:[%s3702 + $0x8] sm:$0xf]
      %v3706 = vld [vmem:[%s3702 + $0xc] sm:$0xf]
      %v3707 = vld [vmem:[%s3702 + $0x10] sm:$0xf]
      %v3708 = vld [vmem:[%s3702 + $0x14] sm:$0xf]
      %v3709 = vld [vmem:[%s3702 + $0x18] sm:$0xf]
      %v3710 = vld [vmem:[%s3702 + $0x1c] sm:$0xf]
      %v3711 = vld [vmem:[%s3702 + $0x20] sm:$0xf]
      %v3712 = vld [vmem:[%s3702 + $0x24] sm:$0xf]
      %v3713 = vld [vmem:[%s3702 + $0x28] sm:$0xf]
      %v3714 = vld [vmem:[%s3702 + $0x2c] sm:$0xf]
      %v3715 = vld [vmem:[%s3702 + $0x30] sm:$0xf]
      %v3716 = vld [vmem:[%s3702 + $0x34] sm:$0xf]
      %v3717 = vld [vmem:[%s3702 + $0x38] sm:$0xf]
      %v3718 = vld [vmem:[%s3702 + $0x3c] sm:$0xf]
      %v3735 = vunpack.c.l.b16 %v3703
      %v3736 = vunpack.c.l.b16 %v3704
      %v3737 = vunpack.c.l.b16 %v3705
      %v3738 = vunpack.c.l.b16 %v3706
      %v3739 = vunpack.c.l.b16 %v3707
      %v3740 = vunpack.c.l.b16 %v3708
      %v3741 = vunpack.c.l.b16 %v3709
      %v3742 = vunpack.c.l.b16 %v3710
      %v3743 = vunpack.c.l.b16 %v3711
      %v3744 = vunpack.c.l.b16 %v3712
      %v3745 = vunpack.c.l.b16 %v3713
      %v3746 = vunpack.c.l.b16 %v3714
      %v3747 = vunpack.c.l.b16 %v3715
      %v3748 = vunpack.c.l.b16 %v3716
      %v3749 = vunpack.c.l.b16 %v3717
      %v3750 = vunpack.c.l.b16 %v3718
      %v3751 = vpack.c.b16 %v3736, %v3735
      %v3752 = vpack.c.b16 %v3738, %v3737
      %v3753 = vpack.c.b16 %v3740, %v3739
      %v3754 = vpack.c.b16 %v3742, %v3741
      %v3755 = vpack.c.b16 %v3744, %v3743
      %v3756 = vpack.c.b16 %v3746, %v3745
      %v3757 = vpack.c.b16 %v3748, %v3747
      %v3758 = vpack.c.b16 %v3750, %v3749
      %3767 = vmatprep.subr.bf16.mxu0 0
      %3768 = vmatpush1.bf16.msra.mxu0 %v3751
      %3769 = vmatprep.subr.bf16.mxu0 0
      %3770 = vmatpush1.bf16.msra.mxu0 %v3752
      %3771 = vmatprep.subr.bf16.mxu0 0
      %3772 = vmatpush1.bf16.msra.mxu0 %v3753
      %3773 = vmatprep.subr.bf16.mxu0 0
      %3774 = vmatpush1.bf16.msra.mxu0 %v3754
      %3775 = vmatprep.subr.bf16.mxu0 0
      %3776 = vmatpush1.bf16.msra.mxu0 %v3755
      %3777 = vmatprep.subr.bf16.mxu0 0
      %3778 = vmatpush1.bf16.msra.mxu0 %v3756
      %3779 = vmatprep.subr.bf16.mxu0 0
      %3780 = vmatpush1.bf16.msra.mxu0 %v3757
      %3781 = vmatprep.subr.bf16.mxu0 0
      %3782 = vmatpush1.bf16.msra.mxu0 %v3758
      %3783 = vmatprep.subr.bf16.mxu0 0
      %3784 = vmatpush1.bf16.msra.mxu0 0
      %3785 = vmatprep.subr.bf16.mxu0 0
      %3786 = vmatpush1.bf16.msra.mxu0 0
      %3787 = vmatprep.subr.bf16.mxu0 0
      %3788 = vmatpush1.bf16.msra.mxu0 0
      %3789 = vmatprep.subr.bf16.mxu0 0
      %3790 = vmatpush1.bf16.msra.mxu0 0
      %3791 = vmatprep.subr.bf16.mxu0 0
      %3792 = vmatpush1.bf16.msra.mxu0 0
      %3793 = vmatprep.subr.bf16.mxu0 0
      %3794 = vmatpush1.bf16.msra.mxu0 0
      %3795 = vmatprep.subr.bf16.mxu0 0
      %3796 = vmatpush1.bf16.msra.mxu0 0
      %3797 = vmatprep.subr.bf16.mxu0 0
      %3798 = vmatpush1.bf16.msra.mxu0 0
      %3799 = vmatprep.mubr.bf16.mxu0 0
      %3800 = vmatmul.mubr.bf16.gmra.mrb[0].mxu0 %v3698
      %v3801 = vpop.f32.mrb[0].mxu0
      %v3802 = vadd.f32 0.0, %v3801
      %v3803 = vpop.f32.mrb[0].mxu0
      %v3804 = vpop.f32.mrb[0].mxu0
      %v3805 = vadd.f32 0.0, %v3804
      %v3806 = vpop.f32.mrb[0].mxu0
      %3807 = vmatprep.mubr.bf16.mxu0 0
      %3808 = vmatmul.mubr.bf16.gmra.mrb[0].mxu0 %v3699
      %v3809 = vpop.f32.mrb[0].mxu0
      %v3810 = vadd.f32 0.0, %v3809
      %v3811 = vpop.f32.mrb[0].mxu0
      %v3812 = vpop.f32.mrb[0].mxu0
      %v3813 = vadd.f32 0.0, %v3812
      %v3814 = vpop.f32.mrb[0].mxu0
      %3815 = vmatprep.mubr.bf16.mxu0 0
      %3816 = vmatmul.mubr.bf16.gmra.mrb[0].mxu0 %v3700
      %v3817 = vpop.f32.mrb[0].mxu0
      %v3818 = vadd.f32 0.0, %v3817
      %v3819 = vpop.f32.mrb[0].mxu0
      %v3820 = vpop.f32.mrb[0].mxu0
      %v3821 = vadd.f32 0.0, %v3820
      %v3822 = vpop.f32.mrb[0].mxu0
      %3823 = vmatprep.mubr.bf16.mxu0 0
      %3824 = vmatmul.mubr.bf16.gmra.mrb[0].mxu0 %v3701
      %v3825 = vpop.f32.mrb[0].mxu0
      %v3826 = vadd.f32 0.0, %v3825
      %v3827 = vpop.f32.mrb[0].mxu0
      %v3828 = vpop.f32.mrb[0].mxu0
      %v3829 = vadd.f32 0.0, %v3828
      %v3830 = vpop.f32.mrb[0].mxu0
      %3831 = vdwg.mxu0
      %v3832 = vadd.f32 %v3690, %v3802
      %v3833 = vadd.f32 %v3691, %v3805
      %v3834 = vadd.f32 %v3692, %v3810
      %v3835 = vadd.f32 %v3693, %v3813
      %v3836 = vadd.f32 %v3694, %v3818
      %v3837 = vadd.f32 %v3695, %v3821
      %v3838 = vadd.f32 %v3696, %v3826
      %v3839 = vadd.f32 %v3697, %v3829
      %v3842 = vrot.slane %v3188, 1
      %v3843 = vrot.slane %v3189, 1
      %v3844 = vsel %vm425, %v3842, %v3843
      %v3846 = vpack.c.bf16 %v3358, %v3355
      %v3847 = vpack.c.bf16 %v3364, %v3361
      %v3848 = vpack.c.bf16 %v3370, %v3367
      %v3849 = vpack.c.bf16 %v3844, %v3373
      %s3850 = scalar_lea.vmem %s3, 1408
      %v3851 = vld [vmem:[%s3850] sm:$0xf]
      %v3852 = vld [vmem:[%s3850 + $0x4] sm:$0xf]
      %v3853 = vld [vmem:[%s3850 + $0x8] sm:$0xf]
      %v3854 = vld [vmem:[%s3850 + $0xc] sm:$0xf]
      %v3855 = vld [vmem:[%s3850 + $0x10] sm:$0xf]
      %v3856 = vld [vmem:[%s3850 + $0x14] sm:$0xf]
      %v3857 = vld [vmem:[%s3850 + $0x18] sm:$0xf]
      %v3858 = vld [vmem:[%s3850 + $0x1c] sm:$0xf]
      %v3859 = vld [vmem:[%s3850 + $0x20] sm:$0xf]
      %v3860 = vld [vmem:[%s3850 + $0x24] sm:$0xf]
      %v3861 = vld [vmem:[%s3850 + $0x28] sm:$0xf]
      %v3862 = vld [vmem:[%s3850 + $0x2c] sm:$0xf]
      %v3863 = vld [vmem:[%s3850 + $0x30] sm:$0xf]
      %v3864 = vld [vmem:[%s3850 + $0x34] sm:$0xf]
      %v3865 = vld [vmem:[%s3850 + $0x38] sm:$0xf]
      %v3866 = vld [vmem:[%s3850 + $0x3c] sm:$0xf]
      %v3883 = vunpack.c.l.b16 %v3851
      %v3884 = vunpack.c.l.b16 %v3852
      %v3885 = vunpack.c.l.b16 %v3853
      %v3886 = vunpack.c.l.b16 %v3854
      %v3887 = vunpack.c.l.b16 %v3855
      %v3888 = vunpack.c.l.b16 %v3856
      %v3889 = vunpack.c.l.b16 %v3857
      %v3890 = vunpack.c.l.b16 %v3858
      %v3891 = vunpack.c.l.b16 %v3859
      %v3892 = vunpack.c.l.b16 %v3860
      %v3893 = vunpack.c.l.b16 %v3861
      %v3894 = vunpack.c.l.b16 %v3862
      %v3895 = vunpack.c.l.b16 %v3863
      %v3896 = vunpack.c.l.b16 %v3864
      %v3897 = vunpack.c.l.b16 %v3865
      %v3898 = vunpack.c.l.b16 %v3866
      %v3899 = vpack.c.b16 %v3884, %v3883
      %v3900 = vpack.c.b16 %v3886, %v3885
      %v3901 = vpack.c.b16 %v3888, %v3887
      %v3902 = vpack.c.b16 %v3890, %v3889
      %v3903 = vpack.c.b16 %v3892, %v3891
      %v3904 = vpack.c.b16 %v3894, %v3893
      %v3905 = vpack.c.b16 %v3896, %v3895
      %v3906 = vpack.c.b16 %v3898, %v3897
      %3915 = vmatprep.subr.bf16.mxu0 0
      %3916 = vmatpush1.bf16.msra.mxu0 %v3899
      %3917 = vmatprep.subr.bf16.mxu0 0
      %3918 = vmatpush1.bf16.msra.mxu0 %v3900
      %3919 = vmatprep.subr.bf16.mxu0 0
      %3920 = vmatpush1.bf16.msra.mxu0 %v3901
      %3921 = vmatprep.subr.bf16.mxu0 0
      %3922 = vmatpush1.bf16.msra.mxu0 %v3902
      %3923 = vmatprep.subr.bf16.mxu0 0
      %3924 = vmatpush1.bf16.msra.mxu0 %v3903
      %3925 = vmatprep.subr.bf16.mxu0 0
      %3926 = vmatpush1.bf16.msra.mxu0 %v3904
      %3927 = vmatprep.subr.bf16.mxu0 0
      %3928 = vmatpush1.bf16.msra.mxu0 %v3905
      %3929 = vmatprep.subr.bf16.mxu0 0
      %3930 = vmatpush1.bf16.msra.mxu0 %v3906
      %3931 = vmatprep.subr.bf16.mxu0 0
      %3932 = vmatpush1.bf16.msra.mxu0 0
      %3933 = vmatprep.subr.bf16.mxu0 0
      %3934 = vmatpush1.bf16.msra.mxu0 0
      %3935 = vmatprep.subr.bf16.mxu0 0
      %3936 = vmatpush1.bf16.msra.mxu0 0
      %3937 = vmatprep.subr.bf16.mxu0 0
      %3938 = vmatpush1.bf16.msra.mxu0 0
      %3939 = vmatprep.subr.bf16.mxu0 0
      %3940 = vmatpush1.bf16.msra.mxu0 0
      %3941 = vmatprep.subr.bf16.mxu0 0
      %3942 = vmatpush1.bf16.msra.mxu0 0
      %3943 = vmatprep.subr.bf16.mxu0 0
      %3944 = vmatpush1.bf16.msra.mxu0 0
      %3945 = vmatprep.subr.bf16.mxu0 0
      %3946 = vmatpush1.bf16.msra.mxu0 0
      %3947 = vmatprep.mubr.bf16.mxu0 0
      %3948 = vmatmul.mubr.bf16.gmra.mrb[0].mxu0 %v3846
      %v3949 = vpop.f32.mrb[0].mxu0
      %v3950 = vadd.f32 0.0, %v3949
      %v3951 = vpop.f32.mrb[0].mxu0
      %v3952 = vpop.f32.mrb[0].mxu0
      %v3953 = vadd.f32 0.0, %v3952
      %v3954 = vpop.f32.mrb[0].mxu0
      %3955 = vmatprep.mubr.bf16.mxu0 0
      %3956 = vmatmul.mubr.bf16.gmra.mrb[0].mxu0 %v3847
      %v3957 = vpop.f32.mrb[0].mxu0
      %v3958 = vadd.f32 0.0, %v3957
      %v3959 = vpop.f32.mrb[0].mxu0
      %v3960 = vpop.f32.mrb[0].mxu0
      %v3961 = vadd.f32 0.0, %v3960
      %v3962 = vpop.f32.mrb[0].mxu0
      %3963 = vmatprep.mubr.bf16.mxu0 0
      %3964 = vmatmul.mubr.bf16.gmra.mrb[0].mxu0 %v3848
      %v3965 = vpop.f32.mrb[0].mxu0
      %v3966 = vadd.f32 0.0, %v3965
      %v3967 = vpop.f32.mrb[0].mxu0
      %v3968 = vpop.f32.mrb[0].mxu0
      %v3969 = vadd.f32 0.0, %v3968
      %v3970 = vpop.f32.mrb[0].mxu0
      %3971 = vmatprep.mubr.bf16.mxu0 0
      %3972 = vmatmul.mubr.bf16.gmra.mrb[0].mxu0 %v3849
      %v3973 = vpop.f32.mrb[0].mxu0
      %v3974 = vadd.f32 0.0, %v3973
      %v3975 = vpop.f32.mrb[0].mxu0
      %v3976 = vpop.f32.mrb[0].mxu0
      %v3977 = vadd.f32 0.0, %v3976
      %v3978 = vpop.f32.mrb[0].mxu0
      %3979 = vdwg.mxu0
      %v3980 = vadd.f32 %v3832, %v3950
      %v3981 = vadd.f32 %v3833, %v3953
      %v3982 = vadd.f32 %v3834, %v3958
      %v3983 = vadd.f32 %v3835, %v3961
      %v3984 = vadd.f32 %v3836, %v3966
      %v3985 = vadd.f32 %v3837, %v3969
      %v3986 = vadd.f32 %v3838, %v3974
      %v3987 = vadd.f32 %v3839, %v3977
      %v3988 = vrot.slane %v3188, 2
      %v3989 = vrot.slane %v3189, 2
      %v3990 = vsel %vm705, %v3988, %v3989
      %v3992 = vpack.c.bf16 %v3532, %v3529
      %v3993 = vpack.c.bf16 %v3538, %v3535
      %v3994 = vpack.c.bf16 %v3544, %v3541
      %v3995 = vpack.c.bf16 %v3990, %v3547
      %s3996 = scalar_lea.vmem %s3, 1472
      %v3997 = vld [vmem:[%s3996] sm:$0xf]
      %v3998 = vld [vmem:[%s3996 + $0x4] sm:$0xf]
      %v3999 = vld [vmem:[%s3996 + $0x8] sm:$0xf]
      %v4000 = vld [vmem:[%s3996 + $0xc] sm:$0xf]
      %v4001 = vld [vmem:[%s3996 + $0x10] sm:$0xf]
      %v4002 = vld [vmem:[%s3996 + $0x14] sm:$0xf]
      %v4003 = vld [vmem:[%s3996 + $0x18] sm:$0xf]
      %v4004 = vld [vmem:[%s3996 + $0x1c] sm:$0xf]
      %v4005 = vld [vmem:[%s3996 + $0x20] sm:$0xf]
      %v4006 = vld [vmem:[%s3996 + $0x24] sm:$0xf]
      %v4007 = vld [vmem:[%s3996 + $0x28] sm:$0xf]
      %v4008 = vld [vmem:[%s3996 + $0x2c] sm:$0xf]
      %v4009 = vld [vmem:[%s3996 + $0x30] sm:$0xf]
      %v4010 = vld [vmem:[%s3996 + $0x34] sm:$0xf]
      %v4011 = vld [vmem:[%s3996 + $0x38] sm:$0xf]
      %v4012 = vld [vmem:[%s3996 + $0x3c] sm:$0xf]
      %v4029 = vunpack.c.l.b16 %v3997
      %v4030 = vunpack.c.l.b16 %v3998
      %v4031 = vunpack.c.l.b16 %v3999
      %v4032 = vunpack.c.l.b16 %v4000
      %v4033 = vunpack.c.l.b16 %v4001
      %v4034 = vunpack.c.l.b16 %v4002
      %v4035 = vunpack.c.l.b16 %v4003
      %v4036 = vunpack.c.l.b16 %v4004
      %v4037 = vunpack.c.l.b16 %v4005
      %v4038 = vunpack.c.l.b16 %v4006
      %v4039 = vunpack.c.l.b16 %v4007
      %v4040 = vunpack.c.l.b16 %v4008
      %v4041 = vunpack.c.l.b16 %v4009
      %v4042 = vunpack.c.l.b16 %v4010
      %v4043 = vunpack.c.l.b16 %v4011
      %v4044 = vunpack.c.l.b16 %v4012
      %v4045 = vpack.c.b16 %v4030, %v4029
      %v4046 = vpack.c.b16 %v4032, %v4031
      %v4047 = vpack.c.b16 %v4034, %v4033
      %v4048 = vpack.c.b16 %v4036, %v4035
      %v4049 = vpack.c.b16 %v4038, %v4037
      %v4050 = vpack.c.b16 %v4040, %v4039
      %v4051 = vpack.c.b16 %v4042, %v4041
      %v4052 = vpack.c.b16 %v4044, %v4043
      %4061 = vmatprep.subr.bf16.mxu0 0
      %4062 = vmatpush1.bf16.msra.mxu0 %v4045
      %4063 = vmatprep.subr.bf16.mxu0 0
      %4064 = vmatpush1.bf16.msra.mxu0 %v4046
      %4065 = vmatprep.subr.bf16.mxu0 0
      %4066 = vmatpush1.bf16.msra.mxu0 %v4047
      %4067 = vmatprep.subr.bf16.mxu0 0
      %4068 = vmatpush1.bf16.msra.mxu0 %v4048
      %4069 = vmatprep.subr.bf16.mxu0 0
      %4070 = vmatpush1.bf16.msra.mxu0 %v4049
      %4071 = vmatprep.subr.bf16.mxu0 0
      %4072 = vmatpush1.bf16.msra.mxu0 %v4050
      %4073 = vmatprep.subr.bf16.mxu0 0
      %4074 = vmatpush1.bf16.msra.mxu0 %v4051
      %4075 = vmatprep.subr.bf16.mxu0 0
      %4076 = vmatpush1.bf16.msra.mxu0 %v4052
      %4077 = vmatprep.subr.bf16.mxu0 0
      %4078 = vmatpush1.bf16.msra.mxu0 0
      %4079 = vmatprep.subr.bf16.mxu0 0
      %4080 = vmatpush1.bf16.msra.mxu0 0
      %4081 = vmatprep.subr.bf16.mxu0 0
      %4082 = vmatpush1.bf16.msra.mxu0 0
      %4083 = vmatprep.subr.bf16.mxu0 0
      %4084 = vmatpush1.bf16.msra.mxu0 0
      %4085 = vmatprep.subr.bf16.mxu0 0
      %4086 = vmatpush1.bf16.msra.mxu0 0
      %4087 = vmatprep.subr.bf16.mxu0 0
      %4088 = vmatpush1.bf16.msra.mxu0 0
      %4089 = vmatprep.subr.bf16.mxu0 0
      %4090 = vmatpush1.bf16.msra.mxu0 0
      %4091 = vmatprep.subr.bf16.mxu0 0
      %4092 = vmatpush1.bf16.msra.mxu0 0
      %4093 = vmatprep.mubr.bf16.mxu0 0
      %4094 = vmatmul.mubr.bf16.gmra.mrb[0].mxu0 %v3992
      %v4095 = vpop.f32.mrb[0].mxu0
      %v4096 = vadd.f32 0.0, %v4095
      %v4097 = vpop.f32.mrb[0].mxu0
      %v4098 = vpop.f32.mrb[0].mxu0
      %v4099 = vadd.f32 0.0, %v4098
      %v4100 = vpop.f32.mrb[0].mxu0
      %4101 = vmatprep.mubr.bf16.mxu0 0
      %4102 = vmatmul.mubr.bf16.gmra.mrb[0].mxu0 %v3993
      %v4103 = vpop.f32.mrb[0].mxu0
      %v4104 = vadd.f32 0.0, %v4103
      %v4105 = vpop.f32.mrb[0].mxu0
      %v4106 = vpop.f32.mrb[0].mxu0
      %v4107 = vadd.f32 0.0, %v4106
      %v4108 = vpop.f32.mrb[0].mxu0
      %4109 = vmatprep.mubr.bf16.mxu0 0
      %4110 = vmatmul.mubr.bf16.gmra.mrb[0].mxu0 %v3994
      %v4111 = vpop.f32.mrb[0].mxu0
      %v4112 = vadd.f32 0.0, %v4111
      %v4113 = vpop.f32.mrb[0].mxu0
      %v4114 = vpop.f32.mrb[0].mxu0
      %v4115 = vadd.f32 0.0, %v4114
      %v4116 = vpop.f32.mrb[0].mxu0
      %4117 = vmatprep.mubr.bf16.mxu0 0
      %4118 = vmatmul.mubr.bf16.gmra.mrb[0].mxu0 %v3995
      %v4119 = vpop.f32.mrb[0].mxu0
      %v4120 = vadd.f32 0.0, %v4119
      %v4121 = vpop.f32.mrb[0].mxu0
      %v4122 = vpop.f32.mrb[0].mxu0
      %v4123 = vadd.f32 0.0, %v4122
      %v4124 = vpop.f32.mrb[0].mxu0
      %4125 = vdwg.mxu0
      %v4126 = vadd.f32 %v3980, %v4096
      %v4127 = vadd.f32 %v3981, %v4099
      %v4128 = vadd.f32 %v3982, %v4104
      %v4129 = vadd.f32 %v3983, %v4107
      %v4130 = vadd.f32 %v3984, %v4112
      %v4131 = vadd.f32 %v3985, %v4115
      %v4132 = vadd.f32 %v3986, %v4120
      %v4133 = vadd.f32 %v3987, %v4123
      %v4134 = vpack.c.bf16 %v3190, %v3188
      %s4135 = scalar_lea.vmem %s3, 1536
      %v4136 = vld [vmem:[%s4135] sm:$0xf]
      %v4137 = vld [vmem:[%s4135 + $0x4] sm:$0xf]
      %v4138 = vld [vmem:[%s4135 + $0x8] sm:$0xf]
      %v4139 = vld [vmem:[%s4135 + $0xc] sm:$0xf]
      %v4140 = vld [vmem:[%s4135 + $0x10] sm:$0xf]
      %v4141 = vld [vmem:[%s4135 + $0x14] sm:$0xf]
      %v4142 = vld [vmem:[%s4135 + $0x18] sm:$0xf]
      %v4143 = vld [vmem:[%s4135 + $0x1c] sm:$0xf]
      %v4144 = vld [vmem:[%s4135 + $0x20] sm:$0xf]
      %v4145 = vld [vmem:[%s4135 + $0x24] sm:$0xf]
      %v4146 = vld [vmem:[%s4135 + $0x28] sm:$0xf]
      %v4147 = vld [vmem:[%s4135 + $0x2c] sm:$0xf]
      %v4148 = vld [vmem:[%s4135 + $0x30] sm:$0xf]
      %v4149 = vld [vmem:[%s4135 + $0x34] sm:$0xf]
      %v4150 = vld [vmem:[%s4135 + $0x38] sm:$0xf]
      %v4151 = vld [vmem:[%s4135 + $0x3c] sm:$0xf]
      %v4168 = vunpack.c.l.b16 %v4136
      %v4169 = vunpack.c.l.b16 %v4137
      %v4170 = vunpack.c.l.b16 %v4138
      %v4171 = vunpack.c.l.b16 %v4139
      %v4172 = vunpack.c.l.b16 %v4140
      %v4173 = vunpack.c.l.b16 %v4141
      %v4174 = vunpack.c.l.b16 %v4142
      %v4175 = vunpack.c.l.b16 %v4143
      %v4176 = vunpack.c.l.b16 %v4144
      %v4177 = vunpack.c.l.b16 %v4145
      %v4178 = vunpack.c.l.b16 %v4146
      %v4179 = vunpack.c.l.b16 %v4147
      %v4180 = vunpack.c.l.b16 %v4148
      %v4181 = vunpack.c.l.b16 %v4149
      %v4182 = vunpack.c.l.b16 %v4150
      %v4183 = vunpack.c.l.b16 %v4151
      %v4184 = vpack.c.b16 %v4169, %v4168
      %v4185 = vpack.c.b16 %v4171, %v4170
      %v4186 = vpack.c.b16 %v4173, %v4172
      %v4187 = vpack.c.b16 %v4175, %v4174
      %v4188 = vpack.c.b16 %v4177, %v4176
      %v4189 = vpack.c.b16 %v4179, %v4178
      %v4190 = vpack.c.b16 %v4181, %v4180
      %v4191 = vpack.c.b16 %v4183, %v4182
      %4200 = vmatprep.subr.bf16.mxu0 0
      %4201 = vmatpush1.bf16.msra.mxu0 %v4184
      %4202 = vmatprep.subr.bf16.mxu0 0
      %4203 = vmatpush1.bf16.msra.mxu0 %v4185
      %4204 = vmatprep.subr.bf16.mxu0 0
      %4205 = vmatpush1.bf16.msra.mxu0 %v4186
      %4206 = vmatprep.subr.bf16.mxu0 0
      %4207 = vmatpush1.bf16.msra.mxu0 %v4187
      %4208 = vmatprep.subr.bf16.mxu0 0
      %4209 = vmatpush1.bf16.msra.mxu0 %v4188
      %4210 = vmatprep.subr.bf16.mxu0 0
      %4211 = vmatpush1.bf16.msra.mxu0 %v4189
      %4212 = vmatprep.subr.bf16.mxu0 0
      %4213 = vmatpush1.bf16.msra.mxu0 %v4190
      %4214 = vmatprep.subr.bf16.mxu0 0
      %4215 = vmatpush1.bf16.msra.mxu0 %v4191
      %4216 = vmatprep.subr.bf16.mxu0 0
      %4217 = vmatpush1.bf16.msra.mxu0 0
      %4218 = vmatprep.subr.bf16.mxu0 0
      %4219 = vmatpush1.bf16.msra.mxu0 0
      %4220 = vmatprep.subr.bf16.mxu0 0
      %4221 = vmatpush1.bf16.msra.mxu0 0
      %4222 = vmatprep.subr.bf16.mxu0 0
      %4223 = vmatpush1.bf16.msra.mxu0 0
      %4224 = vmatprep.subr.bf16.mxu0 0
      %4225 = vmatpush1.bf16.msra.mxu0 0
      %4226 = vmatprep.subr.bf16.mxu0 0
      %4227 = vmatpush1.bf16.msra.mxu0 0
      %4228 = vmatprep.subr.bf16.mxu0 0
      %4229 = vmatpush1.bf16.msra.mxu0 0
      %4230 = vmatprep.subr.bf16.mxu0 0
      %4231 = vmatpush1.bf16.msra.mxu0 0
      %4232 = vmatprep.mubr.bf16.mxu0 0
      %4233 = vmatmul.mubr.bf16.gmra.mrb[0].mxu0 %v3193
      %v4234 = vpop.f32.mrb[0].mxu0
      %v4235 = vadd.f32 0.0, %v4234
      %v4236 = vpop.f32.mrb[0].mxu0
      %v4237 = vpop.f32.mrb[0].mxu0
      %v4238 = vadd.f32 0.0, %v4237
      %v4239 = vpop.f32.mrb[0].mxu0
      %4240 = vmatprep.mubr.bf16.mxu0 0
      %4241 = vmatmul.mubr.bf16.gmra.mrb[0].mxu0 %v3194
      %v4242 = vpop.f32.mrb[0].mxu0
      %v4243 = vadd.f32 0.0, %v4242
      %v4244 = vpop.f32.mrb[0].mxu0
      %v4245 = vpop.f32.mrb[0].mxu0
      %v4246 = vadd.f32 0.0, %v4245
      %v4247 = vpop.f32.mrb[0].mxu0
      %4248 = vmatprep.mubr.bf16.mxu0 0
      %4249 = vmatmul.mubr.bf16.gmra.mrb[0].mxu0 %v3195
      %v4250 = vpop.f32.mrb[0].mxu0
      %v4251 = vadd.f32 0.0, %v4250
      %v4252 = vpop.f32.mrb[0].mxu0
      %v4253 = vpop.f32.mrb[0].mxu0
      %v4254 = vadd.f32 0.0, %v4253
      %v4255 = vpop.f32.mrb[0].mxu0
      %4256 = vmatprep.mubr.bf16.mxu0 0
      %4257 = vmatmul.mubr.bf16.gmra.mrb[0].mxu0 %v4134
      %v4258 = vpop.f32.mrb[0].mxu0
      %v4259 = vadd.f32 0.0, %v4258
      %v4260 = vpop.f32.mrb[0].mxu0
      %v4261 = vpop.f32.mrb[0].mxu0
      %v4262 = vadd.f32 0.0, %v4261
      %v4263 = vpop.f32.mrb[0].mxu0
      %4264 = vdwg.mxu0
      %v4265 = vadd.f32 %v4126, %v4235
      %v4266 = vadd.f32 %v4127, %v4238
      %v4267 = vadd.f32 %v4128, %v4243
      %v4268 = vadd.f32 %v4129, %v4246
      %v4269 = vadd.f32 %v4130, %v4251
      %v4270 = vadd.f32 %v4131, %v4254
      %v4271 = vadd.f32 %v4132, %v4259
      %v4272 = vadd.f32 %v4133, %v4262
      %v4275 = vrot.slane %v3190, 1
      %v4276 = vrot.slane %v3191, 1
      %v4277 = vsel %vm425, %v4275, %v4276
      %v4279 = vpack.c.bf16 %v4277, %v3844
      %s4280 = scalar_lea.vmem %s3, 1600
      %v4281 = vld [vmem:[%s4280] sm:$0xf]
      %v4282 = vld [vmem:[%s4280 + $0x4] sm:$0xf]
      %v4283 = vld [vmem:[%s4280 + $0x8] sm:$0xf]
      %v4284 = vld [vmem:[%s4280 + $0xc] sm:$0xf]
      %v4285 = vld [vmem:[%s4280 + $0x10] sm:$0xf]
      %v4286 = vld [vmem:[%s4280 + $0x14] sm:$0xf]
      %v4287 = vld [vmem:[%s4280 + $0x18] sm:$0xf]
      %v4288 = vld [vmem:[%s4280 + $0x1c] sm:$0xf]
      %v4289 = vld [vmem:[%s4280 + $0x20] sm:$0xf]
      %v4290 = vld [vmem:[%s4280 + $0x24] sm:$0xf]
      %v4291 = vld [vmem:[%s4280 + $0x28] sm:$0xf]
      %v4292 = vld [vmem:[%s4280 + $0x2c] sm:$0xf]
      %v4293 = vld [vmem:[%s4280 + $0x30] sm:$0xf]
      %v4294 = vld [vmem:[%s4280 + $0x34] sm:$0xf]
      %v4295 = vld [vmem:[%s4280 + $0x38] sm:$0xf]
      %v4296 = vld [vmem:[%s4280 + $0x3c] sm:$0xf]
      %v4313 = vunpack.c.l.b16 %v4281
      %v4314 = vunpack.c.l.b16 %v4282
      %v4315 = vunpack.c.l.b16 %v4283
      %v4316 = vunpack.c.l.b16 %v4284
      %v4317 = vunpack.c.l.b16 %v4285
      %v4318 = vunpack.c.l.b16 %v4286
      %v4319 = vunpack.c.l.b16 %v4287
      %v4320 = vunpack.c.l.b16 %v4288
      %v4321 = vunpack.c.l.b16 %v4289
      %v4322 = vunpack.c.l.b16 %v4290
      %v4323 = vunpack.c.l.b16 %v4291
      %v4324 = vunpack.c.l.b16 %v4292
      %v4325 = vunpack.c.l.b16 %v4293
      %v4326 = vunpack.c.l.b16 %v4294
      %v4327 = vunpack.c.l.b16 %v4295
      %v4328 = vunpack.c.l.b16 %v4296
      %v4329 = vpack.c.b16 %v4314, %v4313
      %v4330 = vpack.c.b16 %v4316, %v4315
      %v4331 = vpack.c.b16 %v4318, %v4317
      %v4332 = vpack.c.b16 %v4320, %v4319
      %v4333 = vpack.c.b16 %v4322, %v4321
      %v4334 = vpack.c.b16 %v4324, %v4323
      %v4335 = vpack.c.b16 %v4326, %v4325
      %v4336 = vpack.c.b16 %v4328, %v4327
      %4345 = vmatprep.subr.bf16.mxu0 0
      %4346 = vmatpush1.bf16.msra.mxu0 %v4329
      %4347 = vmatprep.subr.bf16.mxu0 0
      %4348 = vmatpush1.bf16.msra.mxu0 %v4330
      %4349 = vmatprep.subr.bf16.mxu0 0
      %4350 = vmatpush1.bf16.msra.mxu0 %v4331
      %4351 = vmatprep.subr.bf16.mxu0 0
      %4352 = vmatpush1.bf16.msra.mxu0 %v4332
      %4353 = vmatprep.subr.bf16.mxu0 0
      %4354 = vmatpush1.bf16.msra.mxu0 %v4333
      %4355 = vmatprep.subr.bf16.mxu0 0
      %4356 = vmatpush1.bf16.msra.mxu0 %v4334
      %4357 = vmatprep.subr.bf16.mxu0 0
      %4358 = vmatpush1.bf16.msra.mxu0 %v4335
      %4359 = vmatprep.subr.bf16.mxu0 0
      %4360 = vmatpush1.bf16.msra.mxu0 %v4336
      %4361 = vmatprep.subr.bf16.mxu0 0
      %4362 = vmatpush1.bf16.msra.mxu0 0
      %4363 = vmatprep.subr.bf16.mxu0 0
      %4364 = vmatpush1.bf16.msra.mxu0 0
      %4365 = vmatprep.subr.bf16.mxu0 0
      %4366 = vmatpush1.bf16.msra.mxu0 0
      %4367 = vmatprep.subr.bf16.mxu0 0
      %4368 = vmatpush1.bf16.msra.mxu0 0
      %4369 = vmatprep.subr.bf16.mxu0 0
      %4370 = vmatpush1.bf16.msra.mxu0 0
      %4371 = vmatprep.subr.bf16.mxu0 0
      %4372 = vmatpush1.bf16.msra.mxu0 0
      %4373 = vmatprep.subr.bf16.mxu0 0
      %4374 = vmatpush1.bf16.msra.mxu0 0
      %4375 = vmatprep.subr.bf16.mxu0 0
      %4376 = vmatpush1.bf16.msra.mxu0 0
      %4377 = vmatprep.mubr.bf16.mxu0 0
      %4378 = vmatmul.mubr.bf16.gmra.mrb[0].mxu0 %v3383
      %v4379 = vpop.f32.mrb[0].mxu0
      %v4380 = vadd.f32 0.0, %v4379
      %v4381 = vpop.f32.mrb[0].mxu0
      %v4382 = vpop.f32.mrb[0].mxu0
      %v4383 = vadd.f32 0.0, %v4382
      %v4384 = vpop.f32.mrb[0].mxu0
      %4385 = vmatprep.mubr.bf16.mxu0 0
      %4386 = vmatmul.mubr.bf16.gmra.mrb[0].mxu0 %v3384
      %v4387 = vpop.f32.mrb[0].mxu0
      %v4388 = vadd.f32 0.0, %v4387
      %v4389 = vpop.f32.mrb[0].mxu0
      %v4390 = vpop.f32.mrb[0].mxu0
      %v4391 = vadd.f32 0.0, %v4390
      %v4392 = vpop.f32.mrb[0].mxu0
      %4393 = vmatprep.mubr.bf16.mxu0 0
      %4394 = vmatmul.mubr.bf16.gmra.mrb[0].mxu0 %v3385
      %v4395 = vpop.f32.mrb[0].mxu0
      %v4396 = vadd.f32 0.0, %v4395
      %v4397 = vpop.f32.mrb[0].mxu0
      %v4398 = vpop.f32.mrb[0].mxu0
      %v4399 = vadd.f32 0.0, %v4398
      %v4400 = vpop.f32.mrb[0].mxu0
      %4401 = vmatprep.mubr.bf16.mxu0 0
      %4402 = vmatmul.mubr.bf16.gmra.mrb[0].mxu0 %v4279
      %v4403 = vpop.f32.mrb[0].mxu0
      %v4404 = vadd.f32 0.0, %v4403
      %v4405 = vpop.f32.mrb[0].mxu0
      %v4406 = vpop.f32.mrb[0].mxu0
      %v4407 = vadd.f32 0.0, %v4406
      %v4408 = vpop.f32.mrb[0].mxu0
      %4409 = vdwg.mxu0
      %v4410 = vadd.f32 %v4265, %v4380
      %v4411 = vadd.f32 %v4266, %v4383
      %v4412 = vadd.f32 %v4267, %v4388
      %v4413 = vadd.f32 %v4268, %v4391
      %v4414 = vadd.f32 %v4269, %v4396
      %v4415 = vadd.f32 %v4270, %v4399
      %v4416 = vadd.f32 %v4271, %v4404
      %v4417 = vadd.f32 %v4272, %v4407
      %v4418 = vrot.slane %v3190, 2
      %v4419 = vrot.slane %v3191, 2
      %v4420 = vsel %vm705, %v4418, %v4419
      %v4422 = vpack.c.bf16 %v4420, %v3990
      %s4423 = scalar_lea.vmem %s3, 1664
      %v4424 = vld [vmem:[%s4423] sm:$0xf]
      %v4425 = vld [vmem:[%s4423 + $0x4] sm:$0xf]
      %v4426 = vld [vmem:[%s4423 + $0x8] sm:$0xf]
      %v4427 = vld [vmem:[%s4423 + $0xc] sm:$0xf]
      %v4428 = vld [vmem:[%s4423 + $0x10] sm:$0xf]
      %v4429 = vld [vmem:[%s4423 + $0x14] sm:$0xf]
      %v4430 = vld [vmem:[%s4423 + $0x18] sm:$0xf]
      %v4431 = vld [vmem:[%s4423 + $0x1c] sm:$0xf]
      %v4432 = vld [vmem:[%s4423 + $0x20] sm:$0xf]
      %v4433 = vld [vmem:[%s4423 + $0x24] sm:$0xf]
      %v4434 = vld [vmem:[%s4423 + $0x28] sm:$0xf]
      %v4435 = vld [vmem:[%s4423 + $0x2c] sm:$0xf]
      %v4436 = vld [vmem:[%s4423 + $0x30] sm:$0xf]
      %v4437 = vld [vmem:[%s4423 + $0x34] sm:$0xf]
      %v4438 = vld [vmem:[%s4423 + $0x38] sm:$0xf]
      %v4439 = vld [vmem:[%s4423 + $0x3c] sm:$0xf]
      %v4456 = vunpack.c.l.b16 %v4424
      %v4457 = vunpack.c.l.b16 %v4425
      %v4458 = vunpack.c.l.b16 %v4426
      %v4459 = vunpack.c.l.b16 %v4427
      %v4460 = vunpack.c.l.b16 %v4428
      %v4461 = vunpack.c.l.b16 %v4429
      %v4462 = vunpack.c.l.b16 %v4430
      %v4463 = vunpack.c.l.b16 %v4431
      %v4464 = vunpack.c.l.b16 %v4432
      %v4465 = vunpack.c.l.b16 %v4433
      %v4466 = vunpack.c.l.b16 %v4434
      %v4467 = vunpack.c.l.b16 %v4435
      %v4468 = vunpack.c.l.b16 %v4436
      %v4469 = vunpack.c.l.b16 %v4437
      %v4470 = vunpack.c.l.b16 %v4438
      %v4471 = vunpack.c.l.b16 %v4439
      %v4472 = vpack.c.b16 %v4457, %v4456
      %v4473 = vpack.c.b16 %v4459, %v4458
      %v4474 = vpack.c.b16 %v4461, %v4460
      %v4475 = vpack.c.b16 %v4463, %v4462
      %v4476 = vpack.c.b16 %v4465, %v4464
      %v4477 = vpack.c.b16 %v4467, %v4466
      %v4478 = vpack.c.b16 %v4469, %v4468
      %v4479 = vpack.c.b16 %v4471, %v4470
      %4488 = vmatprep.subr.bf16.mxu0 0
      %4489 = vmatpush1.bf16.msra.mxu0 %v4472
      %4490 = vmatprep.subr.bf16.mxu0 0
      %4491 = vmatpush1.bf16.msra.mxu0 %v4473
      %4492 = vmatprep.subr.bf16.mxu0 0
      %4493 = vmatpush1.bf16.msra.mxu0 %v4474
      %4494 = vmatprep.subr.bf16.mxu0 0
      %4495 = vmatpush1.bf16.msra.mxu0 %v4475
      %4496 = vmatprep.subr.bf16.mxu0 0
      %4497 = vmatpush1.bf16.msra.mxu0 %v4476
      %4498 = vmatprep.subr.bf16.mxu0 0
      %4499 = vmatpush1.bf16.msra.mxu0 %v4477
      %4500 = vmatprep.subr.bf16.mxu0 0
      %4501 = vmatpush1.bf16.msra.mxu0 %v4478
      %4502 = vmatprep.subr.bf16.mxu0 0
      %4503 = vmatpush1.bf16.msra.mxu0 %v4479
      %4504 = vmatprep.subr.bf16.mxu0 0
      %4505 = vmatpush1.bf16.msra.mxu0 0
      %4506 = vmatprep.subr.bf16.mxu0 0
      %4507 = vmatpush1.bf16.msra.mxu0 0
      %4508 = vmatprep.subr.bf16.mxu0 0
      %4509 = vmatpush1.bf16.msra.mxu0 0
      %4510 = vmatprep.subr.bf16.mxu0 0
      %4511 = vmatpush1.bf16.msra.mxu0 0
      %4512 = vmatprep.subr.bf16.mxu0 0
      %4513 = vmatpush1.bf16.msra.mxu0 0
      %4514 = vmatprep.subr.bf16.mxu0 0
      %4515 = vmatpush1.bf16.msra.mxu0 0
      %4516 = vmatprep.subr.bf16.mxu0 0
      %4517 = vmatpush1.bf16.msra.mxu0 0
      %4518 = vmatprep.subr.bf16.mxu0 0
      %4519 = vmatpush1.bf16.msra.mxu0 0
      %4520 = vmatprep.mubr.bf16.mxu0 0
      %4521 = vmatmul.mubr.bf16.gmra.mrb[0].mxu0 %v3557
      %v4522 = vpop.f32.mrb[0].mxu0
      %v4523 = vadd.f32 0.0, %v4522
      %v4524 = vpop.f32.mrb[0].mxu0
      %v4525 = vpop.f32.mrb[0].mxu0
      %v4526 = vadd.f32 0.0, %v4525
      %v4527 = vpop.f32.mrb[0].mxu0
      %4528 = vmatprep.mubr.bf16.mxu0 0
      %4529 = vmatmul.mubr.bf16.gmra.mrb[0].mxu0 %v3558
      %v4530 = vpop.f32.mrb[0].mxu0
      %v4531 = vadd.f32 0.0, %v4530
      %v4532 = vpop.f32.mrb[0].mxu0
      %v4533 = vpop.f32.mrb[0].mxu0
      %v4534 = vadd.f32 0.0, %v4533
      %v4535 = vpop.f32.mrb[0].mxu0
      %4536 = vmatprep.mubr.bf16.mxu0 0
      %4537 = vmatmul.mubr.bf16.gmra.mrb[0].mxu0 %v3559
      %v4538 = vpop.f32.mrb[0].mxu0
      %v4539 = vadd.f32 0.0, %v4538
      %v4540 = vpop.f32.mrb[0].mxu0
      %v4541 = vpop.f32.mrb[0].mxu0
      %v4542 = vadd.f32 0.0, %v4541
      %v4543 = vpop.f32.mrb[0].mxu0
      %4544 = vmatprep.mubr.bf16.mxu0 0
      %4545 = vmatmul.mubr.bf16.gmra.mrb[0].mxu0 %v4422
      %v4546 = vpop.f32.mrb[0].mxu0
      %v4547 = vadd.f32 0.0, %v4546
      %v4548 = vpop.f32.mrb[0].mxu0
      %v4549 = vpop.f32.mrb[0].mxu0
      %v4550 = vadd.f32 0.0, %v4549
      %v4551 = vpop.f32.mrb[0].mxu0
      %4552 = vdwg.mxu0
      %v4553 = vadd.f32 %v4410, %v4523
      %v4554 = vadd.f32 %v4411, %v4526
      %v4555 = vadd.f32 %v4412, %v4531
      %v4556 = vadd.f32 %v4413, %v4534
      %v4557 = vadd.f32 %v4414, %v4539
      %v4558 = vadd.f32 %v4415, %v4542
      %v4559 = vadd.f32 %v4416, %v4547
      %v4560 = vadd.f32 %v4417, %v4550
      %v4561 = vpack.c.bf16 %v4553, %v4553
      %v4562 = vpack.c.bf16 %v4554, %v4554
      %v4563 = vpack.c.bf16 %v4555, %v4555
      %v4564 = vpack.c.bf16 %v4556, %v4556
      %v4565 = vpack.c.bf16 %v4557, %v4557
      %v4566 = vpack.c.bf16 %v4558, %v4558
      %v4567 = vpack.c.bf16 %v4559, %v4559
      %v4568 = vpack.c.bf16 %v4560, %v4560
      %4569 = vst [vmem:[%s340] sm:$0xf] %v4561
      %4570 = vst [vmem:[%s340 + $0x4] sm:$0xf] %v4562
      %4571 = vst [vmem:[%s340 + $0x8] sm:$0xf] %v4563
      %4572 = vst [vmem:[%s340 + $0xc] sm:$0xf] %v4564
      %4573 = vst [vmem:[%s340 + $0x10] sm:$0xf] %v4565
      %4574 = vst [vmem:[%s340 + $0x14] sm:$0xf] %v4566
      %4575 = vst [vmem:[%s340 + $0x18] sm:$0xf] %v4567
      %4576 = vst [vmem:[%s340 + $0x1c] sm:$0xf] %v4568
      %v4577 = vld [vmem:[%s5] sm:$0x3]
      %v4578 = vadd.f32 %v4553, %v4554
      %v4579 = vadd.f32 %v4578, %v4555
      %v4580 = vadd.f32 %v4579, %v4556
      %v4581 = vadd.f32 %v4580, %v4557
      %v4582 = vadd.f32 %v4581, %v4558
      %v4583 = vadd.f32 %v4582, %v4559
      %v4584 = vadd.f32 %v4583, %v4560
      %v4585 = vrot.slane %v4584, 4
      %v4586 = vadd.f32 %v4584, %v4585
      %v4587 = vrot.slane %v4586, 2
      %v4588 = vadd.f32 %v4586, %v4587
      %v4589 = vrot.slane %v4588, 1
      %v4590 = vadd.f32 %v4588, %v4589
      %v4591 = vmul.f32 %v4553, %v4553
      %v4592 = vmul.f32 %v4554, %v4554
      %v4593 = vmul.f32 %v4555, %v4555
      %v4594 = vmul.f32 %v4556, %v4556
      %v4595 = vmul.f32 %v4557, %v4557
      %v4596 = vmul.f32 %v4558, %v4558
      %v4597 = vmul.f32 %v4559, %v4559
      %v4598 = vmul.f32 %v4560, %v4560
      %v4599 = vadd.f32 %v4591, %v4592
      %v4600 = vadd.f32 %v4599, %v4593
      %v4601 = vadd.f32 %v4600, %v4594
      %v4602 = vadd.f32 %v4601, %v4595
      %v4603 = vadd.f32 %v4602, %v4596
      %v4604 = vadd.f32 %v4603, %v4597
      %v4605 = vadd.f32 %v4604, %v4598
      %v4606 = vrot.slane %v4605, 4
      %v4607 = vadd.f32 %v4605, %v4606
      %v4608 = vrot.slane %v4607, 2
      %v4609 = vadd.f32 %v4607, %v4608
      %v4610 = vrot.slane %v4609, 1
      %v4611 = vadd.f32 %v4609, %v4610
      %vm4612 = vcmask 1040384
      %v4613 = vsel %vm4612, %v4590, %v4611
      %v4614 = vadd.f32 %v4577, %v4613
      %4615 = vst [vmem:[%s5] sm:$0x3] %v4614
      %p4616 = scmp.lt.s32.totalorder %s21, 1
      %s4617 = scalar_select %p4616, %s21, 1
      %p4618 = scmp.lt.s32.totalorder %s22, 7
      %s4619 = scalar_select %p4618, %s22, 7
      %s4620 = smul.addr %s4619, 8
      %s4621 = smul.addr %s4617, 64
      %s4622 = sadd.s32 %s4620, %s4621
      %s4623 = smul.addr %s4622, 4
      %s4624 = scalar_lea.vmem %s4, %s4623
      // Predicated region
      $region41: #{bottleneck_forward.5} parent=35 // pred_check
        %p4625 = pneg %p158
      $region42: #{bottleneck_forward.5} parent=35 // pred_check_branch
        %4627 = sbr.rel (%p4625) target = $region44
      $region43: #{bottleneck_forward.5} parent=35 // pred_region
        _
      $region44: #{bottleneck_forward.5} parent=35 // pred_fallthru
        _
      // Predicated region
      $region45: #{bottleneck_forward.5} parent=35 // pred_check
        %p4628 = pneg %p179
      $region46: #{bottleneck_forward.5} parent=35 // pred_check_branch
        %4630 = sbr.rel (%p4628) target = $region48
      $region47: #{bottleneck_forward.5} parent=35 // pred_region
        _
      $region48: #{bottleneck_forward.5} parent=35 // pred_fallthru
        _
      // Predicated region
      $region49: #{bottleneck_forward.5} parent=35 // pred_check
        %p4631 = pneg %p179
      $region50: #{bottleneck_forward.5} parent=35 // pred_check_branch
        %4633 = sbr.rel (%p4631) target = $region52
      $region51: #{bottleneck_forward.5} parent=35 // pred_region
        _
      $region52: #{bottleneck_forward.5} parent=35 // pred_fallthru
        _
    $region36: #{bottleneck_forward.5} parent=5 // pred_fallthru
      _
    %p4634 = scmp.le.s32.totalorder 2, %s12
    // Predicated region
    $region53: #{bottleneck_forward.5} parent=5 // pred_check
      %p4635 = pneg %p4634
    $region54: #{bottleneck_forward.5} parent=5 // pred_check_branch
      %4637 = sbr.rel (%p4635) target = $region56
    $region55: #{bottleneck_forward.5} parent=5 // pred_region
      %s4638 = ssub.s32 %s12, 2
      // Predicated region
      $region57: #{bottleneck_forward.5} parent=55 // pred_check
        %p4639 = pneg %p164
      $region58: #{bottleneck_forward.5} parent=55 // pred_check_branch
        %4641 = sbr.rel (%p4639) target = $region60
      $region59: #{bottleneck_forward.5} parent=55 // pred_region
        %p4642 = scmp.lt.s32.totalorder %s23, 1
        %s4643 = scalar_select %p4642, %s23, 1
        %p4644 = scmp.lt.s32.totalorder %s24, 7
        %s4645 = scalar_select %p4644, %s24, 7
        %s4646 = smul.addr %s4645, 8
        %s4647 = smul.addr %s4643, 64
        %s4648 = sadd.s32 %s4646, %s4647
        %s4649 = smul.addr %s4648, 4
        %s4650 = scalar_lea.vmem %s4, %s4649
      $region60: #{bottleneck_forward.5} parent=55 // pred_fallthru
        _
    $region56: #{bottleneck_forward.5} parent=5 // pred_fallthru
      _
  $region6: #{bottleneck_forward.5} parent=0 // loop_footer
    %s16 = sadd.s32 1, %s12
  $region7: #{bottleneck_forward.5} parent=0 // loop_footer_branch
    %11 = sbr.rel target = $region3
  $region8: #{bottleneck_forward.5} parent=0 // loop_exit
    _

</llo_original>
